<compile_context>
chip_gen: v5e
topology: v5e:2x2
jax: 0.10.0
libtpu: 0.0.40
codegen_flags: <defaults>
</compile_context>

<pallas_src>
import functools

import jax
import jax.numpy as jnp
from jax import lax
from jax.experimental import pallas as pl
from jax.experimental.pallas import tpu as pltpu

LAST_LAYER_SIZE = 512
POOL = 4      # MaxPool2d(4, 4)
KSIZE = 5     # conv kernel size
PAD = 2       # conv padding
C1 = 16       # conv1 out channels per child
C2 = 32       # conv2 out channels per child
LANES = 128


def _round_up(x, m):
    return (x + m - 1) // m * m


def _compiler_params(**kw):
    cls = getattr(pltpu, "CompilerParams", None)
    if cls is None:  # fallback for older jax releases
        cls = getattr(pltpu, "TPUCompilerParams")
    return cls(**kw)


def _vmem_limit(est_bytes):
    # generous headroom, but stay below v7x's 64 MiB physical VMEM.
    return int(min(64 * 2**20, max(32 * 2**20, est_bytes + 4 * 2**20)))


# ----------------------------------------------------------------------------
# Kernel A: conv1 (+bias+ReLU) fused with the 4x4 max-pool, all children
# packed along the (128-lane-padded) output-channel axis, tiled over pixels.
# ----------------------------------------------------------------------------
def _conv_relu_pool_kernel(p_ref, w_ref, b_ref, o_ref, *, n_win):
    """p_ref: (n_win, TG, K) im2col patches, pool-window position leading.
       w_ref: (K, 128) packed weights, b_ref: (1, 128), o_ref: (TG, 128).
       o = relu(max_over_window(p @ w) + b): bias/ReLU hoisted out of the max
       (adding a constant and a monotone ReLU both commute with max)."""
    w = w_ref[...]
    m = jnp.dot(p_ref[0], w, preferred_element_type=jnp.float32)
    for i in range(1, n_win):
        m = jnp.maximum(m, jnp.dot(p_ref[i], w, preferred_element_type=jnp.float32))
    o_ref[...] = jnp.maximum(m + b_ref[...], 0.0)


def conv_relu_pool_all(patches, w, b, *, tile_g=512):
    n_win, g, k = patches.shape
    c = w.shape[1]
    tg = _round_up(g, 8) if g <= tile_g else tile_g
    gp = _round_up(g, tg)
    if gp != g:
        patches = jnp.pad(patches, ((0, 0), (0, gp - g), (0, 0)))
    blk = (n_win * tg + 2 * tg) * LANES * 4          # lane-padded block bytes
    out = pl.pallas_call(
        functools.partial(_conv_relu_pool_kernel, n_win=n_win),
        out_shape=jax.ShapeDtypeStruct((gp, c), jnp.float32),
        grid=(gp // tg,),
        in_specs=[
            pl.BlockSpec((n_win, tg, k), lambda i: (0, i, 0)),
            pl.BlockSpec((k, c), lambda i: (0, 0)),
            pl.BlockSpec((1, c), lambda i: (0, 0)),
        ],
        out_specs=pl.BlockSpec((tg, c), lambda i: (i, 0)),
        compiler_params=_compiler_params(
            dimension_semantics=("parallel",),
            vmem_limit_bytes=_vmem_limit(2 * blk)),
    )(patches, w, b)
    return out[:g]


# ----------------------------------------------------------------------------
# Kernel B: per-child tail — grouped conv2 + bias + ReLU + 4x4 max-pool +
# fc3/fc4/fc5 — with the conv2 im2col built in VMEM from static row offsets.
# ----------------------------------------------------------------------------
def _child_tail_kernel(x_ref, w2_ref, b2_ref, w3_ref, b3_ref, w4_ref, b4_ref,
                       w5_ref, b5_ref, o_ref, c2a, c2b, *,
                       batch, h1, w1, margin):
    """x_ref holds the conv1 activation of one child, spatially zero-padded
    and flattened as row = (hp * Wp + wp) * N + n (channels on lanes, zero
    margin rows at both ends), so every conv tap, pool window and NCHW-flatten
    access below is a plain static row offset."""
    n = batch
    wp = w1 + 2 * PAD
    rows = (h1 + 2 * PAD) * wp * n

    # grouped conv2 as 25 accumulating (rows,16)x(16,32) matmuls over
    # tap-shifted static views (bias hoisted out of the tap loop).
    acc = None
    for kh in range(KSIZE):
        for kw in range(KSIZE):
            off = ((kh - PAD) * wp + (kw - PAD)) * n
            slab = x_ref[pl.ds(margin + off, rows), :]
            t = jnp.dot(slab, w2_ref[kh * KSIZE + kw],
                        preferred_element_type=jnp.float32)
            acc = t if acc is None else acc + t
    acc = jnp.maximum(acc + b2_ref[...], 0.0)            # (rows, 32)

    # stage into scratch so the 4x4 pool is 16 static row-offset reads; zero
    # the tail rows so out-of-image reads stay finite (they are never used).
    tail = c2a.shape[0] - rows
    c2a[pl.ds(0, rows), :] = acc
    c2a[pl.ds(rows, tail), :] = jnp.zeros((tail, C2), jnp.float32)

    pooled = c2a[pl.ds(0, rows), :]
    for i in range(POOL):
        for j in range(POOL):
            if i == 0 and j == 0:
                continue
            pooled = jnp.maximum(pooled, c2a[pl.ds((i * wp + j) * n, rows), :])
    # valid pooled pixels live at rows ((2+4*h2)*wp + 2+4*w2)*n + 0..n-1
    c2b[...] = pooled

    # fc3 with the NCHW flatten folded into the contraction: one accumulating
    # (N,32)x(32,1024) matmul per spatial site (W3 packed site-major).
    h2n, w2n = h1 // POOL, w1 // POOL
    cdt = w3_ref.dtype                                   # f32 or bf16 weights
    hidden = jnp.zeros((n, w3_ref.shape[1]), jnp.float32)
    for s in range(h2n * w2n):
        hh, ww = divmod(s, w2n)
        r0 = ((PAD + POOL * hh) * wp + (PAD + POOL * ww)) * n
        slab = c2b[pl.ds(r0, n), :].astype(cdt)
        hidden += jnp.dot(slab, w3_ref[pl.ds(C2 * s, C2), :],
                          preferred_element_type=jnp.float32)
    h = jnp.maximum(hidden + b3_ref[...], 0.0)
    h = jnp.maximum(
        jnp.dot(h.astype(cdt), w4_ref[...],
                preferred_element_type=jnp.float32) + b4_ref[...], 0.0)
    o_ref[...] = jnp.dot(h.astype(cdt), w5_ref[...],
                         preferred_element_type=jnp.float32) + b5_ref[...]


def ensemble_tail(xflat, W2, b2, W3, b3, W4, b4, W5, b5, *,
                  batch, h1, w1, margin):
    nchild = W2.shape[0]
    wp = w1 + 2 * PAD
    rows = (h1 + 2 * PAD) * wp * batch
    tail = (3 * wp + 3) * batch
    ncp = W5.shape[-1]
    h3 = W3.shape[-1]
    h4 = W4.shape[-1]
    itfc = jnp.dtype(W3.dtype).itemsize
    blk = (xflat.shape[1] * LANES * 4 + 25 * C1 * LANES * 4
           + W3.shape[1] * h3 * itfc + W4.shape[1] * h4 * itfc
           + W5.shape[1] * ncp * itfc + 4 * LANES * 4
           + max(batch, 8) * ncp * 4)
    scratch_bytes = (2 * rows + tail) * LANES * 4
    kernel = functools.partial(_child_tail_kernel, batch=batch, h1=h1, w1=w1,
                               margin=margin)
    return pl.pallas_call(
        kernel,
        out_shape=jax.ShapeDtypeStruct((nchild, batch, ncp), jnp.float32),
        grid=(nchild,),
        in_specs=[
            pl.BlockSpec((None,) + tuple(xflat.shape[1:]), lambda c: (c, 0, 0)),
            pl.BlockSpec((None,) + tuple(W2.shape[1:]), lambda c: (c, 0, 0, 0)),
            pl.BlockSpec((None, 1, C2), lambda c: (c, 0, 0)),
            pl.BlockSpec((None,) + tuple(W3.shape[1:]), lambda c: (c, 0, 0)),
            pl.BlockSpec((None, 1, h3), lambda c: (c, 0, 0)),
            pl.BlockSpec((None,) + tuple(W4.shape[1:]), lambda c: (c, 0, 0)),
            pl.BlockSpec((None, 1, h4), lambda c: (c, 0, 0)),
            pl.BlockSpec((None,) + tuple(W5.shape[1:]), lambda c: (c, 0, 0)),
            pl.BlockSpec((None, 1, ncp), lambda c: (c, 0, 0)),
        ],
        out_specs=pl.BlockSpec((None, batch, ncp), lambda c: (c, 0, 0)),
        scratch_shapes=[
            pltpu.VMEM((rows + tail, C2), jnp.float32),   # conv2 output (+halo)
            pltpu.VMEM((rows, C2), jnp.float32),          # pooled conv2 output
        ],
        compiler_params=_compiler_params(
            dimension_semantics=("parallel",),
            vmem_limit_bytes=_vmem_limit(2 * blk + scratch_bytes)),
    )(xflat, W2, b2, W3, b3, W4, b4, W5, b5)


# ----------------------------------------------------------------------------
# Host-side plumbing (conv1 im2col in pooling-window-major order) — plain JAX
# ----------------------------------------------------------------------------
def im2col_pool_major(x_nhwc, k, pad, pool):
    """NHWC -> im2col patches with the pool-window position as the LEADING axis.
    Returns (pool*pool, N*Ho*Wo, C*k*k); rows ordered (n, ho, wo); columns
    ordered (c, kh, kw), matching OIHW weight .reshape(Cout, Cin*k*k).T."""
    N, H, W, C = x_nhwc.shape
    Ho, Wo = H // pool, W // pool
    xp = jnp.pad(x_nhwc, ((0, 0), (pad, pad), (pad, pad), (0, 0)))
    cols = jnp.stack(
        [xp[:, i:i + H, j:j + W, :] for i in range(k) for j in range(k)], axis=3
    )                                                   # (N, H, W, k*k, C)
    cols = cols.transpose(0, 1, 2, 4, 3).reshape(N, H, W, C * k * k)
    K = C * k * k
    cols = cols[:, :Ho * pool, :Wo * pool, :].reshape(N, Ho, pool, Wo, pool, K)
    cols = cols.transpose(2, 4, 0, 1, 3, 5).reshape(pool * pool, N * Ho * Wo, K)
    return cols


# ----------------------------------------------------------------------------
# Parameters: per-child raw (PyTorch layout, for the reference) + packed form
# ----------------------------------------------------------------------------
def init_child_params(key, num_classes, width, height):
    w_ap = width // POOL // POOL
    h_ap = height // POOL // POOL
    keys = jax.random.split(key, 10)

    def uni(k, shape, fan_in):
        bound = 1.0 / float(fan_in) ** 0.5
        return jax.random.uniform(k, shape, jnp.float32, -bound, bound)

    w1 = uni(keys[0], (C1, 1, KSIZE, KSIZE), 25)
    b1 = uni(keys[1], (1, C1), 25)
    w2 = uni(keys[2], (C2, 2, KSIZE, KSIZE), 2 * 25)     # groups=8: per-group Cin=2
    b2 = uni(keys[3], (1, C2), 2 * 25)
    fc_in = C2 * w_ap * h_ap
    w3 = uni(keys[4], (fc_in, 1024), fc_in)
    b3 = uni(keys[5], (1, 1024), fc_in)
    w4 = uni(keys[6], (1024, LAST_LAYER_SIZE), 1024)
    b4 = uni(keys[7], (1, LAST_LAYER_SIZE), 1024)
    w5 = uni(keys[8], (LAST_LAYER_SIZE, num_classes), LAST_LAYER_SIZE)
    b5 = uni(keys[9], (1, num_classes), LAST_LAYER_SIZE)
    return dict(w1=w1, b1=b1, w2=w2, b2=b2, w3=w3, b3=b3,
                w4=w4, b4=b4, w5=w5, b5=b5)


def pack_ensemble_params(children, num_classes, width, height,
                         fc_dtype=jnp.float32):
    """Pack per-child params into the stacked / lane-dense Pallas form."""
    S = (width // 16) * (height // 16)
    ncp = _round_up(max(num_classes, 1), LANES)

    # conv1: children concatenated along output channels, zero-padded to 128
    # lanes (zero weight AND zero bias so pad channels stay exactly 0).
    W1 = jnp.concatenate(
        [c["w1"].reshape(C1, KSIZE * KSIZE).T for c in children], axis=1)
    b1 = jnp.concatenate([c["b1"] for c in children], axis=1)
    lane_pad = LANES - W1.shape[1]
    W1 = jnp.pad(W1, ((0, 0), (0, lane_pad)))
    b1 = jnp.pad(b1, ((0, 0), (0, lane_pad)))

    # conv2 (groups=8): per-tap (16, 32) weights with the block-diag group
    # structure; taps leading so the kernel accumulates over shifted views.
    def tap_w2(w2):
        w2r = w2.reshape(C2, 2, KSIZE * KSIZE)           # (o, i, tap)
        wt = jnp.zeros((KSIZE * KSIZE, C1, C2), jnp.float32)
        for g in range(8):
            blk = jnp.transpose(w2r[4 * g:4 * g + 4], (2, 1, 0))   # (tap, 2, 4)
            wt = wt.at[:, 2 * g:2 * g + 2, 4 * g:4 * g + 4].set(blk)
        return wt

    W2 = jnp.stack([tap_w2(c["w2"]) for c in children])             # (nc,25,16,32)
    b2 = jnp.stack([c["b2"] for c in children])                     # (nc,1,32)

    # fc3: rows permuted to spatial-site-major (site, channel) order so the
    # kernel folds the PyTorch NCHW flatten into per-site accumulating matmuls.
    def w3_site_major(w3):
        return w3.reshape(C2, S, -1).transpose(1, 0, 2).reshape(C2 * S, -1)

    W3 = jnp.stack([w3_site_major(c["w3"]) for c in children]).astype(fc_dtype)
    b3 = jnp.stack([c["b3"] for c in children])
    W4 = jnp.stack([c["w4"] for c in children]).astype(fc_dtype)
    b4 = jnp.stack([c["b4"] for c in children])
    pad_cls = ncp - num_classes
    W5 = jnp.stack([jnp.pad(c["w5"], ((0, 0), (0, pad_cls)))
                    for c in children]).astype(fc_dtype)
    b5 = jnp.stack([jnp.pad(c["b5"], ((0, 0), (0, pad_cls))) for c in children])
    return dict(W1=W1, b1=b1, W2=W2, b2=b2, W3=W3, b3=b3,
                W4=W4, b4=b4, W5=W5, b5=b5)


# ----------------------------------------------------------------------------
# Forward pass (2 pallas_calls total for the whole ensemble)
# ----------------------------------------------------------------------------
def ensemble_forward(x, p, num_classes):
    """x: (N, 1, H, W) NCHW. Returns list of per-child logits (N, num_classes)."""
    N, _, H, W = x.shape
    H1, W1 = H // POOL, W // POOL
    wp = W1 + 2 * PAD
    nchild = p["W2"].shape[0]

    # conv1 im2col, pool-window-major (single input channel: NCHW->NHWC is a
    # pure reshape, no transpose copy).
    x_nhwc = x.reshape(N, H, W, 1)
    patches1 = im2col_pool_major(x_nhwc, KSIZE, PAD, POOL)   # (16, N*H1*W1, 25)

    # Kernel A: conv1 + ReLU + 4x4 max-pool for all children, lane-dense out.
    pooled1 = conv_relu_pool_all(patches1, p["W1"], p["b1"])  # (N*H1*W1, 128)

    # Re-arrange the (small) pooled activation for Kernel B: per child,
    # spatially zero-padded, flattened (hp, wp, n)-major with a zero row margin
    # so all conv2 / pool / flatten accesses become static row offsets in VMEM.
    a1 = pooled1[:, :nchild * C1].reshape(N, H1, W1, nchild, C1)
    a1 = a1.transpose(3, 0, 1, 2, 4)                         # (nc, N, H1, W1, 16)
    a1 = jnp.pad(a1, ((0, 0), (0, 0), (PAD, PAD), (PAD, PAD), (0, 0)))
    a1 = a1.transpose(0, 2, 3, 1, 4)                         # (nc, H1+4, Wp, N, 16)
    rows = (H1 + 2 * PAD) * wp * N
    margin = (PAD * wp + PAD) * N
    xflat = a1.reshape(nchild, rows, C1)
    xflat = jnp.pad(xflat, ((0, 0), (margin, margin), (0, 0)))

    # Kernel B: grouped conv2 + ReLU + pool + full FC stack, grid over children.
    logits_pad = ensemble_tail(
        xflat, p["W2"], p["b2"], p["W3"], p["b3"], p["W4"], p["b4"],
        p["W5"], p["b5"], batch=N, h1=H1, w1=W1, margin=margin)
    logits = logits_pad[:, :, :num_classes]
    return [logits[c] for c in range(nchild)]


def avg_proba(logits):
    return sum(jax.nn.sigmoid(li) for li in logits) / len(logits)


def major_vote(logits):
    return sum((li > 0).astype(jnp.float32) for li in logits) / len(logits) > 0.5


# ----------------------------------------------------------------------------
# Pure-JAX reference (correctness check only)
# ----------------------------------------------------------------------------
def cnn_reference(x, p):
    dn = ("NCHW", "OIHW", "NCHW")
    y = lax.conv_general_dilated(x, p["w1"], (1, 1), [(2, 2), (2, 2)],
                                 dimension_numbers=dn)
    y = jnp.maximum(y + p["b1"].reshape(1, C1, 1, 1), 0.0)
    y = lax.reduce_window(y, -jnp.inf, lax.max, (1, 1, 4, 4), (1, 1, 4, 4), "VALID")
    y = lax.conv_general_dilated(y, p["w2"], (1, 1), [(2, 2), (2, 2)],
                                 dimension_numbers=dn, feature_group_count=8)
    y = jnp.maximum(y + p["b2"].reshape(1, C2, 1, 1), 0.0)
    y = lax.reduce_window(y, -jnp.inf, lax.max, (1, 1, 4, 4), (1, 1, 4, 4), "VALID")
    y = y.reshape(y.shape[0], -1)
    y = jnp.maximum(y @ p["w3"] + p["b3"], 0.0)
    y = jnp.maximum(y @ p["w4"] + p["b4"], 0.0)
    return y @ p["w5"] + p["b5"]


if __name__ == "__main__":
    num_classes, width, height, num_children = 3, 16, 16, 5
    key = jax.random.PRNGKey(0)
    xkey, pkey = jax.random.split(key)
    x = jax.random.normal(xkey, (2, 1, height, width), jnp.float32)

    children = [
        init_child_params(jax.random.fold_in(pkey, i), num_classes, width, height)
        for i in range(num_children)
    ]

    fwd = jax.jit(functools.partial(ensemble_forward, num_classes=num_classes))

    # f32 weights: matches the f32 PyTorch module; validated per child.
    packed_f32 = pack_ensemble_params(children, num_classes, width, height)
    logits = [jax.block_until_ready(li) for li in fwd(x, packed_f32)]
    for child, li in zip(children, logits):
        ref = cnn_reference(x, child)
        err = float(jnp.max(jnp.abs(li - ref)))
        assert jnp.allclose(li, ref, atol=5e-4, rtol=5e-4), f"max abs err {err}"

    # bf16 FC weights: halves HBM traffic on the weight-streaming-bound tail;
    # loose-tolerance check against the f32 kernel result.
    packed_bf16 = pack_ensemble_params(children, num_classes, width, height,
                                       fc_dtype=jnp.bfloat16)
    logits_bf16 = [jax.block_until_ready(li) for li in fwd(x, packed_bf16)]
    for lf, lb in zip(logits, logits_bf16):
        assert bool(jnp.all(jnp.isfinite(lb)))
        assert float(jnp.max(jnp.abs(lf - lb))) < 0.1

    # exercise ensemble aggregation helpers (plain JAX glue)
    _ = jax.block_until_ready(avg_proba(logits))
    _ = jax.block_until_ready(major_vote(logits))

    print("KERNEL_OK")
</pallas_src>

<mosaic_0001>
module attributes {stable_mosaic.version = 11 : i64} {
  func.func @_conv_relu_pool_kernel(%arg0: i32, %arg1: memref<16x32x25xf32, #tpu.memory_space<vmem>>, %arg2: memref<25x128xf32, #tpu.memory_space<vmem>>, %arg3: memref<1x128xf32, #tpu.memory_space<vmem>>, %arg4: memref<32x128xf32, #tpu.memory_space<vmem>>) attributes {dimension_semantics = [#tpu.dimension_semantics<parallel>], iteration_bounds = array<i64: 1>, scalar_prefetch = 0 : i64, scratch_operands = 0 : i64, tpu.core_type = #tpu.core_type<tc>, window_params = [{transform_indices = @transform_0, window_bounds = array<i64: 16, 32, 25>}, {pipeline_mode = #tpu.pipeline_mode<synchronous>, transform_indices = @transform_1, window_bounds = array<i64: 25, 128>}, {pipeline_mode = #tpu.pipeline_mode<synchronous>, transform_indices = @transform_2, window_bounds = array<i64: 1, 128>}, {transform_indices = @transform_3, window_bounds = array<i64: 32, 128>}]} {
    %c0 = arith.constant 0 : index
    %c0_0 = arith.constant 0 : index
    %0 = vector.load %arg2[%c0, %c0_0] : memref<25x128xf32, #tpu.memory_space<vmem>>, vector<25x128xf32>
    %c0_1 = arith.constant 0 : index
    %c0_2 = arith.constant 0 : index
    %c0_3 = arith.constant 0 : index
    %1 = vector.load %arg1[%c0_1, %c0_2, %c0_3] : memref<16x32x25xf32, #tpu.memory_space<vmem>>, vector<1x32x25xf32>
    %2 = vector.shape_cast %1 : vector<1x32x25xf32> to vector<32x25xf32>
    %cst = arith.constant dense<0.000000e+00> : vector<32x128xf32>
    %3 = tpu.matmul %2, %0, %cst {dimension_numbers = #tpu.dot_dimension_numbers<[1], [0], [0], [1], [0, 0, 1, 1], [], []>} : vector<32x25xf32>, vector<25x128xf32>, vector<32x128xf32> -> vector<32x128xf32>
    %c1 = arith.constant 1 : index
    %c0_4 = arith.constant 0 : index
    %c0_5 = arith.constant 0 : index
    %4 = vector.load %arg1[%c1, %c0_4, %c0_5] : memref<16x32x25xf32, #tpu.memory_space<vmem>>, vector<1x32x25xf32>
    %5 = vector.shape_cast %4 : vector<1x32x25xf32> to vector<32x25xf32>
    %cst_6 = arith.constant dense<0.000000e+00> : vector<32x128xf32>
    %6 = tpu.matmul %5, %0, %cst_6 {dimension_numbers = #tpu.dot_dimension_numbers<[1], [0], [0], [1], [0, 0, 1, 1], [], []>} : vector<32x25xf32>, vector<25x128xf32>, vector<32x128xf32> -> vector<32x128xf32>
    %7 = arith.maximumf %3, %6 : vector<32x128xf32>
    %c2 = arith.constant 2 : index
    %c0_7 = arith.constant 0 : index
    %c0_8 = arith.constant 0 : index
    %8 = vector.load %arg1[%c2, %c0_7, %c0_8] : memref<16x32x25xf32, #tpu.memory_space<vmem>>, vector<1x32x25xf32>
    %9 = vector.shape_cast %8 : vector<1x32x25xf32> to vector<32x25xf32>
    %cst_9 = arith.constant dense<0.000000e+00> : vector<32x128xf32>
    %10 = tpu.matmul %9, %0, %cst_9 {dimension_numbers = #tpu.dot_dimension_numbers<[1], [0], [0], [1], [0, 0, 1, 1], [], []>} : vector<32x25xf32>, vector<25x128xf32>, vector<32x128xf32> -> vector<32x128xf32>
    %11 = arith.maximumf %7, %10 : vector<32x128xf32>
    %c3 = arith.constant 3 : index
    %c0_10 = arith.constant 0 : index
    %c0_11 = arith.constant 0 : index
    %12 = vector.load %arg1[%c3, %c0_10, %c0_11] : memref<16x32x25xf32, #tpu.memory_space<vmem>>, vector<1x32x25xf32>
    %13 = vector.shape_cast %12 : vector<1x32x25xf32> to vector<32x25xf32>
    %cst_12 = arith.constant dense<0.000000e+00> : vector<32x128xf32>
    %14 = tpu.matmul %13, %0, %cst_12 {dimension_numbers = #tpu.dot_dimension_numbers<[1], [0], [0], [1], [0, 0, 1, 1], [], []>} : vector<32x25xf32>, vector<25x128xf32>, vector<32x128xf32> -> vector<32x128xf32>
    %15 = arith.maximumf %11, %14 : vector<32x128xf32>
    %c4 = arith.constant 4 : index
    %c0_13 = arith.constant 0 : index
    %c0_14 = arith.constant 0 : index
    %16 = vector.load %arg1[%c4, %c0_13, %c0_14] : memref<16x32x25xf32, #tpu.memory_space<vmem>>, vector<1x32x25xf32>
    %17 = vector.shape_cast %16 : vector<1x32x25xf32> to vector<32x25xf32>
    %cst_15 = arith.constant dense<0.000000e+00> : vector<32x128xf32>
    %18 = tpu.matmul %17, %0, %cst_15 {dimension_numbers = #tpu.dot_dimension_numbers<[1], [0], [0], [1], [0, 0, 1, 1], [], []>} : vector<32x25xf32>, vector<25x128xf32>, vector<32x128xf32> -> vector<32x128xf32>
    %19 = arith.maximumf %15, %18 : vector<32x128xf32>
    %c5 = arith.constant 5 : index
    %c0_16 = arith.constant 0 : index
    %c0_17 = arith.constant 0 : index
    %20 = vector.load %arg1[%c5, %c0_16, %c0_17] : memref<16x32x25xf32, #tpu.memory_space<vmem>>, vector<1x32x25xf32>
    %21 = vector.shape_cast %20 : vector<1x32x25xf32> to vector<32x25xf32>
    %cst_18 = arith.constant dense<0.000000e+00> : vector<32x128xf32>
    %22 = tpu.matmul %21, %0, %cst_18 {dimension_numbers = #tpu.dot_dimension_numbers<[1], [0], [0], [1], [0, 0, 1, 1], [], []>} : vector<32x25xf32>, vector<25x128xf32>, vector<32x128xf32> -> vector<32x128xf32>
    %23 = arith.maximumf %19, %22 : vector<32x128xf32>
    %c6 = arith.constant 6 : index
    %c0_19 = arith.constant 0 : index
    %c0_20 = arith.constant 0 : index
    %24 = vector.load %arg1[%c6, %c0_19, %c0_20] : memref<16x32x25xf32, #tpu.memory_space<vmem>>, vector<1x32x25xf32>
    %25 = vector.shape_cast %24 : vector<1x32x25xf32> to vector<32x25xf32>
    %cst_21 = arith.constant dense<0.000000e+00> : vector<32x128xf32>
    %26 = tpu.matmul %25, %0, %cst_21 {dimension_numbers = #tpu.dot_dimension_numbers<[1], [0], [0], [1], [0, 0, 1, 1], [], []>} : vector<32x25xf32>, vector<25x128xf32>, vector<32x128xf32> -> vector<32x128xf32>
    %27 = arith.maximumf %23, %26 : vector<32x128xf32>
    %c7 = arith.constant 7 : index
    %c0_22 = arith.constant 0 : index
    %c0_23 = arith.constant 0 : index
    %28 = vector.load %arg1[%c7, %c0_22, %c0_23] : memref<16x32x25xf32, #tpu.memory_space<vmem>>, vector<1x32x25xf32>
    %29 = vector.shape_cast %28 : vector<1x32x25xf32> to vector<32x25xf32>
    %cst_24 = arith.constant dense<0.000000e+00> : vector<32x128xf32>
    %30 = tpu.matmul %29, %0, %cst_24 {dimension_numbers = #tpu.dot_dimension_numbers<[1], [0], [0], [1], [0, 0, 1, 1], [], []>} : vector<32x25xf32>, vector<25x128xf32>, vector<32x128xf32> -> vector<32x128xf32>
    %31 = arith.maximumf %27, %30 : vector<32x128xf32>
    %c8 = arith.constant 8 : index
    %c0_25 = arith.constant 0 : index
    %c0_26 = arith.constant 0 : index
    %32 = vector.load %arg1[%c8, %c0_25, %c0_26] : memref<16x32x25xf32, #tpu.memory_space<vmem>>, vector<1x32x25xf32>
    %33 = vector.shape_cast %32 : vector<1x32x25xf32> to vector<32x25xf32>
    %cst_27 = arith.constant dense<0.000000e+00> : vector<32x128xf32>
    %34 = tpu.matmul %33, %0, %cst_27 {dimension_numbers = #tpu.dot_dimension_numbers<[1], [0], [0], [1], [0, 0, 1, 1], [], []>} : vector<32x25xf32>, vector<25x128xf32>, vector<32x128xf32> -> vector<32x128xf32>
    %35 = arith.maximumf %31, %34 : vector<32x128xf32>
    %c9 = arith.constant 9 : index
    %c0_28 = arith.constant 0 : index
    %c0_29 = arith.constant 0 : index
    %36 = vector.load %arg1[%c9, %c0_28, %c0_29] : memref<16x32x25xf32, #tpu.memory_space<vmem>>, vector<1x32x25xf32>
    %37 = vector.shape_cast %36 : vector<1x32x25xf32> to vector<32x25xf32>
    %cst_30 = arith.constant dense<0.000000e+00> : vector<32x128xf32>
    %38 = tpu.matmul %37, %0, %cst_30 {dimension_numbers = #tpu.dot_dimension_numbers<[1], [0], [0], [1], [0, 0, 1, 1], [], []>} : vector<32x25xf32>, vector<25x128xf32>, vector<32x128xf32> -> vector<32x128xf32>
    %39 = arith.maximumf %35, %38 : vector<32x128xf32>
    %c10 = arith.constant 10 : index
    %c0_31 = arith.constant 0 : index
    %c0_32 = arith.constant 0 : index
    %40 = vector.load %arg1[%c10, %c0_31, %c0_32] : memref<16x32x25xf32, #tpu.memory_space<vmem>>, vector<1x32x25xf32>
    %41 = vector.shape_cast %40 : vector<1x32x25xf32> to vector<32x25xf32>
    %cst_33 = arith.constant dense<0.000000e+00> : vector<32x128xf32>
    %42 = tpu.matmul %41, %0, %cst_33 {dimension_numbers = #tpu.dot_dimension_numbers<[1], [0], [0], [1], [0, 0, 1, 1], [], []>} : vector<32x25xf32>, vector<25x128xf32>, vector<32x128xf32> -> vector<32x128xf32>
    %43 = arith.maximumf %39, %42 : vector<32x128xf32>
    %c11 = arith.constant 11 : index
    %c0_34 = arith.constant 0 : index
    %c0_35 = arith.constant 0 : index
    %44 = vector.load %arg1[%c11, %c0_34, %c0_35] : memref<16x32x25xf32, #tpu.memory_space<vmem>>, vector<1x32x25xf32>
    %45 = vector.shape_cast %44 : vector<1x32x25xf32> to vector<32x25xf32>
    %cst_36 = arith.constant dense<0.000000e+00> : vector<32x128xf32>
    %46 = tpu.matmul %45, %0, %cst_36 {dimension_numbers = #tpu.dot_dimension_numbers<[1], [0], [0], [1], [0, 0, 1, 1], [], []>} : vector<32x25xf32>, vector<25x128xf32>, vector<32x128xf32> -> vector<32x128xf32>
    %47 = arith.maximumf %43, %46 : vector<32x128xf32>
    %c12 = arith.constant 12 : index
    %c0_37 = arith.constant 0 : index
    %c0_38 = arith.constant 0 : index
    %48 = vector.load %arg1[%c12, %c0_37, %c0_38] : memref<16x32x25xf32, #tpu.memory_space<vmem>>, vector<1x32x25xf32>
    %49 = vector.shape_cast %48 : vector<1x32x25xf32> to vector<32x25xf32>
    %cst_39 = arith.constant dense<0.000000e+00> : vector<32x128xf32>
    %50 = tpu.matmul %49, %0, %cst_39 {dimension_numbers = #tpu.dot_dimension_numbers<[1], [0], [0], [1], [0, 0, 1, 1], [], []>} : vector<32x25xf32>, vector<25x128xf32>, vector<32x128xf32> -> vector<32x128xf32>
    %51 = arith.maximumf %47, %50 : vector<32x128xf32>
    %c13 = arith.constant 13 : index
    %c0_40 = arith.constant 0 : index
    %c0_41 = arith.constant 0 : index
    %52 = vector.load %arg1[%c13, %c0_40, %c0_41] : memref<16x32x25xf32, #tpu.memory_space<vmem>>, vector<1x32x25xf32>
    %53 = vector.shape_cast %52 : vector<1x32x25xf32> to vector<32x25xf32>
    %cst_42 = arith.constant dense<0.000000e+00> : vector<32x128xf32>
    %54 = tpu.matmul %53, %0, %cst_42 {dimension_numbers = #tpu.dot_dimension_numbers<[1], [0], [0], [1], [0, 0, 1, 1], [], []>} : vector<32x25xf32>, vector<25x128xf32>, vector<32x128xf32> -> vector<32x128xf32>
    %55 = arith.maximumf %51, %54 : vector<32x128xf32>
    %c14 = arith.constant 14 : index
    %c0_43 = arith.constant 0 : index
    %c0_44 = arith.constant 0 : index
    %56 = vector.load %arg1[%c14, %c0_43, %c0_44] : memref<16x32x25xf32, #tpu.memory_space<vmem>>, vector<1x32x25xf32>
    %57 = vector.shape_cast %56 : vector<1x32x25xf32> to vector<32x25xf32>
    %cst_45 = arith.constant dense<0.000000e+00> : vector<32x128xf32>
    %58 = tpu.matmul %57, %0, %cst_45 {dimension_numbers = #tpu.dot_dimension_numbers<[1], [0], [0], [1], [0, 0, 1, 1], [], []>} : vector<32x25xf32>, vector<25x128xf32>, vector<32x128xf32> -> vector<32x128xf32>
    %59 = arith.maximumf %55, %58 : vector<32x128xf32>
    %c15 = arith.constant 15 : index
    %c0_46 = arith.constant 0 : index
    %c0_47 = arith.constant 0 : index
    %60 = vector.load %arg1[%c15, %c0_46, %c0_47] : memref<16x32x25xf32, #tpu.memory_space<vmem>>, vector<1x32x25xf32>
    %61 = vector.shape_cast %60 : vector<1x32x25xf32> to vector<32x25xf32>
    %cst_48 = arith.constant dense<0.000000e+00> : vector<32x128xf32>
    %62 = tpu.matmul %61, %0, %cst_48 {dimension_numbers = #tpu.dot_dimension_numbers<[1], [0], [0], [1], [0, 0, 1, 1], [], []>} : vector<32x25xf32>, vector<25x128xf32>, vector<32x128xf32> -> vector<32x128xf32>
    %63 = arith.maximumf %59, %62 : vector<32x128xf32>
    %c0_49 = arith.constant 0 : index
    %c0_50 = arith.constant 0 : index
    %64 = vector.load %arg3[%c0_49, %c0_50] : memref<1x128xf32, #tpu.memory_space<vmem>>, vector<1x128xf32>
    %65 = vector.broadcast %64 : vector<1x128xf32> to vector<32x128xf32>
    %66 = arith.addf %63, %65 : vector<32x128xf32>
    %cst_51 = arith.constant 0.000000e+00 : f32
    %67 = vector.broadcast %cst_51 : f32 to vector<32x128xf32>
    %68 = arith.maximumf %66, %67 : vector<32x128xf32>
    %c0_52 = arith.constant 0 : index
    %c0_53 = arith.constant 0 : index
    %69 = vector.load %arg4[%c0_52, %c0_53] : memref<32x128xf32, #tpu.memory_space<vmem>>, vector<32x128xf32>
    tpu.vector_store %arg4[%c0_52, %c0_53], %68 {strides = array<i32>} : memref<32x128xf32, #tpu.memory_space<vmem>>, vector<32x128xf32>,
    return
  }
  func.func @transform_0(%arg0: i32) -> (i32, i32, i32) {
    %c0_i32 = arith.constant 0 : i32
    %c0_i32_0 = arith.constant 0 : i32
    %c0_i32_1 = arith.constant 0 : i32
    return %c0_i32, %arg0, %c0_i32_0 : i32, i32, i32
  }
  func.func @transform_1(%arg0: i32) -> (i32, i32) {
    %c0_i32 = arith.constant 0 : i32
    %c0_i32_0 = arith.constant 0 : i32
    %c0_i32_1 = arith.constant 0 : i32
    return %c0_i32, %c0_i32_0 : i32, i32
  }
  func.func @transform_2(%arg0: i32) -> (i32, i32) {
    %c0_i32 = arith.constant 0 : i32
    %c0_i32_0 = arith.constant 0 : i32
    %c0_i32_1 = arith.constant 0 : i32
    return %c0_i32, %c0_i32_0 : i32, i32
  }
  func.func @transform_3(%arg0: i32) -> (i32, i32) {
    %c0_i32 = arith.constant 0 : i32
    %c0_i32_0 = arith.constant 0 : i32
    return %arg0, %c0_i32 : i32, i32
  }
}

module attributes {stable_mosaic.version = 11 : i64} {
  func.func @_child_tail_kernel(%arg0: i32, %arg1: memref<1x200x16xf32, #tpu.memory_space<vmem>>, %arg2: memref<1x25x16x32xf32, #tpu.memory_space<vmem>>, %arg3: memref<1x1x32xf32, #tpu.memory_space<vmem>>, %arg4: memref<1x32x1024xf32, #tpu.memory_space<vmem>>, %arg5: memref<1x1x1024xf32, #tpu.memory_space<vmem>>, %arg6: memref<1x1024x512xf32, #tpu.memory_space<vmem>>, %arg7: memref<1x1x512xf32, #tpu.memory_space<vmem>>, %arg8: memref<1x512x128xf32, #tpu.memory_space<vmem>>, %arg9: memref<1x1x128xf32, #tpu.memory_space<vmem>>, %arg10: memref<1x2x128xf32, #tpu.memory_space<vmem>>, %arg11: memref<182x32xf32, #tpu.memory_space<vmem>>, %arg12: memref<128x32xf32, #tpu.memory_space<vmem>>) attributes {dimension_semantics = [#tpu.dimension_semantics<parallel>], iteration_bounds = array<i64: 5>, scalar_prefetch = 0 : i64, scratch_operands = 2 : i64, tpu.core_type = #tpu.core_type<tc>, window_params = [{transform_indices = @transform_0, window_bounds = array<i64: 1, 200, 16>}, {transform_indices = @transform_1, window_bounds = array<i64: 1, 25, 16, 32>}, {transform_indices = @transform_2, window_bounds = array<i64: 1, 1, 32>}, {transform_indices = @transform_3, window_bounds = array<i64: 1, 32, 1024>}, {transform_indices = @transform_4, window_bounds = array<i64: 1, 1, 1024>}, {transform_indices = @transform_5, window_bounds = array<i64: 1, 1024, 512>}, {transform_indices = @transform_6, window_bounds = array<i64: 1, 1, 512>}, {transform_indices = @transform_7, window_bounds = array<i64: 1, 512, 128>}, {transform_indices = @transform_8, window_bounds = array<i64: 1, 1, 128>}, {transform_indices = @transform_9, window_bounds = array<i64: 1, 2, 128>}]} {
    %c0 = arith.constant 0 : index
    %c0_0 = arith.constant 0 : index
    %c0_1 = arith.constant 0 : index
    %0 = vector.load %arg1[%c0, %c0_0, %c0_1] : memref<1x200x16xf32, #tpu.memory_space<vmem>>, vector<1x128x16xf32>
    %1 = vector.shape_cast %0 : vector<1x128x16xf32> to vector<128x16xf32>
    %c0_2 = arith.constant 0 : index
    %c0_3 = arith.constant 0 : index
    %c0_4 = arith.constant 0 : index
    %c0_5 = arith.constant 0 : index
    %2 = vector.load %arg2[%c0_2, %c0_3, %c0_4, %c0_5] : memref<1x25x16x32xf32, #tpu.memory_space<vmem>>, vector<1x1x16x32xf32>
    %3 = vector.shape_cast %2 : vector<1x1x16x32xf32> to vector<16x32xf32>
    %cst = arith.constant dense<0.000000e+00> : vector<128x32xf32>
    %4 = tpu.matmul %1, %3, %cst {dimension_numbers = #tpu.dot_dimension_numbers<[1], [0], [0], [1], [0, 0, 1, 1], [], []>} : vector<128x16xf32>, vector<16x32xf32>, vector<128x32xf32> -> vector<128x32xf32>
    %c0_6 = arith.constant 0 : index
    %c2 = arith.constant 2 : index
    %c0_7 = arith.constant 0 : index
    %5 = vector.load %arg1[%c0_6, %c2, %c0_7] : memref<1x200x16xf32, #tpu.memory_space<vmem>>, vector<1x128x16xf32>
    %6 = vector.shape_cast %5 : vector<1x128x16xf32> to vector<128x16xf32>
    %c0_8 = arith.constant 0 : index
    %c1 = arith.constant 1 : index
    %c0_9 = arith.constant 0 : index
    %c0_10 = arith.constant 0 : index
    %7 = vector.load %arg2[%c0_8, %c1, %c0_9, %c0_10] : memref<1x25x16x32xf32, #tpu.memory_space<vmem>>, vector<1x1x16x32xf32>
    %8 = vector.shape_cast %7 : vector<1x1x16x32xf32> to vector<16x32xf32>
    %cst_11 = arith.constant dense<0.000000e+00> : vector<128x32xf32>
    %9 = tpu.matmul %6, %8, %cst_11 {dimension_numbers = #tpu.dot_dimension_numbers<[1], [0], [0], [1], [0, 0, 1, 1], [], []>} : vector<128x16xf32>, vector<16x32xf32>, vector<128x32xf32> -> vector<128x32xf32>
    %10 = arith.addf %4, %9 : vector<128x32xf32>
    %c0_12 = arith.constant 0 : index
    %c4 = arith.constant 4 : index
    %c0_13 = arith.constant 0 : index
    %11 = vector.load %arg1[%c0_12, %c4, %c0_13] : memref<1x200x16xf32, #tpu.memory_space<vmem>>, vector<1x128x16xf32>
    %12 = vector.shape_cast %11 : vector<1x128x16xf32> to vector<128x16xf32>
    %c0_14 = arith.constant 0 : index
    %c2_15 = arith.constant 2 : index
    %c0_16 = arith.constant 0 : index
    %c0_17 = arith.constant 0 : index
    %13 = vector.load %arg2[%c0_14, %c2_15, %c0_16, %c0_17] : memref<1x25x16x32xf32, #tpu.memory_space<vmem>>, vector<1x1x16x32xf32>
    %14 = vector.shape_cast %13 : vector<1x1x16x32xf32> to vector<16x32xf32>
    %cst_18 = arith.constant dense<0.000000e+00> : vector<128x32xf32>
    %15 = tpu.matmul %12, %14, %cst_18 {dimension_numbers = #tpu.dot_dimension_numbers<[1], [0], [0], [1], [0, 0, 1, 1], [], []>} : vector<128x16xf32>, vector<16x32xf32>, vector<128x32xf32> -> vector<128x32xf32>
    %16 = arith.addf %10, %15 : vector<128x32xf32>
    %c0_19 = arith.constant 0 : index
    %c6 = arith.constant 6 : index
    %c0_20 = arith.constant 0 : index
    %17 = vector.load %arg1[%c0_19, %c6, %c0_20] : memref<1x200x16xf32, #tpu.memory_space<vmem>>, vector<1x128x16xf32>
    %18 = vector.shape_cast %17 : vector<1x128x16xf32> to vector<128x16xf32>
    %c0_21 = arith.constant 0 : index
    %c3 = arith.constant 3 : index
    %c0_22 = arith.constant 0 : index
    %c0_23 = arith.constant 0 : index
    %19 = vector.load %arg2[%c0_21, %c3, %c0_22, %c0_23] : memref<1x25x16x32xf32, #tpu.memory_space<vmem>>, vector<1x1x16x32xf32>
    %20 = vector.shape_cast %19 : vector<1x1x16x32xf32> to vector<16x32xf32>
    %cst_24 = arith.constant dense<0.000000e+00> : vector<128x32xf32>
    %21 = tpu.matmul %18, %20, %cst_24 {dimension_numbers = #tpu.dot_dimension_numbers<[1], [0], [0], [1], [0, 0, 1, 1], [], []>} : vector<128x16xf32>, vector<16x32xf32>, vector<128x32xf32> -> vector<128x32xf32>
    %22 = arith.addf %16, %21 : vector<128x32xf32>
    %c0_25 = arith.constant 0 : index
    %c8 = arith.constant 8 : index
    %c0_26 = arith.constant 0 : index
    %23 = vector.load %arg1[%c0_25, %c8, %c0_26] : memref<1x200x16xf32, #tpu.memory_space<vmem>>, vector<1x128x16xf32>
    %24 = vector.shape_cast %23 : vector<1x128x16xf32> to vector<128x16xf32>
    %c0_27 = arith.constant 0 : index
    %c4_28 = arith.constant 4 : index
    %c0_29 = arith.constant 0 : index
    %c0_30 = arith.constant 0 : index
    %25 = vector.load %arg2[%c0_27, %c4_28, %c0_29, %c0_30] : memref<1x25x16x32xf32, #tpu.memory_space<vmem>>, vector<1x1x16x32xf32>
    %26 = vector.shape_cast %25 : vector<1x1x16x32xf32> to vector<16x32xf32>
    %cst_31 = arith.constant dense<0.000000e+00> : vector<128x32xf32>
    %27 = tpu.matmul %24, %26, %cst_31 {dimension_numbers = #tpu.dot_dimension_numbers<[1], [0], [0], [1], [0, 0, 1, 1], [], []>} : vector<128x16xf32>, vector<16x32xf32>, vector<128x32xf32> -> vector<128x32xf32>
    %28 = arith.addf %22, %27 : vector<128x32xf32>
    %c0_32 = arith.constant 0 : index
    %c16 = arith.constant 16 : index
    %c0_33 = arith.constant 0 : index
    %29 = vector.load %arg1[%c0_32, %c16, %c0_33] : memref<1x200x16xf32, #tpu.memory_space<vmem>>, vector<1x128x16xf32>
    %30 = vector.shape_cast %29 : vector<1x128x16xf32> to vector<128x16xf32>
    %c0_34 = arith.constant 0 : index
    %c5 = arith.constant 5 : index
    %c0_35 = arith.constant 0 : index
    %c0_36 = arith.constant 0 : index
    %31 = vector.load %arg2[%c0_34, %c5, %c0_35, %c0_36] : memref<1x25x16x32xf32, #tpu.memory_space<vmem>>, vector<1x1x16x32xf32>
    %32 = vector.shape_cast %31 : vector<1x1x16x32xf32> to vector<16x32xf32>
    %cst_37 = arith.constant dense<0.000000e+00> : vector<128x32xf32>
    %33 = tpu.matmul %30, %32, %cst_37 {dimension_numbers = #tpu.dot_dimension_numbers<[1], [0], [0], [1], [0, 0, 1, 1], [], []>} : vector<128x16xf32>, vector<16x32xf32>, vector<128x32xf32> -> vector<128x32xf32>
    %34 = arith.addf %28, %33 : vector<128x32xf32>
    %c0_38 = arith.constant 0 : index
    %c18 = arith.constant 18 : index
    %c0_39 = arith.constant 0 : index
    %35 = vector.load %arg1[%c0_38, %c18, %c0_39] : memref<1x200x16xf32, #tpu.memory_space<vmem>>, vector<1x128x16xf32>
    %36 = vector.shape_cast %35 : vector<1x128x16xf32> to vector<128x16xf32>
    %c0_40 = arith.constant 0 : index
    %c6_41 = arith.constant 6 : index
    %c0_42 = arith.constant 0 : index
    %c0_43 = arith.constant 0 : index
    %37 = vector.load %arg2[%c0_40, %c6_41, %c0_42, %c0_43] : memref<1x25x16x32xf32, #tpu.memory_space<vmem>>, vector<1x1x16x32xf32>
    %38 = vector.shape_cast %37 : vector<1x1x16x32xf32> to vector<16x32xf32>
    %cst_44 = arith.constant dense<0.000000e+00> : vector<128x32xf32>
    %39 = tpu.matmul %36, %38, %cst_44 {dimension_numbers = #tpu.dot_dimension_numbers<[1], [0], [0], [1], [0, 0, 1, 1], [], []>} : vector<128x16xf32>, vector<16x32xf32>, vector<128x32xf32> -> vector<128x32xf32>
    %40 = arith.addf %34, %39 : vector<128x32xf32>
    %c0_45 = arith.constant 0 : index
    %c20 = arith.constant 20 : index
    %c0_46 = arith.constant 0 : index
    %41 = vector.load %arg1[%c0_45, %c20, %c0_46] : memref<1x200x16xf32, #tpu.memory_space<vmem>>, vector<1x128x16xf32>
    %42 = vector.shape_cast %41 : vector<1x128x16xf32> to vector<128x16xf32>
    %c0_47 = arith.constant 0 : index
    %c7 = arith.constant 7 : index
    %c0_48 = arith.constant 0 : index
    %c0_49 = arith.constant 0 : index
    %43 = vector.load %arg2[%c0_47, %c7, %c0_48, %c0_49] : memref<1x25x16x32xf32, #tpu.memory_space<vmem>>, vector<1x1x16x32xf32>
    %44 = vector.shape_cast %43 : vector<1x1x16x32xf32> to vector<16x32xf32>
    %cst_50 = arith.constant dense<0.000000e+00> : vector<128x32xf32>
    %45 = tpu.matmul %42, %44, %cst_50 {dimension_numbers = #tpu.dot_dimension_numbers<[1], [0], [0], [1], [0, 0, 1, 1], [], []>} : vector<128x16xf32>, vector<16x32xf32>, vector<128x32xf32> -> vector<128x32xf32>
    %46 = arith.addf %40, %45 : vector<128x32xf32>
    %c0_51 = arith.constant 0 : index
    %c22 = arith.constant 22 : index
    %c0_52 = arith.constant 0 : index
    %47 = vector.load %arg1[%c0_51, %c22, %c0_52] : memref<1x200x16xf32, #tpu.memory_space<vmem>>, vector<1x128x16xf32>
    %48 = vector.shape_cast %47 : vector<1x128x16xf32> to vector<128x16xf32>
    %c0_53 = arith.constant 0 : index
    %c8_54 = arith.constant 8 : index
    %c0_55 = arith.constant 0 : index
    %c0_56 = arith.constant 0 : index
    %49 = vector.load %arg2[%c0_53, %c8_54, %c0_55, %c0_56] : memref<1x25x16x32xf32, #tpu.memory_space<vmem>>, vector<1x1x16x32xf32>
    %50 = vector.shape_cast %49 : vector<1x1x16x32xf32> to vector<16x32xf32>
    %cst_57 = arith.constant dense<0.000000e+00> : vector<128x32xf32>
    %51 = tpu.matmul %48, %50, %cst_57 {dimension_numbers = #tpu.dot_dimension_numbers<[1], [0], [0], [1], [0, 0, 1, 1], [], []>} : vector<128x16xf32>, vector<16x32xf32>, vector<128x32xf32> -> vector<128x32xf32>
    %52 = arith.addf %46, %51 : vector<128x32xf32>
    %c0_58 = arith.constant 0 : index
    %c24 = arith.constant 24 : index
    %c0_59 = arith.constant 0 : index
    %53 = vector.load %arg1[%c0_58, %c24, %c0_59] : memref<1x200x16xf32, #tpu.memory_space<vmem>>, vector<1x128x16xf32>
    %54 = vector.shape_cast %53 : vector<1x128x16xf32> to vector<128x16xf32>
    %c0_60 = arith.constant 0 : index
    %c9 = arith.constant 9 : index
    %c0_61 = arith.constant 0 : index
    %c0_62 = arith.constant 0 : index
    %55 = vector.load %arg2[%c0_60, %c9, %c0_61, %c0_62] : memref<1x25x16x32xf32, #tpu.memory_space<vmem>>, vector<1x1x16x32xf32>
    %56 = vector.shape_cast %55 : vector<1x1x16x32xf32> to vector<16x32xf32>
    %cst_63 = arith.constant dense<0.000000e+00> : vector<128x32xf32>
    %57 = tpu.matmul %54, %56, %cst_63 {dimension_numbers = #tpu.dot_dimension_numbers<[1], [0], [0], [1], [0, 0, 1, 1], [], []>} : vector<128x16xf32>, vector<16x32xf32>, vector<128x32xf32> -> vector<128x32xf32>
    %58 = arith.addf %52, %57 : vector<128x32xf32>
    %c0_64 = arith.constant 0 : index
    %c32 = arith.constant 32 : index
    %c0_65 = arith.constant 0 : index
    %59 = vector.load %arg1[%c0_64, %c32, %c0_65] : memref<1x200x16xf32, #tpu.memory_space<vmem>>, vector<1x128x16xf32>
    %60 = vector.shape_cast %59 : vector<1x128x16xf32> to vector<128x16xf32>
    %c0_66 = arith.constant 0 : index
    %c10 = arith.constant 10 : index
    %c0_67 = arith.constant 0 : index
    %c0_68 = arith.constant 0 : index
    %61 = vector.load %arg2[%c0_66, %c10, %c0_67, %c0_68] : memref<1x25x16x32xf32, #tpu.memory_space<vmem>>, vector<1x1x16x32xf32>
    %62 = vector.shape_cast %61 : vector<1x1x16x32xf32> to vector<16x32xf32>
    %cst_69 = arith.constant dense<0.000000e+00> : vector<128x32xf32>
    %63 = tpu.matmul %60, %62, %cst_69 {dimension_numbers = #tpu.dot_dimension_numbers<[1], [0], [0], [1], [0, 0, 1, 1], [], []>} : vector<128x16xf32>, vector<16x32xf32>, vector<128x32xf32> -> vector<128x32xf32>
    %64 = arith.addf %58, %63 : vector<128x32xf32>
    %c0_70 = arith.constant 0 : index
    %c34 = arith.constant 34 : index
    %c0_71 = arith.constant 0 : index
    %65 = vector.load %arg1[%c0_70, %c34, %c0_71] : memref<1x200x16xf32, #tpu.memory_space<vmem>>, vector<1x128x16xf32>
    %66 = vector.shape_cast %65 : vector<1x128x16xf32> to vector<128x16xf32>
    %c0_72 = arith.constant 0 : index
    %c11 = arith.constant 11 : index
    %c0_73 = arith.constant 0 : index
    %c0_74 = arith.constant 0 : index
    %67 = vector.load %arg2[%c0_72, %c11, %c0_73, %c0_74] : memref<1x25x16x32xf32, #tpu.memory_space<vmem>>, vector<1x1x16x32xf32>
    %68 = vector.shape_cast %67 : vector<1x1x16x32xf32> to vector<16x32xf32>
    %cst_75 = arith.constant dense<0.000000e+00> : vector<128x32xf32>
    %69 = tpu.matmul %66, %68, %cst_75 {dimension_numbers = #tpu.dot_dimension_numbers<[1], [0], [0], [1], [0, 0, 1, 1], [], []>} : vector<128x16xf32>, vector<16x32xf32>, vector<128x32xf32> -> vector<128x32xf32>
    %70 = arith.addf %64, %69 : vector<128x32xf32>
    %c0_76 = arith.constant 0 : index
    %c36 = arith.constant 36 : index
    %c0_77 = arith.constant 0 : index
    %71 = vector.load %arg1[%c0_76, %c36, %c0_77] : memref<1x200x16xf32, #tpu.memory_space<vmem>>, vector<1x128x16xf32>
    %72 = vector.shape_cast %71 : vector<1x128x16xf32> to vector<128x16xf32>
    %c0_78 = arith.constant 0 : index
    %c12 = arith.constant 12 : index
    %c0_79 = arith.constant 0 : index
    %c0_80 = arith.constant 0 : index
    %73 = vector.load %arg2[%c0_78, %c12, %c0_79, %c0_80] : memref<1x25x16x32xf32, #tpu.memory_space<vmem>>, vector<1x1x16x32xf32>
    %74 = vector.shape_cast %73 : vector<1x1x16x32xf32> to vector<16x32xf32>
    %cst_81 = arith.constant dense<0.000000e+00> : vector<128x32xf32>
    %75 = tpu.matmul %72, %74, %cst_81 {dimension_numbers = #tpu.dot_dimension_numbers<[1], [0], [0], [1], [0, 0, 1, 1], [], []>} : vector<128x16xf32>, vector<16x32xf32>, vector<128x32xf32> -> vector<128x32xf32>
    %76 = arith.addf %70, %75 : vector<128x32xf32>
    %c0_82 = arith.constant 0 : index
    %c38 = arith.constant 38 : index
    %c0_83 = arith.constant 0 : index
    %77 = vector.load %arg1[%c0_82, %c38, %c0_83] : memref<1x200x16xf32, #tpu.memory_space<vmem>>, vector<1x128x16xf32>
    %78 = vector.shape_cast %77 : vector<1x128x16xf32> to vector<128x16xf32>
    %c0_84 = arith.constant 0 : index
    %c13 = arith.constant 13 : index
    %c0_85 = arith.constant 0 : index
    %c0_86 = arith.constant 0 : index
    %79 = vector.load %arg2[%c0_84, %c13, %c0_85, %c0_86] : memref<1x25x16x32xf32, #tpu.memory_space<vmem>>, vector<1x1x16x32xf32>
    %80 = vector.shape_cast %79 : vector<1x1x16x32xf32> to vector<16x32xf32>
    %cst_87 = arith.constant dense<0.000000e+00> : vector<128x32xf32>
    %81 = tpu.matmul %78, %80, %cst_87 {dimension_numbers = #tpu.dot_dimension_numbers<[1], [0], [0], [1], [0, 0, 1, 1], [], []>} : vector<128x16xf32>, vector<16x32xf32>, vector<128x32xf32> -> vector<128x32xf32>
    %82 = arith.addf %76, %81 : vector<128x32xf32>
    %c0_88 = arith.constant 0 : index
    %c40 = arith.constant 40 : index
    %c0_89 = arith.constant 0 : index
    %83 = vector.load %arg1[%c0_88, %c40, %c0_89] : memref<1x200x16xf32, #tpu.memory_space<vmem>>, vector<1x128x16xf32>
    %84 = vector.shape_cast %83 : vector<1x128x16xf32> to vector<128x16xf32>
    %c0_90 = arith.constant 0 : index
    %c14 = arith.constant 14 : index
    %c0_91 = arith.constant 0 : index
    %c0_92 = arith.constant 0 : index
    %85 = vector.load %arg2[%c0_90, %c14, %c0_91, %c0_92] : memref<1x25x16x32xf32, #tpu.memory_space<vmem>>, vector<1x1x16x32xf32>
    %86 = vector.shape_cast %85 : vector<1x1x16x32xf32> to vector<16x32xf32>
    %cst_93 = arith.constant dense<0.000000e+00> : vector<128x32xf32>
    %87 = tpu.matmul %84, %86, %cst_93 {dimension_numbers = #tpu.dot_dimension_numbers<[1], [0], [0], [1], [0, 0, 1, 1], [], []>} : vector<128x16xf32>, vector<16x32xf32>, vector<128x32xf32> -> vector<128x32xf32>
    %88 = arith.addf %82, %87 : vector<128x32xf32>
    %c0_94 = arith.constant 0 : index
    %c48 = arith.constant 48 : index
    %c0_95 = arith.constant 0 : index
    %89 = vector.load %arg1[%c0_94, %c48, %c0_95] : memref<1x200x16xf32, #tpu.memory_space<vmem>>, vector<1x128x16xf32>
    %90 = vector.shape_cast %89 : vector<1x128x16xf32> to vector<128x16xf32>
    %c0_96 = arith.constant 0 : index
    %c15 = arith.constant 15 : index
    %c0_97 = arith.constant 0 : index
    %c0_98 = arith.constant 0 : index
    %91 = vector.load %arg2[%c0_96, %c15, %c0_97, %c0_98] : memref<1x25x16x32xf32, #tpu.memory_space<vmem>>, vector<1x1x16x32xf32>
    %92 = vector.shape_cast %91 : vector<1x1x16x32xf32> to vector<16x32xf32>
    %cst_99 = arith.constant dense<0.000000e+00> : vector<128x32xf32>
    %93 = tpu.matmul %90, %92, %cst_99 {dimension_numbers = #tpu.dot_dimension_numbers<[1], [0], [0], [1], [0, 0, 1, 1], [], []>} : vector<128x16xf32>, vector<16x32xf32>, vector<128x32xf32> -> vector<128x32xf32>
    %94 = arith.addf %88, %93 : vector<128x32xf32>
    %c0_100 = arith.constant 0 : index
    %c50 = arith.constant 50 : index
    %c0_101 = arith.constant 0 : index
    %95 = vector.load %arg1[%c0_100, %c50, %c0_101] : memref<1x200x16xf32, #tpu.memory_space<vmem>>, vector<1x128x16xf32>
    %96 = vector.shape_cast %95 : vector<1x128x16xf32> to vector<128x16xf32>
    %c0_102 = arith.constant 0 : index
    %c16_103 = arith.constant 16 : index
    %c0_104 = arith.constant 0 : index
    %c0_105 = arith.constant 0 : index
    %97 = vector.load %arg2[%c0_102, %c16_103, %c0_104, %c0_105] : memref<1x25x16x32xf32, #tpu.memory_space<vmem>>, vector<1x1x16x32xf32>
    %98 = vector.shape_cast %97 : vector<1x1x16x32xf32> to vector<16x32xf32>
    %cst_106 = arith.constant dense<0.000000e+00> : vector<128x32xf32>
    %99 = tpu.matmul %96, %98, %cst_106 {dimension_numbers = #tpu.dot_dimension_numbers<[1], [0], [0], [1], [0, 0, 1, 1], [], []>} : vector<128x16xf32>, vector<16x32xf32>, vector<128x32xf32> -> vector<128x32xf32>
    %100 = arith.addf %94, %99 : vector<128x32xf32>
    %c0_107 = arith.constant 0 : index
    %c52 = arith.constant 52 : index
    %c0_108 = arith.constant 0 : index
    %101 = vector.load %arg1[%c0_107, %c52, %c0_108] : memref<1x200x16xf32, #tpu.memory_space<vmem>>, vector<1x128x16xf32>
    %102 = vector.shape_cast %101 : vector<1x128x16xf32> to vector<128x16xf32>
    %c0_109 = arith.constant 0 : index
    %c17 = arith.constant 17 : index
    %c0_110 = arith.constant 0 : index
    %c0_111 = arith.constant 0 : index
    %103 = vector.load %arg2[%c0_109, %c17, %c0_110, %c0_111] : memref<1x25x16x32xf32, #tpu.memory_space<vmem>>, vector<1x1x16x32xf32>
    %104 = vector.shape_cast %103 : vector<1x1x16x32xf32> to vector<16x32xf32>
    %cst_112 = arith.constant dense<0.000000e+00> : vector<128x32xf32>
    %105 = tpu.matmul %102, %104, %cst_112 {dimension_numbers = #tpu.dot_dimension_numbers<[1], [0], [0], [1], [0, 0, 1, 1], [], []>} : vector<128x16xf32>, vector<16x32xf32>, vector<128x32xf32> -> vector<128x32xf32>
    %106 = arith.addf %100, %105 : vector<128x32xf32>
    %c0_113 = arith.constant 0 : index
    %c54 = arith.constant 54 : index
    %c0_114 = arith.constant 0 : index
    %107 = vector.load %arg1[%c0_113, %c54, %c0_114] : memref<1x200x16xf32, #tpu.memory_space<vmem>>, vector<1x128x16xf32>
    %108 = vector.shape_cast %107 : vector<1x128x16xf32> to vector<128x16xf32>
    %c0_115 = arith.constant 0 : index
    %c18_116 = arith.constant 18 : index
    %c0_117 = arith.constant 0 : index
    %c0_118 = arith.constant 0 : index
    %109 = vector.load %arg2[%c0_115, %c18_116, %c0_117, %c0_118] : memref<1x25x16x32xf32, #tpu.memory_space<vmem>>, vector<1x1x16x32xf32>
    %110 = vector.shape_cast %109 : vector<1x1x16x32xf32> to vector<16x32xf32>
    %cst_119 = arith.constant dense<0.000000e+00> : vector<128x32xf32>
    %111 = tpu.matmul %108, %110, %cst_119 {dimension_numbers = #tpu.dot_dimension_numbers<[1], [0], [0], [1], [0, 0, 1, 1], [], []>} : vector<128x16xf32>, vector<16x32xf32>, vector<128x32xf32> -> vector<128x32xf32>
    %112 = arith.addf %106, %111 : vector<128x32xf32>
    %c0_120 = arith.constant 0 : index
    %c56 = arith.constant 56 : index
    %c0_121 = arith.constant 0 : index
    %113 = vector.load %arg1[%c0_120, %c56, %c0_121] : memref<1x200x16xf32, #tpu.memory_space<vmem>>, vector<1x128x16xf32>
    %114 = vector.shape_cast %113 : vector<1x128x16xf32> to vector<128x16xf32>
    %c0_122 = arith.constant 0 : index
    %c19 = arith.constant 19 : index
    %c0_123 = arith.constant 0 : index
    %c0_124 = arith.constant 0 : index
    %115 = vector.load %arg2[%c0_122, %c19, %c0_123, %c0_124] : memref<1x25x16x32xf32, #tpu.memory_space<vmem>>, vector<1x1x16x32xf32>
    %116 = vector.shape_cast %115 : vector<1x1x16x32xf32> to vector<16x32xf32>
    %cst_125 = arith.constant dense<0.000000e+00> : vector<128x32xf32>
    %117 = tpu.matmul %114, %116, %cst_125 {dimension_numbers = #tpu.dot_dimension_numbers<[1], [0], [0], [1], [0, 0, 1, 1], [], []>} : vector<128x16xf32>, vector<16x32xf32>, vector<128x32xf32> -> vector<128x32xf32>
    %118 = arith.addf %112, %117 : vector<128x32xf32>
    %c0_126 = arith.constant 0 : index
    %c64 = arith.constant 64 : index
    %c0_127 = arith.constant 0 : index
    %119 = vector.load %arg1[%c0_126, %c64, %c0_127] : memref<1x200x16xf32, #tpu.memory_space<vmem>>, vector<1x128x16xf32>
    %120 = vector.shape_cast %119 : vector<1x128x16xf32> to vector<128x16xf32>
    %c0_128 = arith.constant 0 : index
    %c20_129 = arith.constant 20 : index
    %c0_130 = arith.constant 0 : index
    %c0_131 = arith.constant 0 : index
    %121 = vector.load %arg2[%c0_128, %c20_129, %c0_130, %c0_131] : memref<1x25x16x32xf32, #tpu.memory_space<vmem>>, vector<1x1x16x32xf32>
    %122 = vector.shape_cast %121 : vector<1x1x16x32xf32> to vector<16x32xf32>
    %cst_132 = arith.constant dense<0.000000e+00> : vector<128x32xf32>
    %123 = tpu.matmul %120, %122, %cst_132 {dimension_numbers = #tpu.dot_dimension_numbers<[1], [0], [0], [1], [0, 0, 1, 1], [], []>} : vector<128x16xf32>, vector<16x32xf32>, vector<128x32xf32> -> vector<128x32xf32>
    %124 = arith.addf %118, %123 : vector<128x32xf32>
    %c0_133 = arith.constant 0 : index
    %c66 = arith.constant 66 : index
    %c0_134 = arith.constant 0 : index
    %125 = vector.load %arg1[%c0_133, %c66, %c0_134] : memref<1x200x16xf32, #tpu.memory_space<vmem>>, vector<1x128x16xf32>
    %126 = vector.shape_cast %125 : vector<1x128x16xf32> to vector<128x16xf32>
    %c0_135 = arith.constant 0 : index
    %c21 = arith.constant 21 : index
    %c0_136 = arith.constant 0 : index
    %c0_137 = arith.constant 0 : index
    %127 = vector.load %arg2[%c0_135, %c21, %c0_136, %c0_137] : memref<1x25x16x32xf32, #tpu.memory_space<vmem>>, vector<1x1x16x32xf32>
    %128 = vector.shape_cast %127 : vector<1x1x16x32xf32> to vector<16x32xf32>
    %cst_138 = arith.constant dense<0.000000e+00> : vector<128x32xf32>
    %129 = tpu.matmul %126, %128, %cst_138 {dimension_numbers = #tpu.dot_dimension_numbers<[1], [0], [0], [1], [0, 0, 1, 1], [], []>} : vector<128x16xf32>, vector<16x32xf32>, vector<128x32xf32> -> vector<128x32xf32>
    %130 = arith.addf %124, %129 : vector<128x32xf32>
    %c0_139 = arith.constant 0 : index
    %c68 = arith.constant 68 : index
    %c0_140 = arith.constant 0 : index
    %131 = vector.load %arg1[%c0_139, %c68, %c0_140] : memref<1x200x16xf32, #tpu.memory_space<vmem>>, vector<1x128x16xf32>
    %132 = vector.shape_cast %131 : vector<1x128x16xf32> to vector<128x16xf32>
    %c0_141 = arith.constant 0 : index
    %c22_142 = arith.constant 22 : index
    %c0_143 = arith.constant 0 : index
    %c0_144 = arith.constant 0 : index
    %133 = vector.load %arg2[%c0_141, %c22_142, %c0_143, %c0_144] : memref<1x25x16x32xf32, #tpu.memory_space<vmem>>, vector<1x1x16x32xf32>
    %134 = vector.shape_cast %133 : vector<1x1x16x32xf32> to vector<16x32xf32>
    %cst_145 = arith.constant dense<0.000000e+00> : vector<128x32xf32>
    %135 = tpu.matmul %132, %134, %cst_145 {dimension_numbers = #tpu.dot_dimension_numbers<[1], [0], [0], [1], [0, 0, 1, 1], [], []>} : vector<128x16xf32>, vector<16x32xf32>, vector<128x32xf32> -> vector<128x32xf32>
    %136 = arith.addf %130, %135 : vector<128x32xf32>
    %c0_146 = arith.constant 0 : index
    %c70 = arith.constant 70 : index
    %c0_147 = arith.constant 0 : index
    %137 = vector.load %arg1[%c0_146, %c70, %c0_147] : memref<1x200x16xf32, #tpu.memory_space<vmem>>, vector<1x128x16xf32>
    %138 = vector.shape_cast %137 : vector<1x128x16xf32> to vector<128x16xf32>
    %c0_148 = arith.constant 0 : index
    %c23 = arith.constant 23 : index
    %c0_149 = arith.constant 0 : index
    %c0_150 = arith.constant 0 : index
    %139 = vector.load %arg2[%c0_148, %c23, %c0_149, %c0_150] : memref<1x25x16x32xf32, #tpu.memory_space<vmem>>, vector<1x1x16x32xf32>
    %140 = vector.shape_cast %139 : vector<1x1x16x32xf32> to vector<16x32xf32>
    %cst_151 = arith.constant dense<0.000000e+00> : vector<128x32xf32>
    %141 = tpu.matmul %138, %140, %cst_151 {dimension_numbers = #tpu.dot_dimension_numbers<[1], [0], [0], [1], [0, 0, 1, 1], [], []>} : vector<128x16xf32>, vector<16x32xf32>, vector<128x32xf32> -> vector<128x32xf32>
    %142 = arith.addf %136, %141 : vector<128x32xf32>
    %c0_152 = arith.constant 0 : index
    %c72 = arith.constant 72 : index
    %c0_153 = arith.constant 0 : index
    %143 = vector.load %arg1[%c0_152, %c72, %c0_153] : memref<1x200x16xf32, #tpu.memory_space<vmem>>, vector<1x128x16xf32>
    %144 = vector.shape_cast %143 : vector<1x128x16xf32> to vector<128x16xf32>
    %c0_154 = arith.constant 0 : index
    %c24_155 = arith.constant 24 : index
    %c0_156 = arith.constant 0 : index
    %c0_157 = arith.constant 0 : index
    %145 = vector.load %arg2[%c0_154, %c24_155, %c0_156, %c0_157] : memref<1x25x16x32xf32, #tpu.memory_space<vmem>>, vector<1x1x16x32xf32>
    %146 = vector.shape_cast %145 : vector<1x1x16x32xf32> to vector<16x32xf32>
    %cst_158 = arith.constant dense<0.000000e+00> : vector<128x32xf32>
    %147 = tpu.matmul %144, %146, %cst_158 {dimension_numbers = #tpu.dot_dimension_numbers<[1], [0], [0], [1], [0, 0, 1, 1], [], []>} : vector<128x16xf32>, vector<16x32xf32>, vector<128x32xf32> -> vector<128x32xf32>
    %148 = arith.addf %142, %147 : vector<128x32xf32>
    %c0_159 = arith.constant 0 : index
    %c0_160 = arith.constant 0 : index
    %c0_161 = arith.constant 0 : index
    %149 = vector.load %arg3[%c0_159, %c0_160, %c0_161] : memref<1x1x32xf32, #tpu.memory_space<vmem>>, vector<1x1x32xf32>
    %150 = vector.shape_cast %149 : vector<1x1x32xf32> to vector<1x32xf32>
    %151 = vector.broadcast %150 : vector<1x32xf32> to vector<128x32xf32>
    %152 = arith.addf %148, %151 : vector<128x32xf32>
    %cst_162 = arith.constant 0.000000e+00 : f32
    %153 = vector.broadcast %cst_162 : f32 to vector<128x32xf32>
    %154 = arith.maximumf %152, %153 : vector<128x32xf32>
    %c0_163 = arith.constant 0 : index
    %c0_164 = arith.constant 0 : index
    %155 = vector.load %arg11[%c0_163, %c0_164] : memref<182x32xf32, #tpu.memory_space<vmem>>, vector<128x32xf32>
    tpu.vector_store %arg11[%c0_163, %c0_164], %154 {strides = array<i32>} : memref<182x32xf32, #tpu.memory_space<vmem>>, vector<128x32xf32>,
    %cst_165 = arith.constant 0.000000e+00 : f32
    %156 = vector.broadcast %cst_165 : f32 to vector<54x32xf32>
    %c128 = arith.constant 128 : index
    %c0_166 = arith.constant 0 : index
    %157 = vector.load %arg11[%c128, %c0_166] : memref<182x32xf32, #tpu.memory_space<vmem>>, vector<54x32xf32>
    tpu.vector_store %arg11[%c128, %c0_166], %156 {strides = array<i32>} : memref<182x32xf32, #tpu.memory_space<vmem>>, vector<54x32xf32>,
    %c0_167 = arith.constant 0 : index
    %c0_168 = arith.constant 0 : index
    %158 = vector.load %arg11[%c0_167, %c0_168] : memref<182x32xf32, #tpu.memory_space<vmem>>, vector<128x32xf32>
    %c2_169 = arith.constant 2 : index
    %c0_170 = arith.constant 0 : index
    %159 = vector.load %arg11[%c2_169, %c0_170] : memref<182x32xf32, #tpu.memory_space<vmem>>, vector<128x32xf32>
    %160 = arith.maximumf %158, %159 : vector<128x32xf32>
    %c4_171 = arith.constant 4 : index
    %c0_172 = arith.constant 0 : index
    %161 = vector.load %arg11[%c4_171, %c0_172] : memref<182x32xf32, #tpu.memory_space<vmem>>, vector<128x32xf32>
    %162 = arith.maximumf %160, %161 : vector<128x32xf32>
    %c6_173 = arith.constant 6 : index
    %c0_174 = arith.constant 0 : index
    %163 = vector.load %arg11[%c6_173, %c0_174] : memref<182x32xf32, #tpu.memory_space<vmem>>, vector<128x32xf32>
    %164 = arith.maximumf %162, %163 : vector<128x32xf32>
    %c16_175 = arith.constant 16 : index
    %c0_176 = arith.constant 0 : index
    %165 = vector.load %arg11[%c16_175, %c0_176] : memref<182x32xf32, #tpu.memory_space<vmem>>, vector<128x32xf32>
    %166 = arith.maximumf %164, %165 : vector<128x32xf32>
    %c18_177 = arith.constant 18 : index
    %c0_178 = arith.constant 0 : index
    %167 = vector.load %arg11[%c18_177, %c0_178] : memref<182x32xf32, #tpu.memory_space<vmem>>, vector<128x32xf32>
    %168 = arith.maximumf %166, %167 : vector<128x32xf32>
    %c20_179 = arith.constant 20 : index
    %c0_180 = arith.constant 0 : index
    %169 = vector.load %arg11[%c20_179, %c0_180] : memref<182x32xf32, #tpu.memory_space<vmem>>, vector<128x32xf32>
    %170 = arith.maximumf %168, %169 : vector<128x32xf32>
    %c22_181 = arith.constant 22 : index
    %c0_182 = arith.constant 0 : index
    %171 = vector.load %arg11[%c22_181, %c0_182] : memref<182x32xf32, #tpu.memory_space<vmem>>, vector<128x32xf32>
    %172 = arith.maximumf %170, %171 : vector<128x32xf32>
    %c32_183 = arith.constant 32 : index
    %c0_184 = arith.constant 0 : index
    %173 = vector.load %arg11[%c32_183, %c0_184] : memref<182x32xf32, #tpu.memory_space<vmem>>, vector<128x32xf32>
    %174 = arith.maximumf %172, %173 : vector<128x32xf32>
    %c34_185 = arith.constant 34 : index
    %c0_186 = arith.constant 0 : index
    %175 = vector.load %arg11[%c34_185, %c0_186] : memref<182x32xf32, #tpu.memory_space<vmem>>, vector<128x32xf32>
    %176 = arith.maximumf %174, %175 : vector<128x32xf32>
    %c36_187 = arith.constant 36 : index
    %c0_188 = arith.constant 0 : index
    %177 = vector.load %arg11[%c36_187, %c0_188] : memref<182x32xf32, #tpu.memory_space<vmem>>, vector<128x32xf32>
    %178 = arith.maximumf %176, %177 : vector<128x32xf32>
    %c38_189 = arith.constant 38 : index
    %c0_190 = arith.constant 0 : index
    %179 = vector.load %arg11[%c38_189, %c0_190] : memref<182x32xf32, #tpu.memory_space<vmem>>, vector<128x32xf32>
    %180 = arith.maximumf %178, %179 : vector<128x32xf32>
    %c48_191 = arith.constant 48 : index
    %c0_192 = arith.constant 0 : index
    %181 = vector.load %arg11[%c48_191, %c0_192] : memref<182x32xf32, #tpu.memory_space<vmem>>, vector<128x32xf32>
    %182 = arith.maximumf %180, %181 : vector<128x32xf32>
    %c50_193 = arith.constant 50 : index
    %c0_194 = arith.constant 0 : index
    %183 = vector.load %arg11[%c50_193, %c0_194] : memref<182x32xf32, #tpu.memory_space<vmem>>, vector<128x32xf32>
    %184 = arith.maximumf %182, %183 : vector<128x32xf32>
    %c52_195 = arith.constant 52 : index
    %c0_196 = arith.constant 0 : index
    %185 = vector.load %arg11[%c52_195, %c0_196] : memref<182x32xf32, #tpu.memory_space<vmem>>, vector<128x32xf32>
    %186 = arith.maximumf %184, %185 : vector<128x32xf32>
    %c54_197 = arith.constant 54 : index
    %c0_198 = arith.constant 0 : index
    %187 = vector.load %arg11[%c54_197, %c0_198] : memref<182x32xf32, #tpu.memory_space<vmem>>, vector<128x32xf32>
    %188 = arith.maximumf %186, %187 : vector<128x32xf32>
    %c0_199 = arith.constant 0 : index
    %c0_200 = arith.constant 0 : index
    %189 = vector.load %arg12[%c0_199, %c0_200] : memref<128x32xf32, #tpu.memory_space<vmem>>, vector<128x32xf32>
    tpu.vector_store %arg12[%c0_199, %c0_200], %188 {strides = array<i32>} : memref<128x32xf32, #tpu.memory_space<vmem>>, vector<128x32xf32>,
    %cst_201 = arith.constant 0.000000e+00 : f32
    %190 = vector.broadcast %cst_201 : f32 to vector<2x1024xf32>
    %c36_202 = arith.constant 36 : index
    %c0_203 = arith.constant 0 : index
    %191 = vector.load %arg12[%c36_202, %c0_203] : memref<128x32xf32, #tpu.memory_space<vmem>>, vector<2x32xf32>
    %c0_204 = arith.constant 0 : index
    %c0_205 = arith.constant 0 : index
    %c0_206 = arith.constant 0 : index
    %192 = vector.load %arg4[%c0_204, %c0_205, %c0_206] : memref<1x32x1024xf32, #tpu.memory_space<vmem>>, vector<1x32x1024xf32>
    %193 = vector.shape_cast %192 : vector<1x32x1024xf32> to vector<32x1024xf32>
    %cst_207 = arith.constant dense<0.000000e+00> : vector<2x1024xf32>
    %194 = tpu.matmul %191, %193, %cst_207 {dimension_numbers = #tpu.dot_dimension_numbers<[1], [0], [0], [1], [0, 0, 1, 1], [], []>} : vector<2x32xf32>, vector<32x1024xf32>, vector<2x1024xf32> -> vector<2x1024xf32>
    %195 = arith.addf %190, %194 : vector<2x1024xf32>
    %c0_208 = arith.constant 0 : index
    %c0_209 = arith.constant 0 : index
    %c0_210 = arith.constant 0 : index
    %196 = vector.load %arg5[%c0_208, %c0_209, %c0_210] : memref<1x1x1024xf32, #tpu.memory_space<vmem>>, vector<1x1x1024xf32>
    %197 = vector.shape_cast %196 : vector<1x1x1024xf32> to vector<1x1024xf32>
    %198 = vector.broadcast %197 : vector<1x1024xf32> to vector<2x1024xf32>
    %199 = arith.addf %195, %198 : vector<2x1024xf32>
    %cst_211 = arith.constant 0.000000e+00 : f32
    %200 = vector.broadcast %cst_211 : f32 to vector<2x1024xf32>
    %201 = arith.maximumf %199, %200 : vector<2x1024xf32>
    %c0_212 = arith.constant 0 : index
    %c0_213 = arith.constant 0 : index
    %c0_214 = arith.constant 0 : index
    %202 = vector.load %arg6[%c0_212, %c0_213, %c0_214] : memref<1x1024x512xf32, #tpu.memory_space<vmem>>, vector<1x1024x512xf32>
    %203 = vector.shape_cast %202 : vector<1x1024x512xf32> to vector<1024x512xf32>
    %cst_215 = arith.constant dense<0.000000e+00> : vector<2x512xf32>
    %204 = tpu.matmul %201, %203, %cst_215 {dimension_numbers = #tpu.dot_dimension_numbers<[1], [0], [0], [1], [0, 0, 1, 1], [], []>} : vector<2x1024xf32>, vector<1024x512xf32>, vector<2x512xf32> -> vector<2x512xf32>
    %c0_216 = arith.constant 0 : index
    %c0_217 = arith.constant 0 : index
    %c0_218 = arith.constant 0 : index
    %205 = vector.load %arg7[%c0_216, %c0_217, %c0_218] : memref<1x1x512xf32, #tpu.memory_space<vmem>>, vector<1x1x512xf32>
    %206 = vector.shape_cast %205 : vector<1x1x512xf32> to vector<1x512xf32>
    %207 = vector.broadcast %206 : vector<1x512xf32> to vector<2x512xf32>
    %208 = arith.addf %204, %207 : vector<2x512xf32>
    %cst_219 = arith.constant 0.000000e+00 : f32
    %209 = vector.broadcast %cst_219 : f32 to vector<2x512xf32>
    %210 = arith.maximumf %208, %209 : vector<2x512xf32>
    %c0_220 = arith.constant 0 : index
    %c0_221 = arith.constant 0 : index
    %c0_222 = arith.constant 0 : index
    %211 = vector.load %arg8[%c0_220, %c0_221, %c0_222] : memref<1x512x128xf32, #tpu.memory_space<vmem>>, vector<1x512x128xf32>
    %212 = vector.shape_cast %211 : vector<1x512x128xf32> to vector<512x128xf32>
    %cst_223 = arith.constant dense<0.000000e+00> : vector<2x128xf32>
    %213 = tpu.matmul %210, %212, %cst_223 {dimension_numbers = #tpu.dot_dimension_numbers<[1], [0], [0], [1], [0, 0, 1, 1], [], []>} : vector<2x512xf32>, vector<512x128xf32>, vector<2x128xf32> -> vector<2x128xf32>
    %c0_224 = arith.constant 0 : index
    %c0_225 = arith.constant 0 : index
    %c0_226 = arith.constant 0 : index
    %214 = vector.load %arg9[%c0_224, %c0_225, %c0_226] : memref<1x1x128xf32, #tpu.memory_space<vmem>>, vector<1x1x128xf32>
    %215 = vector.shape_cast %214 : vector<1x1x128xf32> to vector<1x128xf32>
    %216 = vector.broadcast %215 : vector<1x128xf32> to vector<2x128xf32>
    %217 = arith.addf %213, %216 : vector<2x128xf32>
    %c0_227 = arith.constant 0 : index
    %c0_228 = arith.constant 0 : index
    %c0_229 = arith.constant 0 : index
    %218 = vector.load %arg10[%c0_227, %c0_228, %c0_229] : memref<1x2x128xf32, #tpu.memory_space<vmem>>, vector<1x2x128xf32>
    %219 = vector.shape_cast %218 : vector<1x2x128xf32> to vector<2x128xf32>
    %220 = vector.shape_cast %217 : vector<2x128xf32> to vector<1x2x128xf32>
    tpu.vector_store %arg10[%c0_227, %c0_228, %c0_229], %220 {strides = array<i32>} : memref<1x2x128xf32, #tpu.memory_space<vmem>>, vector<1x2x128xf32>,
    return
  }
  func.func @transform_0(%arg0: i32) -> (i32, i32, i32) {
    %c0_i32 = arith.constant 0 : i32
    %c0_i32_0 = arith.constant 0 : i32
    %c0_i32_1 = arith.constant 0 : i32
    return %arg0, %c0_i32, %c0_i32_0 : i32, i32, i32
  }
  func.func @transform_1(%arg0: i32) -> (i32, i32, i32, i32) {
    %c0_i32 = arith.constant 0 : i32
    %c0_i32_0 = arith.constant 0 : i32
    %c0_i32_1 = arith.constant 0 : i32
    %c0_i32_2 = arith.constant 0 : i32
    return %arg0, %c0_i32, %c0_i32_0, %c0_i32_1 : i32, i32, i32, i32
  }
  func.func @transform_2(%arg0: i32) -> (i32, i32, i32) {
    %c0_i32 = arith.constant 0 : i32
    %c0_i32_0 = arith.constant 0 : i32
    %c0_i32_1 = arith.constant 0 : i32
    return %arg0, %c0_i32, %c0_i32_0 : i32, i32, i32
  }
  func.func @transform_3(%arg0: i32) -> (i32, i32, i32) {
    %c0_i32 = arith.constant 0 : i32
    %c0_i32_0 = arith.constant 0 : i32
    %c0_i32_1 = arith.constant 0 : i32
    return %arg0, %c0_i32, %c0_i32_0 : i32, i32, i32
  }
  func.func @transform_4(%arg0: i32) -> (i32, i32, i32) {
    %c0_i32 = arith.constant 0 : i32
    %c0_i32_0 = arith.constant 0 : i32
    %c0_i32_1 = arith.constant 0 : i32
    return %arg0, %c0_i32, %c0_i32_0 : i32, i32, i32
  }
  func.func @transform_5(%arg0: i32) -> (i32, i32, i32) {
    %c0_i32 = arith.constant 0 : i32
    %c0_i32_0 = arith.constant 0 : i32
    %c0_i32_1 = arith.constant 0 : i32
    return %arg0, %c0_i32, %c0_i32_0 : i32, i32, i32
  }
  func.func @transform_6(%arg0: i32) -> (i32, i32, i32) {
    %c0_i32 = arith.constant 0 : i32
    %c0_i32_0 = arith.constant 0 : i32
    %c0_i32_1 = arith.constant 0 : i32
    return %arg0, %c0_i32, %c0_i32_0 : i32, i32, i32
  }
  func.func @transform_7(%arg0: i32) -> (i32, i32, i32) {
    %c0_i32 = arith.constant 0 : i32
    %c0_i32_0 = arith.constant 0 : i32
    %c0_i32_1 = arith.constant 0 : i32
    return %arg0, %c0_i32, %c0_i32_0 : i32, i32, i32
  }
  func.func @transform_8(%arg0: i32) -> (i32, i32, i32) {
    %c0_i32 = arith.constant 0 : i32
    %c0_i32_0 = arith.constant 0 : i32
    %c0_i32_1 = arith.constant 0 : i32
    return %arg0, %c0_i32, %c0_i32_0 : i32, i32, i32
  }
  func.func @transform_9(%arg0: i32) -> (i32, i32, i32) {
    %c0_i32 = arith.constant 0 : i32
    %c0_i32_0 = arith.constant 0 : i32
    %c0_i32_1 = arith.constant 0 : i32
    return %arg0, %c0_i32, %c0_i32_0 : i32, i32, i32
  }
}

</mosaic_0001>

<llo_original>
// kernel: ensemble_forward.2
$region0: #{ensemble_forward.2}
  #allocation0 [shape = 'u32[]', space=smem, size = 0x4, offset = 0x4, fixed_abs, tag = 'smem constant byte address 0x4 - core index']
  #allocation1 [shape = 'u32[72,128]{1,0:T(1,128)}', space=vmem, size = 0x9000, scoped, tag = 'internal scratch']
  %s0 = inlined_call_operand.vmem [shape: f32[16,32,25], index: 0, kind: input, shape index: {}]
  %s1 = inlined_call_operand.vmem [shape: f32[25,128], index: 1, kind: input, shape index: {}]
  %s2 = inlined_call_operand.vmem [shape: f32[1,128], index: 2, kind: input, shape index: {}]
  %s3 = inlined_call_operand.vmem [shape: f32[32,128], index: 3, kind: output, shape index: {}]
  %s4 = sld [smem:[#allocation0]]
  $region22: #{ensemble_forward.2} parent=0
    _
  %s6 = ssub.s32 1, %s4
  %s7 = scalar_select 0, %s6, %s4
  // Predicated region
  $region2: #{ensemble_forward.2} parent=0 // pred_check
    _
  $region3: #{ensemble_forward.2} parent=0 // pred_check_branch
    %9 = sbr.rel (0) target = $region5
  $region4: #{ensemble_forward.2} parent=0 // pred_region
    _
  $region5: #{ensemble_forward.2} parent=0 // pred_fallthru
    _
  // Predicated region
  $region6: #{ensemble_forward.2} parent=0 // pred_check
    _
  $region7: #{ensemble_forward.2} parent=0 // pred_check_branch
    %11 = sbr.rel (0) target = $region9
  $region8: #{ensemble_forward.2} parent=0 // pred_region
    _
  $region9: #{ensemble_forward.2} parent=0 // pred_fallthru
    _
  // Predicated region
  $region10: #{ensemble_forward.2} parent=0 // pred_check
    _
  $region11: #{ensemble_forward.2} parent=0 // pred_check_branch
    %13 = sbr.rel (0) target = $region13
  $region12: #{ensemble_forward.2} parent=0 // pred_region
    _
  $region13: #{ensemble_forward.2} parent=0 // pred_fallthru
    _
  %v14 = vld [vmem:[%s1] sm:$0xff]
  %v15 = vld [vmem:[%s1 + $0x8] sm:$0xff]
  %v16 = vld [vmem:[%s1 + $0x10] sm:$0xff]
  %v17 = vld [vmem:[%s1 + $0x18] sm:$0x1]
  %v18 = vld [vmem:[%s0] sm:$0xff]
  %v19 = vld [vmem:[%s0 + $0x8] sm:$0xff]
  %v20 = vld [vmem:[%s0 + $0x10] sm:$0xff]
  %v21 = vld [vmem:[%s0 + $0x18] sm:$0xff]
  %vm22 = vcmask 203776
  %v24 = vsel %vm22, %v18, 0
  %v27 = vsel %vm22, %v19, 0
  %v30 = vsel %vm22, %v20, 0
  %v33 = vsel %vm22, %v21, 0
  %vm35 = vcmask 1040384
  %v37 = vsel %vm35, %v17, 0
  %39 = vmatpush.msra.mxu0 0.0
  %40 = vmatpush.msra.mxu0 0.0
  %41 = vmatpush.msra.mxu0 0.0
  %42 = vmatpush.msra.mxu0 0.0
  %43 = vmatpush.msra.mxu0 0.0
  %44 = vmatpush.msra.mxu0 0.0
  %45 = vmatpush.msra.mxu0 0.0
  %46 = vmatpush.msra.mxu0 0.0
  %47 = vmatpush.msra.mxu0 0.0
  %48 = vmatpush.msra.mxu0 0.0
  %49 = vmatpush.msra.mxu0 0.0
  %50 = vmatpush.msra.mxu0 0.0
  %51 = vmatpush.msra.mxu0 %v37
  %52 = vmatpush.msra.mxu0 %v16
  %53 = vmatpush.msra.mxu0 %v15
  %54 = vmatpush.msra.mxu0 %v14
  %55 = vmatmul.f32.gmra.mxu0 %v24
  %v56 = vpop.f32.mrf.mxu0
  %v57 = vadd.f32 0.0, %v56
  %58 = vmatmul.f32.gmra.mxu0 %v27
  %v59 = vpop.f32.mrf.mxu0
  %v60 = vadd.f32 0.0, %v59
  %61 = vmatmul.f32.gmra.mxu0 %v30
  %v62 = vpop.f32.mrf.mxu0
  %v63 = vadd.f32 0.0, %v62
  %64 = vmatmul.f32.gmra.mxu0 %v33
  %v65 = vpop.f32.mrf.mxu0
  %v66 = vadd.f32 0.0, %v65
  %67 = vdwg.mxu0
  %s68 = scalar_lea.vmem %s0, 32
  %v69 = vld [vmem:[%s68] sm:$0xff]
  %v70 = vld [vmem:[%s68 + $0x8] sm:$0xff]
  %v71 = vld [vmem:[%s68 + $0x10] sm:$0xff]
  %v72 = vld [vmem:[%s68 + $0x18] sm:$0xff]
  %v74 = vsel %vm22, %v69, 0
  %v77 = vsel %vm22, %v70, 0
  %v80 = vsel %vm22, %v71, 0
  %v83 = vsel %vm22, %v72, 0
  %85 = vmatpush.msra.mxu0 0.0
  %86 = vmatpush.msra.mxu0 0.0
  %87 = vmatpush.msra.mxu0 0.0
  %88 = vmatpush.msra.mxu0 0.0
  %89 = vmatpush.msra.mxu0 0.0
  %90 = vmatpush.msra.mxu0 0.0
  %91 = vmatpush.msra.mxu0 0.0
  %92 = vmatpush.msra.mxu0 0.0
  %93 = vmatpush.msra.mxu0 0.0
  %94 = vmatpush.msra.mxu0 0.0
  %95 = vmatpush.msra.mxu0 0.0
  %96 = vmatpush.msra.mxu0 0.0
  %97 = vmatpush.msra.mxu0 %v37
  %98 = vmatpush.msra.mxu0 %v16
  %99 = vmatpush.msra.mxu0 %v15
  %100 = vmatpush.msra.mxu0 %v14
  %101 = vmatmul.f32.gmra.mxu0 %v74
  %v102 = vpop.f32.mrf.mxu0
  %v103 = vadd.f32 0.0, %v102
  %104 = vmatmul.f32.gmra.mxu0 %v77
  %v105 = vpop.f32.mrf.mxu0
  %v106 = vadd.f32 0.0, %v105
  %107 = vmatmul.f32.gmra.mxu0 %v80
  %v108 = vpop.f32.mrf.mxu0
  %v109 = vadd.f32 0.0, %v108
  %110 = vmatmul.f32.gmra.mxu0 %v83
  %v111 = vpop.f32.mrf.mxu0
  %v112 = vadd.f32 0.0, %v111
  %113 = vdwg.mxu0
  %v114 = vmax.f32 %v57, %v103
  %v115 = vmax.f32 %v60, %v106
  %v116 = vmax.f32 %v63, %v109
  %v117 = vmax.f32 %v66, %v112
  %s118 = scalar_lea.vmem %s0, 64
  %v119 = vld [vmem:[%s118] sm:$0xff]
  %v120 = vld [vmem:[%s118 + $0x8] sm:$0xff]
  %v121 = vld [vmem:[%s118 + $0x10] sm:$0xff]
  %v122 = vld [vmem:[%s118 + $0x18] sm:$0xff]
  %v124 = vsel %vm22, %v119, 0
  %v127 = vsel %vm22, %v120, 0
  %v130 = vsel %vm22, %v121, 0
  %v133 = vsel %vm22, %v122, 0
  %135 = vmatpush.msra.mxu0 0.0
  %136 = vmatpush.msra.mxu0 0.0
  %137 = vmatpush.msra.mxu0 0.0
  %138 = vmatpush.msra.mxu0 0.0
  %139 = vmatpush.msra.mxu0 0.0
  %140 = vmatpush.msra.mxu0 0.0
  %141 = vmatpush.msra.mxu0 0.0
  %142 = vmatpush.msra.mxu0 0.0
  %143 = vmatpush.msra.mxu0 0.0
  %144 = vmatpush.msra.mxu0 0.0
  %145 = vmatpush.msra.mxu0 0.0
  %146 = vmatpush.msra.mxu0 0.0
  %147 = vmatpush.msra.mxu0 %v37
  %148 = vmatpush.msra.mxu0 %v16
  %149 = vmatpush.msra.mxu0 %v15
  %150 = vmatpush.msra.mxu0 %v14
  %151 = vmatmul.f32.gmra.mxu0 %v124
  %v152 = vpop.f32.mrf.mxu0
  %v153 = vadd.f32 0.0, %v152
  %154 = vmatmul.f32.gmra.mxu0 %v127
  %v155 = vpop.f32.mrf.mxu0
  %v156 = vadd.f32 0.0, %v155
  %157 = vmatmul.f32.gmra.mxu0 %v130
  %v158 = vpop.f32.mrf.mxu0
  %v159 = vadd.f32 0.0, %v158
  %160 = vmatmul.f32.gmra.mxu0 %v133
  %v161 = vpop.f32.mrf.mxu0
  %v162 = vadd.f32 0.0, %v161
  %163 = vdwg.mxu0
  %v164 = vmax.f32 %v114, %v153
  %v165 = vmax.f32 %v115, %v156
  %v166 = vmax.f32 %v116, %v159
  %v167 = vmax.f32 %v117, %v162
  %s168 = scalar_lea.vmem %s0, 96
  %v169 = vld [vmem:[%s168] sm:$0xff]
  %v170 = vld [vmem:[%s168 + $0x8] sm:$0xff]
  %v171 = vld [vmem:[%s168 + $0x10] sm:$0xff]
  %v172 = vld [vmem:[%s168 + $0x18] sm:$0xff]
  %v174 = vsel %vm22, %v169, 0
  %v177 = vsel %vm22, %v170, 0
  %v180 = vsel %vm22, %v171, 0
  %v183 = vsel %vm22, %v172, 0
  %185 = vmatpush.msra.mxu0 0.0
  %186 = vmatpush.msra.mxu0 0.0
  %187 = vmatpush.msra.mxu0 0.0
  %188 = vmatpush.msra.mxu0 0.0
  %189 = vmatpush.msra.mxu0 0.0
  %190 = vmatpush.msra.mxu0 0.0
  %191 = vmatpush.msra.mxu0 0.0
  %192 = vmatpush.msra.mxu0 0.0
  %193 = vmatpush.msra.mxu0 0.0
  %194 = vmatpush.msra.mxu0 0.0
  %195 = vmatpush.msra.mxu0 0.0
  %196 = vmatpush.msra.mxu0 0.0
  %197 = vmatpush.msra.mxu0 %v37
  %198 = vmatpush.msra.mxu0 %v16
  %199 = vmatpush.msra.mxu0 %v15
  %200 = vmatpush.msra.mxu0 %v14
  %201 = vmatmul.f32.gmra.mxu0 %v174
  %v202 = vpop.f32.mrf.mxu0
  %v203 = vadd.f32 0.0, %v202
  %204 = vmatmul.f32.gmra.mxu0 %v177
  %v205 = vpop.f32.mrf.mxu0
  %v206 = vadd.f32 0.0, %v205
  %207 = vmatmul.f32.gmra.mxu0 %v180
  %v208 = vpop.f32.mrf.mxu0
  %v209 = vadd.f32 0.0, %v208
  %210 = vmatmul.f32.gmra.mxu0 %v183
  %v211 = vpop.f32.mrf.mxu0
  %v212 = vadd.f32 0.0, %v211
  %213 = vdwg.mxu0
  %v214 = vmax.f32 %v164, %v203
  %v215 = vmax.f32 %v165, %v206
  %v216 = vmax.f32 %v166, %v209
  %v217 = vmax.f32 %v167, %v212
  %s218 = scalar_lea.vmem %s0, 128
  %v219 = vld [vmem:[%s218] sm:$0xff]
  %v220 = vld [vmem:[%s218 + $0x8] sm:$0xff]
  %v221 = vld [vmem:[%s218 + $0x10] sm:$0xff]
  %v222 = vld [vmem:[%s218 + $0x18] sm:$0xff]
  %v224 = vsel %vm22, %v219, 0
  %v227 = vsel %vm22, %v220, 0
  %v230 = vsel %vm22, %v221, 0
  %v233 = vsel %vm22, %v222, 0
  %235 = vmatpush.msra.mxu0 0.0
  %236 = vmatpush.msra.mxu0 0.0
  %237 = vmatpush.msra.mxu0 0.0
  %238 = vmatpush.msra.mxu0 0.0
  %239 = vmatpush.msra.mxu0 0.0
  %240 = vmatpush.msra.mxu0 0.0
  %241 = vmatpush.msra.mxu0 0.0
  %242 = vmatpush.msra.mxu0 0.0
  %243 = vmatpush.msra.mxu0 0.0
  %244 = vmatpush.msra.mxu0 0.0
  %245 = vmatpush.msra.mxu0 0.0
  %246 = vmatpush.msra.mxu0 0.0
  %247 = vmatpush.msra.mxu0 %v37
  %248 = vmatpush.msra.mxu0 %v16
  %249 = vmatpush.msra.mxu0 %v15
  %250 = vmatpush.msra.mxu0 %v14
  %251 = vmatmul.f32.gmra.mxu0 %v224
  %v252 = vpop.f32.mrf.mxu0
  %v253 = vadd.f32 0.0, %v252
  %254 = vmatmul.f32.gmra.mxu0 %v227
  %v255 = vpop.f32.mrf.mxu0
  %v256 = vadd.f32 0.0, %v255
  %257 = vmatmul.f32.gmra.mxu0 %v230
  %v258 = vpop.f32.mrf.mxu0
  %v259 = vadd.f32 0.0, %v258
  %260 = vmatmul.f32.gmra.mxu0 %v233
  %v261 = vpop.f32.mrf.mxu0
  %v262 = vadd.f32 0.0, %v261
  %263 = vdwg.mxu0
  %v264 = vmax.f32 %v214, %v253
  %v265 = vmax.f32 %v215, %v256
  %v266 = vmax.f32 %v216, %v259
  %v267 = vmax.f32 %v217, %v262
  %s268 = scalar_lea.vmem %s0, 160
  %v269 = vld [vmem:[%s268] sm:$0xff]
  %v270 = vld [vmem:[%s268 + $0x8] sm:$0xff]
  %v271 = vld [vmem:[%s268 + $0x10] sm:$0xff]
  %v272 = vld [vmem:[%s268 + $0x18] sm:$0xff]
  %v274 = vsel %vm22, %v269, 0
  %v277 = vsel %vm22, %v270, 0
  %v280 = vsel %vm22, %v271, 0
  %v283 = vsel %vm22, %v272, 0
  %285 = vmatpush.msra.mxu0 0.0
  %286 = vmatpush.msra.mxu0 0.0
  %287 = vmatpush.msra.mxu0 0.0
  %288 = vmatpush.msra.mxu0 0.0
  %289 = vmatpush.msra.mxu0 0.0
  %290 = vmatpush.msra.mxu0 0.0
  %291 = vmatpush.msra.mxu0 0.0
  %292 = vmatpush.msra.mxu0 0.0
  %293 = vmatpush.msra.mxu0 0.0
  %294 = vmatpush.msra.mxu0 0.0
  %295 = vmatpush.msra.mxu0 0.0
  %296 = vmatpush.msra.mxu0 0.0
  %297 = vmatpush.msra.mxu0 %v37
  %298 = vmatpush.msra.mxu0 %v16
  %299 = vmatpush.msra.mxu0 %v15
  %300 = vmatpush.msra.mxu0 %v14
  %301 = vmatmul.f32.gmra.mxu0 %v274
  %v302 = vpop.f32.mrf.mxu0
  %v303 = vadd.f32 0.0, %v302
  %304 = vmatmul.f32.gmra.mxu0 %v277
  %v305 = vpop.f32.mrf.mxu0
  %v306 = vadd.f32 0.0, %v305
  %307 = vmatmul.f32.gmra.mxu0 %v280
  %v308 = vpop.f32.mrf.mxu0
  %v309 = vadd.f32 0.0, %v308
  %310 = vmatmul.f32.gmra.mxu0 %v283
  %v311 = vpop.f32.mrf.mxu0
  %v312 = vadd.f32 0.0, %v311
  %313 = vdwg.mxu0
  %v314 = vmax.f32 %v264, %v303
  %v315 = vmax.f32 %v265, %v306
  %v316 = vmax.f32 %v266, %v309
  %v317 = vmax.f32 %v267, %v312
  %s318 = scalar_lea.vmem %s0, 192
  %v319 = vld [vmem:[%s318] sm:$0xff]
  %v320 = vld [vmem:[%s318 + $0x8] sm:$0xff]
  %v321 = vld [vmem:[%s318 + $0x10] sm:$0xff]
  %v322 = vld [vmem:[%s318 + $0x18] sm:$0xff]
  %v324 = vsel %vm22, %v319, 0
  %v327 = vsel %vm22, %v320, 0
  %v330 = vsel %vm22, %v321, 0
  %v333 = vsel %vm22, %v322, 0
  %335 = vmatpush.msra.mxu0 0.0
  %336 = vmatpush.msra.mxu0 0.0
  %337 = vmatpush.msra.mxu0 0.0
  %338 = vmatpush.msra.mxu0 0.0
  %339 = vmatpush.msra.mxu0 0.0
  %340 = vmatpush.msra.mxu0 0.0
  %341 = vmatpush.msra.mxu0 0.0
  %342 = vmatpush.msra.mxu0 0.0
  %343 = vmatpush.msra.mxu0 0.0
  %344 = vmatpush.msra.mxu0 0.0
  %345 = vmatpush.msra.mxu0 0.0
  %346 = vmatpush.msra.mxu0 0.0
  %347 = vmatpush.msra.mxu0 %v37
  %348 = vmatpush.msra.mxu0 %v16
  %349 = vmatpush.msra.mxu0 %v15
  %350 = vmatpush.msra.mxu0 %v14
  %351 = vmatmul.f32.gmra.mxu0 %v324
  %v352 = vpop.f32.mrf.mxu0
  %v353 = vadd.f32 0.0, %v352
  %354 = vmatmul.f32.gmra.mxu0 %v327
  %v355 = vpop.f32.mrf.mxu0
  %v356 = vadd.f32 0.0, %v355
  %357 = vmatmul.f32.gmra.mxu0 %v330
  %v358 = vpop.f32.mrf.mxu0
  %v359 = vadd.f32 0.0, %v358
  %360 = vmatmul.f32.gmra.mxu0 %v333
  %v361 = vpop.f32.mrf.mxu0
  %v362 = vadd.f32 0.0, %v361
  %363 = vdwg.mxu0
  %v364 = vmax.f32 %v314, %v353
  %v365 = vmax.f32 %v315, %v356
  %v366 = vmax.f32 %v316, %v359
  %v367 = vmax.f32 %v317, %v362
  %s368 = scalar_lea.vmem %s0, 224
  %v369 = vld [vmem:[%s368] sm:$0xff]
  %v370 = vld [vmem:[%s368 + $0x8] sm:$0xff]
  %v371 = vld [vmem:[%s368 + $0x10] sm:$0xff]
  %v372 = vld [vmem:[%s368 + $0x18] sm:$0xff]
  %v374 = vsel %vm22, %v369, 0
  %v377 = vsel %vm22, %v370, 0
  %v380 = vsel %vm22, %v371, 0
  %v383 = vsel %vm22, %v372, 0
  %385 = vmatpush.msra.mxu0 0.0
  %386 = vmatpush.msra.mxu0 0.0
  %387 = vmatpush.msra.mxu0 0.0
  %388 = vmatpush.msra.mxu0 0.0
  %389 = vmatpush.msra.mxu0 0.0
  %390 = vmatpush.msra.mxu0 0.0
  %391 = vmatpush.msra.mxu0 0.0
  %392 = vmatpush.msra.mxu0 0.0
  %393 = vmatpush.msra.mxu0 0.0
  %394 = vmatpush.msra.mxu0 0.0
  %395 = vmatpush.msra.mxu0 0.0
  %396 = vmatpush.msra.mxu0 0.0
  %397 = vmatpush.msra.mxu0 %v37
  %398 = vmatpush.msra.mxu0 %v16
  %399 = vmatpush.msra.mxu0 %v15
  %400 = vmatpush.msra.mxu0 %v14
  %401 = vmatmul.f32.gmra.mxu0 %v374
  %v402 = vpop.f32.mrf.mxu0
  %v403 = vadd.f32 0.0, %v402
  %404 = vmatmul.f32.gmra.mxu0 %v377
  %v405 = vpop.f32.mrf.mxu0
  %v406 = vadd.f32 0.0, %v405
  %407 = vmatmul.f32.gmra.mxu0 %v380
  %v408 = vpop.f32.mrf.mxu0
  %v409 = vadd.f32 0.0, %v408
  %410 = vmatmul.f32.gmra.mxu0 %v383
  %v411 = vpop.f32.mrf.mxu0
  %v412 = vadd.f32 0.0, %v411
  %413 = vdwg.mxu0
  %v414 = vmax.f32 %v364, %v403
  %v415 = vmax.f32 %v365, %v406
  %v416 = vmax.f32 %v366, %v409
  %v417 = vmax.f32 %v367, %v412
  %s418 = scalar_lea.vmem %s0, 256
  %v419 = vld [vmem:[%s418] sm:$0xff]
  %v420 = vld [vmem:[%s418 + $0x8] sm:$0xff]
  %v421 = vld [vmem:[%s418 + $0x10] sm:$0xff]
  %v422 = vld [vmem:[%s418 + $0x18] sm:$0xff]
  %v424 = vsel %vm22, %v419, 0
  %v427 = vsel %vm22, %v420, 0
  %v430 = vsel %vm22, %v421, 0
  %v433 = vsel %vm22, %v422, 0
  %435 = vmatpush.msra.mxu0 0.0
  %436 = vmatpush.msra.mxu0 0.0
  %437 = vmatpush.msra.mxu0 0.0
  %438 = vmatpush.msra.mxu0 0.0
  %439 = vmatpush.msra.mxu0 0.0
  %440 = vmatpush.msra.mxu0 0.0
  %441 = vmatpush.msra.mxu0 0.0
  %442 = vmatpush.msra.mxu0 0.0
  %443 = vmatpush.msra.mxu0 0.0
  %444 = vmatpush.msra.mxu0 0.0
  %445 = vmatpush.msra.mxu0 0.0
  %446 = vmatpush.msra.mxu0 0.0
  %447 = vmatpush.msra.mxu0 %v37
  %448 = vmatpush.msra.mxu0 %v16
  %449 = vmatpush.msra.mxu0 %v15
  %450 = vmatpush.msra.mxu0 %v14
  %451 = vmatmul.f32.gmra.mxu0 %v424
  %v452 = vpop.f32.mrf.mxu0
  %v453 = vadd.f32 0.0, %v452
  %454 = vmatmul.f32.gmra.mxu0 %v427
  %v455 = vpop.f32.mrf.mxu0
  %v456 = vadd.f32 0.0, %v455
  %457 = vmatmul.f32.gmra.mxu0 %v430
  %v458 = vpop.f32.mrf.mxu0
  %v459 = vadd.f32 0.0, %v458
  %460 = vmatmul.f32.gmra.mxu0 %v433
  %v461 = vpop.f32.mrf.mxu0
  %v462 = vadd.f32 0.0, %v461
  %463 = vdwg.mxu0
  %v464 = vmax.f32 %v414, %v453
  %v465 = vmax.f32 %v415, %v456
  %v466 = vmax.f32 %v416, %v459
  %v467 = vmax.f32 %v417, %v462
  %s468 = scalar_lea.vmem %s0, 288
  %v469 = vld [vmem:[%s468] sm:$0xff]
  %v470 = vld [vmem:[%s468 + $0x8] sm:$0xff]
  %v471 = vld [vmem:[%s468 + $0x10] sm:$0xff]
  %v472 = vld [vmem:[%s468 + $0x18] sm:$0xff]
  %v474 = vsel %vm22, %v469, 0
  %v477 = vsel %vm22, %v470, 0
  %v480 = vsel %vm22, %v471, 0
  %v483 = vsel %vm22, %v472, 0
  %485 = vmatpush.msra.mxu0 0.0
  %486 = vmatpush.msra.mxu0 0.0
  %487 = vmatpush.msra.mxu0 0.0
  %488 = vmatpush.msra.mxu0 0.0
  %489 = vmatpush.msra.mxu0 0.0
  %490 = vmatpush.msra.mxu0 0.0
  %491 = vmatpush.msra.mxu0 0.0
  %492 = vmatpush.msra.mxu0 0.0
  %493 = vmatpush.msra.mxu0 0.0
  %494 = vmatpush.msra.mxu0 0.0
  %495 = vmatpush.msra.mxu0 0.0
  %496 = vmatpush.msra.mxu0 0.0
  %497 = vmatpush.msra.mxu0 %v37
  %498 = vmatpush.msra.mxu0 %v16
  %499 = vmatpush.msra.mxu0 %v15
  %500 = vmatpush.msra.mxu0 %v14
  %501 = vmatmul.f32.gmra.mxu0 %v474
  %v502 = vpop.f32.mrf.mxu0
  %v503 = vadd.f32 0.0, %v502
  %504 = vmatmul.f32.gmra.mxu0 %v477
  %v505 = vpop.f32.mrf.mxu0
  %v506 = vadd.f32 0.0, %v505
  %507 = vmatmul.f32.gmra.mxu0 %v480
  %v508 = vpop.f32.mrf.mxu0
  %v509 = vadd.f32 0.0, %v508
  %510 = vmatmul.f32.gmra.mxu0 %v483
  %v511 = vpop.f32.mrf.mxu0
  %v512 = vadd.f32 0.0, %v511
  %513 = vdwg.mxu0
  %v514 = vmax.f32 %v464, %v503
  %v515 = vmax.f32 %v465, %v506
  %v516 = vmax.f32 %v466, %v509
  %v517 = vmax.f32 %v467, %v512
  %s518 = scalar_lea.vmem %s0, 320
  %v519 = vld [vmem:[%s518] sm:$0xff]
  %v520 = vld [vmem:[%s518 + $0x8] sm:$0xff]
  %v521 = vld [vmem:[%s518 + $0x10] sm:$0xff]
  %v522 = vld [vmem:[%s518 + $0x18] sm:$0xff]
  %v524 = vsel %vm22, %v519, 0
  %v527 = vsel %vm22, %v520, 0
  %v530 = vsel %vm22, %v521, 0
  %v533 = vsel %vm22, %v522, 0
  %535 = vmatpush.msra.mxu0 0.0
  %536 = vmatpush.msra.mxu0 0.0
  %537 = vmatpush.msra.mxu0 0.0
  %538 = vmatpush.msra.mxu0 0.0
  %539 = vmatpush.msra.mxu0 0.0
  %540 = vmatpush.msra.mxu0 0.0
  %541 = vmatpush.msra.mxu0 0.0
  %542 = vmatpush.msra.mxu0 0.0
  %543 = vmatpush.msra.mxu0 0.0
  %544 = vmatpush.msra.mxu0 0.0
  %545 = vmatpush.msra.mxu0 0.0
  %546 = vmatpush.msra.mxu0 0.0
  %547 = vmatpush.msra.mxu0 %v37
  %548 = vmatpush.msra.mxu0 %v16
  %549 = vmatpush.msra.mxu0 %v15
  %550 = vmatpush.msra.mxu0 %v14
  %551 = vmatmul.f32.gmra.mxu0 %v524
  %v552 = vpop.f32.mrf.mxu0
  %v553 = vadd.f32 0.0, %v552
  %554 = vmatmul.f32.gmra.mxu0 %v527
  %v555 = vpop.f32.mrf.mxu0
  %v556 = vadd.f32 0.0, %v555
  %557 = vmatmul.f32.gmra.mxu0 %v530
  %v558 = vpop.f32.mrf.mxu0
  %v559 = vadd.f32 0.0, %v558
  %560 = vmatmul.f32.gmra.mxu0 %v533
  %v561 = vpop.f32.mrf.mxu0
  %v562 = vadd.f32 0.0, %v561
  %563 = vdwg.mxu0
  %v564 = vmax.f32 %v514, %v553
  %v565 = vmax.f32 %v515, %v556
  %v566 = vmax.f32 %v516, %v559
  %v567 = vmax.f32 %v517, %v562
  %s568 = scalar_lea.vmem %s0, 352
  %v569 = vld [vmem:[%s568] sm:$0xff]
  %v570 = vld [vmem:[%s568 + $0x8] sm:$0xff]
  %v571 = vld [vmem:[%s568 + $0x10] sm:$0xff]
  %v572 = vld [vmem:[%s568 + $0x18] sm:$0xff]
  %v574 = vsel %vm22, %v569, 0
  %v577 = vsel %vm22, %v570, 0
  %v580 = vsel %vm22, %v571, 0
  %v583 = vsel %vm22, %v572, 0
  %585 = vmatpush.msra.mxu0 0.0
  %586 = vmatpush.msra.mxu0 0.0
  %587 = vmatpush.msra.mxu0 0.0
  %588 = vmatpush.msra.mxu0 0.0
  %589 = vmatpush.msra.mxu0 0.0
  %590 = vmatpush.msra.mxu0 0.0
  %591 = vmatpush.msra.mxu0 0.0
  %592 = vmatpush.msra.mxu0 0.0
  %593 = vmatpush.msra.mxu0 0.0
  %594 = vmatpush.msra.mxu0 0.0
  %595 = vmatpush.msra.mxu0 0.0
  %596 = vmatpush.msra.mxu0 0.0
  %597 = vmatpush.msra.mxu0 %v37
  %598 = vmatpush.msra.mxu0 %v16
  %599 = vmatpush.msra.mxu0 %v15
  %600 = vmatpush.msra.mxu0 %v14
  %601 = vmatmul.f32.gmra.mxu0 %v574
  %v602 = vpop.f32.mrf.mxu0
  %v603 = vadd.f32 0.0, %v602
  %604 = vmatmul.f32.gmra.mxu0 %v577
  %v605 = vpop.f32.mrf.mxu0
  %v606 = vadd.f32 0.0, %v605
  %607 = vmatmul.f32.gmra.mxu0 %v580
  %v608 = vpop.f32.mrf.mxu0
  %v609 = vadd.f32 0.0, %v608
  %610 = vmatmul.f32.gmra.mxu0 %v583
  %v611 = vpop.f32.mrf.mxu0
  %v612 = vadd.f32 0.0, %v611
  %613 = vdwg.mxu0
  %v614 = vmax.f32 %v564, %v603
  %v615 = vmax.f32 %v565, %v606
  %v616 = vmax.f32 %v566, %v609
  %v617 = vmax.f32 %v567, %v612
  %s618 = scalar_lea.vmem %s0, 384
  %v619 = vld [vmem:[%s618] sm:$0xff]
  %v620 = vld [vmem:[%s618 + $0x8] sm:$0xff]
  %v621 = vld [vmem:[%s618 + $0x10] sm:$0xff]
  %v622 = vld [vmem:[%s618 + $0x18] sm:$0xff]
  %v624 = vsel %vm22, %v619, 0
  %v627 = vsel %vm22, %v620, 0
  %v630 = vsel %vm22, %v621, 0
  %v633 = vsel %vm22, %v622, 0
  %635 = vmatpush.msra.mxu0 0.0
  %636 = vmatpush.msra.mxu0 0.0
  %637 = vmatpush.msra.mxu0 0.0
  %638 = vmatpush.msra.mxu0 0.0
  %639 = vmatpush.msra.mxu0 0.0
  %640 = vmatpush.msra.mxu0 0.0
  %641 = vmatpush.msra.mxu0 0.0
  %642 = vmatpush.msra.mxu0 0.0
  %643 = vmatpush.msra.mxu0 0.0
  %644 = vmatpush.msra.mxu0 0.0
  %645 = vmatpush.msra.mxu0 0.0
  %646 = vmatpush.msra.mxu0 0.0
  %647 = vmatpush.msra.mxu0 %v37
  %648 = vmatpush.msra.mxu0 %v16
  %649 = vmatpush.msra.mxu0 %v15
  %650 = vmatpush.msra.mxu0 %v14
  %651 = vmatmul.f32.gmra.mxu0 %v624
  %v652 = vpop.f32.mrf.mxu0
  %v653 = vadd.f32 0.0, %v652
  %654 = vmatmul.f32.gmra.mxu0 %v627
  %v655 = vpop.f32.mrf.mxu0
  %v656 = vadd.f32 0.0, %v655
  %657 = vmatmul.f32.gmra.mxu0 %v630
  %v658 = vpop.f32.mrf.mxu0
  %v659 = vadd.f32 0.0, %v658
  %660 = vmatmul.f32.gmra.mxu0 %v633
  %v661 = vpop.f32.mrf.mxu0
  %v662 = vadd.f32 0.0, %v661
  %663 = vdwg.mxu0
  %v664 = vmax.f32 %v614, %v653
  %v665 = vmax.f32 %v615, %v656
  %v666 = vmax.f32 %v616, %v659
  %v667 = vmax.f32 %v617, %v662
  %s668 = scalar_lea.vmem %s0, 416
  %v669 = vld [vmem:[%s668] sm:$0xff]
  %v670 = vld [vmem:[%s668 + $0x8] sm:$0xff]
  %v671 = vld [vmem:[%s668 + $0x10] sm:$0xff]
  %v672 = vld [vmem:[%s668 + $0x18] sm:$0xff]
  %v674 = vsel %vm22, %v669, 0
  %v677 = vsel %vm22, %v670, 0
  %v680 = vsel %vm22, %v671, 0
  %v683 = vsel %vm22, %v672, 0
  %685 = vmatpush.msra.mxu0 0.0
  %686 = vmatpush.msra.mxu0 0.0
  %687 = vmatpush.msra.mxu0 0.0
  %688 = vmatpush.msra.mxu0 0.0
  %689 = vmatpush.msra.mxu0 0.0
  %690 = vmatpush.msra.mxu0 0.0
  %691 = vmatpush.msra.mxu0 0.0
  %692 = vmatpush.msra.mxu0 0.0
  %693 = vmatpush.msra.mxu0 0.0
  %694 = vmatpush.msra.mxu0 0.0
  %695 = vmatpush.msra.mxu0 0.0
  %696 = vmatpush.msra.mxu0 0.0
  %697 = vmatpush.msra.mxu0 %v37
  %698 = vmatpush.msra.mxu0 %v16
  %699 = vmatpush.msra.mxu0 %v15
  %700 = vmatpush.msra.mxu0 %v14
  %701 = vmatmul.f32.gmra.mxu0 %v674
  %v702 = vpop.f32.mrf.mxu0
  %v703 = vadd.f32 0.0, %v702
  %704 = vmatmul.f32.gmra.mxu0 %v677
  %v705 = vpop.f32.mrf.mxu0
  %v706 = vadd.f32 0.0, %v705
  %707 = vmatmul.f32.gmra.mxu0 %v680
  %v708 = vpop.f32.mrf.mxu0
  %v709 = vadd.f32 0.0, %v708
  %710 = vmatmul.f32.gmra.mxu0 %v683
  %v711 = vpop.f32.mrf.mxu0
  %v712 = vadd.f32 0.0, %v711
  %713 = vdwg.mxu0
  %v714 = vmax.f32 %v664, %v703
  %v715 = vmax.f32 %v665, %v706
  %v716 = vmax.f32 %v666, %v709
  %v717 = vmax.f32 %v667, %v712
  %s718 = scalar_lea.vmem %s0, 448
  %v719 = vld [vmem:[%s718] sm:$0xff]
  %v720 = vld [vmem:[%s718 + $0x8] sm:$0xff]
  %v721 = vld [vmem:[%s718 + $0x10] sm:$0xff]
  %v722 = vld [vmem:[%s718 + $0x18] sm:$0xff]
  %v724 = vsel %vm22, %v719, 0
  %v727 = vsel %vm22, %v720, 0
  %v730 = vsel %vm22, %v721, 0
  %v733 = vsel %vm22, %v722, 0
  %735 = vmatpush.msra.mxu0 0.0
  %736 = vmatpush.msra.mxu0 0.0
  %737 = vmatpush.msra.mxu0 0.0
  %738 = vmatpush.msra.mxu0 0.0
  %739 = vmatpush.msra.mxu0 0.0
  %740 = vmatpush.msra.mxu0 0.0
  %741 = vmatpush.msra.mxu0 0.0
  %742 = vmatpush.msra.mxu0 0.0
  %743 = vmatpush.msra.mxu0 0.0
  %744 = vmatpush.msra.mxu0 0.0
  %745 = vmatpush.msra.mxu0 0.0
  %746 = vmatpush.msra.mxu0 0.0
  %747 = vmatpush.msra.mxu0 %v37
  %748 = vmatpush.msra.mxu0 %v16
  %749 = vmatpush.msra.mxu0 %v15
  %750 = vmatpush.msra.mxu0 %v14
  %751 = vmatmul.f32.gmra.mxu0 %v724
  %v752 = vpop.f32.mrf.mxu0
  %v753 = vadd.f32 0.0, %v752
  %754 = vmatmul.f32.gmra.mxu0 %v727
  %v755 = vpop.f32.mrf.mxu0
  %v756 = vadd.f32 0.0, %v755
  %757 = vmatmul.f32.gmra.mxu0 %v730
  %v758 = vpop.f32.mrf.mxu0
  %v759 = vadd.f32 0.0, %v758
  %760 = vmatmul.f32.gmra.mxu0 %v733
  %v761 = vpop.f32.mrf.mxu0
  %v762 = vadd.f32 0.0, %v761
  %763 = vdwg.mxu0
  %v764 = vmax.f32 %v714, %v753
  %v765 = vmax.f32 %v715, %v756
  %v766 = vmax.f32 %v716, %v759
  %v767 = vmax.f32 %v717, %v762
  %s768 = scalar_lea.vmem %s0, 480
  %v769 = vld [vmem:[%s768] sm:$0xff]
  %v770 = vld [vmem:[%s768 + $0x8] sm:$0xff]
  %v771 = vld [vmem:[%s768 + $0x10] sm:$0xff]
  %v772 = vld [vmem:[%s768 + $0x18] sm:$0xff]
  %v774 = vsel %vm22, %v769, 0
  %v777 = vsel %vm22, %v770, 0
  %v780 = vsel %vm22, %v771, 0
  %v783 = vsel %vm22, %v772, 0
  %785 = vmatpush.msra.mxu0 0.0
  %786 = vmatpush.msra.mxu0 0.0
  %787 = vmatpush.msra.mxu0 0.0
  %788 = vmatpush.msra.mxu0 0.0
  %789 = vmatpush.msra.mxu0 0.0
  %790 = vmatpush.msra.mxu0 0.0
  %791 = vmatpush.msra.mxu0 0.0
  %792 = vmatpush.msra.mxu0 0.0
  %793 = vmatpush.msra.mxu0 0.0
  %794 = vmatpush.msra.mxu0 0.0
  %795 = vmatpush.msra.mxu0 0.0
  %796 = vmatpush.msra.mxu0 0.0
  %797 = vmatpush.msra.mxu0 %v37
  %798 = vmatpush.msra.mxu0 %v16
  %799 = vmatpush.msra.mxu0 %v15
  %800 = vmatpush.msra.mxu0 %v14
  %801 = vmatmul.f32.gmra.mxu0 %v774
  %v802 = vpop.f32.mrf.mxu0
  %v803 = vadd.f32 0.0, %v802
  %804 = vmatmul.f32.gmra.mxu0 %v777
  %v805 = vpop.f32.mrf.mxu0
  %v806 = vadd.f32 0.0, %v805
  %807 = vmatmul.f32.gmra.mxu0 %v780
  %v808 = vpop.f32.mrf.mxu0
  %v809 = vadd.f32 0.0, %v808
  %810 = vmatmul.f32.gmra.mxu0 %v783
  %v811 = vpop.f32.mrf.mxu0
  %v812 = vadd.f32 0.0, %v811
  %813 = vdwg.mxu0
  %v814 = vmax.f32 %v764, %v803
  %v815 = vmax.f32 %v765, %v806
  %v816 = vmax.f32 %v766, %v809
  %v817 = vmax.f32 %v767, %v812
  %v818 = vld [vmem:[%s2] sm:$0x1]
  %v820 = vperm.slane %v818, 0
  %v822 = vadd.f32 %v814, %v820
  %v823 = vadd.f32 %v815, %v820
  %v824 = vadd.f32 %v816, %v820
  %v825 = vadd.f32 %v817, %v820
  %v826 = vmax.f32 %v822, 0.0
  %v827 = vmax.f32 %v823, 0.0
  %v828 = vmax.f32 %v824, 0.0
  %v829 = vmax.f32 %v825, 0.0
  %830 = vst [vmem:[%s3] sm:$0xff] %v826
  %831 = vst [vmem:[%s3 + $0x8] sm:$0xff] %v827
  %832 = vst [vmem:[%s3 + $0x10] sm:$0xff] %v828
  %833 = vst [vmem:[%s3 + $0x18] sm:$0xff] %v829
  // Predicated region
  $region14: #{ensemble_forward.2} parent=0 // pred_check
    _
  $region15: #{ensemble_forward.2} parent=0 // pred_check_branch
    %835 = sbr.rel (0) target = $region17
  $region16: #{ensemble_forward.2} parent=0 // pred_region
    _
  $region17: #{ensemble_forward.2} parent=0 // pred_fallthru
    _
  // Predicated region
  $region18: #{ensemble_forward.2} parent=0 // pred_check
    _
  $region19: #{ensemble_forward.2} parent=0 // pred_check_branch
    %837 = sbr.rel (0) target = $region21
  $region20: #{ensemble_forward.2} parent=0 // pred_region
    _
  $region21: #{ensemble_forward.2} parent=0 // pred_fallthru
    _

// kernel: ensemble_forward.3
$region0: #{ensemble_forward.3}
  #allocation0 [shape = 'u32[]', space=smem, size = 0x4, offset = 0x4, fixed_abs, tag = 'smem constant byte address 0x4 - core index']
  #allocation1 [shape = 'u32[72,128]{1,0:T(1,128)}', space=vmem, size = 0x9000, scoped, tag = 'internal scratch']
  #allocation2 [shape = 'f32[182,32]{1,0:T(8,128)}', space=vmem, size = 0x17000, scoped, tag = 'scratch operand']
  #allocation3 [shape = 'f32[128,32]{1,0:T(8,128)}', space=vmem, size = 0x10000, scoped, tag = 'scratch operand']
  %s0 = inlined_call_operand.vmem [shape: f32[5,200,16], index: 0, kind: input, shape index: {}]
  %s1 = inlined_call_operand.vmem [shape: f32[5,25,16,32], index: 1, kind: input, shape index: {}]
  %s2 = inlined_call_operand.vmem [shape: f32[5,1,32], index: 2, kind: input, shape index: {}]
  %s3 = inlined_call_operand.vmem [shape: f32[5,32,1024], index: 3, kind: input, shape index: {}]
  %s4 = inlined_call_operand.vmem [shape: f32[5,1,1024], index: 4, kind: input, shape index: {}]
  %s5 = inlined_call_operand.vmem [shape: f32[5,1024,512], index: 5, kind: input, shape index: {}]
  %s6 = inlined_call_operand.vmem [shape: f32[5,1,512], index: 6, kind: input, shape index: {}]
  %s7 = inlined_call_operand.vmem [shape: f32[5,512,128], index: 7, kind: input, shape index: {}]
  %s8 = inlined_call_operand.vmem [shape: f32[5,1,128], index: 8, kind: input, shape index: {}]
  %s9 = inlined_call_operand.vmem [shape: f32[5,2,128], index: 9, kind: output, shape index: {}]
  %s10 = sld [smem:[#allocation0]]
  $region69: #{ensemble_forward.3} parent=0
    _
  %s12 = ssub.s32 1, %s10
  %s13 = scalar_select 0, %s12, %s10
  loop: start=0, step=1, limit=7
  $region2: #{ensemble_forward.3} parent=0 // loop_pre_header
    _
  $region3: #{ensemble_forward.3} parent=0 // loop_header
    %s15 = sphi 0, %s19
    %p16 = scmp.ge.s32.totalorder %s15, 7
    %s25 = sphi 0, %s27
    %s28 = sphi 0, %s25
    %s29 = sphi 0, %s28
    %s45 = sphi 0, %s29
    %s51 = sphi 0, %s53
    %s54 = sphi 0, %s51
    %s55 = sphi 0, %s54
    %s71 = sphi 0, %s55
    %s77 = sphi 0, %s79
    %s80 = sphi 0, %s77
    %s81 = sphi 0, %s80
    %s97 = sphi 0, %s81
    %s103 = sphi 0, %s105
    %s106 = sphi 0, %s103
    %s107 = sphi 0, %s106
    %s123 = sphi 0, %s107
    %s129 = sphi 0, %s131
    %s132 = sphi 0, %s129
    %s133 = sphi 0, %s132
    %s149 = sphi 0, %s133
    %s155 = sphi 0, %s157
    %s158 = sphi 0, %s155
    %s159 = sphi 0, %s158
    %s175 = sphi 0, %s159
    %s181 = sphi 0, %s183
    %s184 = sphi 0, %s181
    %s185 = sphi 0, %s184
    %s201 = sphi 0, %s185
    %s207 = sphi 0, %s209
    %s210 = sphi 0, %s207
    %s211 = sphi 0, %s210
    %s227 = sphi 0, %s211
    %s233 = sphi 0, %s235
    %s236 = sphi 0, %s233
    %s237 = sphi 0, %s236
    %s253 = sphi 0, %s237
    %s259 = sphi 0, %s261
    %s262 = sphi 0, %s259
    %s263 = sphi 0, %s262
    %s279 = sphi 0, %s263
  $region4: #{ensemble_forward.3} parent=0 // loop_header_branch
    %18 = sbr.rel (%p16) target = $region8
  $region5: #{ensemble_forward.3} parent=0 // loop_body
    %s20 = ssub.s32 %s15, 1
    %s21 = ssub.s32 %s15, 2
    %s22 = sadd.s32 %s15, 1
    %s23 = ssub.s32 %s15, %s22
    %p24 = scmp.eq.s32.totalorder %s23, 0
    %s26 = sadd.s32 %s25, 1
    %s27 = scalar_select %p24, %s25, %s26
    %p30 = pneg %p24
    %p31 = scmp.eq.s32.totalorder %s15, 4
    %p32 = por %p30, %p31
    %p33 = scmp.ne.s32.totalorder %s25, %s28
    %p34 = scmp.eq.s32.totalorder %s15, 0
    %p35 = por %p33, %p34
    %p36 = scmp.ne.s32.totalorder %s25, %s28
    %p37 = scmp.eq.s32.totalorder %s20, 4
    %p38 = por %p36, %p37
    %p39 = scmp.ne.s32.totalorder %s28, %s29
    %p40 = scmp.eq.s32.totalorder %s20, 0
    %p41 = por %p39, %p40
    %p42 = scmp.ne.s32.totalorder %s28, %s29
    %p43 = scmp.eq.s32.totalorder %s21, 4
    %p44 = por %p42, %p43
    %p46 = scmp.ne.s32.totalorder %s29, %s45
    %p47 = scmp.eq.s32.totalorder %s21, 0
    %p48 = por %p46, %p47
    %s49 = ssub.s32 %s15, %s22
    %p50 = scmp.eq.s32.totalorder %s49, 0
    %s52 = sadd.s32 %s51, 1
    %s53 = scalar_select %p50, %s51, %s52
    %p56 = pneg %p50
    %p57 = scmp.eq.s32.totalorder %s15, 4
    %p58 = por %p56, %p57
    %p59 = scmp.ne.s32.totalorder %s51, %s54
    %p60 = scmp.eq.s32.totalorder %s15, 0
    %p61 = por %p59, %p60
    %p62 = scmp.ne.s32.totalorder %s51, %s54
    %p63 = scmp.eq.s32.totalorder %s20, 4
    %p64 = por %p62, %p63
    %p65 = scmp.ne.s32.totalorder %s54, %s55
    %p66 = scmp.eq.s32.totalorder %s20, 0
    %p67 = por %p65, %p66
    %p68 = scmp.ne.s32.totalorder %s54, %s55
    %p69 = scmp.eq.s32.totalorder %s21, 4
    %p70 = por %p68, %p69
    %p72 = scmp.ne.s32.totalorder %s55, %s71
    %p73 = scmp.eq.s32.totalorder %s21, 0
    %p74 = por %p72, %p73
    %s75 = ssub.s32 %s15, %s22
    %p76 = scmp.eq.s32.totalorder %s75, 0
    %s78 = sadd.s32 %s77, 1
    %s79 = scalar_select %p76, %s77, %s78
    %p82 = pneg %p76
    %p83 = scmp.eq.s32.totalorder %s15, 4
    %p84 = por %p82, %p83
    %p85 = scmp.ne.s32.totalorder %s77, %s80
    %p86 = scmp.eq.s32.totalorder %s15, 0
    %p87 = por %p85, %p86
    %p88 = scmp.ne.s32.totalorder %s77, %s80
    %p89 = scmp.eq.s32.totalorder %s20, 4
    %p90 = por %p88, %p89
    %p91 = scmp.ne.s32.totalorder %s80, %s81
    %p92 = scmp.eq.s32.totalorder %s20, 0
    %p93 = por %p91, %p92
    %p94 = scmp.ne.s32.totalorder %s80, %s81
    %p95 = scmp.eq.s32.totalorder %s21, 4
    %p96 = por %p94, %p95
    %p98 = scmp.ne.s32.totalorder %s81, %s97
    %p99 = scmp.eq.s32.totalorder %s21, 0
    %p100 = por %p98, %p99
    %s101 = ssub.s32 %s15, %s22
    %p102 = scmp.eq.s32.totalorder %s101, 0
    %s104 = sadd.s32 %s103, 1
    %s105 = scalar_select %p102, %s103, %s104
    %p108 = pneg %p102
    %p109 = scmp.eq.s32.totalorder %s15, 4
    %p110 = por %p108, %p109
    %p111 = scmp.ne.s32.totalorder %s103, %s106
    %p112 = scmp.eq.s32.totalorder %s15, 0
    %p113 = por %p111, %p112
    %p114 = scmp.ne.s32.totalorder %s103, %s106
    %p115 = scmp.eq.s32.totalorder %s20, 4
    %p116 = por %p114, %p115
    %p117 = scmp.ne.s32.totalorder %s106, %s107
    %p118 = scmp.eq.s32.totalorder %s20, 0
    %p119 = por %p117, %p118
    %p120 = scmp.ne.s32.totalorder %s106, %s107
    %p121 = scmp.eq.s32.totalorder %s21, 4
    %p122 = por %p120, %p121
    %p124 = scmp.ne.s32.totalorder %s107, %s123
    %p125 = scmp.eq.s32.totalorder %s21, 0
    %p126 = por %p124, %p125
    %s127 = ssub.s32 %s15, %s22
    %p128 = scmp.eq.s32.totalorder %s127, 0
    %s130 = sadd.s32 %s129, 1
    %s131 = scalar_select %p128, %s129, %s130
    %p134 = pneg %p128
    %p135 = scmp.eq.s32.totalorder %s15, 4
    %p136 = por %p134, %p135
    %p137 = scmp.ne.s32.totalorder %s129, %s132
    %p138 = scmp.eq.s32.totalorder %s15, 0
    %p139 = por %p137, %p138
    %p140 = scmp.ne.s32.totalorder %s129, %s132
    %p141 = scmp.eq.s32.totalorder %s20, 4
    %p142 = por %p140, %p141
    %p143 = scmp.ne.s32.totalorder %s132, %s133
    %p144 = scmp.eq.s32.totalorder %s20, 0
    %p145 = por %p143, %p144
    %p146 = scmp.ne.s32.totalorder %s132, %s133
    %p147 = scmp.eq.s32.totalorder %s21, 4
    %p148 = por %p146, %p147
    %p150 = scmp.ne.s32.totalorder %s133, %s149
    %p151 = scmp.eq.s32.totalorder %s21, 0
    %p152 = por %p150, %p151
    %s153 = ssub.s32 %s15, %s22
    %p154 = scmp.eq.s32.totalorder %s153, 0
    %s156 = sadd.s32 %s155, 1
    %s157 = scalar_select %p154, %s155, %s156
    %p160 = pneg %p154
    %p161 = scmp.eq.s32.totalorder %s15, 4
    %p162 = por %p160, %p161
    %p163 = scmp.ne.s32.totalorder %s155, %s158
    %p164 = scmp.eq.s32.totalorder %s15, 0
    %p165 = por %p163, %p164
    %p166 = scmp.ne.s32.totalorder %s155, %s158
    %p167 = scmp.eq.s32.totalorder %s20, 4
    %p168 = por %p166, %p167
    %p169 = scmp.ne.s32.totalorder %s158, %s159
    %p170 = scmp.eq.s32.totalorder %s20, 0
    %p171 = por %p169, %p170
    %p172 = scmp.ne.s32.totalorder %s158, %s159
    %p173 = scmp.eq.s32.totalorder %s21, 4
    %p174 = por %p172, %p173
    %p176 = scmp.ne.s32.totalorder %s159, %s175
    %p177 = scmp.eq.s32.totalorder %s21, 0
    %p178 = por %p176, %p177
    %s179 = ssub.s32 %s15, %s22
    %p180 = scmp.eq.s32.totalorder %s179, 0
    %s182 = sadd.s32 %s181, 1
    %s183 = scalar_select %p180, %s181, %s182
    %p186 = pneg %p180
    %p187 = scmp.eq.s32.totalorder %s15, 4
    %p188 = por %p186, %p187
    %p189 = scmp.ne.s32.totalorder %s181, %s184
    %p190 = scmp.eq.s32.totalorder %s15, 0
    %p191 = por %p189, %p190
    %p192 = scmp.ne.s32.totalorder %s181, %s184
    %p193 = scmp.eq.s32.totalorder %s20, 4
    %p194 = por %p192, %p193
    %p195 = scmp.ne.s32.totalorder %s184, %s185
    %p196 = scmp.eq.s32.totalorder %s20, 0
    %p197 = por %p195, %p196
    %p198 = scmp.ne.s32.totalorder %s184, %s185
    %p199 = scmp.eq.s32.totalorder %s21, 4
    %p200 = por %p198, %p199
    %p202 = scmp.ne.s32.totalorder %s185, %s201
    %p203 = scmp.eq.s32.totalorder %s21, 0
    %p204 = por %p202, %p203
    %s205 = ssub.s32 %s15, %s22
    %p206 = scmp.eq.s32.totalorder %s205, 0
    %s208 = sadd.s32 %s207, 1
    %s209 = scalar_select %p206, %s207, %s208
    %p212 = pneg %p206
    %p213 = scmp.eq.s32.totalorder %s15, 4
    %p214 = por %p212, %p213
    %p215 = scmp.ne.s32.totalorder %s207, %s210
    %p216 = scmp.eq.s32.totalorder %s15, 0
    %p217 = por %p215, %p216
    %p218 = scmp.ne.s32.totalorder %s207, %s210
    %p219 = scmp.eq.s32.totalorder %s20, 4
    %p220 = por %p218, %p219
    %p221 = scmp.ne.s32.totalorder %s210, %s211
    %p222 = scmp.eq.s32.totalorder %s20, 0
    %p223 = por %p221, %p222
    %p224 = scmp.ne.s32.totalorder %s210, %s211
    %p225 = scmp.eq.s32.totalorder %s21, 4
    %p226 = por %p224, %p225
    %p228 = scmp.ne.s32.totalorder %s211, %s227
    %p229 = scmp.eq.s32.totalorder %s21, 0
    %p230 = por %p228, %p229
    %s231 = ssub.s32 %s15, %s22
    %p232 = scmp.eq.s32.totalorder %s231, 0
    %s234 = sadd.s32 %s233, 1
    %s235 = scalar_select %p232, %s233, %s234
    %p238 = pneg %p232
    %p239 = scmp.eq.s32.totalorder %s15, 4
    %p240 = por %p238, %p239
    %p241 = scmp.ne.s32.totalorder %s233, %s236
    %p242 = scmp.eq.s32.totalorder %s15, 0
    %p243 = por %p241, %p242
    %p244 = scmp.ne.s32.totalorder %s233, %s236
    %p245 = scmp.eq.s32.totalorder %s20, 4
    %p246 = por %p244, %p245
    %p247 = scmp.ne.s32.totalorder %s236, %s237
    %p248 = scmp.eq.s32.totalorder %s20, 0
    %p249 = por %p247, %p248
    %p250 = scmp.ne.s32.totalorder %s236, %s237
    %p251 = scmp.eq.s32.totalorder %s21, 4
    %p252 = por %p250, %p251
    %p254 = scmp.ne.s32.totalorder %s237, %s253
    %p255 = scmp.eq.s32.totalorder %s21, 0
    %p256 = por %p254, %p255
    %s257 = ssub.s32 %s15, %s22
    %p258 = scmp.eq.s32.totalorder %s257, 0
    %s260 = sadd.s32 %s259, 1
    %s261 = scalar_select %p258, %s259, %s260
    %p264 = pneg %p258
    %p265 = scmp.eq.s32.totalorder %s15, 4
    %p266 = por %p264, %p265
    %p267 = scmp.ne.s32.totalorder %s259, %s262
    %p268 = scmp.eq.s32.totalorder %s15, 0
    %p269 = por %p267, %p268
    %p270 = scmp.ne.s32.totalorder %s259, %s262
    %p271 = scmp.eq.s32.totalorder %s20, 4
    %p272 = por %p270, %p271
    %p273 = scmp.ne.s32.totalorder %s262, %s263
    %p274 = scmp.eq.s32.totalorder %s20, 0
    %p275 = por %p273, %p274
    %p276 = scmp.ne.s32.totalorder %s262, %s263
    %p277 = scmp.eq.s32.totalorder %s21, 4
    %p278 = por %p276, %p277
    %p280 = scmp.ne.s32.totalorder %s263, %s279
    %p281 = scmp.eq.s32.totalorder %s21, 0
    %p282 = por %p280, %p281
    %p283 = scmp.le.s32.totalorder 1, %s15
    %p284 = scmp.lt.s32.totalorder %s15, 6
    %p285 = pnand %p283, %p284
    %p286 = pneg %p285
    // Predicated region
    $region9: #{ensemble_forward.3} parent=5 // pred_check
      _
    $region10: #{ensemble_forward.3} parent=5 // pred_check_branch
      %288 = sbr.rel (%p285) target = $region12
    $region11: #{ensemble_forward.3} parent=5 // pred_region
      %s289 = ssub.s32 %s15, 1
    $region12: #{ensemble_forward.3} parent=5 // pred_fallthru
      _
    %p290 = scmp.lt.s32.totalorder %s15, 5
    // Predicated region
    $region13: #{ensemble_forward.3} parent=5 // pred_check
      %p291 = pneg %p290
    $region14: #{ensemble_forward.3} parent=5 // pred_check_branch
      %293 = sbr.rel (%p291) target = $region16
    $region15: #{ensemble_forward.3} parent=5 // pred_region
      // Predicated region
      $region17: #{ensemble_forward.3} parent=15 // pred_check
        %p294 = pneg %p35
      $region18: #{ensemble_forward.3} parent=15 // pred_check_branch
        %296 = sbr.rel (%p294) target = $region20
      $region19: #{ensemble_forward.3} parent=15 // pred_region
        %p297 = scmp.lt.s32.totalorder %s15, 4
        %s298 = scalar_select %p297, %s15, 4
        %s299 = smul.addr %s298, 25
        %s300 = smul.addr %s299, 8
        %s301 = scalar_lea.vmem %s0, %s300
      $region20: #{ensemble_forward.3} parent=15 // pred_fallthru
        _
      // Predicated region
      $region21: #{ensemble_forward.3} parent=15 // pred_check
        %p302 = pneg %p61
      $region22: #{ensemble_forward.3} parent=15 // pred_check_branch
        %304 = sbr.rel (%p302) target = $region24
      $region23: #{ensemble_forward.3} parent=15 // pred_region
        %p305 = scmp.lt.s32.totalorder %s15, 4
        %s306 = scalar_select %p305, %s15, 4
        %s307 = smul.addr %s306, 50
        %s308 = smul.addr %s307, 8
        %s309 = scalar_lea.vmem %s1, %s308
      $region24: #{ensemble_forward.3} parent=15 // pred_fallthru
        _
      // Predicated region
      $region25: #{ensemble_forward.3} parent=15 // pred_check
        %p310 = pneg %p87
      $region26: #{ensemble_forward.3} parent=15 // pred_check_branch
        %312 = sbr.rel (%p310) target = $region28
      $region27: #{ensemble_forward.3} parent=15 // pred_region
        %p313 = scmp.lt.s32.totalorder %s15, 4
        %s314 = scalar_select %p313, %s15, 4
        %s315 = scalar_lea.vmem %s2, %s314
      $region28: #{ensemble_forward.3} parent=15 // pred_fallthru
        _
      // Predicated region
      $region29: #{ensemble_forward.3} parent=15 // pred_check
        %p316 = pneg %p113
      $region30: #{ensemble_forward.3} parent=15 // pred_check_branch
        %318 = sbr.rel (%p316) target = $region32
      $region31: #{ensemble_forward.3} parent=15 // pred_region
        %p319 = scmp.lt.s32.totalorder %s15, 4
        %s320 = scalar_select %p319, %s15, 4
        %s321 = smul.addr %s320, 32
        %s322 = smul.addr %s321, 8
        %s323 = scalar_lea.vmem %s3, %s322
      $region32: #{ensemble_forward.3} parent=15 // pred_fallthru
        _
      // Predicated region
      $region33: #{ensemble_forward.3} parent=15 // pred_check
        %p324 = pneg %p139
      $region34: #{ensemble_forward.3} parent=15 // pred_check_branch
        %326 = sbr.rel (%p324) target = $region36
      $region35: #{ensemble_forward.3} parent=15 // pred_region
        %p327 = scmp.lt.s32.totalorder %s15, 4
        %s328 = scalar_select %p327, %s15, 4
        %s329 = smul.addr %s328, 8
        %s330 = scalar_lea.vmem %s4, %s329
      $region36: #{ensemble_forward.3} parent=15 // pred_fallthru
        _
      // Predicated region
      $region37: #{ensemble_forward.3} parent=15 // pred_check
        %p331 = pneg %p165
      $region38: #{ensemble_forward.3} parent=15 // pred_check_branch
        %333 = sbr.rel (%p331) target = $region40
      $region39: #{ensemble_forward.3} parent=15 // pred_region
        %p334 = scmp.lt.s32.totalorder %s15, 4
        %s335 = scalar_select %p334, %s15, 4
        %s336 = smul.addr %s335, 512
        %s337 = smul.addr %s336, 8
        %s338 = scalar_lea.vmem %s5, %s337
      $region40: #{ensemble_forward.3} parent=15 // pred_fallthru
        _
      // Predicated region
      $region41: #{ensemble_forward.3} parent=15 // pred_check
        %p339 = pneg %p191
      $region42: #{ensemble_forward.3} parent=15 // pred_check_branch
        %341 = sbr.rel (%p339) target = $region44
      $region43: #{ensemble_forward.3} parent=15 // pred_region
        %p342 = scmp.lt.s32.totalorder %s15, 4
        %s343 = scalar_select %p342, %s15, 4
        %s344 = smul.addr %s343, 4
        %s345 = scalar_lea.vmem %s6, %s344
      $region44: #{ensemble_forward.3} parent=15 // pred_fallthru
        _
      // Predicated region
      $region45: #{ensemble_forward.3} parent=15 // pred_check
        %p346 = pneg %p217
      $region46: #{ensemble_forward.3} parent=15 // pred_check_branch
        %348 = sbr.rel (%p346) target = $region48
      $region47: #{ensemble_forward.3} parent=15 // pred_region
        %p349 = scmp.lt.s32.totalorder %s15, 4
        %s350 = scalar_select %p349, %s15, 4
        %s351 = smul.addr %s350, 64
        %s352 = smul.addr %s351, 8
        %s353 = scalar_lea.vmem %s7, %s352
      $region48: #{ensemble_forward.3} parent=15 // pred_fallthru
        _
      // Predicated region
      $region49: #{ensemble_forward.3} parent=15 // pred_check
        %p354 = pneg %p243
      $region50: #{ensemble_forward.3} parent=15 // pred_check_branch
        %356 = sbr.rel (%p354) target = $region52
      $region51: #{ensemble_forward.3} parent=15 // pred_region
        %p357 = scmp.lt.s32.totalorder %s15, 4
        %s358 = scalar_select %p357, %s15, 4
        %s359 = scalar_lea.vmem %s8, %s358
      $region52: #{ensemble_forward.3} parent=15 // pred_fallthru
        _
    $region16: #{ensemble_forward.3} parent=5 // pred_fallthru
      _
    %p360 = scmp.le.s32.totalorder 1, %s15
    %p361 = scmp.lt.s32.totalorder %s15, 6
    %p362 = pnand %p360, %p361
    %p363 = pneg %p362
    // Predicated region
    $region53: #{ensemble_forward.3} parent=5 // pred_check
      _
    $region54: #{ensemble_forward.3} parent=5 // pred_check_branch
      %365 = sbr.rel (%p362) target = $region56
    $region55: #{ensemble_forward.3} parent=5 // pred_region
      %s366 = ssub.s32 %s15, 1
      %p367 = scmp.lt.s32.totalorder %s20, 4
      %s368 = scalar_select %p367, %s20, 4
      %s369 = smul.addr %s368, 25
      %s370 = smul.addr %s369, 8
      %s371 = scalar_lea.vmem %s0, %s370
      %p372 = pneg %p41
      %p373 = pneg %p38
      %p374 = scmp.lt.s32.totalorder %s20, 4
      %s375 = scalar_select %p374, %s20, 4
      %s376 = smul.addr %s375, 50
      %s377 = smul.addr %s376, 8
      %s378 = scalar_lea.vmem %s1, %s377
      %p379 = pneg %p67
      %p380 = pneg %p64
      %p381 = scmp.lt.s32.totalorder %s20, 4
      %s382 = scalar_select %p381, %s20, 4
      %s383 = scalar_lea.vmem %s2, %s382
      %p384 = pneg %p93
      %p385 = pneg %p90
      %p386 = scmp.lt.s32.totalorder %s20, 4
      %s387 = scalar_select %p386, %s20, 4
      %s388 = smul.addr %s387, 32
      %s389 = smul.addr %s388, 8
      %s390 = scalar_lea.vmem %s3, %s389
      %p391 = pneg %p119
      %p392 = pneg %p116
      %p393 = scmp.lt.s32.totalorder %s20, 4
      %s394 = scalar_select %p393, %s20, 4
      %s395 = smul.addr %s394, 8
      %s396 = scalar_lea.vmem %s4, %s395
      %p397 = pneg %p145
      %p398 = pneg %p142
      %p399 = scmp.lt.s32.totalorder %s20, 4
      %s400 = scalar_select %p399, %s20, 4
      %s401 = smul.addr %s400, 512
      %s402 = smul.addr %s401, 8
      %s403 = scalar_lea.vmem %s5, %s402
      %p404 = pneg %p171
      %p405 = pneg %p168
      %p406 = scmp.lt.s32.totalorder %s20, 4
      %s407 = scalar_select %p406, %s20, 4
      %s408 = smul.addr %s407, 4
      %s409 = scalar_lea.vmem %s6, %s408
      %p410 = pneg %p197
      %p411 = pneg %p194
      %p412 = scmp.lt.s32.totalorder %s20, 4
      %s413 = scalar_select %p412, %s20, 4
      %s414 = smul.addr %s413, 64
      %s415 = smul.addr %s414, 8
      %s416 = scalar_lea.vmem %s7, %s415
      %p417 = pneg %p223
      %p418 = pneg %p220
      %p419 = scmp.lt.s32.totalorder %s20, 4
      %s420 = scalar_select %p419, %s20, 4
      %s421 = scalar_lea.vmem %s8, %s420
      %p422 = pneg %p249
      %p423 = pneg %p246
      %p424 = pneg %p275
      %p425 = pneg %p272
      %p426 = scmp.lt.s32.totalorder %s20, 4
      %s427 = scalar_select %p426, %s20, 4
      %s428 = smul.addr %s427, 2
      %s429 = scalar_lea.vmem %s9, %s428
      %p430 = scmp.lt.s32.totalorder %s20, 4
      %s431 = scalar_select %p430, %s20, 4
      %s432 = smul.addr %s431, 25
      %s433 = smul.addr %s432, 8
      %s434 = scalar_lea.vmem %s0, %s433
      %p435 = scmp.lt.s32.totalorder %s20, 4
      %s436 = scalar_select %p435, %s20, 4
      %s437 = smul.addr %s436, 50
      %s438 = smul.addr %s437, 8
      %s439 = scalar_lea.vmem %s1, %s438
      %p440 = scmp.lt.s32.totalorder %s20, 4
      %s441 = scalar_select %p440, %s20, 4
      %s442 = scalar_lea.vmem %s2, %s441
      %p443 = scmp.lt.s32.totalorder %s20, 4
      %s444 = scalar_select %p443, %s20, 4
      %s445 = smul.addr %s444, 32
      %s446 = smul.addr %s445, 8
      %s447 = scalar_lea.vmem %s3, %s446
      %p448 = scmp.lt.s32.totalorder %s20, 4
      %s449 = scalar_select %p448, %s20, 4
      %s450 = smul.addr %s449, 8
      %s451 = scalar_lea.vmem %s4, %s450
      %p452 = scmp.lt.s32.totalorder %s20, 4
      %s453 = scalar_select %p452, %s20, 4
      %s454 = smul.addr %s453, 512
      %s455 = smul.addr %s454, 8
      %s456 = scalar_lea.vmem %s5, %s455
      %p457 = scmp.lt.s32.totalorder %s20, 4
      %s458 = scalar_select %p457, %s20, 4
      %s459 = smul.addr %s458, 4
      %s460 = scalar_lea.vmem %s6, %s459
      %p461 = scmp.lt.s32.totalorder %s20, 4
      %s462 = scalar_select %p461, %s20, 4
      %s463 = smul.addr %s462, 64
      %s464 = smul.addr %s463, 8
      %s465 = scalar_lea.vmem %s7, %s464
      %p466 = scmp.lt.s32.totalorder %s20, 4
      %s467 = scalar_select %p466, %s20, 4
      %s468 = scalar_lea.vmem %s8, %s467
      %p469 = scmp.lt.s32.totalorder %s20, 4
      %s470 = scalar_select %p469, %s20, 4
      %s471 = smul.addr %s470, 2
      %s472 = scalar_lea.vmem %s9, %s471
      %v473 = vld [vmem:[%s434] sm:$0xff]
      %v474 = vld [vmem:[%s434 + $0x8] sm:$0xff]
      %v475 = vld [vmem:[%s434 + $0x10] sm:$0xff]
      %v476 = vld [vmem:[%s434 + $0x18] sm:$0xff]
      %v477 = vld [vmem:[%s434 + $0x20] sm:$0xff]
      %v478 = vld [vmem:[%s434 + $0x28] sm:$0xff]
      %v479 = vld [vmem:[%s434 + $0x30] sm:$0xff]
      %v480 = vld [vmem:[%s434 + $0x38] sm:$0xff]
      %v481 = vld [vmem:[%s434 + $0x40] sm:$0xff]
      %v482 = vld [vmem:[%s434 + $0x48] sm:$0xff]
      %v483 = vld [vmem:[%s434 + $0x50] sm:$0xff]
      %v484 = vld [vmem:[%s434 + $0x58] sm:$0xff]
      %v485 = vld [vmem:[%s434 + $0x60] sm:$0xff]
      %v486 = vld [vmem:[%s434 + $0x68] sm:$0xff]
      %v487 = vld [vmem:[%s434 + $0x70] sm:$0xff]
      %v488 = vld [vmem:[%s434 + $0x78] sm:$0xff]
      %v489 = vld [vmem:[%s439] sm:$0xff]
      %v490 = vld [vmem:[%s439 + $0x8] sm:$0xff]
      %v491 = vld [vmem:[%s434 + $0x2] sm:$0xff]
      %v492 = vld [vmem:[%s434 + $0xa] sm:$0xff]
      %v493 = vld [vmem:[%s434 + $0x12] sm:$0xff]
      %v494 = vld [vmem:[%s434 + $0x1a] sm:$0xff]
      %v495 = vld [vmem:[%s434 + $0x22] sm:$0xff]
      %v496 = vld [vmem:[%s434 + $0x2a] sm:$0xff]
      %v497 = vld [vmem:[%s434 + $0x32] sm:$0xff]
      %v498 = vld [vmem:[%s434 + $0x3a] sm:$0xff]
      %v499 = vld [vmem:[%s434 + $0x42] sm:$0xff]
      %v500 = vld [vmem:[%s434 + $0x4a] sm:$0xff]
      %v501 = vld [vmem:[%s434 + $0x52] sm:$0xff]
      %v502 = vld [vmem:[%s434 + $0x5a] sm:$0xff]
      %v503 = vld [vmem:[%s434 + $0x62] sm:$0xff]
      %v504 = vld [vmem:[%s434 + $0x6a] sm:$0xff]
      %v505 = vld [vmem:[%s434 + $0x72] sm:$0xff]
      %v506 = vld [vmem:[%s434 + $0x7a] sm:$0xff]
      %s507 = scalar_lea.vmem %s439, 16
      %v508 = vld [vmem:[%s507] sm:$0xff]
      %v509 = vld [vmem:[%s507 + $0x8] sm:$0xff]
      %vm510 = vcmask 130048
      %v512 = vsel %vm510, %v491, 0
      %v515 = vsel %vm510, %v492, 0
      %v518 = vsel %vm510, %v493, 0
      %v521 = vsel %vm510, %v494, 0
      %v524 = vsel %vm510, %v495, 0
      %v527 = vsel %vm510, %v496, 0
      %v530 = vsel %vm510, %v497, 0
      %v533 = vsel %vm510, %v498, 0
      %v536 = vsel %vm510, %v499, 0
      %v539 = vsel %vm510, %v500, 0
      %v542 = vsel %vm510, %v501, 0
      %v545 = vsel %vm510, %v502, 0
      %v548 = vsel %vm510, %v503, 0
      %v551 = vsel %vm510, %v504, 0
      %v554 = vsel %vm510, %v505, 0
      %v557 = vsel %vm510, %v506, 0
      %559 = vmatpush.msra.mxu0 0.0
      %560 = vmatpush.msra.mxu0 0.0
      %561 = vmatpush.msra.mxu0 0.0
      %562 = vmatpush.msra.mxu0 0.0
      %563 = vmatpush.msra.mxu0 0.0
      %564 = vmatpush.msra.mxu0 0.0
      %565 = vmatpush.msra.mxu0 0.0
      %566 = vmatpush.msra.mxu0 0.0
      %567 = vmatpush.msra.mxu0 0.0
      %568 = vmatpush.msra.mxu0 0.0
      %569 = vmatpush.msra.mxu0 0.0
      %570 = vmatpush.msra.mxu0 0.0
      %571 = vmatpush.msra.mxu0 0.0
      %572 = vmatpush.msra.mxu0 0.0
      %573 = vmatpush.msra.mxu0 %v509
      %574 = vmatpush.msra.mxu0 %v508
      %575 = vmatmul.f32.gmra.mxu0 %v512
      %v576 = vpop.f32.mrf.mxu0
      %v577 = vadd.f32 0.0, %v576
      %578 = vmatmul.f32.gmra.mxu0 %v515
      %v579 = vpop.f32.mrf.mxu0
      %v580 = vadd.f32 0.0, %v579
      %581 = vmatmul.f32.gmra.mxu0 %v518
      %v582 = vpop.f32.mrf.mxu0
      %v583 = vadd.f32 0.0, %v582
      %584 = vmatmul.f32.gmra.mxu0 %v521
      %v585 = vpop.f32.mrf.mxu0
      %v586 = vadd.f32 0.0, %v585
      %587 = vmatmul.f32.gmra.mxu0 %v524
      %v588 = vpop.f32.mrf.mxu0
      %v589 = vadd.f32 0.0, %v588
      %590 = vmatmul.f32.gmra.mxu0 %v527
      %v591 = vpop.f32.mrf.mxu0
      %v592 = vadd.f32 0.0, %v591
      %593 = vmatmul.f32.gmra.mxu0 %v530
      %v594 = vpop.f32.mrf.mxu0
      %v595 = vadd.f32 0.0, %v594
      %596 = vmatmul.f32.gmra.mxu0 %v533
      %v597 = vpop.f32.mrf.mxu0
      %v598 = vadd.f32 0.0, %v597
      %599 = vmatmul.f32.gmra.mxu0 %v536
      %v600 = vpop.f32.mrf.mxu0
      %v601 = vadd.f32 0.0, %v600
      %602 = vmatmul.f32.gmra.mxu0 %v539
      %v603 = vpop.f32.mrf.mxu0
      %v604 = vadd.f32 0.0, %v603
      %605 = vmatmul.f32.gmra.mxu0 %v542
      %v606 = vpop.f32.mrf.mxu0
      %v607 = vadd.f32 0.0, %v606
      %608 = vmatmul.f32.gmra.mxu0 %v545
      %v609 = vpop.f32.mrf.mxu0
      %v610 = vadd.f32 0.0, %v609
      %611 = vmatmul.f32.gmra.mxu0 %v548
      %v612 = vpop.f32.mrf.mxu0
      %v613 = vadd.f32 0.0, %v612
      %614 = vmatmul.f32.gmra.mxu0 %v551
      %v615 = vpop.f32.mrf.mxu0
      %v616 = vadd.f32 0.0, %v615
      %617 = vmatmul.f32.gmra.mxu0 %v554
      %v618 = vpop.f32.mrf.mxu0
      %v619 = vadd.f32 0.0, %v618
      %620 = vmatmul.f32.gmra.mxu0 %v557
      %v621 = vpop.f32.mrf.mxu0
      %v622 = vadd.f32 0.0, %v621
      %623 = vdwg.mxu0
      %v625 = vsel %vm510, %v473, 0
      %v628 = vsel %vm510, %v474, 0
      %v631 = vsel %vm510, %v475, 0
      %v634 = vsel %vm510, %v476, 0
      %v637 = vsel %vm510, %v477, 0
      %v640 = vsel %vm510, %v478, 0
      %v643 = vsel %vm510, %v479, 0
      %v646 = vsel %vm510, %v480, 0
      %v649 = vsel %vm510, %v481, 0
      %v652 = vsel %vm510, %v482, 0
      %v655 = vsel %vm510, %v483, 0
      %v658 = vsel %vm510, %v484, 0
      %v661 = vsel %vm510, %v485, 0
      %v664 = vsel %vm510, %v486, 0
      %v667 = vsel %vm510, %v487, 0
      %v670 = vsel %vm510, %v488, 0
      %672 = vmatpush.msra.mxu0 0.0
      %673 = vmatpush.msra.mxu0 0.0
      %674 = vmatpush.msra.mxu0 0.0
      %675 = vmatpush.msra.mxu0 0.0
      %676 = vmatpush.msra.mxu0 0.0
      %677 = vmatpush.msra.mxu0 0.0
      %678 = vmatpush.msra.mxu0 0.0
      %679 = vmatpush.msra.mxu0 0.0
      %680 = vmatpush.msra.mxu0 0.0
      %681 = vmatpush.msra.mxu0 0.0
      %682 = vmatpush.msra.mxu0 0.0
      %683 = vmatpush.msra.mxu0 0.0
      %684 = vmatpush.msra.mxu0 0.0
      %685 = vmatpush.msra.mxu0 0.0
      %686 = vmatpush.msra.mxu0 %v490
      %687 = vmatpush.msra.mxu0 %v489
      %688 = vmatmul.f32.gmra.mxu0 %v625
      %v689 = vpop.f32.mrf.mxu0
      %v690 = vadd.f32 %v577, %v689
      %691 = vmatmul.f32.gmra.mxu0 %v628
      %v692 = vpop.f32.mrf.mxu0
      %v693 = vadd.f32 %v580, %v692
      %694 = vmatmul.f32.gmra.mxu0 %v631
      %v695 = vpop.f32.mrf.mxu0
      %v696 = vadd.f32 %v583, %v695
      %697 = vmatmul.f32.gmra.mxu0 %v634
      %v698 = vpop.f32.mrf.mxu0
      %v699 = vadd.f32 %v586, %v698
      %700 = vmatmul.f32.gmra.mxu0 %v637
      %v701 = vpop.f32.mrf.mxu0
      %v702 = vadd.f32 %v589, %v701
      %703 = vmatmul.f32.gmra.mxu0 %v640
      %v704 = vpop.f32.mrf.mxu0
      %v705 = vadd.f32 %v592, %v704
      %706 = vmatmul.f32.gmra.mxu0 %v643
      %v707 = vpop.f32.mrf.mxu0
      %v708 = vadd.f32 %v595, %v707
      %709 = vmatmul.f32.gmra.mxu0 %v646
      %v710 = vpop.f32.mrf.mxu0
      %v711 = vadd.f32 %v598, %v710
      %712 = vmatmul.f32.gmra.mxu0 %v649
      %v713 = vpop.f32.mrf.mxu0
      %v714 = vadd.f32 %v601, %v713
      %715 = vmatmul.f32.gmra.mxu0 %v652
      %v716 = vpop.f32.mrf.mxu0
      %v717 = vadd.f32 %v604, %v716
      %718 = vmatmul.f32.gmra.mxu0 %v655
      %v719 = vpop.f32.mrf.mxu0
      %v720 = vadd.f32 %v607, %v719
      %721 = vmatmul.f32.gmra.mxu0 %v658
      %v722 = vpop.f32.mrf.mxu0
      %v723 = vadd.f32 %v610, %v722
      %724 = vmatmul.f32.gmra.mxu0 %v661
      %v725 = vpop.f32.mrf.mxu0
      %v726 = vadd.f32 %v613, %v725
      %727 = vmatmul.f32.gmra.mxu0 %v664
      %v728 = vpop.f32.mrf.mxu0
      %v729 = vadd.f32 %v616, %v728
      %730 = vmatmul.f32.gmra.mxu0 %v667
      %v731 = vpop.f32.mrf.mxu0
      %v732 = vadd.f32 %v619, %v731
      %733 = vmatmul.f32.gmra.mxu0 %v670
      %v734 = vpop.f32.mrf.mxu0
      %v735 = vadd.f32 %v622, %v734
      %736 = vdwg.mxu0
      %v737 = vld [vmem:[%s434 + $0x4] sm:$0xff]
      %v738 = vld [vmem:[%s434 + $0xc] sm:$0xff]
      %v739 = vld [vmem:[%s434 + $0x14] sm:$0xff]
      %v740 = vld [vmem:[%s434 + $0x1c] sm:$0xff]
      %v741 = vld [vmem:[%s434 + $0x24] sm:$0xff]
      %v742 = vld [vmem:[%s434 + $0x2c] sm:$0xff]
      %v743 = vld [vmem:[%s434 + $0x34] sm:$0xff]
      %v744 = vld [vmem:[%s434 + $0x3c] sm:$0xff]
      %v745 = vld [vmem:[%s434 + $0x44] sm:$0xff]
      %v746 = vld [vmem:[%s434 + $0x4c] sm:$0xff]
      %v747 = vld [vmem:[%s434 + $0x54] sm:$0xff]
      %v748 = vld [vmem:[%s434 + $0x5c] sm:$0xff]
      %v749 = vld [vmem:[%s434 + $0x64] sm:$0xff]
      %v750 = vld [vmem:[%s434 + $0x6c] sm:$0xff]
      %v751 = vld [vmem:[%s434 + $0x74] sm:$0xff]
      %v752 = vld [vmem:[%s434 + $0x7c] sm:$0xff]
      %s753 = scalar_lea.vmem %s439, 32
      %v754 = vld [vmem:[%s753] sm:$0xff]
      %v755 = vld [vmem:[%s753 + $0x8] sm:$0xff]
      %v757 = vsel %vm510, %v737, 0
      %v760 = vsel %vm510, %v738, 0
      %v763 = vsel %vm510, %v739, 0
      %v766 = vsel %vm510, %v740, 0
      %v769 = vsel %vm510, %v741, 0
      %v772 = vsel %vm510, %v742, 0
      %v775 = vsel %vm510, %v743, 0
      %v778 = vsel %vm510, %v744, 0
      %v781 = vsel %vm510, %v745, 0
      %v784 = vsel %vm510, %v746, 0
      %v787 = vsel %vm510, %v747, 0
      %v790 = vsel %vm510, %v748, 0
      %v793 = vsel %vm510, %v749, 0
      %v796 = vsel %vm510, %v750, 0
      %v799 = vsel %vm510, %v751, 0
      %v802 = vsel %vm510, %v752, 0
      %804 = vmatpush.msra.mxu0 0.0
      %805 = vmatpush.msra.mxu0 0.0
      %806 = vmatpush.msra.mxu0 0.0
      %807 = vmatpush.msra.mxu0 0.0
      %808 = vmatpush.msra.mxu0 0.0
      %809 = vmatpush.msra.mxu0 0.0
      %810 = vmatpush.msra.mxu0 0.0
      %811 = vmatpush.msra.mxu0 0.0
      %812 = vmatpush.msra.mxu0 0.0
      %813 = vmatpush.msra.mxu0 0.0
      %814 = vmatpush.msra.mxu0 0.0
      %815 = vmatpush.msra.mxu0 0.0
      %816 = vmatpush.msra.mxu0 0.0
      %817 = vmatpush.msra.mxu0 0.0
      %818 = vmatpush.msra.mxu0 %v755
      %819 = vmatpush.msra.mxu0 %v754
      %820 = vmatmul.f32.gmra.mxu0 %v757
      %v821 = vpop.f32.mrf.mxu0
      %v822 = vadd.f32 0.0, %v821
      %823 = vmatmul.f32.gmra.mxu0 %v760
      %v824 = vpop.f32.mrf.mxu0
      %v825 = vadd.f32 0.0, %v824
      %826 = vmatmul.f32.gmra.mxu0 %v763
      %v827 = vpop.f32.mrf.mxu0
      %v828 = vadd.f32 0.0, %v827
      %829 = vmatmul.f32.gmra.mxu0 %v766
      %v830 = vpop.f32.mrf.mxu0
      %v831 = vadd.f32 0.0, %v830
      %832 = vmatmul.f32.gmra.mxu0 %v769
      %v833 = vpop.f32.mrf.mxu0
      %v834 = vadd.f32 0.0, %v833
      %835 = vmatmul.f32.gmra.mxu0 %v772
      %v836 = vpop.f32.mrf.mxu0
      %v837 = vadd.f32 0.0, %v836
      %838 = vmatmul.f32.gmra.mxu0 %v775
      %v839 = vpop.f32.mrf.mxu0
      %v840 = vadd.f32 0.0, %v839
      %841 = vmatmul.f32.gmra.mxu0 %v778
      %v842 = vpop.f32.mrf.mxu0
      %v843 = vadd.f32 0.0, %v842
      %844 = vmatmul.f32.gmra.mxu0 %v781
      %v845 = vpop.f32.mrf.mxu0
      %v846 = vadd.f32 0.0, %v845
      %847 = vmatmul.f32.gmra.mxu0 %v784
      %v848 = vpop.f32.mrf.mxu0
      %v849 = vadd.f32 0.0, %v848
      %850 = vmatmul.f32.gmra.mxu0 %v787
      %v851 = vpop.f32.mrf.mxu0
      %v852 = vadd.f32 0.0, %v851
      %853 = vmatmul.f32.gmra.mxu0 %v790
      %v854 = vpop.f32.mrf.mxu0
      %v855 = vadd.f32 0.0, %v854
      %856 = vmatmul.f32.gmra.mxu0 %v793
      %v857 = vpop.f32.mrf.mxu0
      %v858 = vadd.f32 0.0, %v857
      %859 = vmatmul.f32.gmra.mxu0 %v796
      %v860 = vpop.f32.mrf.mxu0
      %v861 = vadd.f32 0.0, %v860
      %862 = vmatmul.f32.gmra.mxu0 %v799
      %v863 = vpop.f32.mrf.mxu0
      %v864 = vadd.f32 0.0, %v863
      %865 = vmatmul.f32.gmra.mxu0 %v802
      %v866 = vpop.f32.mrf.mxu0
      %v867 = vadd.f32 0.0, %v866
      %868 = vdwg.mxu0
      %v869 = vadd.f32 %v690, %v822
      %v870 = vadd.f32 %v693, %v825
      %v871 = vadd.f32 %v696, %v828
      %v872 = vadd.f32 %v699, %v831
      %v873 = vadd.f32 %v702, %v834
      %v874 = vadd.f32 %v705, %v837
      %v875 = vadd.f32 %v708, %v840
      %v876 = vadd.f32 %v711, %v843
      %v877 = vadd.f32 %v714, %v846
      %v878 = vadd.f32 %v717, %v849
      %v879 = vadd.f32 %v720, %v852
      %v880 = vadd.f32 %v723, %v855
      %v881 = vadd.f32 %v726, %v858
      %v882 = vadd.f32 %v729, %v861
      %v883 = vadd.f32 %v732, %v864
      %v884 = vadd.f32 %v735, %v867
      %v885 = vld [vmem:[%s434 + $0x6] sm:$0xff]
      %v886 = vld [vmem:[%s434 + $0xe] sm:$0xff]
      %v887 = vld [vmem:[%s434 + $0x16] sm:$0xff]
      %v888 = vld [vmem:[%s434 + $0x1e] sm:$0xff]
      %v889 = vld [vmem:[%s434 + $0x26] sm:$0xff]
      %v890 = vld [vmem:[%s434 + $0x2e] sm:$0xff]
      %v891 = vld [vmem:[%s434 + $0x36] sm:$0xff]
      %v892 = vld [vmem:[%s434 + $0x3e] sm:$0xff]
      %v893 = vld [vmem:[%s434 + $0x46] sm:$0xff]
      %v894 = vld [vmem:[%s434 + $0x4e] sm:$0xff]
      %v895 = vld [vmem:[%s434 + $0x56] sm:$0xff]
      %v896 = vld [vmem:[%s434 + $0x5e] sm:$0xff]
      %v897 = vld [vmem:[%s434 + $0x66] sm:$0xff]
      %v898 = vld [vmem:[%s434 + $0x6e] sm:$0xff]
      %v899 = vld [vmem:[%s434 + $0x76] sm:$0xff]
      %v900 = vld [vmem:[%s434 + $0x7e] sm:$0xff]
      %s901 = scalar_lea.vmem %s439, 48
      %v902 = vld [vmem:[%s901] sm:$0xff]
      %v903 = vld [vmem:[%s901 + $0x8] sm:$0xff]
      %v905 = vsel %vm510, %v885, 0
      %v908 = vsel %vm510, %v886, 0
      %v911 = vsel %vm510, %v887, 0
      %v914 = vsel %vm510, %v888, 0
      %v917 = vsel %vm510, %v889, 0
      %v920 = vsel %vm510, %v890, 0
      %v923 = vsel %vm510, %v891, 0
      %v926 = vsel %vm510, %v892, 0
      %v929 = vsel %vm510, %v893, 0
      %v932 = vsel %vm510, %v894, 0
      %v935 = vsel %vm510, %v895, 0
      %v938 = vsel %vm510, %v896, 0
      %v941 = vsel %vm510, %v897, 0
      %v944 = vsel %vm510, %v898, 0
      %v947 = vsel %vm510, %v899, 0
      %v950 = vsel %vm510, %v900, 0
      %952 = vmatpush.msra.mxu0 0.0
      %953 = vmatpush.msra.mxu0 0.0
      %954 = vmatpush.msra.mxu0 0.0
      %955 = vmatpush.msra.mxu0 0.0
      %956 = vmatpush.msra.mxu0 0.0
      %957 = vmatpush.msra.mxu0 0.0
      %958 = vmatpush.msra.mxu0 0.0
      %959 = vmatpush.msra.mxu0 0.0
      %960 = vmatpush.msra.mxu0 0.0
      %961 = vmatpush.msra.mxu0 0.0
      %962 = vmatpush.msra.mxu0 0.0
      %963 = vmatpush.msra.mxu0 0.0
      %964 = vmatpush.msra.mxu0 0.0
      %965 = vmatpush.msra.mxu0 0.0
      %966 = vmatpush.msra.mxu0 %v903
      %967 = vmatpush.msra.mxu0 %v902
      %968 = vmatmul.f32.gmra.mxu0 %v905
      %v969 = vpop.f32.mrf.mxu0
      %v970 = vadd.f32 0.0, %v969
      %971 = vmatmul.f32.gmra.mxu0 %v908
      %v972 = vpop.f32.mrf.mxu0
      %v973 = vadd.f32 0.0, %v972
      %974 = vmatmul.f32.gmra.mxu0 %v911
      %v975 = vpop.f32.mrf.mxu0
      %v976 = vadd.f32 0.0, %v975
      %977 = vmatmul.f32.gmra.mxu0 %v914
      %v978 = vpop.f32.mrf.mxu0
      %v979 = vadd.f32 0.0, %v978
      %980 = vmatmul.f32.gmra.mxu0 %v917
      %v981 = vpop.f32.mrf.mxu0
      %v982 = vadd.f32 0.0, %v981
      %983 = vmatmul.f32.gmra.mxu0 %v920
      %v984 = vpop.f32.mrf.mxu0
      %v985 = vadd.f32 0.0, %v984
      %986 = vmatmul.f32.gmra.mxu0 %v923
      %v987 = vpop.f32.mrf.mxu0
      %v988 = vadd.f32 0.0, %v987
      %989 = vmatmul.f32.gmra.mxu0 %v926
      %v990 = vpop.f32.mrf.mxu0
      %v991 = vadd.f32 0.0, %v990
      %992 = vmatmul.f32.gmra.mxu0 %v929
      %v993 = vpop.f32.mrf.mxu0
      %v994 = vadd.f32 0.0, %v993
      %995 = vmatmul.f32.gmra.mxu0 %v932
      %v996 = vpop.f32.mrf.mxu0
      %v997 = vadd.f32 0.0, %v996
      %998 = vmatmul.f32.gmra.mxu0 %v935
      %v999 = vpop.f32.mrf.mxu0
      %v1000 = vadd.f32 0.0, %v999
      %1001 = vmatmul.f32.gmra.mxu0 %v938
      %v1002 = vpop.f32.mrf.mxu0
      %v1003 = vadd.f32 0.0, %v1002
      %1004 = vmatmul.f32.gmra.mxu0 %v941
      %v1005 = vpop.f32.mrf.mxu0
      %v1006 = vadd.f32 0.0, %v1005
      %1007 = vmatmul.f32.gmra.mxu0 %v944
      %v1008 = vpop.f32.mrf.mxu0
      %v1009 = vadd.f32 0.0, %v1008
      %1010 = vmatmul.f32.gmra.mxu0 %v947
      %v1011 = vpop.f32.mrf.mxu0
      %v1012 = vadd.f32 0.0, %v1011
      %1013 = vmatmul.f32.gmra.mxu0 %v950
      %v1014 = vpop.f32.mrf.mxu0
      %v1015 = vadd.f32 0.0, %v1014
      %1016 = vdwg.mxu0
      %v1017 = vadd.f32 %v869, %v970
      %v1018 = vadd.f32 %v870, %v973
      %v1019 = vadd.f32 %v871, %v976
      %v1020 = vadd.f32 %v872, %v979
      %v1021 = vadd.f32 %v873, %v982
      %v1022 = vadd.f32 %v874, %v985
      %v1023 = vadd.f32 %v875, %v988
      %v1024 = vadd.f32 %v876, %v991
      %v1025 = vadd.f32 %v877, %v994
      %v1026 = vadd.f32 %v878, %v997
      %v1027 = vadd.f32 %v879, %v1000
      %v1028 = vadd.f32 %v880, %v1003
      %v1029 = vadd.f32 %v881, %v1006
      %v1030 = vadd.f32 %v882, %v1009
      %v1031 = vadd.f32 %v883, %v1012
      %v1032 = vadd.f32 %v884, %v1015
      %v1033 = vld [vmem:[%s434 + $0x8] sm:$0xff]
      %v1034 = vld [vmem:[%s434 + $0x10] sm:$0xff]
      %v1035 = vld [vmem:[%s434 + $0x18] sm:$0xff]
      %v1036 = vld [vmem:[%s434 + $0x20] sm:$0xff]
      %v1037 = vld [vmem:[%s434 + $0x28] sm:$0xff]
      %v1038 = vld [vmem:[%s434 + $0x30] sm:$0xff]
      %v1039 = vld [vmem:[%s434 + $0x38] sm:$0xff]
      %v1040 = vld [vmem:[%s434 + $0x40] sm:$0xff]
      %v1041 = vld [vmem:[%s434 + $0x48] sm:$0xff]
      %v1042 = vld [vmem:[%s434 + $0x50] sm:$0xff]
      %v1043 = vld [vmem:[%s434 + $0x58] sm:$0xff]
      %v1044 = vld [vmem:[%s434 + $0x60] sm:$0xff]
      %v1045 = vld [vmem:[%s434 + $0x68] sm:$0xff]
      %v1046 = vld [vmem:[%s434 + $0x70] sm:$0xff]
      %v1047 = vld [vmem:[%s434 + $0x78] sm:$0xff]
      %v1048 = vld [vmem:[%s434 + $0x80] sm:$0xff]
      %s1049 = scalar_lea.vmem %s439, 64
      %v1050 = vld [vmem:[%s1049] sm:$0xff]
      %v1051 = vld [vmem:[%s1049 + $0x8] sm:$0xff]
      %v1053 = vsel %vm510, %v1033, 0
      %v1056 = vsel %vm510, %v1034, 0
      %v1059 = vsel %vm510, %v1035, 0
      %v1062 = vsel %vm510, %v1036, 0
      %v1065 = vsel %vm510, %v1037, 0
      %v1068 = vsel %vm510, %v1038, 0
      %v1071 = vsel %vm510, %v1039, 0
      %v1074 = vsel %vm510, %v1040, 0
      %v1077 = vsel %vm510, %v1041, 0
      %v1080 = vsel %vm510, %v1042, 0
      %v1083 = vsel %vm510, %v1043, 0
      %v1086 = vsel %vm510, %v1044, 0
      %v1089 = vsel %vm510, %v1045, 0
      %v1092 = vsel %vm510, %v1046, 0
      %v1095 = vsel %vm510, %v1047, 0
      %v1098 = vsel %vm510, %v1048, 0
      %1100 = vmatpush.msra.mxu0 0.0
      %1101 = vmatpush.msra.mxu0 0.0
      %1102 = vmatpush.msra.mxu0 0.0
      %1103 = vmatpush.msra.mxu0 0.0
      %1104 = vmatpush.msra.mxu0 0.0
      %1105 = vmatpush.msra.mxu0 0.0
      %1106 = vmatpush.msra.mxu0 0.0
      %1107 = vmatpush.msra.mxu0 0.0
      %1108 = vmatpush.msra.mxu0 0.0
      %1109 = vmatpush.msra.mxu0 0.0
      %1110 = vmatpush.msra.mxu0 0.0
      %1111 = vmatpush.msra.mxu0 0.0
      %1112 = vmatpush.msra.mxu0 0.0
      %1113 = vmatpush.msra.mxu0 0.0
      %1114 = vmatpush.msra.mxu0 %v1051
      %1115 = vmatpush.msra.mxu0 %v1050
      %1116 = vmatmul.f32.gmra.mxu0 %v1053
      %v1117 = vpop.f32.mrf.mxu0
      %v1118 = vadd.f32 0.0, %v1117
      %1119 = vmatmul.f32.gmra.mxu0 %v1056
      %v1120 = vpop.f32.mrf.mxu0
      %v1121 = vadd.f32 0.0, %v1120
      %1122 = vmatmul.f32.gmra.mxu0 %v1059
      %v1123 = vpop.f32.mrf.mxu0
      %v1124 = vadd.f32 0.0, %v1123
      %1125 = vmatmul.f32.gmra.mxu0 %v1062
      %v1126 = vpop.f32.mrf.mxu0
      %v1127 = vadd.f32 0.0, %v1126
      %1128 = vmatmul.f32.gmra.mxu0 %v1065
      %v1129 = vpop.f32.mrf.mxu0
      %v1130 = vadd.f32 0.0, %v1129
      %1131 = vmatmul.f32.gmra.mxu0 %v1068
      %v1132 = vpop.f32.mrf.mxu0
      %v1133 = vadd.f32 0.0, %v1132
      %1134 = vmatmul.f32.gmra.mxu0 %v1071
      %v1135 = vpop.f32.mrf.mxu0
      %v1136 = vadd.f32 0.0, %v1135
      %1137 = vmatmul.f32.gmra.mxu0 %v1074
      %v1138 = vpop.f32.mrf.mxu0
      %v1139 = vadd.f32 0.0, %v1138
      %1140 = vmatmul.f32.gmra.mxu0 %v1077
      %v1141 = vpop.f32.mrf.mxu0
      %v1142 = vadd.f32 0.0, %v1141
      %1143 = vmatmul.f32.gmra.mxu0 %v1080
      %v1144 = vpop.f32.mrf.mxu0
      %v1145 = vadd.f32 0.0, %v1144
      %1146 = vmatmul.f32.gmra.mxu0 %v1083
      %v1147 = vpop.f32.mrf.mxu0
      %v1148 = vadd.f32 0.0, %v1147
      %1149 = vmatmul.f32.gmra.mxu0 %v1086
      %v1150 = vpop.f32.mrf.mxu0
      %v1151 = vadd.f32 0.0, %v1150
      %1152 = vmatmul.f32.gmra.mxu0 %v1089
      %v1153 = vpop.f32.mrf.mxu0
      %v1154 = vadd.f32 0.0, %v1153
      %1155 = vmatmul.f32.gmra.mxu0 %v1092
      %v1156 = vpop.f32.mrf.mxu0
      %v1157 = vadd.f32 0.0, %v1156
      %1158 = vmatmul.f32.gmra.mxu0 %v1095
      %v1159 = vpop.f32.mrf.mxu0
      %v1160 = vadd.f32 0.0, %v1159
      %1161 = vmatmul.f32.gmra.mxu0 %v1098
      %v1162 = vpop.f32.mrf.mxu0
      %v1163 = vadd.f32 0.0, %v1162
      %1164 = vdwg.mxu0
      %v1165 = vadd.f32 %v1017, %v1118
      %v1166 = vadd.f32 %v1018, %v1121
      %v1167 = vadd.f32 %v1019, %v1124
      %v1168 = vadd.f32 %v1020, %v1127
      %v1169 = vadd.f32 %v1021, %v1130
      %v1170 = vadd.f32 %v1022, %v1133
      %v1171 = vadd.f32 %v1023, %v1136
      %v1172 = vadd.f32 %v1024, %v1139
      %v1173 = vadd.f32 %v1025, %v1142
      %v1174 = vadd.f32 %v1026, %v1145
      %v1175 = vadd.f32 %v1027, %v1148
      %v1176 = vadd.f32 %v1028, %v1151
      %v1177 = vadd.f32 %v1029, %v1154
      %v1178 = vadd.f32 %v1030, %v1157
      %v1179 = vadd.f32 %v1031, %v1160
      %v1180 = vadd.f32 %v1032, %v1163
      %v1181 = vld [vmem:[%s434 + $0x10] sm:$0xff]
      %v1182 = vld [vmem:[%s434 + $0x18] sm:$0xff]
      %v1183 = vld [vmem:[%s434 + $0x20] sm:$0xff]
      %v1184 = vld [vmem:[%s434 + $0x28] sm:$0xff]
      %v1185 = vld [vmem:[%s434 + $0x30] sm:$0xff]
      %v1186 = vld [vmem:[%s434 + $0x38] sm:$0xff]
      %v1187 = vld [vmem:[%s434 + $0x40] sm:$0xff]
      %v1188 = vld [vmem:[%s434 + $0x48] sm:$0xff]
      %v1189 = vld [vmem:[%s434 + $0x50] sm:$0xff]
      %v1190 = vld [vmem:[%s434 + $0x58] sm:$0xff]
      %v1191 = vld [vmem:[%s434 + $0x60] sm:$0xff]
      %v1192 = vld [vmem:[%s434 + $0x68] sm:$0xff]
      %v1193 = vld [vmem:[%s434 + $0x70] sm:$0xff]
      %v1194 = vld [vmem:[%s434 + $0x78] sm:$0xff]
      %v1195 = vld [vmem:[%s434 + $0x80] sm:$0xff]
      %v1196 = vld [vmem:[%s434 + $0x88] sm:$0xff]
      %s1197 = scalar_lea.vmem %s439, 80
      %v1198 = vld [vmem:[%s1197] sm:$0xff]
      %v1199 = vld [vmem:[%s1197 + $0x8] sm:$0xff]
      %v1201 = vsel %vm510, %v1181, 0
      %v1204 = vsel %vm510, %v1182, 0
      %v1207 = vsel %vm510, %v1183, 0
      %v1210 = vsel %vm510, %v1184, 0
      %v1213 = vsel %vm510, %v1185, 0
      %v1216 = vsel %vm510, %v1186, 0
      %v1219 = vsel %vm510, %v1187, 0
      %v1222 = vsel %vm510, %v1188, 0
      %v1225 = vsel %vm510, %v1189, 0
      %v1228 = vsel %vm510, %v1190, 0
      %v1231 = vsel %vm510, %v1191, 0
      %v1234 = vsel %vm510, %v1192, 0
      %v1237 = vsel %vm510, %v1193, 0
      %v1240 = vsel %vm510, %v1194, 0
      %v1243 = vsel %vm510, %v1195, 0
      %v1246 = vsel %vm510, %v1196, 0
      %1248 = vmatpush.msra.mxu0 0.0
      %1249 = vmatpush.msra.mxu0 0.0
      %1250 = vmatpush.msra.mxu0 0.0
      %1251 = vmatpush.msra.mxu0 0.0
      %1252 = vmatpush.msra.mxu0 0.0
      %1253 = vmatpush.msra.mxu0 0.0
      %1254 = vmatpush.msra.mxu0 0.0
      %1255 = vmatpush.msra.mxu0 0.0
      %1256 = vmatpush.msra.mxu0 0.0
      %1257 = vmatpush.msra.mxu0 0.0
      %1258 = vmatpush.msra.mxu0 0.0
      %1259 = vmatpush.msra.mxu0 0.0
      %1260 = vmatpush.msra.mxu0 0.0
      %1261 = vmatpush.msra.mxu0 0.0
      %1262 = vmatpush.msra.mxu0 %v1199
      %1263 = vmatpush.msra.mxu0 %v1198
      %1264 = vmatmul.f32.gmra.mxu0 %v1201
      %v1265 = vpop.f32.mrf.mxu0
      %v1266 = vadd.f32 0.0, %v1265
      %1267 = vmatmul.f32.gmra.mxu0 %v1204
      %v1268 = vpop.f32.mrf.mxu0
      %v1269 = vadd.f32 0.0, %v1268
      %1270 = vmatmul.f32.gmra.mxu0 %v1207
      %v1271 = vpop.f32.mrf.mxu0
      %v1272 = vadd.f32 0.0, %v1271
      %1273 = vmatmul.f32.gmra.mxu0 %v1210
      %v1274 = vpop.f32.mrf.mxu0
      %v1275 = vadd.f32 0.0, %v1274
      %1276 = vmatmul.f32.gmra.mxu0 %v1213
      %v1277 = vpop.f32.mrf.mxu0
      %v1278 = vadd.f32 0.0, %v1277
      %1279 = vmatmul.f32.gmra.mxu0 %v1216
      %v1280 = vpop.f32.mrf.mxu0
      %v1281 = vadd.f32 0.0, %v1280
      %1282 = vmatmul.f32.gmra.mxu0 %v1219
      %v1283 = vpop.f32.mrf.mxu0
      %v1284 = vadd.f32 0.0, %v1283
      %1285 = vmatmul.f32.gmra.mxu0 %v1222
      %v1286 = vpop.f32.mrf.mxu0
      %v1287 = vadd.f32 0.0, %v1286
      %1288 = vmatmul.f32.gmra.mxu0 %v1225
      %v1289 = vpop.f32.mrf.mxu0
      %v1290 = vadd.f32 0.0, %v1289
      %1291 = vmatmul.f32.gmra.mxu0 %v1228
      %v1292 = vpop.f32.mrf.mxu0
      %v1293 = vadd.f32 0.0, %v1292
      %1294 = vmatmul.f32.gmra.mxu0 %v1231
      %v1295 = vpop.f32.mrf.mxu0
      %v1296 = vadd.f32 0.0, %v1295
      %1297 = vmatmul.f32.gmra.mxu0 %v1234
      %v1298 = vpop.f32.mrf.mxu0
      %v1299 = vadd.f32 0.0, %v1298
      %1300 = vmatmul.f32.gmra.mxu0 %v1237
      %v1301 = vpop.f32.mrf.mxu0
      %v1302 = vadd.f32 0.0, %v1301
      %1303 = vmatmul.f32.gmra.mxu0 %v1240
      %v1304 = vpop.f32.mrf.mxu0
      %v1305 = vadd.f32 0.0, %v1304
      %1306 = vmatmul.f32.gmra.mxu0 %v1243
      %v1307 = vpop.f32.mrf.mxu0
      %v1308 = vadd.f32 0.0, %v1307
      %1309 = vmatmul.f32.gmra.mxu0 %v1246
      %v1310 = vpop.f32.mrf.mxu0
      %v1311 = vadd.f32 0.0, %v1310
      %1312 = vdwg.mxu0
      %v1313 = vadd.f32 %v1165, %v1266
      %v1314 = vadd.f32 %v1166, %v1269
      %v1315 = vadd.f32 %v1167, %v1272
      %v1316 = vadd.f32 %v1168, %v1275
      %v1317 = vadd.f32 %v1169, %v1278
      %v1318 = vadd.f32 %v1170, %v1281
      %v1319 = vadd.f32 %v1171, %v1284
      %v1320 = vadd.f32 %v1172, %v1287
      %v1321 = vadd.f32 %v1173, %v1290
      %v1322 = vadd.f32 %v1174, %v1293
      %v1323 = vadd.f32 %v1175, %v1296
      %v1324 = vadd.f32 %v1176, %v1299
      %v1325 = vadd.f32 %v1177, %v1302
      %v1326 = vadd.f32 %v1178, %v1305
      %v1327 = vadd.f32 %v1179, %v1308
      %v1328 = vadd.f32 %v1180, %v1311
      %v1329 = vld [vmem:[%s434 + $0x12] sm:$0xff]
      %v1330 = vld [vmem:[%s434 + $0x1a] sm:$0xff]
      %v1331 = vld [vmem:[%s434 + $0x22] sm:$0xff]
      %v1332 = vld [vmem:[%s434 + $0x2a] sm:$0xff]
      %v1333 = vld [vmem:[%s434 + $0x32] sm:$0xff]
      %v1334 = vld [vmem:[%s434 + $0x3a] sm:$0xff]
      %v1335 = vld [vmem:[%s434 + $0x42] sm:$0xff]
      %v1336 = vld [vmem:[%s434 + $0x4a] sm:$0xff]
      %v1337 = vld [vmem:[%s434 + $0x52] sm:$0xff]
      %v1338 = vld [vmem:[%s434 + $0x5a] sm:$0xff]
      %v1339 = vld [vmem:[%s434 + $0x62] sm:$0xff]
      %v1340 = vld [vmem:[%s434 + $0x6a] sm:$0xff]
      %v1341 = vld [vmem:[%s434 + $0x72] sm:$0xff]
      %v1342 = vld [vmem:[%s434 + $0x7a] sm:$0xff]
      %v1343 = vld [vmem:[%s434 + $0x82] sm:$0xff]
      %v1344 = vld [vmem:[%s434 + $0x8a] sm:$0xff]
      %s1345 = scalar_lea.vmem %s439, 96
      %v1346 = vld [vmem:[%s1345] sm:$0xff]
      %v1347 = vld [vmem:[%s1345 + $0x8] sm:$0xff]
      %v1349 = vsel %vm510, %v1329, 0
      %v1352 = vsel %vm510, %v1330, 0
      %v1355 = vsel %vm510, %v1331, 0
      %v1358 = vsel %vm510, %v1332, 0
      %v1361 = vsel %vm510, %v1333, 0
      %v1364 = vsel %vm510, %v1334, 0
      %v1367 = vsel %vm510, %v1335, 0
      %v1370 = vsel %vm510, %v1336, 0
      %v1373 = vsel %vm510, %v1337, 0
      %v1376 = vsel %vm510, %v1338, 0
      %v1379 = vsel %vm510, %v1339, 0
      %v1382 = vsel %vm510, %v1340, 0
      %v1385 = vsel %vm510, %v1341, 0
      %v1388 = vsel %vm510, %v1342, 0
      %v1391 = vsel %vm510, %v1343, 0
      %v1394 = vsel %vm510, %v1344, 0
      %1396 = vmatpush.msra.mxu0 0.0
      %1397 = vmatpush.msra.mxu0 0.0
      %1398 = vmatpush.msra.mxu0 0.0
      %1399 = vmatpush.msra.mxu0 0.0
      %1400 = vmatpush.msra.mxu0 0.0
      %1401 = vmatpush.msra.mxu0 0.0
      %1402 = vmatpush.msra.mxu0 0.0
      %1403 = vmatpush.msra.mxu0 0.0
      %1404 = vmatpush.msra.mxu0 0.0
      %1405 = vmatpush.msra.mxu0 0.0
      %1406 = vmatpush.msra.mxu0 0.0
      %1407 = vmatpush.msra.mxu0 0.0
      %1408 = vmatpush.msra.mxu0 0.0
      %1409 = vmatpush.msra.mxu0 0.0
      %1410 = vmatpush.msra.mxu0 %v1347
      %1411 = vmatpush.msra.mxu0 %v1346
      %1412 = vmatmul.f32.gmra.mxu0 %v1349
      %v1413 = vpop.f32.mrf.mxu0
      %v1414 = vadd.f32 0.0, %v1413
      %1415 = vmatmul.f32.gmra.mxu0 %v1352
      %v1416 = vpop.f32.mrf.mxu0
      %v1417 = vadd.f32 0.0, %v1416
      %1418 = vmatmul.f32.gmra.mxu0 %v1355
      %v1419 = vpop.f32.mrf.mxu0
      %v1420 = vadd.f32 0.0, %v1419
      %1421 = vmatmul.f32.gmra.mxu0 %v1358
      %v1422 = vpop.f32.mrf.mxu0
      %v1423 = vadd.f32 0.0, %v1422
      %1424 = vmatmul.f32.gmra.mxu0 %v1361
      %v1425 = vpop.f32.mrf.mxu0
      %v1426 = vadd.f32 0.0, %v1425
      %1427 = vmatmul.f32.gmra.mxu0 %v1364
      %v1428 = vpop.f32.mrf.mxu0
      %v1429 = vadd.f32 0.0, %v1428
      %1430 = vmatmul.f32.gmra.mxu0 %v1367
      %v1431 = vpop.f32.mrf.mxu0
      %v1432 = vadd.f32 0.0, %v1431
      %1433 = vmatmul.f32.gmra.mxu0 %v1370
      %v1434 = vpop.f32.mrf.mxu0
      %v1435 = vadd.f32 0.0, %v1434
      %1436 = vmatmul.f32.gmra.mxu0 %v1373
      %v1437 = vpop.f32.mrf.mxu0
      %v1438 = vadd.f32 0.0, %v1437
      %1439 = vmatmul.f32.gmra.mxu0 %v1376
      %v1440 = vpop.f32.mrf.mxu0
      %v1441 = vadd.f32 0.0, %v1440
      %1442 = vmatmul.f32.gmra.mxu0 %v1379
      %v1443 = vpop.f32.mrf.mxu0
      %v1444 = vadd.f32 0.0, %v1443
      %1445 = vmatmul.f32.gmra.mxu0 %v1382
      %v1446 = vpop.f32.mrf.mxu0
      %v1447 = vadd.f32 0.0, %v1446
      %1448 = vmatmul.f32.gmra.mxu0 %v1385
      %v1449 = vpop.f32.mrf.mxu0
      %v1450 = vadd.f32 0.0, %v1449
      %1451 = vmatmul.f32.gmra.mxu0 %v1388
      %v1452 = vpop.f32.mrf.mxu0
      %v1453 = vadd.f32 0.0, %v1452
      %1454 = vmatmul.f32.gmra.mxu0 %v1391
      %v1455 = vpop.f32.mrf.mxu0
      %v1456 = vadd.f32 0.0, %v1455
      %1457 = vmatmul.f32.gmra.mxu0 %v1394
      %v1458 = vpop.f32.mrf.mxu0
      %v1459 = vadd.f32 0.0, %v1458
      %1460 = vdwg.mxu0
      %v1461 = vadd.f32 %v1313, %v1414
      %v1462 = vadd.f32 %v1314, %v1417
      %v1463 = vadd.f32 %v1315, %v1420
      %v1464 = vadd.f32 %v1316, %v1423
      %v1465 = vadd.f32 %v1317, %v1426
      %v1466 = vadd.f32 %v1318, %v1429
      %v1467 = vadd.f32 %v1319, %v1432
      %v1468 = vadd.f32 %v1320, %v1435
      %v1469 = vadd.f32 %v1321, %v1438
      %v1470 = vadd.f32 %v1322, %v1441
      %v1471 = vadd.f32 %v1323, %v1444
      %v1472 = vadd.f32 %v1324, %v1447
      %v1473 = vadd.f32 %v1325, %v1450
      %v1474 = vadd.f32 %v1326, %v1453
      %v1475 = vadd.f32 %v1327, %v1456
      %v1476 = vadd.f32 %v1328, %v1459
      %v1477 = vld [vmem:[%s434 + $0x14] sm:$0xff]
      %v1478 = vld [vmem:[%s434 + $0x1c] sm:$0xff]
      %v1479 = vld [vmem:[%s434 + $0x24] sm:$0xff]
      %v1480 = vld [vmem:[%s434 + $0x2c] sm:$0xff]
      %v1481 = vld [vmem:[%s434 + $0x34] sm:$0xff]
      %v1482 = vld [vmem:[%s434 + $0x3c] sm:$0xff]
      %v1483 = vld [vmem:[%s434 + $0x44] sm:$0xff]
      %v1484 = vld [vmem:[%s434 + $0x4c] sm:$0xff]
      %v1485 = vld [vmem:[%s434 + $0x54] sm:$0xff]
      %v1486 = vld [vmem:[%s434 + $0x5c] sm:$0xff]
      %v1487 = vld [vmem:[%s434 + $0x64] sm:$0xff]
      %v1488 = vld [vmem:[%s434 + $0x6c] sm:$0xff]
      %v1489 = vld [vmem:[%s434 + $0x74] sm:$0xff]
      %v1490 = vld [vmem:[%s434 + $0x7c] sm:$0xff]
      %v1491 = vld [vmem:[%s434 + $0x84] sm:$0xff]
      %v1492 = vld [vmem:[%s434 + $0x8c] sm:$0xff]
      %s1493 = scalar_lea.vmem %s439, 112
      %v1494 = vld [vmem:[%s1493] sm:$0xff]
      %v1495 = vld [vmem:[%s1493 + $0x8] sm:$0xff]
      %v1497 = vsel %vm510, %v1477, 0
      %v1500 = vsel %vm510, %v1478, 0
      %v1503 = vsel %vm510, %v1479, 0
      %v1506 = vsel %vm510, %v1480, 0
      %v1509 = vsel %vm510, %v1481, 0
      %v1512 = vsel %vm510, %v1482, 0
      %v1515 = vsel %vm510, %v1483, 0
      %v1518 = vsel %vm510, %v1484, 0
      %v1521 = vsel %vm510, %v1485, 0
      %v1524 = vsel %vm510, %v1486, 0
      %v1527 = vsel %vm510, %v1487, 0
      %v1530 = vsel %vm510, %v1488, 0
      %v1533 = vsel %vm510, %v1489, 0
      %v1536 = vsel %vm510, %v1490, 0
      %v1539 = vsel %vm510, %v1491, 0
      %v1542 = vsel %vm510, %v1492, 0
      %1544 = vmatpush.msra.mxu0 0.0
      %1545 = vmatpush.msra.mxu0 0.0
      %1546 = vmatpush.msra.mxu0 0.0
      %1547 = vmatpush.msra.mxu0 0.0
      %1548 = vmatpush.msra.mxu0 0.0
      %1549 = vmatpush.msra.mxu0 0.0
      %1550 = vmatpush.msra.mxu0 0.0
      %1551 = vmatpush.msra.mxu0 0.0
      %1552 = vmatpush.msra.mxu0 0.0
      %1553 = vmatpush.msra.mxu0 0.0
      %1554 = vmatpush.msra.mxu0 0.0
      %1555 = vmatpush.msra.mxu0 0.0
      %1556 = vmatpush.msra.mxu0 0.0
      %1557 = vmatpush.msra.mxu0 0.0
      %1558 = vmatpush.msra.mxu0 %v1495
      %1559 = vmatpush.msra.mxu0 %v1494
      %1560 = vmatmul.f32.gmra.mxu0 %v1497
      %v1561 = vpop.f32.mrf.mxu0
      %v1562 = vadd.f32 0.0, %v1561
      %1563 = vmatmul.f32.gmra.mxu0 %v1500
      %v1564 = vpop.f32.mrf.mxu0
      %v1565 = vadd.f32 0.0, %v1564
      %1566 = vmatmul.f32.gmra.mxu0 %v1503
      %v1567 = vpop.f32.mrf.mxu0
      %v1568 = vadd.f32 0.0, %v1567
      %1569 = vmatmul.f32.gmra.mxu0 %v1506
      %v1570 = vpop.f32.mrf.mxu0
      %v1571 = vadd.f32 0.0, %v1570
      %1572 = vmatmul.f32.gmra.mxu0 %v1509
      %v1573 = vpop.f32.mrf.mxu0
      %v1574 = vadd.f32 0.0, %v1573
      %1575 = vmatmul.f32.gmra.mxu0 %v1512
      %v1576 = vpop.f32.mrf.mxu0
      %v1577 = vadd.f32 0.0, %v1576
      %1578 = vmatmul.f32.gmra.mxu0 %v1515
      %v1579 = vpop.f32.mrf.mxu0
      %v1580 = vadd.f32 0.0, %v1579
      %1581 = vmatmul.f32.gmra.mxu0 %v1518
      %v1582 = vpop.f32.mrf.mxu0
      %v1583 = vadd.f32 0.0, %v1582
      %1584 = vmatmul.f32.gmra.mxu0 %v1521
      %v1585 = vpop.f32.mrf.mxu0
      %v1586 = vadd.f32 0.0, %v1585
      %1587 = vmatmul.f32.gmra.mxu0 %v1524
      %v1588 = vpop.f32.mrf.mxu0
      %v1589 = vadd.f32 0.0, %v1588
      %1590 = vmatmul.f32.gmra.mxu0 %v1527
      %v1591 = vpop.f32.mrf.mxu0
      %v1592 = vadd.f32 0.0, %v1591
      %1593 = vmatmul.f32.gmra.mxu0 %v1530
      %v1594 = vpop.f32.mrf.mxu0
      %v1595 = vadd.f32 0.0, %v1594
      %1596 = vmatmul.f32.gmra.mxu0 %v1533
      %v1597 = vpop.f32.mrf.mxu0
      %v1598 = vadd.f32 0.0, %v1597
      %1599 = vmatmul.f32.gmra.mxu0 %v1536
      %v1600 = vpop.f32.mrf.mxu0
      %v1601 = vadd.f32 0.0, %v1600
      %1602 = vmatmul.f32.gmra.mxu0 %v1539
      %v1603 = vpop.f32.mrf.mxu0
      %v1604 = vadd.f32 0.0, %v1603
      %1605 = vmatmul.f32.gmra.mxu0 %v1542
      %v1606 = vpop.f32.mrf.mxu0
      %v1607 = vadd.f32 0.0, %v1606
      %1608 = vdwg.mxu0
      %v1609 = vadd.f32 %v1461, %v1562
      %v1610 = vadd.f32 %v1462, %v1565
      %v1611 = vadd.f32 %v1463, %v1568
      %v1612 = vadd.f32 %v1464, %v1571
      %v1613 = vadd.f32 %v1465, %v1574
      %v1614 = vadd.f32 %v1466, %v1577
      %v1615 = vadd.f32 %v1467, %v1580
      %v1616 = vadd.f32 %v1468, %v1583
      %v1617 = vadd.f32 %v1469, %v1586
      %v1618 = vadd.f32 %v1470, %v1589
      %v1619 = vadd.f32 %v1471, %v1592
      %v1620 = vadd.f32 %v1472, %v1595
      %v1621 = vadd.f32 %v1473, %v1598
      %v1622 = vadd.f32 %v1474, %v1601
      %v1623 = vadd.f32 %v1475, %v1604
      %v1624 = vadd.f32 %v1476, %v1607
      %v1625 = vld [vmem:[%s434 + $0x16] sm:$0xff]
      %v1626 = vld [vmem:[%s434 + $0x1e] sm:$0xff]
      %v1627 = vld [vmem:[%s434 + $0x26] sm:$0xff]
      %v1628 = vld [vmem:[%s434 + $0x2e] sm:$0xff]
      %v1629 = vld [vmem:[%s434 + $0x36] sm:$0xff]
      %v1630 = vld [vmem:[%s434 + $0x3e] sm:$0xff]
      %v1631 = vld [vmem:[%s434 + $0x46] sm:$0xff]
      %v1632 = vld [vmem:[%s434 + $0x4e] sm:$0xff]
      %v1633 = vld [vmem:[%s434 + $0x56] sm:$0xff]
      %v1634 = vld [vmem:[%s434 + $0x5e] sm:$0xff]
      %v1635 = vld [vmem:[%s434 + $0x66] sm:$0xff]
      %v1636 = vld [vmem:[%s434 + $0x6e] sm:$0xff]
      %v1637 = vld [vmem:[%s434 + $0x76] sm:$0xff]
      %v1638 = vld [vmem:[%s434 + $0x7e] sm:$0xff]
      %v1639 = vld [vmem:[%s434 + $0x86] sm:$0xff]
      %v1640 = vld [vmem:[%s434 + $0x8e] sm:$0xff]
      %s1641 = scalar_lea.vmem %s439, 128
      %v1642 = vld [vmem:[%s1641] sm:$0xff]
      %v1643 = vld [vmem:[%s1641 + $0x8] sm:$0xff]
      %v1645 = vsel %vm510, %v1625, 0
      %v1648 = vsel %vm510, %v1626, 0
      %v1651 = vsel %vm510, %v1627, 0
      %v1654 = vsel %vm510, %v1628, 0
      %v1657 = vsel %vm510, %v1629, 0
      %v1660 = vsel %vm510, %v1630, 0
      %v1663 = vsel %vm510, %v1631, 0
      %v1666 = vsel %vm510, %v1632, 0
      %v1669 = vsel %vm510, %v1633, 0
      %v1672 = vsel %vm510, %v1634, 0
      %v1675 = vsel %vm510, %v1635, 0
      %v1678 = vsel %vm510, %v1636, 0
      %v1681 = vsel %vm510, %v1637, 0
      %v1684 = vsel %vm510, %v1638, 0
      %v1687 = vsel %vm510, %v1639, 0
      %v1690 = vsel %vm510, %v1640, 0
      %1692 = vmatpush.msra.mxu0 0.0
      %1693 = vmatpush.msra.mxu0 0.0
      %1694 = vmatpush.msra.mxu0 0.0
      %1695 = vmatpush.msra.mxu0 0.0
      %1696 = vmatpush.msra.mxu0 0.0
      %1697 = vmatpush.msra.mxu0 0.0
      %1698 = vmatpush.msra.mxu0 0.0
      %1699 = vmatpush.msra.mxu0 0.0
      %1700 = vmatpush.msra.mxu0 0.0
      %1701 = vmatpush.msra.mxu0 0.0
      %1702 = vmatpush.msra.mxu0 0.0
      %1703 = vmatpush.msra.mxu0 0.0
      %1704 = vmatpush.msra.mxu0 0.0
      %1705 = vmatpush.msra.mxu0 0.0
      %1706 = vmatpush.msra.mxu0 %v1643
      %1707 = vmatpush.msra.mxu0 %v1642
      %1708 = vmatmul.f32.gmra.mxu0 %v1645
      %v1709 = vpop.f32.mrf.mxu0
      %v1710 = vadd.f32 0.0, %v1709
      %1711 = vmatmul.f32.gmra.mxu0 %v1648
      %v1712 = vpop.f32.mrf.mxu0
      %v1713 = vadd.f32 0.0, %v1712
      %1714 = vmatmul.f32.gmra.mxu0 %v1651
      %v1715 = vpop.f32.mrf.mxu0
      %v1716 = vadd.f32 0.0, %v1715
      %1717 = vmatmul.f32.gmra.mxu0 %v1654
      %v1718 = vpop.f32.mrf.mxu0
      %v1719 = vadd.f32 0.0, %v1718
      %1720 = vmatmul.f32.gmra.mxu0 %v1657
      %v1721 = vpop.f32.mrf.mxu0
      %v1722 = vadd.f32 0.0, %v1721
      %1723 = vmatmul.f32.gmra.mxu0 %v1660
      %v1724 = vpop.f32.mrf.mxu0
      %v1725 = vadd.f32 0.0, %v1724
      %1726 = vmatmul.f32.gmra.mxu0 %v1663
      %v1727 = vpop.f32.mrf.mxu0
      %v1728 = vadd.f32 0.0, %v1727
      %1729 = vmatmul.f32.gmra.mxu0 %v1666
      %v1730 = vpop.f32.mrf.mxu0
      %v1731 = vadd.f32 0.0, %v1730
      %1732 = vmatmul.f32.gmra.mxu0 %v1669
      %v1733 = vpop.f32.mrf.mxu0
      %v1734 = vadd.f32 0.0, %v1733
      %1735 = vmatmul.f32.gmra.mxu0 %v1672
      %v1736 = vpop.f32.mrf.mxu0
      %v1737 = vadd.f32 0.0, %v1736
      %1738 = vmatmul.f32.gmra.mxu0 %v1675
      %v1739 = vpop.f32.mrf.mxu0
      %v1740 = vadd.f32 0.0, %v1739
      %1741 = vmatmul.f32.gmra.mxu0 %v1678
      %v1742 = vpop.f32.mrf.mxu0
      %v1743 = vadd.f32 0.0, %v1742
      %1744 = vmatmul.f32.gmra.mxu0 %v1681
      %v1745 = vpop.f32.mrf.mxu0
      %v1746 = vadd.f32 0.0, %v1745
      %1747 = vmatmul.f32.gmra.mxu0 %v1684
      %v1748 = vpop.f32.mrf.mxu0
      %v1749 = vadd.f32 0.0, %v1748
      %1750 = vmatmul.f32.gmra.mxu0 %v1687
      %v1751 = vpop.f32.mrf.mxu0
      %v1752 = vadd.f32 0.0, %v1751
      %1753 = vmatmul.f32.gmra.mxu0 %v1690
      %v1754 = vpop.f32.mrf.mxu0
      %v1755 = vadd.f32 0.0, %v1754
      %1756 = vdwg.mxu0
      %v1757 = vadd.f32 %v1609, %v1710
      %v1758 = vadd.f32 %v1610, %v1713
      %v1759 = vadd.f32 %v1611, %v1716
      %v1760 = vadd.f32 %v1612, %v1719
      %v1761 = vadd.f32 %v1613, %v1722
      %v1762 = vadd.f32 %v1614, %v1725
      %v1763 = vadd.f32 %v1615, %v1728
      %v1764 = vadd.f32 %v1616, %v1731
      %v1765 = vadd.f32 %v1617, %v1734
      %v1766 = vadd.f32 %v1618, %v1737
      %v1767 = vadd.f32 %v1619, %v1740
      %v1768 = vadd.f32 %v1620, %v1743
      %v1769 = vadd.f32 %v1621, %v1746
      %v1770 = vadd.f32 %v1622, %v1749
      %v1771 = vadd.f32 %v1623, %v1752
      %v1772 = vadd.f32 %v1624, %v1755
      %v1773 = vld [vmem:[%s434 + $0x18] sm:$0xff]
      %v1774 = vld [vmem:[%s434 + $0x20] sm:$0xff]
      %v1775 = vld [vmem:[%s434 + $0x28] sm:$0xff]
      %v1776 = vld [vmem:[%s434 + $0x30] sm:$0xff]
      %v1777 = vld [vmem:[%s434 + $0x38] sm:$0xff]
      %v1778 = vld [vmem:[%s434 + $0x40] sm:$0xff]
      %v1779 = vld [vmem:[%s434 + $0x48] sm:$0xff]
      %v1780 = vld [vmem:[%s434 + $0x50] sm:$0xff]
      %v1781 = vld [vmem:[%s434 + $0x58] sm:$0xff]
      %v1782 = vld [vmem:[%s434 + $0x60] sm:$0xff]
      %v1783 = vld [vmem:[%s434 + $0x68] sm:$0xff]
      %v1784 = vld [vmem:[%s434 + $0x70] sm:$0xff]
      %v1785 = vld [vmem:[%s434 + $0x78] sm:$0xff]
      %v1786 = vld [vmem:[%s434 + $0x80] sm:$0xff]
      %v1787 = vld [vmem:[%s434 + $0x88] sm:$0xff]
      %v1788 = vld [vmem:[%s434 + $0x90] sm:$0xff]
      %s1789 = scalar_lea.vmem %s439, 144
      %v1790 = vld [vmem:[%s1789] sm:$0xff]
      %v1791 = vld [vmem:[%s1789 + $0x8] sm:$0xff]
      %v1793 = vsel %vm510, %v1773, 0
      %v1796 = vsel %vm510, %v1774, 0
      %v1799 = vsel %vm510, %v1775, 0
      %v1802 = vsel %vm510, %v1776, 0
      %v1805 = vsel %vm510, %v1777, 0
      %v1808 = vsel %vm510, %v1778, 0
      %v1811 = vsel %vm510, %v1779, 0
      %v1814 = vsel %vm510, %v1780, 0
      %v1817 = vsel %vm510, %v1781, 0
      %v1820 = vsel %vm510, %v1782, 0
      %v1823 = vsel %vm510, %v1783, 0
      %v1826 = vsel %vm510, %v1784, 0
      %v1829 = vsel %vm510, %v1785, 0
      %v1832 = vsel %vm510, %v1786, 0
      %v1835 = vsel %vm510, %v1787, 0
      %v1838 = vsel %vm510, %v1788, 0
      %1840 = vmatpush.msra.mxu0 0.0
      %1841 = vmatpush.msra.mxu0 0.0
      %1842 = vmatpush.msra.mxu0 0.0
      %1843 = vmatpush.msra.mxu0 0.0
      %1844 = vmatpush.msra.mxu0 0.0
      %1845 = vmatpush.msra.mxu0 0.0
      %1846 = vmatpush.msra.mxu0 0.0
      %1847 = vmatpush.msra.mxu0 0.0
      %1848 = vmatpush.msra.mxu0 0.0
      %1849 = vmatpush.msra.mxu0 0.0
      %1850 = vmatpush.msra.mxu0 0.0
      %1851 = vmatpush.msra.mxu0 0.0
      %1852 = vmatpush.msra.mxu0 0.0
      %1853 = vmatpush.msra.mxu0 0.0
      %1854 = vmatpush.msra.mxu0 %v1791
      %1855 = vmatpush.msra.mxu0 %v1790
      %1856 = vmatmul.f32.gmra.mxu0 %v1793
      %v1857 = vpop.f32.mrf.mxu0
      %v1858 = vadd.f32 0.0, %v1857
      %1859 = vmatmul.f32.gmra.mxu0 %v1796
      %v1860 = vpop.f32.mrf.mxu0
      %v1861 = vadd.f32 0.0, %v1860
      %1862 = vmatmul.f32.gmra.mxu0 %v1799
      %v1863 = vpop.f32.mrf.mxu0
      %v1864 = vadd.f32 0.0, %v1863
      %1865 = vmatmul.f32.gmra.mxu0 %v1802
      %v1866 = vpop.f32.mrf.mxu0
      %v1867 = vadd.f32 0.0, %v1866
      %1868 = vmatmul.f32.gmra.mxu0 %v1805
      %v1869 = vpop.f32.mrf.mxu0
      %v1870 = vadd.f32 0.0, %v1869
      %1871 = vmatmul.f32.gmra.mxu0 %v1808
      %v1872 = vpop.f32.mrf.mxu0
      %v1873 = vadd.f32 0.0, %v1872
      %1874 = vmatmul.f32.gmra.mxu0 %v1811
      %v1875 = vpop.f32.mrf.mxu0
      %v1876 = vadd.f32 0.0, %v1875
      %1877 = vmatmul.f32.gmra.mxu0 %v1814
      %v1878 = vpop.f32.mrf.mxu0
      %v1879 = vadd.f32 0.0, %v1878
      %1880 = vmatmul.f32.gmra.mxu0 %v1817
      %v1881 = vpop.f32.mrf.mxu0
      %v1882 = vadd.f32 0.0, %v1881
      %1883 = vmatmul.f32.gmra.mxu0 %v1820
      %v1884 = vpop.f32.mrf.mxu0
      %v1885 = vadd.f32 0.0, %v1884
      %1886 = vmatmul.f32.gmra.mxu0 %v1823
      %v1887 = vpop.f32.mrf.mxu0
      %v1888 = vadd.f32 0.0, %v1887
      %1889 = vmatmul.f32.gmra.mxu0 %v1826
      %v1890 = vpop.f32.mrf.mxu0
      %v1891 = vadd.f32 0.0, %v1890
      %1892 = vmatmul.f32.gmra.mxu0 %v1829
      %v1893 = vpop.f32.mrf.mxu0
      %v1894 = vadd.f32 0.0, %v1893
      %1895 = vmatmul.f32.gmra.mxu0 %v1832
      %v1896 = vpop.f32.mrf.mxu0
      %v1897 = vadd.f32 0.0, %v1896
      %1898 = vmatmul.f32.gmra.mxu0 %v1835
      %v1899 = vpop.f32.mrf.mxu0
      %v1900 = vadd.f32 0.0, %v1899
      %1901 = vmatmul.f32.gmra.mxu0 %v1838
      %v1902 = vpop.f32.mrf.mxu0
      %v1903 = vadd.f32 0.0, %v1902
      %1904 = vdwg.mxu0
      %v1905 = vadd.f32 %v1757, %v1858
      %v1906 = vadd.f32 %v1758, %v1861
      %v1907 = vadd.f32 %v1759, %v1864
      %v1908 = vadd.f32 %v1760, %v1867
      %v1909 = vadd.f32 %v1761, %v1870
      %v1910 = vadd.f32 %v1762, %v1873
      %v1911 = vadd.f32 %v1763, %v1876
      %v1912 = vadd.f32 %v1764, %v1879
      %v1913 = vadd.f32 %v1765, %v1882
      %v1914 = vadd.f32 %v1766, %v1885
      %v1915 = vadd.f32 %v1767, %v1888
      %v1916 = vadd.f32 %v1768, %v1891
      %v1917 = vadd.f32 %v1769, %v1894
      %v1918 = vadd.f32 %v1770, %v1897
      %v1919 = vadd.f32 %v1771, %v1900
      %v1920 = vadd.f32 %v1772, %v1903
      %v1921 = vld [vmem:[%s434 + $0x20] sm:$0xff]
      %v1922 = vld [vmem:[%s434 + $0x28] sm:$0xff]
      %v1923 = vld [vmem:[%s434 + $0x30] sm:$0xff]
      %v1924 = vld [vmem:[%s434 + $0x38] sm:$0xff]
      %v1925 = vld [vmem:[%s434 + $0x40] sm:$0xff]
      %v1926 = vld [vmem:[%s434 + $0x48] sm:$0xff]
      %v1927 = vld [vmem:[%s434 + $0x50] sm:$0xff]
      %v1928 = vld [vmem:[%s434 + $0x58] sm:$0xff]
      %v1929 = vld [vmem:[%s434 + $0x60] sm:$0xff]
      %v1930 = vld [vmem:[%s434 + $0x68] sm:$0xff]
      %v1931 = vld [vmem:[%s434 + $0x70] sm:$0xff]
      %v1932 = vld [vmem:[%s434 + $0x78] sm:$0xff]
      %v1933 = vld [vmem:[%s434 + $0x80] sm:$0xff]
      %v1934 = vld [vmem:[%s434 + $0x88] sm:$0xff]
      %v1935 = vld [vmem:[%s434 + $0x90] sm:$0xff]
      %v1936 = vld [vmem:[%s434 + $0x98] sm:$0xff]
      %s1937 = scalar_lea.vmem %s439, 160
      %v1938 = vld [vmem:[%s1937] sm:$0xff]
      %v1939 = vld [vmem:[%s1937 + $0x8] sm:$0xff]
      %v1941 = vsel %vm510, %v1921, 0
      %v1944 = vsel %vm510, %v1922, 0
      %v1947 = vsel %vm510, %v1923, 0
      %v1950 = vsel %vm510, %v1924, 0
      %v1953 = vsel %vm510, %v1925, 0
      %v1956 = vsel %vm510, %v1926, 0
      %v1959 = vsel %vm510, %v1927, 0
      %v1962 = vsel %vm510, %v1928, 0
      %v1965 = vsel %vm510, %v1929, 0
      %v1968 = vsel %vm510, %v1930, 0
      %v1971 = vsel %vm510, %v1931, 0
      %v1974 = vsel %vm510, %v1932, 0
      %v1977 = vsel %vm510, %v1933, 0
      %v1980 = vsel %vm510, %v1934, 0
      %v1983 = vsel %vm510, %v1935, 0
      %v1986 = vsel %vm510, %v1936, 0
      %1988 = vmatpush.msra.mxu0 0.0
      %1989 = vmatpush.msra.mxu0 0.0
      %1990 = vmatpush.msra.mxu0 0.0
      %1991 = vmatpush.msra.mxu0 0.0
      %1992 = vmatpush.msra.mxu0 0.0
      %1993 = vmatpush.msra.mxu0 0.0
      %1994 = vmatpush.msra.mxu0 0.0
      %1995 = vmatpush.msra.mxu0 0.0
      %1996 = vmatpush.msra.mxu0 0.0
      %1997 = vmatpush.msra.mxu0 0.0
      %1998 = vmatpush.msra.mxu0 0.0
      %1999 = vmatpush.msra.mxu0 0.0
      %2000 = vmatpush.msra.mxu0 0.0
      %2001 = vmatpush.msra.mxu0 0.0
      %2002 = vmatpush.msra.mxu0 %v1939
      %2003 = vmatpush.msra.mxu0 %v1938
      %2004 = vmatmul.f32.gmra.mxu0 %v1941
      %v2005 = vpop.f32.mrf.mxu0
      %v2006 = vadd.f32 0.0, %v2005
      %2007 = vmatmul.f32.gmra.mxu0 %v1944
      %v2008 = vpop.f32.mrf.mxu0
      %v2009 = vadd.f32 0.0, %v2008
      %2010 = vmatmul.f32.gmra.mxu0 %v1947
      %v2011 = vpop.f32.mrf.mxu0
      %v2012 = vadd.f32 0.0, %v2011
      %2013 = vmatmul.f32.gmra.mxu0 %v1950
      %v2014 = vpop.f32.mrf.mxu0
      %v2015 = vadd.f32 0.0, %v2014
      %2016 = vmatmul.f32.gmra.mxu0 %v1953
      %v2017 = vpop.f32.mrf.mxu0
      %v2018 = vadd.f32 0.0, %v2017
      %2019 = vmatmul.f32.gmra.mxu0 %v1956
      %v2020 = vpop.f32.mrf.mxu0
      %v2021 = vadd.f32 0.0, %v2020
      %2022 = vmatmul.f32.gmra.mxu0 %v1959
      %v2023 = vpop.f32.mrf.mxu0
      %v2024 = vadd.f32 0.0, %v2023
      %2025 = vmatmul.f32.gmra.mxu0 %v1962
      %v2026 = vpop.f32.mrf.mxu0
      %v2027 = vadd.f32 0.0, %v2026
      %2028 = vmatmul.f32.gmra.mxu0 %v1965
      %v2029 = vpop.f32.mrf.mxu0
      %v2030 = vadd.f32 0.0, %v2029
      %2031 = vmatmul.f32.gmra.mxu0 %v1968
      %v2032 = vpop.f32.mrf.mxu0
      %v2033 = vadd.f32 0.0, %v2032
      %2034 = vmatmul.f32.gmra.mxu0 %v1971
      %v2035 = vpop.f32.mrf.mxu0
      %v2036 = vadd.f32 0.0, %v2035
      %2037 = vmatmul.f32.gmra.mxu0 %v1974
      %v2038 = vpop.f32.mrf.mxu0
      %v2039 = vadd.f32 0.0, %v2038
      %2040 = vmatmul.f32.gmra.mxu0 %v1977
      %v2041 = vpop.f32.mrf.mxu0
      %v2042 = vadd.f32 0.0, %v2041
      %2043 = vmatmul.f32.gmra.mxu0 %v1980
      %v2044 = vpop.f32.mrf.mxu0
      %v2045 = vadd.f32 0.0, %v2044
      %2046 = vmatmul.f32.gmra.mxu0 %v1983
      %v2047 = vpop.f32.mrf.mxu0
      %v2048 = vadd.f32 0.0, %v2047
      %2049 = vmatmul.f32.gmra.mxu0 %v1986
      %v2050 = vpop.f32.mrf.mxu0
      %v2051 = vadd.f32 0.0, %v2050
      %2052 = vdwg.mxu0
      %v2053 = vadd.f32 %v1905, %v2006
      %v2054 = vadd.f32 %v1906, %v2009
      %v2055 = vadd.f32 %v1907, %v2012
      %v2056 = vadd.f32 %v1908, %v2015
      %v2057 = vadd.f32 %v1909, %v2018
      %v2058 = vadd.f32 %v1910, %v2021
      %v2059 = vadd.f32 %v1911, %v2024
      %v2060 = vadd.f32 %v1912, %v2027
      %v2061 = vadd.f32 %v1913, %v2030
      %v2062 = vadd.f32 %v1914, %v2033
      %v2063 = vadd.f32 %v1915, %v2036
      %v2064 = vadd.f32 %v1916, %v2039
      %v2065 = vadd.f32 %v1917, %v2042
      %v2066 = vadd.f32 %v1918, %v2045
      %v2067 = vadd.f32 %v1919, %v2048
      %v2068 = vadd.f32 %v1920, %v2051
      %v2069 = vld [vmem:[%s434 + $0x22] sm:$0xff]
      %v2070 = vld [vmem:[%s434 + $0x2a] sm:$0xff]
      %v2071 = vld [vmem:[%s434 + $0x32] sm:$0xff]
      %v2072 = vld [vmem:[%s434 + $0x3a] sm:$0xff]
      %v2073 = vld [vmem:[%s434 + $0x42] sm:$0xff]
      %v2074 = vld [vmem:[%s434 + $0x4a] sm:$0xff]
      %v2075 = vld [vmem:[%s434 + $0x52] sm:$0xff]
      %v2076 = vld [vmem:[%s434 + $0x5a] sm:$0xff]
      %v2077 = vld [vmem:[%s434 + $0x62] sm:$0xff]
      %v2078 = vld [vmem:[%s434 + $0x6a] sm:$0xff]
      %v2079 = vld [vmem:[%s434 + $0x72] sm:$0xff]
      %v2080 = vld [vmem:[%s434 + $0x7a] sm:$0xff]
      %v2081 = vld [vmem:[%s434 + $0x82] sm:$0xff]
      %v2082 = vld [vmem:[%s434 + $0x8a] sm:$0xff]
      %v2083 = vld [vmem:[%s434 + $0x92] sm:$0xff]
      %v2084 = vld [vmem:[%s434 + $0x9a] sm:$0xff]
      %s2085 = scalar_lea.vmem %s439, 176
      %v2086 = vld [vmem:[%s2085] sm:$0xff]
      %v2087 = vld [vmem:[%s2085 + $0x8] sm:$0xff]
      %v2089 = vsel %vm510, %v2069, 0
      %v2092 = vsel %vm510, %v2070, 0
      %v2095 = vsel %vm510, %v2071, 0
      %v2098 = vsel %vm510, %v2072, 0
      %v2101 = vsel %vm510, %v2073, 0
      %v2104 = vsel %vm510, %v2074, 0
      %v2107 = vsel %vm510, %v2075, 0
      %v2110 = vsel %vm510, %v2076, 0
      %v2113 = vsel %vm510, %v2077, 0
      %v2116 = vsel %vm510, %v2078, 0
      %v2119 = vsel %vm510, %v2079, 0
      %v2122 = vsel %vm510, %v2080, 0
      %v2125 = vsel %vm510, %v2081, 0
      %v2128 = vsel %vm510, %v2082, 0
      %v2131 = vsel %vm510, %v2083, 0
      %v2134 = vsel %vm510, %v2084, 0
      %2136 = vmatpush.msra.mxu0 0.0
      %2137 = vmatpush.msra.mxu0 0.0
      %2138 = vmatpush.msra.mxu0 0.0
      %2139 = vmatpush.msra.mxu0 0.0
      %2140 = vmatpush.msra.mxu0 0.0
      %2141 = vmatpush.msra.mxu0 0.0
      %2142 = vmatpush.msra.mxu0 0.0
      %2143 = vmatpush.msra.mxu0 0.0
      %2144 = vmatpush.msra.mxu0 0.0
      %2145 = vmatpush.msra.mxu0 0.0
      %2146 = vmatpush.msra.mxu0 0.0
      %2147 = vmatpush.msra.mxu0 0.0
      %2148 = vmatpush.msra.mxu0 0.0
      %2149 = vmatpush.msra.mxu0 0.0
      %2150 = vmatpush.msra.mxu0 %v2087
      %2151 = vmatpush.msra.mxu0 %v2086
      %2152 = vmatmul.f32.gmra.mxu0 %v2089
      %v2153 = vpop.f32.mrf.mxu0
      %v2154 = vadd.f32 0.0, %v2153
      %2155 = vmatmul.f32.gmra.mxu0 %v2092
      %v2156 = vpop.f32.mrf.mxu0
      %v2157 = vadd.f32 0.0, %v2156
      %2158 = vmatmul.f32.gmra.mxu0 %v2095
      %v2159 = vpop.f32.mrf.mxu0
      %v2160 = vadd.f32 0.0, %v2159
      %2161 = vmatmul.f32.gmra.mxu0 %v2098
      %v2162 = vpop.f32.mrf.mxu0
      %v2163 = vadd.f32 0.0, %v2162
      %2164 = vmatmul.f32.gmra.mxu0 %v2101
      %v2165 = vpop.f32.mrf.mxu0
      %v2166 = vadd.f32 0.0, %v2165
      %2167 = vmatmul.f32.gmra.mxu0 %v2104
      %v2168 = vpop.f32.mrf.mxu0
      %v2169 = vadd.f32 0.0, %v2168
      %2170 = vmatmul.f32.gmra.mxu0 %v2107
      %v2171 = vpop.f32.mrf.mxu0
      %v2172 = vadd.f32 0.0, %v2171
      %2173 = vmatmul.f32.gmra.mxu0 %v2110
      %v2174 = vpop.f32.mrf.mxu0
      %v2175 = vadd.f32 0.0, %v2174
      %2176 = vmatmul.f32.gmra.mxu0 %v2113
      %v2177 = vpop.f32.mrf.mxu0
      %v2178 = vadd.f32 0.0, %v2177
      %2179 = vmatmul.f32.gmra.mxu0 %v2116
      %v2180 = vpop.f32.mrf.mxu0
      %v2181 = vadd.f32 0.0, %v2180
      %2182 = vmatmul.f32.gmra.mxu0 %v2119
      %v2183 = vpop.f32.mrf.mxu0
      %v2184 = vadd.f32 0.0, %v2183
      %2185 = vmatmul.f32.gmra.mxu0 %v2122
      %v2186 = vpop.f32.mrf.mxu0
      %v2187 = vadd.f32 0.0, %v2186
      %2188 = vmatmul.f32.gmra.mxu0 %v2125
      %v2189 = vpop.f32.mrf.mxu0
      %v2190 = vadd.f32 0.0, %v2189
      %2191 = vmatmul.f32.gmra.mxu0 %v2128
      %v2192 = vpop.f32.mrf.mxu0
      %v2193 = vadd.f32 0.0, %v2192
      %2194 = vmatmul.f32.gmra.mxu0 %v2131
      %v2195 = vpop.f32.mrf.mxu0
      %v2196 = vadd.f32 0.0, %v2195
      %2197 = vmatmul.f32.gmra.mxu0 %v2134
      %v2198 = vpop.f32.mrf.mxu0
      %v2199 = vadd.f32 0.0, %v2198
      %2200 = vdwg.mxu0
      %v2201 = vadd.f32 %v2053, %v2154
      %v2202 = vadd.f32 %v2054, %v2157
      %v2203 = vadd.f32 %v2055, %v2160
      %v2204 = vadd.f32 %v2056, %v2163
      %v2205 = vadd.f32 %v2057, %v2166
      %v2206 = vadd.f32 %v2058, %v2169
      %v2207 = vadd.f32 %v2059, %v2172
      %v2208 = vadd.f32 %v2060, %v2175
      %v2209 = vadd.f32 %v2061, %v2178
      %v2210 = vadd.f32 %v2062, %v2181
      %v2211 = vadd.f32 %v2063, %v2184
      %v2212 = vadd.f32 %v2064, %v2187
      %v2213 = vadd.f32 %v2065, %v2190
      %v2214 = vadd.f32 %v2066, %v2193
      %v2215 = vadd.f32 %v2067, %v2196
      %v2216 = vadd.f32 %v2068, %v2199
      %v2217 = vld [vmem:[%s434 + $0x24] sm:$0xff]
      %v2218 = vld [vmem:[%s434 + $0x2c] sm:$0xff]
      %v2219 = vld [vmem:[%s434 + $0x34] sm:$0xff]
      %v2220 = vld [vmem:[%s434 + $0x3c] sm:$0xff]
      %v2221 = vld [vmem:[%s434 + $0x44] sm:$0xff]
      %v2222 = vld [vmem:[%s434 + $0x4c] sm:$0xff]
      %v2223 = vld [vmem:[%s434 + $0x54] sm:$0xff]
      %v2224 = vld [vmem:[%s434 + $0x5c] sm:$0xff]
      %v2225 = vld [vmem:[%s434 + $0x64] sm:$0xff]
      %v2226 = vld [vmem:[%s434 + $0x6c] sm:$0xff]
      %v2227 = vld [vmem:[%s434 + $0x74] sm:$0xff]
      %v2228 = vld [vmem:[%s434 + $0x7c] sm:$0xff]
      %v2229 = vld [vmem:[%s434 + $0x84] sm:$0xff]
      %v2230 = vld [vmem:[%s434 + $0x8c] sm:$0xff]
      %v2231 = vld [vmem:[%s434 + $0x94] sm:$0xff]
      %v2232 = vld [vmem:[%s434 + $0x9c] sm:$0xff]
      %s2233 = scalar_lea.vmem %s439, 192
      %v2234 = vld [vmem:[%s2233] sm:$0xff]
      %v2235 = vld [vmem:[%s2233 + $0x8] sm:$0xff]
      %v2237 = vsel %vm510, %v2217, 0
      %v2240 = vsel %vm510, %v2218, 0
      %v2243 = vsel %vm510, %v2219, 0
      %v2246 = vsel %vm510, %v2220, 0
      %v2249 = vsel %vm510, %v2221, 0
      %v2252 = vsel %vm510, %v2222, 0
      %v2255 = vsel %vm510, %v2223, 0
      %v2258 = vsel %vm510, %v2224, 0
      %v2261 = vsel %vm510, %v2225, 0
      %v2264 = vsel %vm510, %v2226, 0
      %v2267 = vsel %vm510, %v2227, 0
      %v2270 = vsel %vm510, %v2228, 0
      %v2273 = vsel %vm510, %v2229, 0
      %v2276 = vsel %vm510, %v2230, 0
      %v2279 = vsel %vm510, %v2231, 0
      %v2282 = vsel %vm510, %v2232, 0
      %2284 = vmatpush.msra.mxu0 0.0
      %2285 = vmatpush.msra.mxu0 0.0
      %2286 = vmatpush.msra.mxu0 0.0
      %2287 = vmatpush.msra.mxu0 0.0
      %2288 = vmatpush.msra.mxu0 0.0
      %2289 = vmatpush.msra.mxu0 0.0
      %2290 = vmatpush.msra.mxu0 0.0
      %2291 = vmatpush.msra.mxu0 0.0
      %2292 = vmatpush.msra.mxu0 0.0
      %2293 = vmatpush.msra.mxu0 0.0
      %2294 = vmatpush.msra.mxu0 0.0
      %2295 = vmatpush.msra.mxu0 0.0
      %2296 = vmatpush.msra.mxu0 0.0
      %2297 = vmatpush.msra.mxu0 0.0
      %2298 = vmatpush.msra.mxu0 %v2235
      %2299 = vmatpush.msra.mxu0 %v2234
      %2300 = vmatmul.f32.gmra.mxu0 %v2237
      %v2301 = vpop.f32.mrf.mxu0
      %v2302 = vadd.f32 0.0, %v2301
      %2303 = vmatmul.f32.gmra.mxu0 %v2240
      %v2304 = vpop.f32.mrf.mxu0
      %v2305 = vadd.f32 0.0, %v2304
      %2306 = vmatmul.f32.gmra.mxu0 %v2243
      %v2307 = vpop.f32.mrf.mxu0
      %v2308 = vadd.f32 0.0, %v2307
      %2309 = vmatmul.f32.gmra.mxu0 %v2246
      %v2310 = vpop.f32.mrf.mxu0
      %v2311 = vadd.f32 0.0, %v2310
      %2312 = vmatmul.f32.gmra.mxu0 %v2249
      %v2313 = vpop.f32.mrf.mxu0
      %v2314 = vadd.f32 0.0, %v2313
      %2315 = vmatmul.f32.gmra.mxu0 %v2252
      %v2316 = vpop.f32.mrf.mxu0
      %v2317 = vadd.f32 0.0, %v2316
      %2318 = vmatmul.f32.gmra.mxu0 %v2255
      %v2319 = vpop.f32.mrf.mxu0
      %v2320 = vadd.f32 0.0, %v2319
      %2321 = vmatmul.f32.gmra.mxu0 %v2258
      %v2322 = vpop.f32.mrf.mxu0
      %v2323 = vadd.f32 0.0, %v2322
      %2324 = vmatmul.f32.gmra.mxu0 %v2261
      %v2325 = vpop.f32.mrf.mxu0
      %v2326 = vadd.f32 0.0, %v2325
      %2327 = vmatmul.f32.gmra.mxu0 %v2264
      %v2328 = vpop.f32.mrf.mxu0
      %v2329 = vadd.f32 0.0, %v2328
      %2330 = vmatmul.f32.gmra.mxu0 %v2267
      %v2331 = vpop.f32.mrf.mxu0
      %v2332 = vadd.f32 0.0, %v2331
      %2333 = vmatmul.f32.gmra.mxu0 %v2270
      %v2334 = vpop.f32.mrf.mxu0
      %v2335 = vadd.f32 0.0, %v2334
      %2336 = vmatmul.f32.gmra.mxu0 %v2273
      %v2337 = vpop.f32.mrf.mxu0
      %v2338 = vadd.f32 0.0, %v2337
      %2339 = vmatmul.f32.gmra.mxu0 %v2276
      %v2340 = vpop.f32.mrf.mxu0
      %v2341 = vadd.f32 0.0, %v2340
      %2342 = vmatmul.f32.gmra.mxu0 %v2279
      %v2343 = vpop.f32.mrf.mxu0
      %v2344 = vadd.f32 0.0, %v2343
      %2345 = vmatmul.f32.gmra.mxu0 %v2282
      %v2346 = vpop.f32.mrf.mxu0
      %v2347 = vadd.f32 0.0, %v2346
      %2348 = vdwg.mxu0
      %v2349 = vadd.f32 %v2201, %v2302
      %v2350 = vadd.f32 %v2202, %v2305
      %v2351 = vadd.f32 %v2203, %v2308
      %v2352 = vadd.f32 %v2204, %v2311
      %v2353 = vadd.f32 %v2205, %v2314
      %v2354 = vadd.f32 %v2206, %v2317
      %v2355 = vadd.f32 %v2207, %v2320
      %v2356 = vadd.f32 %v2208, %v2323
      %v2357 = vadd.f32 %v2209, %v2326
      %v2358 = vadd.f32 %v2210, %v2329
      %v2359 = vadd.f32 %v2211, %v2332
      %v2360 = vadd.f32 %v2212, %v2335
      %v2361 = vadd.f32 %v2213, %v2338
      %v2362 = vadd.f32 %v2214, %v2341
      %v2363 = vadd.f32 %v2215, %v2344
      %v2364 = vadd.f32 %v2216, %v2347
      %v2365 = vld [vmem:[%s434 + $0x26] sm:$0xff]
      %v2366 = vld [vmem:[%s434 + $0x2e] sm:$0xff]
      %v2367 = vld [vmem:[%s434 + $0x36] sm:$0xff]
      %v2368 = vld [vmem:[%s434 + $0x3e] sm:$0xff]
      %v2369 = vld [vmem:[%s434 + $0x46] sm:$0xff]
      %v2370 = vld [vmem:[%s434 + $0x4e] sm:$0xff]
      %v2371 = vld [vmem:[%s434 + $0x56] sm:$0xff]
      %v2372 = vld [vmem:[%s434 + $0x5e] sm:$0xff]
      %v2373 = vld [vmem:[%s434 + $0x66] sm:$0xff]
      %v2374 = vld [vmem:[%s434 + $0x6e] sm:$0xff]
      %v2375 = vld [vmem:[%s434 + $0x76] sm:$0xff]
      %v2376 = vld [vmem:[%s434 + $0x7e] sm:$0xff]
      %v2377 = vld [vmem:[%s434 + $0x86] sm:$0xff]
      %v2378 = vld [vmem:[%s434 + $0x8e] sm:$0xff]
      %v2379 = vld [vmem:[%s434 + $0x96] sm:$0xff]
      %v2380 = vld [vmem:[%s434 + $0x9e] sm:$0xff]
      %s2381 = scalar_lea.vmem %s439, 208
      %v2382 = vld [vmem:[%s2381] sm:$0xff]
      %v2383 = vld [vmem:[%s2381 + $0x8] sm:$0xff]
      %v2385 = vsel %vm510, %v2365, 0
      %v2388 = vsel %vm510, %v2366, 0
      %v2391 = vsel %vm510, %v2367, 0
      %v2394 = vsel %vm510, %v2368, 0
      %v2397 = vsel %vm510, %v2369, 0
      %v2400 = vsel %vm510, %v2370, 0
      %v2403 = vsel %vm510, %v2371, 0
      %v2406 = vsel %vm510, %v2372, 0
      %v2409 = vsel %vm510, %v2373, 0
      %v2412 = vsel %vm510, %v2374, 0
      %v2415 = vsel %vm510, %v2375, 0
      %v2418 = vsel %vm510, %v2376, 0
      %v2421 = vsel %vm510, %v2377, 0
      %v2424 = vsel %vm510, %v2378, 0
      %v2427 = vsel %vm510, %v2379, 0
      %v2430 = vsel %vm510, %v2380, 0
      %2432 = vmatpush.msra.mxu0 0.0
      %2433 = vmatpush.msra.mxu0 0.0
      %2434 = vmatpush.msra.mxu0 0.0
      %2435 = vmatpush.msra.mxu0 0.0
      %2436 = vmatpush.msra.mxu0 0.0
      %2437 = vmatpush.msra.mxu0 0.0
      %2438 = vmatpush.msra.mxu0 0.0
      %2439 = vmatpush.msra.mxu0 0.0
      %2440 = vmatpush.msra.mxu0 0.0
      %2441 = vmatpush.msra.mxu0 0.0
      %2442 = vmatpush.msra.mxu0 0.0
      %2443 = vmatpush.msra.mxu0 0.0
      %2444 = vmatpush.msra.mxu0 0.0
      %2445 = vmatpush.msra.mxu0 0.0
      %2446 = vmatpush.msra.mxu0 %v2383
      %2447 = vmatpush.msra.mxu0 %v2382
      %2448 = vmatmul.f32.gmra.mxu0 %v2385
      %v2449 = vpop.f32.mrf.mxu0
      %v2450 = vadd.f32 0.0, %v2449
      %2451 = vmatmul.f32.gmra.mxu0 %v2388
      %v2452 = vpop.f32.mrf.mxu0
      %v2453 = vadd.f32 0.0, %v2452
      %2454 = vmatmul.f32.gmra.mxu0 %v2391
      %v2455 = vpop.f32.mrf.mxu0
      %v2456 = vadd.f32 0.0, %v2455
      %2457 = vmatmul.f32.gmra.mxu0 %v2394
      %v2458 = vpop.f32.mrf.mxu0
      %v2459 = vadd.f32 0.0, %v2458
      %2460 = vmatmul.f32.gmra.mxu0 %v2397
      %v2461 = vpop.f32.mrf.mxu0
      %v2462 = vadd.f32 0.0, %v2461
      %2463 = vmatmul.f32.gmra.mxu0 %v2400
      %v2464 = vpop.f32.mrf.mxu0
      %v2465 = vadd.f32 0.0, %v2464
      %2466 = vmatmul.f32.gmra.mxu0 %v2403
      %v2467 = vpop.f32.mrf.mxu0
      %v2468 = vadd.f32 0.0, %v2467
      %2469 = vmatmul.f32.gmra.mxu0 %v2406
      %v2470 = vpop.f32.mrf.mxu0
      %v2471 = vadd.f32 0.0, %v2470
      %2472 = vmatmul.f32.gmra.mxu0 %v2409
      %v2473 = vpop.f32.mrf.mxu0
      %v2474 = vadd.f32 0.0, %v2473
      %2475 = vmatmul.f32.gmra.mxu0 %v2412
      %v2476 = vpop.f32.mrf.mxu0
      %v2477 = vadd.f32 0.0, %v2476
      %2478 = vmatmul.f32.gmra.mxu0 %v2415
      %v2479 = vpop.f32.mrf.mxu0
      %v2480 = vadd.f32 0.0, %v2479
      %2481 = vmatmul.f32.gmra.mxu0 %v2418
      %v2482 = vpop.f32.mrf.mxu0
      %v2483 = vadd.f32 0.0, %v2482
      %2484 = vmatmul.f32.gmra.mxu0 %v2421
      %v2485 = vpop.f32.mrf.mxu0
      %v2486 = vadd.f32 0.0, %v2485
      %2487 = vmatmul.f32.gmra.mxu0 %v2424
      %v2488 = vpop.f32.mrf.mxu0
      %v2489 = vadd.f32 0.0, %v2488
      %2490 = vmatmul.f32.gmra.mxu0 %v2427
      %v2491 = vpop.f32.mrf.mxu0
      %v2492 = vadd.f32 0.0, %v2491
      %2493 = vmatmul.f32.gmra.mxu0 %v2430
      %v2494 = vpop.f32.mrf.mxu0
      %v2495 = vadd.f32 0.0, %v2494
      %2496 = vdwg.mxu0
      %v2497 = vadd.f32 %v2349, %v2450
      %v2498 = vadd.f32 %v2350, %v2453
      %v2499 = vadd.f32 %v2351, %v2456
      %v2500 = vadd.f32 %v2352, %v2459
      %v2501 = vadd.f32 %v2353, %v2462
      %v2502 = vadd.f32 %v2354, %v2465
      %v2503 = vadd.f32 %v2355, %v2468
      %v2504 = vadd.f32 %v2356, %v2471
      %v2505 = vadd.f32 %v2357, %v2474
      %v2506 = vadd.f32 %v2358, %v2477
      %v2507 = vadd.f32 %v2359, %v2480
      %v2508 = vadd.f32 %v2360, %v2483
      %v2509 = vadd.f32 %v2361, %v2486
      %v2510 = vadd.f32 %v2362, %v2489
      %v2511 = vadd.f32 %v2363, %v2492
      %v2512 = vadd.f32 %v2364, %v2495
      %v2513 = vld [vmem:[%s434 + $0x28] sm:$0xff]
      %v2514 = vld [vmem:[%s434 + $0x30] sm:$0xff]
      %v2515 = vld [vmem:[%s434 + $0x38] sm:$0xff]
      %v2516 = vld [vmem:[%s434 + $0x40] sm:$0xff]
      %v2517 = vld [vmem:[%s434 + $0x48] sm:$0xff]
      %v2518 = vld [vmem:[%s434 + $0x50] sm:$0xff]
      %v2519 = vld [vmem:[%s434 + $0x58] sm:$0xff]
      %v2520 = vld [vmem:[%s434 + $0x60] sm:$0xff]
      %v2521 = vld [vmem:[%s434 + $0x68] sm:$0xff]
      %v2522 = vld [vmem:[%s434 + $0x70] sm:$0xff]
      %v2523 = vld [vmem:[%s434 + $0x78] sm:$0xff]
      %v2524 = vld [vmem:[%s434 + $0x80] sm:$0xff]
      %v2525 = vld [vmem:[%s434 + $0x88] sm:$0xff]
      %v2526 = vld [vmem:[%s434 + $0x90] sm:$0xff]
      %v2527 = vld [vmem:[%s434 + $0x98] sm:$0xff]
      %v2528 = vld [vmem:[%s434 + $0xa0] sm:$0xff]
      %s2529 = scalar_lea.vmem %s439, 224
      %v2530 = vld [vmem:[%s2529] sm:$0xff]
      %v2531 = vld [vmem:[%s2529 + $0x8] sm:$0xff]
      %v2533 = vsel %vm510, %v2513, 0
      %v2536 = vsel %vm510, %v2514, 0
      %v2539 = vsel %vm510, %v2515, 0
      %v2542 = vsel %vm510, %v2516, 0
      %v2545 = vsel %vm510, %v2517, 0
      %v2548 = vsel %vm510, %v2518, 0
      %v2551 = vsel %vm510, %v2519, 0
      %v2554 = vsel %vm510, %v2520, 0
      %v2557 = vsel %vm510, %v2521, 0
      %v2560 = vsel %vm510, %v2522, 0
      %v2563 = vsel %vm510, %v2523, 0
      %v2566 = vsel %vm510, %v2524, 0
      %v2569 = vsel %vm510, %v2525, 0
      %v2572 = vsel %vm510, %v2526, 0
      %v2575 = vsel %vm510, %v2527, 0
      %v2578 = vsel %vm510, %v2528, 0
      %2580 = vmatpush.msra.mxu0 0.0
      %2581 = vmatpush.msra.mxu0 0.0
      %2582 = vmatpush.msra.mxu0 0.0
      %2583 = vmatpush.msra.mxu0 0.0
      %2584 = vmatpush.msra.mxu0 0.0
      %2585 = vmatpush.msra.mxu0 0.0
      %2586 = vmatpush.msra.mxu0 0.0
      %2587 = vmatpush.msra.mxu0 0.0
      %2588 = vmatpush.msra.mxu0 0.0
      %2589 = vmatpush.msra.mxu0 0.0
      %2590 = vmatpush.msra.mxu0 0.0
      %2591 = vmatpush.msra.mxu0 0.0
      %2592 = vmatpush.msra.mxu0 0.0
      %2593 = vmatpush.msra.mxu0 0.0
      %2594 = vmatpush.msra.mxu0 %v2531
      %2595 = vmatpush.msra.mxu0 %v2530
      %2596 = vmatmul.f32.gmra.mxu0 %v2533
      %v2597 = vpop.f32.mrf.mxu0
      %v2598 = vadd.f32 0.0, %v2597
      %2599 = vmatmul.f32.gmra.mxu0 %v2536
      %v2600 = vpop.f32.mrf.mxu0
      %v2601 = vadd.f32 0.0, %v2600
      %2602 = vmatmul.f32.gmra.mxu0 %v2539
      %v2603 = vpop.f32.mrf.mxu0
      %v2604 = vadd.f32 0.0, %v2603
      %2605 = vmatmul.f32.gmra.mxu0 %v2542
      %v2606 = vpop.f32.mrf.mxu0
      %v2607 = vadd.f32 0.0, %v2606
      %2608 = vmatmul.f32.gmra.mxu0 %v2545
      %v2609 = vpop.f32.mrf.mxu0
      %v2610 = vadd.f32 0.0, %v2609
      %2611 = vmatmul.f32.gmra.mxu0 %v2548
      %v2612 = vpop.f32.mrf.mxu0
      %v2613 = vadd.f32 0.0, %v2612
      %2614 = vmatmul.f32.gmra.mxu0 %v2551
      %v2615 = vpop.f32.mrf.mxu0
      %v2616 = vadd.f32 0.0, %v2615
      %2617 = vmatmul.f32.gmra.mxu0 %v2554
      %v2618 = vpop.f32.mrf.mxu0
      %v2619 = vadd.f32 0.0, %v2618
      %2620 = vmatmul.f32.gmra.mxu0 %v2557
      %v2621 = vpop.f32.mrf.mxu0
      %v2622 = vadd.f32 0.0, %v2621
      %2623 = vmatmul.f32.gmra.mxu0 %v2560
      %v2624 = vpop.f32.mrf.mxu0
      %v2625 = vadd.f32 0.0, %v2624
      %2626 = vmatmul.f32.gmra.mxu0 %v2563
      %v2627 = vpop.f32.mrf.mxu0
      %v2628 = vadd.f32 0.0, %v2627
      %2629 = vmatmul.f32.gmra.mxu0 %v2566
      %v2630 = vpop.f32.mrf.mxu0
      %v2631 = vadd.f32 0.0, %v2630
      %2632 = vmatmul.f32.gmra.mxu0 %v2569
      %v2633 = vpop.f32.mrf.mxu0
      %v2634 = vadd.f32 0.0, %v2633
      %2635 = vmatmul.f32.gmra.mxu0 %v2572
      %v2636 = vpop.f32.mrf.mxu0
      %v2637 = vadd.f32 0.0, %v2636
      %2638 = vmatmul.f32.gmra.mxu0 %v2575
      %v2639 = vpop.f32.mrf.mxu0
      %v2640 = vadd.f32 0.0, %v2639
      %2641 = vmatmul.f32.gmra.mxu0 %v2578
      %v2642 = vpop.f32.mrf.mxu0
      %v2643 = vadd.f32 0.0, %v2642
      %2644 = vdwg.mxu0
      %v2645 = vadd.f32 %v2497, %v2598
      %v2646 = vadd.f32 %v2498, %v2601
      %v2647 = vadd.f32 %v2499, %v2604
      %v2648 = vadd.f32 %v2500, %v2607
      %v2649 = vadd.f32 %v2501, %v2610
      %v2650 = vadd.f32 %v2502, %v2613
      %v2651 = vadd.f32 %v2503, %v2616
      %v2652 = vadd.f32 %v2504, %v2619
      %v2653 = vadd.f32 %v2505, %v2622
      %v2654 = vadd.f32 %v2506, %v2625
      %v2655 = vadd.f32 %v2507, %v2628
      %v2656 = vadd.f32 %v2508, %v2631
      %v2657 = vadd.f32 %v2509, %v2634
      %v2658 = vadd.f32 %v2510, %v2637
      %v2659 = vadd.f32 %v2511, %v2640
      %v2660 = vadd.f32 %v2512, %v2643
      %v2661 = vld [vmem:[%s434 + $0x30] sm:$0xff]
      %v2662 = vld [vmem:[%s434 + $0x38] sm:$0xff]
      %v2663 = vld [vmem:[%s434 + $0x40] sm:$0xff]
      %v2664 = vld [vmem:[%s434 + $0x48] sm:$0xff]
      %v2665 = vld [vmem:[%s434 + $0x50] sm:$0xff]
      %v2666 = vld [vmem:[%s434 + $0x58] sm:$0xff]
      %v2667 = vld [vmem:[%s434 + $0x60] sm:$0xff]
      %v2668 = vld [vmem:[%s434 + $0x68] sm:$0xff]
      %v2669 = vld [vmem:[%s434 + $0x70] sm:$0xff]
      %v2670 = vld [vmem:[%s434 + $0x78] sm:$0xff]
      %v2671 = vld [vmem:[%s434 + $0x80] sm:$0xff]
      %v2672 = vld [vmem:[%s434 + $0x88] sm:$0xff]
      %v2673 = vld [vmem:[%s434 + $0x90] sm:$0xff]
      %v2674 = vld [vmem:[%s434 + $0x98] sm:$0xff]
      %v2675 = vld [vmem:[%s434 + $0xa0] sm:$0xff]
      %v2676 = vld [vmem:[%s434 + $0xa8] sm:$0xff]
      %s2677 = scalar_lea.vmem %s439, 240
      %v2678 = vld [vmem:[%s2677] sm:$0xff]
      %v2679 = vld [vmem:[%s2677 + $0x8] sm:$0xff]
      %v2681 = vsel %vm510, %v2661, 0
      %v2684 = vsel %vm510, %v2662, 0
      %v2687 = vsel %vm510, %v2663, 0
      %v2690 = vsel %vm510, %v2664, 0
      %v2693 = vsel %vm510, %v2665, 0
      %v2696 = vsel %vm510, %v2666, 0
      %v2699 = vsel %vm510, %v2667, 0
      %v2702 = vsel %vm510, %v2668, 0
      %v2705 = vsel %vm510, %v2669, 0
      %v2708 = vsel %vm510, %v2670, 0
      %v2711 = vsel %vm510, %v2671, 0
      %v2714 = vsel %vm510, %v2672, 0
      %v2717 = vsel %vm510, %v2673, 0
      %v2720 = vsel %vm510, %v2674, 0
      %v2723 = vsel %vm510, %v2675, 0
      %v2726 = vsel %vm510, %v2676, 0
      %2728 = vmatpush.msra.mxu0 0.0
      %2729 = vmatpush.msra.mxu0 0.0
      %2730 = vmatpush.msra.mxu0 0.0
      %2731 = vmatpush.msra.mxu0 0.0
      %2732 = vmatpush.msra.mxu0 0.0
      %2733 = vmatpush.msra.mxu0 0.0
      %2734 = vmatpush.msra.mxu0 0.0
      %2735 = vmatpush.msra.mxu0 0.0
      %2736 = vmatpush.msra.mxu0 0.0
      %2737 = vmatpush.msra.mxu0 0.0
      %2738 = vmatpush.msra.mxu0 0.0
      %2739 = vmatpush.msra.mxu0 0.0
      %2740 = vmatpush.msra.mxu0 0.0
      %2741 = vmatpush.msra.mxu0 0.0
      %2742 = vmatpush.msra.mxu0 %v2679
      %2743 = vmatpush.msra.mxu0 %v2678
      %2744 = vmatmul.f32.gmra.mxu0 %v2681
      %v2745 = vpop.f32.mrf.mxu0
      %v2746 = vadd.f32 0.0, %v2745
      %2747 = vmatmul.f32.gmra.mxu0 %v2684
      %v2748 = vpop.f32.mrf.mxu0
      %v2749 = vadd.f32 0.0, %v2748
      %2750 = vmatmul.f32.gmra.mxu0 %v2687
      %v2751 = vpop.f32.mrf.mxu0
      %v2752 = vadd.f32 0.0, %v2751
      %2753 = vmatmul.f32.gmra.mxu0 %v2690
      %v2754 = vpop.f32.mrf.mxu0
      %v2755 = vadd.f32 0.0, %v2754
      %2756 = vmatmul.f32.gmra.mxu0 %v2693
      %v2757 = vpop.f32.mrf.mxu0
      %v2758 = vadd.f32 0.0, %v2757
      %2759 = vmatmul.f32.gmra.mxu0 %v2696
      %v2760 = vpop.f32.mrf.mxu0
      %v2761 = vadd.f32 0.0, %v2760
      %2762 = vmatmul.f32.gmra.mxu0 %v2699
      %v2763 = vpop.f32.mrf.mxu0
      %v2764 = vadd.f32 0.0, %v2763
      %2765 = vmatmul.f32.gmra.mxu0 %v2702
      %v2766 = vpop.f32.mrf.mxu0
      %v2767 = vadd.f32 0.0, %v2766
      %2768 = vmatmul.f32.gmra.mxu0 %v2705
      %v2769 = vpop.f32.mrf.mxu0
      %v2770 = vadd.f32 0.0, %v2769
      %2771 = vmatmul.f32.gmra.mxu0 %v2708
      %v2772 = vpop.f32.mrf.mxu0
      %v2773 = vadd.f32 0.0, %v2772
      %2774 = vmatmul.f32.gmra.mxu0 %v2711
      %v2775 = vpop.f32.mrf.mxu0
      %v2776 = vadd.f32 0.0, %v2775
      %2777 = vmatmul.f32.gmra.mxu0 %v2714
      %v2778 = vpop.f32.mrf.mxu0
      %v2779 = vadd.f32 0.0, %v2778
      %2780 = vmatmul.f32.gmra.mxu0 %v2717
      %v2781 = vpop.f32.mrf.mxu0
      %v2782 = vadd.f32 0.0, %v2781
      %2783 = vmatmul.f32.gmra.mxu0 %v2720
      %v2784 = vpop.f32.mrf.mxu0
      %v2785 = vadd.f32 0.0, %v2784
      %2786 = vmatmul.f32.gmra.mxu0 %v2723
      %v2787 = vpop.f32.mrf.mxu0
      %v2788 = vadd.f32 0.0, %v2787
      %2789 = vmatmul.f32.gmra.mxu0 %v2726
      %v2790 = vpop.f32.mrf.mxu0
      %v2791 = vadd.f32 0.0, %v2790
      %2792 = vdwg.mxu0
      %v2793 = vadd.f32 %v2645, %v2746
      %v2794 = vadd.f32 %v2646, %v2749
      %v2795 = vadd.f32 %v2647, %v2752
      %v2796 = vadd.f32 %v2648, %v2755
      %v2797 = vadd.f32 %v2649, %v2758
      %v2798 = vadd.f32 %v2650, %v2761
      %v2799 = vadd.f32 %v2651, %v2764
      %v2800 = vadd.f32 %v2652, %v2767
      %v2801 = vadd.f32 %v2653, %v2770
      %v2802 = vadd.f32 %v2654, %v2773
      %v2803 = vadd.f32 %v2655, %v2776
      %v2804 = vadd.f32 %v2656, %v2779
      %v2805 = vadd.f32 %v2657, %v2782
      %v2806 = vadd.f32 %v2658, %v2785
      %v2807 = vadd.f32 %v2659, %v2788
      %v2808 = vadd.f32 %v2660, %v2791
      %v2809 = vld [vmem:[%s434 + $0x32] sm:$0xff]
      %v2810 = vld [vmem:[%s434 + $0x3a] sm:$0xff]
      %v2811 = vld [vmem:[%s434 + $0x42] sm:$0xff]
      %v2812 = vld [vmem:[%s434 + $0x4a] sm:$0xff]
      %v2813 = vld [vmem:[%s434 + $0x52] sm:$0xff]
      %v2814 = vld [vmem:[%s434 + $0x5a] sm:$0xff]
      %v2815 = vld [vmem:[%s434 + $0x62] sm:$0xff]
      %v2816 = vld [vmem:[%s434 + $0x6a] sm:$0xff]
      %v2817 = vld [vmem:[%s434 + $0x72] sm:$0xff]
      %v2818 = vld [vmem:[%s434 + $0x7a] sm:$0xff]
      %v2819 = vld [vmem:[%s434 + $0x82] sm:$0xff]
      %v2820 = vld [vmem:[%s434 + $0x8a] sm:$0xff]
      %v2821 = vld [vmem:[%s434 + $0x92] sm:$0xff]
      %v2822 = vld [vmem:[%s434 + $0x9a] sm:$0xff]
      %v2823 = vld [vmem:[%s434 + $0xa2] sm:$0xff]
      %v2824 = vld [vmem:[%s434 + $0xaa] sm:$0xff]
      %s2825 = scalar_lea.vmem %s439, 256
      %v2826 = vld [vmem:[%s2825] sm:$0xff]
      %v2827 = vld [vmem:[%s2825 + $0x8] sm:$0xff]
      %v2829 = vsel %vm510, %v2809, 0
      %v2832 = vsel %vm510, %v2810, 0
      %v2835 = vsel %vm510, %v2811, 0
      %v2838 = vsel %vm510, %v2812, 0
      %v2841 = vsel %vm510, %v2813, 0
      %v2844 = vsel %vm510, %v2814, 0
      %v2847 = vsel %vm510, %v2815, 0
      %v2850 = vsel %vm510, %v2816, 0
      %v2853 = vsel %vm510, %v2817, 0
      %v2856 = vsel %vm510, %v2818, 0
      %v2859 = vsel %vm510, %v2819, 0
      %v2862 = vsel %vm510, %v2820, 0
      %v2865 = vsel %vm510, %v2821, 0
      %v2868 = vsel %vm510, %v2822, 0
      %v2871 = vsel %vm510, %v2823, 0
      %v2874 = vsel %vm510, %v2824, 0
      %2876 = vmatpush.msra.mxu0 0.0
      %2877 = vmatpush.msra.mxu0 0.0
      %2878 = vmatpush.msra.mxu0 0.0
      %2879 = vmatpush.msra.mxu0 0.0
      %2880 = vmatpush.msra.mxu0 0.0
      %2881 = vmatpush.msra.mxu0 0.0
      %2882 = vmatpush.msra.mxu0 0.0
      %2883 = vmatpush.msra.mxu0 0.0
      %2884 = vmatpush.msra.mxu0 0.0
      %2885 = vmatpush.msra.mxu0 0.0
      %2886 = vmatpush.msra.mxu0 0.0
      %2887 = vmatpush.msra.mxu0 0.0
      %2888 = vmatpush.msra.mxu0 0.0
      %2889 = vmatpush.msra.mxu0 0.0
      %2890 = vmatpush.msra.mxu0 %v2827
      %2891 = vmatpush.msra.mxu0 %v2826
      %2892 = vmatmul.f32.gmra.mxu0 %v2829
      %v2893 = vpop.f32.mrf.mxu0
      %v2894 = vadd.f32 0.0, %v2893
      %2895 = vmatmul.f32.gmra.mxu0 %v2832
      %v2896 = vpop.f32.mrf.mxu0
      %v2897 = vadd.f32 0.0, %v2896
      %2898 = vmatmul.f32.gmra.mxu0 %v2835
      %v2899 = vpop.f32.mrf.mxu0
      %v2900 = vadd.f32 0.0, %v2899
      %2901 = vmatmul.f32.gmra.mxu0 %v2838
      %v2902 = vpop.f32.mrf.mxu0
      %v2903 = vadd.f32 0.0, %v2902
      %2904 = vmatmul.f32.gmra.mxu0 %v2841
      %v2905 = vpop.f32.mrf.mxu0
      %v2906 = vadd.f32 0.0, %v2905
      %2907 = vmatmul.f32.gmra.mxu0 %v2844
      %v2908 = vpop.f32.mrf.mxu0
      %v2909 = vadd.f32 0.0, %v2908
      %2910 = vmatmul.f32.gmra.mxu0 %v2847
      %v2911 = vpop.f32.mrf.mxu0
      %v2912 = vadd.f32 0.0, %v2911
      %2913 = vmatmul.f32.gmra.mxu0 %v2850
      %v2914 = vpop.f32.mrf.mxu0
      %v2915 = vadd.f32 0.0, %v2914
      %2916 = vmatmul.f32.gmra.mxu0 %v2853
      %v2917 = vpop.f32.mrf.mxu0
      %v2918 = vadd.f32 0.0, %v2917
      %2919 = vmatmul.f32.gmra.mxu0 %v2856
      %v2920 = vpop.f32.mrf.mxu0
      %v2921 = vadd.f32 0.0, %v2920
      %2922 = vmatmul.f32.gmra.mxu0 %v2859
      %v2923 = vpop.f32.mrf.mxu0
      %v2924 = vadd.f32 0.0, %v2923
      %2925 = vmatmul.f32.gmra.mxu0 %v2862
      %v2926 = vpop.f32.mrf.mxu0
      %v2927 = vadd.f32 0.0, %v2926
      %2928 = vmatmul.f32.gmra.mxu0 %v2865
      %v2929 = vpop.f32.mrf.mxu0
      %v2930 = vadd.f32 0.0, %v2929
      %2931 = vmatmul.f32.gmra.mxu0 %v2868
      %v2932 = vpop.f32.mrf.mxu0
      %v2933 = vadd.f32 0.0, %v2932
      %2934 = vmatmul.f32.gmra.mxu0 %v2871
      %v2935 = vpop.f32.mrf.mxu0
      %v2936 = vadd.f32 0.0, %v2935
      %2937 = vmatmul.f32.gmra.mxu0 %v2874
      %v2938 = vpop.f32.mrf.mxu0
      %v2939 = vadd.f32 0.0, %v2938
      %2940 = vdwg.mxu0
      %v2941 = vadd.f32 %v2793, %v2894
      %v2942 = vadd.f32 %v2794, %v2897
      %v2943 = vadd.f32 %v2795, %v2900
      %v2944 = vadd.f32 %v2796, %v2903
      %v2945 = vadd.f32 %v2797, %v2906
      %v2946 = vadd.f32 %v2798, %v2909
      %v2947 = vadd.f32 %v2799, %v2912
      %v2948 = vadd.f32 %v2800, %v2915
      %v2949 = vadd.f32 %v2801, %v2918
      %v2950 = vadd.f32 %v2802, %v2921
      %v2951 = vadd.f32 %v2803, %v2924
      %v2952 = vadd.f32 %v2804, %v2927
      %v2953 = vadd.f32 %v2805, %v2930
      %v2954 = vadd.f32 %v2806, %v2933
      %v2955 = vadd.f32 %v2807, %v2936
      %v2956 = vadd.f32 %v2808, %v2939
      %v2957 = vld [vmem:[%s434 + $0x34] sm:$0xff]
      %v2958 = vld [vmem:[%s434 + $0x3c] sm:$0xff]
      %v2959 = vld [vmem:[%s434 + $0x44] sm:$0xff]
      %v2960 = vld [vmem:[%s434 + $0x4c] sm:$0xff]
      %v2961 = vld [vmem:[%s434 + $0x54] sm:$0xff]
      %v2962 = vld [vmem:[%s434 + $0x5c] sm:$0xff]
      %v2963 = vld [vmem:[%s434 + $0x64] sm:$0xff]
      %v2964 = vld [vmem:[%s434 + $0x6c] sm:$0xff]
      %v2965 = vld [vmem:[%s434 + $0x74] sm:$0xff]
      %v2966 = vld [vmem:[%s434 + $0x7c] sm:$0xff]
      %v2967 = vld [vmem:[%s434 + $0x84] sm:$0xff]
      %v2968 = vld [vmem:[%s434 + $0x8c] sm:$0xff]
      %v2969 = vld [vmem:[%s434 + $0x94] sm:$0xff]
      %v2970 = vld [vmem:[%s434 + $0x9c] sm:$0xff]
      %v2971 = vld [vmem:[%s434 + $0xa4] sm:$0xff]
      %v2972 = vld [vmem:[%s434 + $0xac] sm:$0xff]
      %s2973 = scalar_lea.vmem %s439, 272
      %v2974 = vld [vmem:[%s2973] sm:$0xff]
      %v2975 = vld [vmem:[%s2973 + $0x8] sm:$0xff]
      %v2977 = vsel %vm510, %v2957, 0
      %v2980 = vsel %vm510, %v2958, 0
      %v2983 = vsel %vm510, %v2959, 0
      %v2986 = vsel %vm510, %v2960, 0
      %v2989 = vsel %vm510, %v2961, 0
      %v2992 = vsel %vm510, %v2962, 0
      %v2995 = vsel %vm510, %v2963, 0
      %v2998 = vsel %vm510, %v2964, 0
      %v3001 = vsel %vm510, %v2965, 0
      %v3004 = vsel %vm510, %v2966, 0
      %v3007 = vsel %vm510, %v2967, 0
      %v3010 = vsel %vm510, %v2968, 0
      %v3013 = vsel %vm510, %v2969, 0
      %v3016 = vsel %vm510, %v2970, 0
      %v3019 = vsel %vm510, %v2971, 0
      %v3022 = vsel %vm510, %v2972, 0
      %3024 = vmatpush.msra.mxu0 0.0
      %3025 = vmatpush.msra.mxu0 0.0
      %3026 = vmatpush.msra.mxu0 0.0
      %3027 = vmatpush.msra.mxu0 0.0
      %3028 = vmatpush.msra.mxu0 0.0
      %3029 = vmatpush.msra.mxu0 0.0
      %3030 = vmatpush.msra.mxu0 0.0
      %3031 = vmatpush.msra.mxu0 0.0
      %3032 = vmatpush.msra.mxu0 0.0
      %3033 = vmatpush.msra.mxu0 0.0
      %3034 = vmatpush.msra.mxu0 0.0
      %3035 = vmatpush.msra.mxu0 0.0
      %3036 = vmatpush.msra.mxu0 0.0
      %3037 = vmatpush.msra.mxu0 0.0
      %3038 = vmatpush.msra.mxu0 %v2975
      %3039 = vmatpush.msra.mxu0 %v2974
      %3040 = vmatmul.f32.gmra.mxu0 %v2977
      %v3041 = vpop.f32.mrf.mxu0
      %v3042 = vadd.f32 0.0, %v3041
      %3043 = vmatmul.f32.gmra.mxu0 %v2980
      %v3044 = vpop.f32.mrf.mxu0
      %v3045 = vadd.f32 0.0, %v3044
      %3046 = vmatmul.f32.gmra.mxu0 %v2983
      %v3047 = vpop.f32.mrf.mxu0
      %v3048 = vadd.f32 0.0, %v3047
      %3049 = vmatmul.f32.gmra.mxu0 %v2986
      %v3050 = vpop.f32.mrf.mxu0
      %v3051 = vadd.f32 0.0, %v3050
      %3052 = vmatmul.f32.gmra.mxu0 %v2989
      %v3053 = vpop.f32.mrf.mxu0
      %v3054 = vadd.f32 0.0, %v3053
      %3055 = vmatmul.f32.gmra.mxu0 %v2992
      %v3056 = vpop.f32.mrf.mxu0
      %v3057 = vadd.f32 0.0, %v3056
      %3058 = vmatmul.f32.gmra.mxu0 %v2995
      %v3059 = vpop.f32.mrf.mxu0
      %v3060 = vadd.f32 0.0, %v3059
      %3061 = vmatmul.f32.gmra.mxu0 %v2998
      %v3062 = vpop.f32.mrf.mxu0
      %v3063 = vadd.f32 0.0, %v3062
      %3064 = vmatmul.f32.gmra.mxu0 %v3001
      %v3065 = vpop.f32.mrf.mxu0
      %v3066 = vadd.f32 0.0, %v3065
      %3067 = vmatmul.f32.gmra.mxu0 %v3004
      %v3068 = vpop.f32.mrf.mxu0
      %v3069 = vadd.f32 0.0, %v3068
      %3070 = vmatmul.f32.gmra.mxu0 %v3007
      %v3071 = vpop.f32.mrf.mxu0
      %v3072 = vadd.f32 0.0, %v3071
      %3073 = vmatmul.f32.gmra.mxu0 %v3010
      %v3074 = vpop.f32.mrf.mxu0
      %v3075 = vadd.f32 0.0, %v3074
      %3076 = vmatmul.f32.gmra.mxu0 %v3013
      %v3077 = vpop.f32.mrf.mxu0
      %v3078 = vadd.f32 0.0, %v3077
      %3079 = vmatmul.f32.gmra.mxu0 %v3016
      %v3080 = vpop.f32.mrf.mxu0
      %v3081 = vadd.f32 0.0, %v3080
      %3082 = vmatmul.f32.gmra.mxu0 %v3019
      %v3083 = vpop.f32.mrf.mxu0
      %v3084 = vadd.f32 0.0, %v3083
      %3085 = vmatmul.f32.gmra.mxu0 %v3022
      %v3086 = vpop.f32.mrf.mxu0
      %v3087 = vadd.f32 0.0, %v3086
      %3088 = vdwg.mxu0
      %v3089 = vadd.f32 %v2941, %v3042
      %v3090 = vadd.f32 %v2942, %v3045
      %v3091 = vadd.f32 %v2943, %v3048
      %v3092 = vadd.f32 %v2944, %v3051
      %v3093 = vadd.f32 %v2945, %v3054
      %v3094 = vadd.f32 %v2946, %v3057
      %v3095 = vadd.f32 %v2947, %v3060
      %v3096 = vadd.f32 %v2948, %v3063
      %v3097 = vadd.f32 %v2949, %v3066
      %v3098 = vadd.f32 %v2950, %v3069
      %v3099 = vadd.f32 %v2951, %v3072
      %v3100 = vadd.f32 %v2952, %v3075
      %v3101 = vadd.f32 %v2953, %v3078
      %v3102 = vadd.f32 %v2954, %v3081
      %v3103 = vadd.f32 %v2955, %v3084
      %v3104 = vadd.f32 %v2956, %v3087
      %v3105 = vld [vmem:[%s434 + $0x36] sm:$0xff]
      %v3106 = vld [vmem:[%s434 + $0x3e] sm:$0xff]
      %v3107 = vld [vmem:[%s434 + $0x46] sm:$0xff]
      %v3108 = vld [vmem:[%s434 + $0x4e] sm:$0xff]
      %v3109 = vld [vmem:[%s434 + $0x56] sm:$0xff]
      %v3110 = vld [vmem:[%s434 + $0x5e] sm:$0xff]
      %v3111 = vld [vmem:[%s434 + $0x66] sm:$0xff]
      %v3112 = vld [vmem:[%s434 + $0x6e] sm:$0xff]
      %v3113 = vld [vmem:[%s434 + $0x76] sm:$0xff]
      %v3114 = vld [vmem:[%s434 + $0x7e] sm:$0xff]
      %v3115 = vld [vmem:[%s434 + $0x86] sm:$0xff]
      %v3116 = vld [vmem:[%s434 + $0x8e] sm:$0xff]
      %v3117 = vld [vmem:[%s434 + $0x96] sm:$0xff]
      %v3118 = vld [vmem:[%s434 + $0x9e] sm:$0xff]
      %v3119 = vld [vmem:[%s434 + $0xa6] sm:$0xff]
      %v3120 = vld [vmem:[%s434 + $0xae] sm:$0xff]
      %s3121 = scalar_lea.vmem %s439, 288
      %v3122 = vld [vmem:[%s3121] sm:$0xff]
      %v3123 = vld [vmem:[%s3121 + $0x8] sm:$0xff]
      %v3125 = vsel %vm510, %v3105, 0
      %v3128 = vsel %vm510, %v3106, 0
      %v3131 = vsel %vm510, %v3107, 0
      %v3134 = vsel %vm510, %v3108, 0
      %v3137 = vsel %vm510, %v3109, 0
      %v3140 = vsel %vm510, %v3110, 0
      %v3143 = vsel %vm510, %v3111, 0
      %v3146 = vsel %vm510, %v3112, 0
      %v3149 = vsel %vm510, %v3113, 0
      %v3152 = vsel %vm510, %v3114, 0
      %v3155 = vsel %vm510, %v3115, 0
      %v3158 = vsel %vm510, %v3116, 0
      %v3161 = vsel %vm510, %v3117, 0
      %v3164 = vsel %vm510, %v3118, 0
      %v3167 = vsel %vm510, %v3119, 0
      %v3170 = vsel %vm510, %v3120, 0
      %3172 = vmatpush.msra.mxu0 0.0
      %3173 = vmatpush.msra.mxu0 0.0
      %3174 = vmatpush.msra.mxu0 0.0
      %3175 = vmatpush.msra.mxu0 0.0
      %3176 = vmatpush.msra.mxu0 0.0
      %3177 = vmatpush.msra.mxu0 0.0
      %3178 = vmatpush.msra.mxu0 0.0
      %3179 = vmatpush.msra.mxu0 0.0
      %3180 = vmatpush.msra.mxu0 0.0
      %3181 = vmatpush.msra.mxu0 0.0
      %3182 = vmatpush.msra.mxu0 0.0
      %3183 = vmatpush.msra.mxu0 0.0
      %3184 = vmatpush.msra.mxu0 0.0
      %3185 = vmatpush.msra.mxu0 0.0
      %3186 = vmatpush.msra.mxu0 %v3123
      %3187 = vmatpush.msra.mxu0 %v3122
      %3188 = vmatmul.f32.gmra.mxu0 %v3125
      %v3189 = vpop.f32.mrf.mxu0
      %v3190 = vadd.f32 0.0, %v3189
      %3191 = vmatmul.f32.gmra.mxu0 %v3128
      %v3192 = vpop.f32.mrf.mxu0
      %v3193 = vadd.f32 0.0, %v3192
      %3194 = vmatmul.f32.gmra.mxu0 %v3131
      %v3195 = vpop.f32.mrf.mxu0
      %v3196 = vadd.f32 0.0, %v3195
      %3197 = vmatmul.f32.gmra.mxu0 %v3134
      %v3198 = vpop.f32.mrf.mxu0
      %v3199 = vadd.f32 0.0, %v3198
      %3200 = vmatmul.f32.gmra.mxu0 %v3137
      %v3201 = vpop.f32.mrf.mxu0
      %v3202 = vadd.f32 0.0, %v3201
      %3203 = vmatmul.f32.gmra.mxu0 %v3140
      %v3204 = vpop.f32.mrf.mxu0
      %v3205 = vadd.f32 0.0, %v3204
      %3206 = vmatmul.f32.gmra.mxu0 %v3143
      %v3207 = vpop.f32.mrf.mxu0
      %v3208 = vadd.f32 0.0, %v3207
      %3209 = vmatmul.f32.gmra.mxu0 %v3146
      %v3210 = vpop.f32.mrf.mxu0
      %v3211 = vadd.f32 0.0, %v3210
      %3212 = vmatmul.f32.gmra.mxu0 %v3149
      %v3213 = vpop.f32.mrf.mxu0
      %v3214 = vadd.f32 0.0, %v3213
      %3215 = vmatmul.f32.gmra.mxu0 %v3152
      %v3216 = vpop.f32.mrf.mxu0
      %v3217 = vadd.f32 0.0, %v3216
      %3218 = vmatmul.f32.gmra.mxu0 %v3155
      %v3219 = vpop.f32.mrf.mxu0
      %v3220 = vadd.f32 0.0, %v3219
      %3221 = vmatmul.f32.gmra.mxu0 %v3158
      %v3222 = vpop.f32.mrf.mxu0
      %v3223 = vadd.f32 0.0, %v3222
      %3224 = vmatmul.f32.gmra.mxu0 %v3161
      %v3225 = vpop.f32.mrf.mxu0
      %v3226 = vadd.f32 0.0, %v3225
      %3227 = vmatmul.f32.gmra.mxu0 %v3164
      %v3228 = vpop.f32.mrf.mxu0
      %v3229 = vadd.f32 0.0, %v3228
      %3230 = vmatmul.f32.gmra.mxu0 %v3167
      %v3231 = vpop.f32.mrf.mxu0
      %v3232 = vadd.f32 0.0, %v3231
      %3233 = vmatmul.f32.gmra.mxu0 %v3170
      %v3234 = vpop.f32.mrf.mxu0
      %v3235 = vadd.f32 0.0, %v3234
      %3236 = vdwg.mxu0
      %v3237 = vadd.f32 %v3089, %v3190
      %v3238 = vadd.f32 %v3090, %v3193
      %v3239 = vadd.f32 %v3091, %v3196
      %v3240 = vadd.f32 %v3092, %v3199
      %v3241 = vadd.f32 %v3093, %v3202
      %v3242 = vadd.f32 %v3094, %v3205
      %v3243 = vadd.f32 %v3095, %v3208
      %v3244 = vadd.f32 %v3096, %v3211
      %v3245 = vadd.f32 %v3097, %v3214
      %v3246 = vadd.f32 %v3098, %v3217
      %v3247 = vadd.f32 %v3099, %v3220
      %v3248 = vadd.f32 %v3100, %v3223
      %v3249 = vadd.f32 %v3101, %v3226
      %v3250 = vadd.f32 %v3102, %v3229
      %v3251 = vadd.f32 %v3103, %v3232
      %v3252 = vadd.f32 %v3104, %v3235
      %v3253 = vld [vmem:[%s434 + $0x38] sm:$0xff]
      %v3254 = vld [vmem:[%s434 + $0x40] sm:$0xff]
      %v3255 = vld [vmem:[%s434 + $0x48] sm:$0xff]
      %v3256 = vld [vmem:[%s434 + $0x50] sm:$0xff]
      %v3257 = vld [vmem:[%s434 + $0x58] sm:$0xff]
      %v3258 = vld [vmem:[%s434 + $0x60] sm:$0xff]
      %v3259 = vld [vmem:[%s434 + $0x68] sm:$0xff]
      %v3260 = vld [vmem:[%s434 + $0x70] sm:$0xff]
      %v3261 = vld [vmem:[%s434 + $0x78] sm:$0xff]
      %v3262 = vld [vmem:[%s434 + $0x80] sm:$0xff]
      %v3263 = vld [vmem:[%s434 + $0x88] sm:$0xff]
      %v3264 = vld [vmem:[%s434 + $0x90] sm:$0xff]
      %v3265 = vld [vmem:[%s434 + $0x98] sm:$0xff]
      %v3266 = vld [vmem:[%s434 + $0xa0] sm:$0xff]
      %v3267 = vld [vmem:[%s434 + $0xa8] sm:$0xff]
      %v3268 = vld [vmem:[%s434 + $0xb0] sm:$0xff]
      %s3269 = scalar_lea.vmem %s439, 304
      %v3270 = vld [vmem:[%s3269] sm:$0xff]
      %v3271 = vld [vmem:[%s3269 + $0x8] sm:$0xff]
      %v3273 = vsel %vm510, %v3253, 0
      %v3276 = vsel %vm510, %v3254, 0
      %v3279 = vsel %vm510, %v3255, 0
      %v3282 = vsel %vm510, %v3256, 0
      %v3285 = vsel %vm510, %v3257, 0
      %v3288 = vsel %vm510, %v3258, 0
      %v3291 = vsel %vm510, %v3259, 0
      %v3294 = vsel %vm510, %v3260, 0
      %v3297 = vsel %vm510, %v3261, 0
      %v3300 = vsel %vm510, %v3262, 0
      %v3303 = vsel %vm510, %v3263, 0
      %v3306 = vsel %vm510, %v3264, 0
      %v3309 = vsel %vm510, %v3265, 0
      %v3312 = vsel %vm510, %v3266, 0
      %v3315 = vsel %vm510, %v3267, 0
      %v3318 = vsel %vm510, %v3268, 0
      %3320 = vmatpush.msra.mxu0 0.0
      %3321 = vmatpush.msra.mxu0 0.0
      %3322 = vmatpush.msra.mxu0 0.0
      %3323 = vmatpush.msra.mxu0 0.0
      %3324 = vmatpush.msra.mxu0 0.0
      %3325 = vmatpush.msra.mxu0 0.0
      %3326 = vmatpush.msra.mxu0 0.0
      %3327 = vmatpush.msra.mxu0 0.0
      %3328 = vmatpush.msra.mxu0 0.0
      %3329 = vmatpush.msra.mxu0 0.0
      %3330 = vmatpush.msra.mxu0 0.0
      %3331 = vmatpush.msra.mxu0 0.0
      %3332 = vmatpush.msra.mxu0 0.0
      %3333 = vmatpush.msra.mxu0 0.0
      %3334 = vmatpush.msra.mxu0 %v3271
      %3335 = vmatpush.msra.mxu0 %v3270
      %3336 = vmatmul.f32.gmra.mxu0 %v3273
      %v3337 = vpop.f32.mrf.mxu0
      %v3338 = vadd.f32 0.0, %v3337
      %3339 = vmatmul.f32.gmra.mxu0 %v3276
      %v3340 = vpop.f32.mrf.mxu0
      %v3341 = vadd.f32 0.0, %v3340
      %3342 = vmatmul.f32.gmra.mxu0 %v3279
      %v3343 = vpop.f32.mrf.mxu0
      %v3344 = vadd.f32 0.0, %v3343
      %3345 = vmatmul.f32.gmra.mxu0 %v3282
      %v3346 = vpop.f32.mrf.mxu0
      %v3347 = vadd.f32 0.0, %v3346
      %3348 = vmatmul.f32.gmra.mxu0 %v3285
      %v3349 = vpop.f32.mrf.mxu0
      %v3350 = vadd.f32 0.0, %v3349
      %3351 = vmatmul.f32.gmra.mxu0 %v3288
      %v3352 = vpop.f32.mrf.mxu0
      %v3353 = vadd.f32 0.0, %v3352
      %3354 = vmatmul.f32.gmra.mxu0 %v3291
      %v3355 = vpop.f32.mrf.mxu0
      %v3356 = vadd.f32 0.0, %v3355
      %3357 = vmatmul.f32.gmra.mxu0 %v3294
      %v3358 = vpop.f32.mrf.mxu0
      %v3359 = vadd.f32 0.0, %v3358
      %3360 = vmatmul.f32.gmra.mxu0 %v3297
      %v3361 = vpop.f32.mrf.mxu0
      %v3362 = vadd.f32 0.0, %v3361
      %3363 = vmatmul.f32.gmra.mxu0 %v3300
      %v3364 = vpop.f32.mrf.mxu0
      %v3365 = vadd.f32 0.0, %v3364
      %3366 = vmatmul.f32.gmra.mxu0 %v3303
      %v3367 = vpop.f32.mrf.mxu0
      %v3368 = vadd.f32 0.0, %v3367
      %3369 = vmatmul.f32.gmra.mxu0 %v3306
      %v3370 = vpop.f32.mrf.mxu0
      %v3371 = vadd.f32 0.0, %v3370
      %3372 = vmatmul.f32.gmra.mxu0 %v3309
      %v3373 = vpop.f32.mrf.mxu0
      %v3374 = vadd.f32 0.0, %v3373
      %3375 = vmatmul.f32.gmra.mxu0 %v3312
      %v3376 = vpop.f32.mrf.mxu0
      %v3377 = vadd.f32 0.0, %v3376
      %3378 = vmatmul.f32.gmra.mxu0 %v3315
      %v3379 = vpop.f32.mrf.mxu0
      %v3380 = vadd.f32 0.0, %v3379
      %3381 = vmatmul.f32.gmra.mxu0 %v3318
      %v3382 = vpop.f32.mrf.mxu0
      %v3383 = vadd.f32 0.0, %v3382
      %3384 = vdwg.mxu0
      %v3385 = vadd.f32 %v3237, %v3338
      %v3386 = vadd.f32 %v3238, %v3341
      %v3387 = vadd.f32 %v3239, %v3344
      %v3388 = vadd.f32 %v3240, %v3347
      %v3389 = vadd.f32 %v3241, %v3350
      %v3390 = vadd.f32 %v3242, %v3353
      %v3391 = vadd.f32 %v3243, %v3356
      %v3392 = vadd.f32 %v3244, %v3359
      %v3393 = vadd.f32 %v3245, %v3362
      %v3394 = vadd.f32 %v3246, %v3365
      %v3395 = vadd.f32 %v3247, %v3368
      %v3396 = vadd.f32 %v3248, %v3371
      %v3397 = vadd.f32 %v3249, %v3374
      %v3398 = vadd.f32 %v3250, %v3377
      %v3399 = vadd.f32 %v3251, %v3380
      %v3400 = vadd.f32 %v3252, %v3383
      %v3401 = vld [vmem:[%s434 + $0x40] sm:$0xff]
      %v3402 = vld [vmem:[%s434 + $0x48] sm:$0xff]
      %v3403 = vld [vmem:[%s434 + $0x50] sm:$0xff]
      %v3404 = vld [vmem:[%s434 + $0x58] sm:$0xff]
      %v3405 = vld [vmem:[%s434 + $0x60] sm:$0xff]
      %v3406 = vld [vmem:[%s434 + $0x68] sm:$0xff]
      %v3407 = vld [vmem:[%s434 + $0x70] sm:$0xff]
      %v3408 = vld [vmem:[%s434 + $0x78] sm:$0xff]
      %v3409 = vld [vmem:[%s434 + $0x80] sm:$0xff]
      %v3410 = vld [vmem:[%s434 + $0x88] sm:$0xff]
      %v3411 = vld [vmem:[%s434 + $0x90] sm:$0xff]
      %v3412 = vld [vmem:[%s434 + $0x98] sm:$0xff]
      %v3413 = vld [vmem:[%s434 + $0xa0] sm:$0xff]
      %v3414 = vld [vmem:[%s434 + $0xa8] sm:$0xff]
      %v3415 = vld [vmem:[%s434 + $0xb0] sm:$0xff]
      %v3416 = vld [vmem:[%s434 + $0xb8] sm:$0xff]
      %s3417 = scalar_lea.vmem %s439, 320
      %v3418 = vld [vmem:[%s3417] sm:$0xff]
      %v3419 = vld [vmem:[%s3417 + $0x8] sm:$0xff]
      %v3421 = vsel %vm510, %v3401, 0
      %v3424 = vsel %vm510, %v3402, 0
      %v3427 = vsel %vm510, %v3403, 0
      %v3430 = vsel %vm510, %v3404, 0
      %v3433 = vsel %vm510, %v3405, 0
      %v3436 = vsel %vm510, %v3406, 0
      %v3439 = vsel %vm510, %v3407, 0
      %v3442 = vsel %vm510, %v3408, 0
      %v3445 = vsel %vm510, %v3409, 0
      %v3448 = vsel %vm510, %v3410, 0
      %v3451 = vsel %vm510, %v3411, 0
      %v3454 = vsel %vm510, %v3412, 0
      %v3457 = vsel %vm510, %v3413, 0
      %v3460 = vsel %vm510, %v3414, 0
      %v3463 = vsel %vm510, %v3415, 0
      %v3466 = vsel %vm510, %v3416, 0
      %3468 = vmatpush.msra.mxu0 0.0
      %3469 = vmatpush.msra.mxu0 0.0
      %3470 = vmatpush.msra.mxu0 0.0
      %3471 = vmatpush.msra.mxu0 0.0
      %3472 = vmatpush.msra.mxu0 0.0
      %3473 = vmatpush.msra.mxu0 0.0
      %3474 = vmatpush.msra.mxu0 0.0
      %3475 = vmatpush.msra.mxu0 0.0
      %3476 = vmatpush.msra.mxu0 0.0
      %3477 = vmatpush.msra.mxu0 0.0
      %3478 = vmatpush.msra.mxu0 0.0
      %3479 = vmatpush.msra.mxu0 0.0
      %3480 = vmatpush.msra.mxu0 0.0
      %3481 = vmatpush.msra.mxu0 0.0
      %3482 = vmatpush.msra.mxu0 %v3419
      %3483 = vmatpush.msra.mxu0 %v3418
      %3484 = vmatmul.f32.gmra.mxu0 %v3421
      %v3485 = vpop.f32.mrf.mxu0
      %v3486 = vadd.f32 0.0, %v3485
      %3487 = vmatmul.f32.gmra.mxu0 %v3424
      %v3488 = vpop.f32.mrf.mxu0
      %v3489 = vadd.f32 0.0, %v3488
      %3490 = vmatmul.f32.gmra.mxu0 %v3427
      %v3491 = vpop.f32.mrf.mxu0
      %v3492 = vadd.f32 0.0, %v3491
      %3493 = vmatmul.f32.gmra.mxu0 %v3430
      %v3494 = vpop.f32.mrf.mxu0
      %v3495 = vadd.f32 0.0, %v3494
      %3496 = vmatmul.f32.gmra.mxu0 %v3433
      %v3497 = vpop.f32.mrf.mxu0
      %v3498 = vadd.f32 0.0, %v3497
      %3499 = vmatmul.f32.gmra.mxu0 %v3436
      %v3500 = vpop.f32.mrf.mxu0
      %v3501 = vadd.f32 0.0, %v3500
      %3502 = vmatmul.f32.gmra.mxu0 %v3439
      %v3503 = vpop.f32.mrf.mxu0
      %v3504 = vadd.f32 0.0, %v3503
      %3505 = vmatmul.f32.gmra.mxu0 %v3442
      %v3506 = vpop.f32.mrf.mxu0
      %v3507 = vadd.f32 0.0, %v3506
      %3508 = vmatmul.f32.gmra.mxu0 %v3445
      %v3509 = vpop.f32.mrf.mxu0
      %v3510 = vadd.f32 0.0, %v3509
      %3511 = vmatmul.f32.gmra.mxu0 %v3448
      %v3512 = vpop.f32.mrf.mxu0
      %v3513 = vadd.f32 0.0, %v3512
      %3514 = vmatmul.f32.gmra.mxu0 %v3451
      %v3515 = vpop.f32.mrf.mxu0
      %v3516 = vadd.f32 0.0, %v3515
      %3517 = vmatmul.f32.gmra.mxu0 %v3454
      %v3518 = vpop.f32.mrf.mxu0
      %v3519 = vadd.f32 0.0, %v3518
      %3520 = vmatmul.f32.gmra.mxu0 %v3457
      %v3521 = vpop.f32.mrf.mxu0
      %v3522 = vadd.f32 0.0, %v3521
      %3523 = vmatmul.f32.gmra.mxu0 %v3460
      %v3524 = vpop.f32.mrf.mxu0
      %v3525 = vadd.f32 0.0, %v3524
      %3526 = vmatmul.f32.gmra.mxu0 %v3463
      %v3527 = vpop.f32.mrf.mxu0
      %v3528 = vadd.f32 0.0, %v3527
      %3529 = vmatmul.f32.gmra.mxu0 %v3466
      %v3530 = vpop.f32.mrf.mxu0
      %v3531 = vadd.f32 0.0, %v3530
      %3532 = vdwg.mxu0
      %v3533 = vadd.f32 %v3385, %v3486
      %v3534 = vadd.f32 %v3386, %v3489
      %v3535 = vadd.f32 %v3387, %v3492
      %v3536 = vadd.f32 %v3388, %v3495
      %v3537 = vadd.f32 %v3389, %v3498
      %v3538 = vadd.f32 %v3390, %v3501
      %v3539 = vadd.f32 %v3391, %v3504
      %v3540 = vadd.f32 %v3392, %v3507
      %v3541 = vadd.f32 %v3393, %v3510
      %v3542 = vadd.f32 %v3394, %v3513
      %v3543 = vadd.f32 %v3395, %v3516
      %v3544 = vadd.f32 %v3396, %v3519
      %v3545 = vadd.f32 %v3397, %v3522
      %v3546 = vadd.f32 %v3398, %v3525
      %v3547 = vadd.f32 %v3399, %v3528
      %v3548 = vadd.f32 %v3400, %v3531
      %v3549 = vld [vmem:[%s434 + $0x42] sm:$0xff]
      %v3550 = vld [vmem:[%s434 + $0x4a] sm:$0xff]
      %v3551 = vld [vmem:[%s434 + $0x52] sm:$0xff]
      %v3552 = vld [vmem:[%s434 + $0x5a] sm:$0xff]
      %v3553 = vld [vmem:[%s434 + $0x62] sm:$0xff]
      %v3554 = vld [vmem:[%s434 + $0x6a] sm:$0xff]
      %v3555 = vld [vmem:[%s434 + $0x72] sm:$0xff]
      %v3556 = vld [vmem:[%s434 + $0x7a] sm:$0xff]
      %v3557 = vld [vmem:[%s434 + $0x82] sm:$0xff]
      %v3558 = vld [vmem:[%s434 + $0x8a] sm:$0xff]
      %v3559 = vld [vmem:[%s434 + $0x92] sm:$0xff]
      %v3560 = vld [vmem:[%s434 + $0x9a] sm:$0xff]
      %v3561 = vld [vmem:[%s434 + $0xa2] sm:$0xff]
      %v3562 = vld [vmem:[%s434 + $0xaa] sm:$0xff]
      %v3563 = vld [vmem:[%s434 + $0xb2] sm:$0xff]
      %v3564 = vld [vmem:[%s434 + $0xba] sm:$0xff]
      %s3565 = scalar_lea.vmem %s439, 336
      %v3566 = vld [vmem:[%s3565] sm:$0xff]
      %v3567 = vld [vmem:[%s3565 + $0x8] sm:$0xff]
      %v3569 = vsel %vm510, %v3549, 0
      %v3572 = vsel %vm510, %v3550, 0
      %v3575 = vsel %vm510, %v3551, 0
      %v3578 = vsel %vm510, %v3552, 0
      %v3581 = vsel %vm510, %v3553, 0
      %v3584 = vsel %vm510, %v3554, 0
      %v3587 = vsel %vm510, %v3555, 0
      %v3590 = vsel %vm510, %v3556, 0
      %v3593 = vsel %vm510, %v3557, 0
      %v3596 = vsel %vm510, %v3558, 0
      %v3599 = vsel %vm510, %v3559, 0
      %v3602 = vsel %vm510, %v3560, 0
      %v3605 = vsel %vm510, %v3561, 0
      %v3608 = vsel %vm510, %v3562, 0
      %v3611 = vsel %vm510, %v3563, 0
      %v3614 = vsel %vm510, %v3564, 0
      %3616 = vmatpush.msra.mxu0 0.0
      %3617 = vmatpush.msra.mxu0 0.0
      %3618 = vmatpush.msra.mxu0 0.0
      %3619 = vmatpush.msra.mxu0 0.0
      %3620 = vmatpush.msra.mxu0 0.0
      %3621 = vmatpush.msra.mxu0 0.0
      %3622 = vmatpush.msra.mxu0 0.0
      %3623 = vmatpush.msra.mxu0 0.0
      %3624 = vmatpush.msra.mxu0 0.0
      %3625 = vmatpush.msra.mxu0 0.0
      %3626 = vmatpush.msra.mxu0 0.0
      %3627 = vmatpush.msra.mxu0 0.0
      %3628 = vmatpush.msra.mxu0 0.0
      %3629 = vmatpush.msra.mxu0 0.0
      %3630 = vmatpush.msra.mxu0 %v3567
      %3631 = vmatpush.msra.mxu0 %v3566
      %3632 = vmatmul.f32.gmra.mxu0 %v3569
      %v3633 = vpop.f32.mrf.mxu0
      %v3634 = vadd.f32 0.0, %v3633
      %3635 = vmatmul.f32.gmra.mxu0 %v3572
      %v3636 = vpop.f32.mrf.mxu0
      %v3637 = vadd.f32 0.0, %v3636
      %3638 = vmatmul.f32.gmra.mxu0 %v3575
      %v3639 = vpop.f32.mrf.mxu0
      %v3640 = vadd.f32 0.0, %v3639
      %3641 = vmatmul.f32.gmra.mxu0 %v3578
      %v3642 = vpop.f32.mrf.mxu0
      %v3643 = vadd.f32 0.0, %v3642
      %3644 = vmatmul.f32.gmra.mxu0 %v3581
      %v3645 = vpop.f32.mrf.mxu0
      %v3646 = vadd.f32 0.0, %v3645
      %3647 = vmatmul.f32.gmra.mxu0 %v3584
      %v3648 = vpop.f32.mrf.mxu0
      %v3649 = vadd.f32 0.0, %v3648
      %3650 = vmatmul.f32.gmra.mxu0 %v3587
      %v3651 = vpop.f32.mrf.mxu0
      %v3652 = vadd.f32 0.0, %v3651
      %3653 = vmatmul.f32.gmra.mxu0 %v3590
      %v3654 = vpop.f32.mrf.mxu0
      %v3655 = vadd.f32 0.0, %v3654
      %3656 = vmatmul.f32.gmra.mxu0 %v3593
      %v3657 = vpop.f32.mrf.mxu0
      %v3658 = vadd.f32 0.0, %v3657
      %3659 = vmatmul.f32.gmra.mxu0 %v3596
      %v3660 = vpop.f32.mrf.mxu0
      %v3661 = vadd.f32 0.0, %v3660
      %3662 = vmatmul.f32.gmra.mxu0 %v3599
      %v3663 = vpop.f32.mrf.mxu0
      %v3664 = vadd.f32 0.0, %v3663
      %3665 = vmatmul.f32.gmra.mxu0 %v3602
      %v3666 = vpop.f32.mrf.mxu0
      %v3667 = vadd.f32 0.0, %v3666
      %3668 = vmatmul.f32.gmra.mxu0 %v3605
      %v3669 = vpop.f32.mrf.mxu0
      %v3670 = vadd.f32 0.0, %v3669
      %3671 = vmatmul.f32.gmra.mxu0 %v3608
      %v3672 = vpop.f32.mrf.mxu0
      %v3673 = vadd.f32 0.0, %v3672
      %3674 = vmatmul.f32.gmra.mxu0 %v3611
      %v3675 = vpop.f32.mrf.mxu0
      %v3676 = vadd.f32 0.0, %v3675
      %3677 = vmatmul.f32.gmra.mxu0 %v3614
      %v3678 = vpop.f32.mrf.mxu0
      %v3679 = vadd.f32 0.0, %v3678
      %3680 = vdwg.mxu0
      %v3681 = vadd.f32 %v3533, %v3634
      %v3682 = vadd.f32 %v3534, %v3637
      %v3683 = vadd.f32 %v3535, %v3640
      %v3684 = vadd.f32 %v3536, %v3643
      %v3685 = vadd.f32 %v3537, %v3646
      %v3686 = vadd.f32 %v3538, %v3649
      %v3687 = vadd.f32 %v3539, %v3652
      %v3688 = vadd.f32 %v3540, %v3655
      %v3689 = vadd.f32 %v3541, %v3658
      %v3690 = vadd.f32 %v3542, %v3661
      %v3691 = vadd.f32 %v3543, %v3664
      %v3692 = vadd.f32 %v3544, %v3667
      %v3693 = vadd.f32 %v3545, %v3670
      %v3694 = vadd.f32 %v3546, %v3673
      %v3695 = vadd.f32 %v3547, %v3676
      %v3696 = vadd.f32 %v3548, %v3679
      %v3697 = vld [vmem:[%s434 + $0x44] sm:$0xff]
      %v3698 = vld [vmem:[%s434 + $0x4c] sm:$0xff]
      %v3699 = vld [vmem:[%s434 + $0x54] sm:$0xff]
      %v3700 = vld [vmem:[%s434 + $0x5c] sm:$0xff]
      %v3701 = vld [vmem:[%s434 + $0x64] sm:$0xff]
      %v3702 = vld [vmem:[%s434 + $0x6c] sm:$0xff]
      %v3703 = vld [vmem:[%s434 + $0x74] sm:$0xff]
      %v3704 = vld [vmem:[%s434 + $0x7c] sm:$0xff]
      %v3705 = vld [vmem:[%s434 + $0x84] sm:$0xff]
      %v3706 = vld [vmem:[%s434 + $0x8c] sm:$0xff]
      %v3707 = vld [vmem:[%s434 + $0x94] sm:$0xff]
      %v3708 = vld [vmem:[%s434 + $0x9c] sm:$0xff]
      %v3709 = vld [vmem:[%s434 + $0xa4] sm:$0xff]
      %v3710 = vld [vmem:[%s434 + $0xac] sm:$0xff]
      %v3711 = vld [vmem:[%s434 + $0xb4] sm:$0xff]
      %v3712 = vld [vmem:[%s434 + $0xbc] sm:$0xff]
      %s3713 = scalar_lea.vmem %s439, 352
      %v3714 = vld [vmem:[%s3713] sm:$0xff]
      %v3715 = vld [vmem:[%s3713 + $0x8] sm:$0xff]
      %v3717 = vsel %vm510, %v3697, 0
      %v3720 = vsel %vm510, %v3698, 0
      %v3723 = vsel %vm510, %v3699, 0
      %v3726 = vsel %vm510, %v3700, 0
      %v3729 = vsel %vm510, %v3701, 0
      %v3732 = vsel %vm510, %v3702, 0
      %v3735 = vsel %vm510, %v3703, 0
      %v3738 = vsel %vm510, %v3704, 0
      %v3741 = vsel %vm510, %v3705, 0
      %v3744 = vsel %vm510, %v3706, 0
      %v3747 = vsel %vm510, %v3707, 0
      %v3750 = vsel %vm510, %v3708, 0
      %v3753 = vsel %vm510, %v3709, 0
      %v3756 = vsel %vm510, %v3710, 0
      %v3759 = vsel %vm510, %v3711, 0
      %v3762 = vsel %vm510, %v3712, 0
      %3764 = vmatpush.msra.mxu0 0.0
      %3765 = vmatpush.msra.mxu0 0.0
      %3766 = vmatpush.msra.mxu0 0.0
      %3767 = vmatpush.msra.mxu0 0.0
      %3768 = vmatpush.msra.mxu0 0.0
      %3769 = vmatpush.msra.mxu0 0.0
      %3770 = vmatpush.msra.mxu0 0.0
      %3771 = vmatpush.msra.mxu0 0.0
      %3772 = vmatpush.msra.mxu0 0.0
      %3773 = vmatpush.msra.mxu0 0.0
      %3774 = vmatpush.msra.mxu0 0.0
      %3775 = vmatpush.msra.mxu0 0.0
      %3776 = vmatpush.msra.mxu0 0.0
      %3777 = vmatpush.msra.mxu0 0.0
      %3778 = vmatpush.msra.mxu0 %v3715
      %3779 = vmatpush.msra.mxu0 %v3714
      %3780 = vmatmul.f32.gmra.mxu0 %v3717
      %v3781 = vpop.f32.mrf.mxu0
      %v3782 = vadd.f32 0.0, %v3781
      %3783 = vmatmul.f32.gmra.mxu0 %v3720
      %v3784 = vpop.f32.mrf.mxu0
      %v3785 = vadd.f32 0.0, %v3784
      %3786 = vmatmul.f32.gmra.mxu0 %v3723
      %v3787 = vpop.f32.mrf.mxu0
      %v3788 = vadd.f32 0.0, %v3787
      %3789 = vmatmul.f32.gmra.mxu0 %v3726
      %v3790 = vpop.f32.mrf.mxu0
      %v3791 = vadd.f32 0.0, %v3790
      %3792 = vmatmul.f32.gmra.mxu0 %v3729
      %v3793 = vpop.f32.mrf.mxu0
      %v3794 = vadd.f32 0.0, %v3793
      %3795 = vmatmul.f32.gmra.mxu0 %v3732
      %v3796 = vpop.f32.mrf.mxu0
      %v3797 = vadd.f32 0.0, %v3796
      %3798 = vmatmul.f32.gmra.mxu0 %v3735
      %v3799 = vpop.f32.mrf.mxu0
      %v3800 = vadd.f32 0.0, %v3799
      %3801 = vmatmul.f32.gmra.mxu0 %v3738
      %v3802 = vpop.f32.mrf.mxu0
      %v3803 = vadd.f32 0.0, %v3802
      %3804 = vmatmul.f32.gmra.mxu0 %v3741
      %v3805 = vpop.f32.mrf.mxu0
      %v3806 = vadd.f32 0.0, %v3805
      %3807 = vmatmul.f32.gmra.mxu0 %v3744
      %v3808 = vpop.f32.mrf.mxu0
      %v3809 = vadd.f32 0.0, %v3808
      %3810 = vmatmul.f32.gmra.mxu0 %v3747
      %v3811 = vpop.f32.mrf.mxu0
      %v3812 = vadd.f32 0.0, %v3811
      %3813 = vmatmul.f32.gmra.mxu0 %v3750
      %v3814 = vpop.f32.mrf.mxu0
      %v3815 = vadd.f32 0.0, %v3814
      %3816 = vmatmul.f32.gmra.mxu0 %v3753
      %v3817 = vpop.f32.mrf.mxu0
      %v3818 = vadd.f32 0.0, %v3817
      %3819 = vmatmul.f32.gmra.mxu0 %v3756
      %v3820 = vpop.f32.mrf.mxu0
      %v3821 = vadd.f32 0.0, %v3820
      %3822 = vmatmul.f32.gmra.mxu0 %v3759
      %v3823 = vpop.f32.mrf.mxu0
      %v3824 = vadd.f32 0.0, %v3823
      %3825 = vmatmul.f32.gmra.mxu0 %v3762
      %v3826 = vpop.f32.mrf.mxu0
      %v3827 = vadd.f32 0.0, %v3826
      %3828 = vdwg.mxu0
      %v3829 = vadd.f32 %v3681, %v3782
      %v3830 = vadd.f32 %v3682, %v3785
      %v3831 = vadd.f32 %v3683, %v3788
      %v3832 = vadd.f32 %v3684, %v3791
      %v3833 = vadd.f32 %v3685, %v3794
      %v3834 = vadd.f32 %v3686, %v3797
      %v3835 = vadd.f32 %v3687, %v3800
      %v3836 = vadd.f32 %v3688, %v3803
      %v3837 = vadd.f32 %v3689, %v3806
      %v3838 = vadd.f32 %v3690, %v3809
      %v3839 = vadd.f32 %v3691, %v3812
      %v3840 = vadd.f32 %v3692, %v3815
      %v3841 = vadd.f32 %v3693, %v3818
      %v3842 = vadd.f32 %v3694, %v3821
      %v3843 = vadd.f32 %v3695, %v3824
      %v3844 = vadd.f32 %v3696, %v3827
      %v3845 = vld [vmem:[%s434 + $0x46] sm:$0xff]
      %v3846 = vld [vmem:[%s434 + $0x4e] sm:$0xff]
      %v3847 = vld [vmem:[%s434 + $0x56] sm:$0xff]
      %v3848 = vld [vmem:[%s434 + $0x5e] sm:$0xff]
      %v3849 = vld [vmem:[%s434 + $0x66] sm:$0xff]
      %v3850 = vld [vmem:[%s434 + $0x6e] sm:$0xff]
      %v3851 = vld [vmem:[%s434 + $0x76] sm:$0xff]
      %v3852 = vld [vmem:[%s434 + $0x7e] sm:$0xff]
      %v3853 = vld [vmem:[%s434 + $0x86] sm:$0xff]
      %v3854 = vld [vmem:[%s434 + $0x8e] sm:$0xff]
      %v3855 = vld [vmem:[%s434 + $0x96] sm:$0xff]
      %v3856 = vld [vmem:[%s434 + $0x9e] sm:$0xff]
      %v3857 = vld [vmem:[%s434 + $0xa6] sm:$0xff]
      %v3858 = vld [vmem:[%s434 + $0xae] sm:$0xff]
      %v3859 = vld [vmem:[%s434 + $0xb6] sm:$0xff]
      %v3860 = vld [vmem:[%s434 + $0xbe] sm:$0xff]
      %s3861 = scalar_lea.vmem %s439, 368
      %v3862 = vld [vmem:[%s3861] sm:$0xff]
      %v3863 = vld [vmem:[%s3861 + $0x8] sm:$0xff]
      %v3865 = vsel %vm510, %v3845, 0
      %v3868 = vsel %vm510, %v3846, 0
      %v3871 = vsel %vm510, %v3847, 0
      %v3874 = vsel %vm510, %v3848, 0
      %v3877 = vsel %vm510, %v3849, 0
      %v3880 = vsel %vm510, %v3850, 0
      %v3883 = vsel %vm510, %v3851, 0
      %v3886 = vsel %vm510, %v3852, 0
      %v3889 = vsel %vm510, %v3853, 0
      %v3892 = vsel %vm510, %v3854, 0
      %v3895 = vsel %vm510, %v3855, 0
      %v3898 = vsel %vm510, %v3856, 0
      %v3901 = vsel %vm510, %v3857, 0
      %v3904 = vsel %vm510, %v3858, 0
      %v3907 = vsel %vm510, %v3859, 0
      %v3910 = vsel %vm510, %v3860, 0
      %3912 = vmatpush.msra.mxu0 0.0
      %3913 = vmatpush.msra.mxu0 0.0
      %3914 = vmatpush.msra.mxu0 0.0
      %3915 = vmatpush.msra.mxu0 0.0
      %3916 = vmatpush.msra.mxu0 0.0
      %3917 = vmatpush.msra.mxu0 0.0
      %3918 = vmatpush.msra.mxu0 0.0
      %3919 = vmatpush.msra.mxu0 0.0
      %3920 = vmatpush.msra.mxu0 0.0
      %3921 = vmatpush.msra.mxu0 0.0
      %3922 = vmatpush.msra.mxu0 0.0
      %3923 = vmatpush.msra.mxu0 0.0
      %3924 = vmatpush.msra.mxu0 0.0
      %3925 = vmatpush.msra.mxu0 0.0
      %3926 = vmatpush.msra.mxu0 %v3863
      %3927 = vmatpush.msra.mxu0 %v3862
      %3928 = vmatmul.f32.gmra.mxu0 %v3865
      %v3929 = vpop.f32.mrf.mxu0
      %v3930 = vadd.f32 0.0, %v3929
      %3931 = vmatmul.f32.gmra.mxu0 %v3868
      %v3932 = vpop.f32.mrf.mxu0
      %v3933 = vadd.f32 0.0, %v3932
      %3934 = vmatmul.f32.gmra.mxu0 %v3871
      %v3935 = vpop.f32.mrf.mxu0
      %v3936 = vadd.f32 0.0, %v3935
      %3937 = vmatmul.f32.gmra.mxu0 %v3874
      %v3938 = vpop.f32.mrf.mxu0
      %v3939 = vadd.f32 0.0, %v3938
      %3940 = vmatmul.f32.gmra.mxu0 %v3877
      %v3941 = vpop.f32.mrf.mxu0
      %v3942 = vadd.f32 0.0, %v3941
      %3943 = vmatmul.f32.gmra.mxu0 %v3880
      %v3944 = vpop.f32.mrf.mxu0
      %v3945 = vadd.f32 0.0, %v3944
      %3946 = vmatmul.f32.gmra.mxu0 %v3883
      %v3947 = vpop.f32.mrf.mxu0
      %v3948 = vadd.f32 0.0, %v3947
      %3949 = vmatmul.f32.gmra.mxu0 %v3886
      %v3950 = vpop.f32.mrf.mxu0
      %v3951 = vadd.f32 0.0, %v3950
      %3952 = vmatmul.f32.gmra.mxu0 %v3889
      %v3953 = vpop.f32.mrf.mxu0
      %v3954 = vadd.f32 0.0, %v3953
      %3955 = vmatmul.f32.gmra.mxu0 %v3892
      %v3956 = vpop.f32.mrf.mxu0
      %v3957 = vadd.f32 0.0, %v3956
      %3958 = vmatmul.f32.gmra.mxu0 %v3895
      %v3959 = vpop.f32.mrf.mxu0
      %v3960 = vadd.f32 0.0, %v3959
      %3961 = vmatmul.f32.gmra.mxu0 %v3898
      %v3962 = vpop.f32.mrf.mxu0
      %v3963 = vadd.f32 0.0, %v3962
      %3964 = vmatmul.f32.gmra.mxu0 %v3901
      %v3965 = vpop.f32.mrf.mxu0
      %v3966 = vadd.f32 0.0, %v3965
      %3967 = vmatmul.f32.gmra.mxu0 %v3904
      %v3968 = vpop.f32.mrf.mxu0
      %v3969 = vadd.f32 0.0, %v3968
      %3970 = vmatmul.f32.gmra.mxu0 %v3907
      %v3971 = vpop.f32.mrf.mxu0
      %v3972 = vadd.f32 0.0, %v3971
      %3973 = vmatmul.f32.gmra.mxu0 %v3910
      %v3974 = vpop.f32.mrf.mxu0
      %v3975 = vadd.f32 0.0, %v3974
      %3976 = vdwg.mxu0
      %v3977 = vadd.f32 %v3829, %v3930
      %v3978 = vadd.f32 %v3830, %v3933
      %v3979 = vadd.f32 %v3831, %v3936
      %v3980 = vadd.f32 %v3832, %v3939
      %v3981 = vadd.f32 %v3833, %v3942
      %v3982 = vadd.f32 %v3834, %v3945
      %v3983 = vadd.f32 %v3835, %v3948
      %v3984 = vadd.f32 %v3836, %v3951
      %v3985 = vadd.f32 %v3837, %v3954
      %v3986 = vadd.f32 %v3838, %v3957
      %v3987 = vadd.f32 %v3839, %v3960
      %v3988 = vadd.f32 %v3840, %v3963
      %v3989 = vadd.f32 %v3841, %v3966
      %v3990 = vadd.f32 %v3842, %v3969
      %v3991 = vadd.f32 %v3843, %v3972
      %v3992 = vadd.f32 %v3844, %v3975
      %v3993 = vld [vmem:[%s434 + $0x48] sm:$0xff]
      %v3994 = vld [vmem:[%s434 + $0x50] sm:$0xff]
      %v3995 = vld [vmem:[%s434 + $0x58] sm:$0xff]
      %v3996 = vld [vmem:[%s434 + $0x60] sm:$0xff]
      %v3997 = vld [vmem:[%s434 + $0x68] sm:$0xff]
      %v3998 = vld [vmem:[%s434 + $0x70] sm:$0xff]
      %v3999 = vld [vmem:[%s434 + $0x78] sm:$0xff]
      %v4000 = vld [vmem:[%s434 + $0x80] sm:$0xff]
      %v4001 = vld [vmem:[%s434 + $0x88] sm:$0xff]
      %v4002 = vld [vmem:[%s434 + $0x90] sm:$0xff]
      %v4003 = vld [vmem:[%s434 + $0x98] sm:$0xff]
      %v4004 = vld [vmem:[%s434 + $0xa0] sm:$0xff]
      %v4005 = vld [vmem:[%s434 + $0xa8] sm:$0xff]
      %v4006 = vld [vmem:[%s434 + $0xb0] sm:$0xff]
      %v4007 = vld [vmem:[%s434 + $0xb8] sm:$0xff]
      %v4008 = vld [vmem:[%s434 + $0xc0] sm:$0xff]
      %s4009 = scalar_lea.vmem %s439, 384
      %v4010 = vld [vmem:[%s4009] sm:$0xff]
      %v4011 = vld [vmem:[%s4009 + $0x8] sm:$0xff]
      %v4013 = vsel %vm510, %v3993, 0
      %v4016 = vsel %vm510, %v3994, 0
      %v4019 = vsel %vm510, %v3995, 0
      %v4022 = vsel %vm510, %v3996, 0
      %v4025 = vsel %vm510, %v3997, 0
      %v4028 = vsel %vm510, %v3998, 0
      %v4031 = vsel %vm510, %v3999, 0
      %v4034 = vsel %vm510, %v4000, 0
      %v4037 = vsel %vm510, %v4001, 0
      %v4040 = vsel %vm510, %v4002, 0
      %v4043 = vsel %vm510, %v4003, 0
      %v4046 = vsel %vm510, %v4004, 0
      %v4049 = vsel %vm510, %v4005, 0
      %v4052 = vsel %vm510, %v4006, 0
      %v4055 = vsel %vm510, %v4007, 0
      %v4058 = vsel %vm510, %v4008, 0
      %4060 = vmatpush.msra.mxu0 0.0
      %4061 = vmatpush.msra.mxu0 0.0
      %4062 = vmatpush.msra.mxu0 0.0
      %4063 = vmatpush.msra.mxu0 0.0
      %4064 = vmatpush.msra.mxu0 0.0
      %4065 = vmatpush.msra.mxu0 0.0
      %4066 = vmatpush.msra.mxu0 0.0
      %4067 = vmatpush.msra.mxu0 0.0
      %4068 = vmatpush.msra.mxu0 0.0
      %4069 = vmatpush.msra.mxu0 0.0
      %4070 = vmatpush.msra.mxu0 0.0
      %4071 = vmatpush.msra.mxu0 0.0
      %4072 = vmatpush.msra.mxu0 0.0
      %4073 = vmatpush.msra.mxu0 0.0
      %4074 = vmatpush.msra.mxu0 %v4011
      %4075 = vmatpush.msra.mxu0 %v4010
      %4076 = vmatmul.f32.gmra.mxu0 %v4013
      %v4077 = vpop.f32.mrf.mxu0
      %v4078 = vadd.f32 0.0, %v4077
      %4079 = vmatmul.f32.gmra.mxu0 %v4016
      %v4080 = vpop.f32.mrf.mxu0
      %v4081 = vadd.f32 0.0, %v4080
      %4082 = vmatmul.f32.gmra.mxu0 %v4019
      %v4083 = vpop.f32.mrf.mxu0
      %v4084 = vadd.f32 0.0, %v4083
      %4085 = vmatmul.f32.gmra.mxu0 %v4022
      %v4086 = vpop.f32.mrf.mxu0
      %v4087 = vadd.f32 0.0, %v4086
      %4088 = vmatmul.f32.gmra.mxu0 %v4025
      %v4089 = vpop.f32.mrf.mxu0
      %v4090 = vadd.f32 0.0, %v4089
      %4091 = vmatmul.f32.gmra.mxu0 %v4028
      %v4092 = vpop.f32.mrf.mxu0
      %v4093 = vadd.f32 0.0, %v4092
      %4094 = vmatmul.f32.gmra.mxu0 %v4031
      %v4095 = vpop.f32.mrf.mxu0
      %v4096 = vadd.f32 0.0, %v4095
      %4097 = vmatmul.f32.gmra.mxu0 %v4034
      %v4098 = vpop.f32.mrf.mxu0
      %v4099 = vadd.f32 0.0, %v4098
      %4100 = vmatmul.f32.gmra.mxu0 %v4037
      %v4101 = vpop.f32.mrf.mxu0
      %v4102 = vadd.f32 0.0, %v4101
      %4103 = vmatmul.f32.gmra.mxu0 %v4040
      %v4104 = vpop.f32.mrf.mxu0
      %v4105 = vadd.f32 0.0, %v4104
      %4106 = vmatmul.f32.gmra.mxu0 %v4043
      %v4107 = vpop.f32.mrf.mxu0
      %v4108 = vadd.f32 0.0, %v4107
      %4109 = vmatmul.f32.gmra.mxu0 %v4046
      %v4110 = vpop.f32.mrf.mxu0
      %v4111 = vadd.f32 0.0, %v4110
      %4112 = vmatmul.f32.gmra.mxu0 %v4049
      %v4113 = vpop.f32.mrf.mxu0
      %v4114 = vadd.f32 0.0, %v4113
      %4115 = vmatmul.f32.gmra.mxu0 %v4052
      %v4116 = vpop.f32.mrf.mxu0
      %v4117 = vadd.f32 0.0, %v4116
      %4118 = vmatmul.f32.gmra.mxu0 %v4055
      %v4119 = vpop.f32.mrf.mxu0
      %v4120 = vadd.f32 0.0, %v4119
      %4121 = vmatmul.f32.gmra.mxu0 %v4058
      %v4122 = vpop.f32.mrf.mxu0
      %v4123 = vadd.f32 0.0, %v4122
      %4124 = vdwg.mxu0
      %v4125 = vadd.f32 %v3977, %v4078
      %v4126 = vadd.f32 %v3978, %v4081
      %v4127 = vadd.f32 %v3979, %v4084
      %v4128 = vadd.f32 %v3980, %v4087
      %v4129 = vadd.f32 %v3981, %v4090
      %v4130 = vadd.f32 %v3982, %v4093
      %v4131 = vadd.f32 %v3983, %v4096
      %v4132 = vadd.f32 %v3984, %v4099
      %v4133 = vadd.f32 %v3985, %v4102
      %v4134 = vadd.f32 %v3986, %v4105
      %v4135 = vadd.f32 %v3987, %v4108
      %v4136 = vadd.f32 %v3988, %v4111
      %v4137 = vadd.f32 %v3989, %v4114
      %v4138 = vadd.f32 %v3990, %v4117
      %v4139 = vadd.f32 %v3991, %v4120
      %v4140 = vadd.f32 %v3992, %v4123
      %v4141 = vld [vmem:[%s442] sm:$0x1]
      %v4143 = vperm.slane %v4141, 0
      %v4145 = vadd.f32 %v4125, %v4143
      %v4146 = vadd.f32 %v4126, %v4143
      %v4147 = vadd.f32 %v4127, %v4143
      %v4148 = vadd.f32 %v4128, %v4143
      %v4149 = vadd.f32 %v4129, %v4143
      %v4150 = vadd.f32 %v4130, %v4143
      %v4151 = vadd.f32 %v4131, %v4143
      %v4152 = vadd.f32 %v4132, %v4143
      %v4153 = vadd.f32 %v4133, %v4143
      %v4154 = vadd.f32 %v4134, %v4143
      %v4155 = vadd.f32 %v4135, %v4143
      %v4156 = vadd.f32 %v4136, %v4143
      %v4157 = vadd.f32 %v4137, %v4143
      %v4158 = vadd.f32 %v4138, %v4143
      %v4159 = vadd.f32 %v4139, %v4143
      %v4160 = vadd.f32 %v4140, %v4143
      %v4161 = vmax.f32 %v4145, 0.0
      %v4162 = vmax.f32 %v4146, 0.0
      %v4163 = vmax.f32 %v4147, 0.0
      %v4164 = vmax.f32 %v4148, 0.0
      %v4165 = vmax.f32 %v4149, 0.0
      %v4166 = vmax.f32 %v4150, 0.0
      %v4167 = vmax.f32 %v4151, 0.0
      %v4168 = vmax.f32 %v4152, 0.0
      %v4169 = vmax.f32 %v4153, 0.0
      %v4170 = vmax.f32 %v4154, 0.0
      %v4171 = vmax.f32 %v4155, 0.0
      %v4172 = vmax.f32 %v4156, 0.0
      %v4173 = vmax.f32 %v4157, 0.0
      %v4174 = vmax.f32 %v4158, 0.0
      %v4175 = vmax.f32 %v4159, 0.0
      %v4176 = vmax.f32 %v4160, 0.0
      %vm4177 = vcmask 261120
      %4178 = vst.msk [vmem:[#allocation2] sm:$0xff] %vm4177, %v4161
      %4179 = vst.msk [vmem:[#allocation2 + $0x8] sm:$0xff] %vm4177, %v4162
      %4180 = vst.msk [vmem:[#allocation2 + $0x10] sm:$0xff] %vm4177, %v4163
      %4181 = vst.msk [vmem:[#allocation2 + $0x18] sm:$0xff] %vm4177, %v4164
      %4182 = vst.msk [vmem:[#allocation2 + $0x20] sm:$0xff] %vm4177, %v4165
      %4183 = vst.msk [vmem:[#allocation2 + $0x28] sm:$0xff] %vm4177, %v4166
      %4184 = vst.msk [vmem:[#allocation2 + $0x30] sm:$0xff] %vm4177, %v4167
      %4185 = vst.msk [vmem:[#allocation2 + $0x38] sm:$0xff] %vm4177, %v4168
      %4186 = vst.msk [vmem:[#allocation2 + $0x40] sm:$0xff] %vm4177, %v4169
      %4187 = vst.msk [vmem:[#allocation2 + $0x48] sm:$0xff] %vm4177, %v4170
      %4188 = vst.msk [vmem:[#allocation2 + $0x50] sm:$0xff] %vm4177, %v4171
      %4189 = vst.msk [vmem:[#allocation2 + $0x58] sm:$0xff] %vm4177, %v4172
      %4190 = vst.msk [vmem:[#allocation2 + $0x60] sm:$0xff] %vm4177, %v4173
      %4191 = vst.msk [vmem:[#allocation2 + $0x68] sm:$0xff] %vm4177, %v4174
      %4192 = vst.msk [vmem:[#allocation2 + $0x70] sm:$0xff] %vm4177, %v4175
      %4193 = vst.msk [vmem:[#allocation2 + $0x78] sm:$0xff] %vm4177, %v4176
      %4194 = vst.msk [vmem:[#allocation2 + $0x80] sm:$0xff] %vm4177, 0.0
      %4195 = vst.msk [vmem:[#allocation2 + $0x88] sm:$0xff] %vm4177, 0.0
      %4196 = vst.msk [vmem:[#allocation2 + $0x90] sm:$0xff] %vm4177, 0.0
      %4197 = vst.msk [vmem:[#allocation2 + $0x98] sm:$0xff] %vm4177, 0.0
      %4198 = vst.msk [vmem:[#allocation2 + $0xa0] sm:$0xff] %vm4177, 0.0
      %4199 = vst.msk [vmem:[#allocation2 + $0xa8] sm:$0xff] %vm4177, 0.0
      %vm4200 = vcmask 259072
      %4201 = vst.msk [vmem:[#allocation2 + $0xb0] sm:$0x3f] %vm4200, 0.0
      %v4202 = vld [vmem:[#allocation2] sm:$0xff]
      %v4203 = vld [vmem:[#allocation2 + $0x8] sm:$0xff]
      %v4204 = vld [vmem:[#allocation2 + $0x10] sm:$0xff]
      %v4205 = vld [vmem:[#allocation2 + $0x18] sm:$0xff]
      %v4206 = vld [vmem:[#allocation2 + $0x20] sm:$0xff]
      %v4207 = vld [vmem:[#allocation2 + $0x28] sm:$0xff]
      %v4208 = vld [vmem:[#allocation2 + $0x30] sm:$0xff]
      %v4209 = vld [vmem:[#allocation2 + $0x38] sm:$0xff]
      %v4210 = vld [vmem:[#allocation2 + $0x40] sm:$0xff]
      %v4211 = vld [vmem:[#allocation2 + $0x48] sm:$0xff]
      %v4212 = vld [vmem:[#allocation2 + $0x50] sm:$0xff]
      %v4213 = vld [vmem:[#allocation2 + $0x58] sm:$0xff]
      %v4214 = vld [vmem:[#allocation2 + $0x60] sm:$0xff]
      %v4215 = vld [vmem:[#allocation2 + $0x68] sm:$0xff]
      %v4216 = vld [vmem:[#allocation2 + $0x70] sm:$0xff]
      %v4217 = vld [vmem:[#allocation2 + $0x78] sm:$0xff]
      %v4218 = vld [vmem:[#allocation2 + $0x2] sm:$0xff]
      %v4219 = vld [vmem:[#allocation2 + $0xa] sm:$0xff]
      %v4220 = vld [vmem:[#allocation2 + $0x12] sm:$0xff]
      %v4221 = vld [vmem:[#allocation2 + $0x1a] sm:$0xff]
      %v4222 = vld [vmem:[#allocation2 + $0x22] sm:$0xff]
      %v4223 = vld [vmem:[#allocation2 + $0x2a] sm:$0xff]
      %v4224 = vld [vmem:[#allocation2 + $0x32] sm:$0xff]
      %v4225 = vld [vmem:[#allocation2 + $0x3a] sm:$0xff]
      %v4226 = vld [vmem:[#allocation2 + $0x42] sm:$0xff]
      %v4227 = vld [vmem:[#allocation2 + $0x4a] sm:$0xff]
      %v4228 = vld [vmem:[#allocation2 + $0x52] sm:$0xff]
      %v4229 = vld [vmem:[#allocation2 + $0x5a] sm:$0xff]
      %v4230 = vld [vmem:[#allocation2 + $0x62] sm:$0xff]
      %v4231 = vld [vmem:[#allocation2 + $0x6a] sm:$0xff]
      %v4232 = vld [vmem:[#allocation2 + $0x72] sm:$0xff]
      %v4233 = vld [vmem:[#allocation2 + $0x7a] sm:$0xff]
      %v4234 = vmax.f32 %v4202, %v4218
      %v4235 = vmax.f32 %v4203, %v4219
      %v4236 = vmax.f32 %v4204, %v4220
      %v4237 = vmax.f32 %v4205, %v4221
      %v4238 = vmax.f32 %v4206, %v4222
      %v4239 = vmax.f32 %v4207, %v4223
      %v4240 = vmax.f32 %v4208, %v4224
      %v4241 = vmax.f32 %v4209, %v4225
      %v4242 = vmax.f32 %v4210, %v4226
      %v4243 = vmax.f32 %v4211, %v4227
      %v4244 = vmax.f32 %v4212, %v4228
      %v4245 = vmax.f32 %v4213, %v4229
      %v4246 = vmax.f32 %v4214, %v4230
      %v4247 = vmax.f32 %v4215, %v4231
      %v4248 = vmax.f32 %v4216, %v4232
      %v4249 = vmax.f32 %v4217, %v4233
      %v4250 = vld [vmem:[#allocation2 + $0x4] sm:$0xff]
      %v4251 = vld [vmem:[#allocation2 + $0xc] sm:$0xff]
      %v4252 = vld [vmem:[#allocation2 + $0x14] sm:$0xff]
      %v4253 = vld [vmem:[#allocation2 + $0x1c] sm:$0xff]
      %v4254 = vld [vmem:[#allocation2 + $0x24] sm:$0xff]
      %v4255 = vld [vmem:[#allocation2 + $0x2c] sm:$0xff]
      %v4256 = vld [vmem:[#allocation2 + $0x34] sm:$0xff]
      %v4257 = vld [vmem:[#allocation2 + $0x3c] sm:$0xff]
      %v4258 = vld [vmem:[#allocation2 + $0x44] sm:$0xff]
      %v4259 = vld [vmem:[#allocation2 + $0x4c] sm:$0xff]
      %v4260 = vld [vmem:[#allocation2 + $0x54] sm:$0xff]
      %v4261 = vld [vmem:[#allocation2 + $0x5c] sm:$0xff]
      %v4262 = vld [vmem:[#allocation2 + $0x64] sm:$0xff]
      %v4263 = vld [vmem:[#allocation2 + $0x6c] sm:$0xff]
      %v4264 = vld [vmem:[#allocation2 + $0x74] sm:$0xff]
      %v4265 = vld [vmem:[#allocation2 + $0x7c] sm:$0xff]
      %v4266 = vmax.f32 %v4234, %v4250
      %v4267 = vmax.f32 %v4235, %v4251
      %v4268 = vmax.f32 %v4236, %v4252
      %v4269 = vmax.f32 %v4237, %v4253
      %v4270 = vmax.f32 %v4238, %v4254
      %v4271 = vmax.f32 %v4239, %v4255
      %v4272 = vmax.f32 %v4240, %v4256
      %v4273 = vmax.f32 %v4241, %v4257
      %v4274 = vmax.f32 %v4242, %v4258
      %v4275 = vmax.f32 %v4243, %v4259
      %v4276 = vmax.f32 %v4244, %v4260
      %v4277 = vmax.f32 %v4245, %v4261
      %v4278 = vmax.f32 %v4246, %v4262
      %v4279 = vmax.f32 %v4247, %v4263
      %v4280 = vmax.f32 %v4248, %v4264
      %v4281 = vmax.f32 %v4249, %v4265
      %v4282 = vld [vmem:[#allocation2 + $0x6] sm:$0xff]
      %v4283 = vld [vmem:[#allocation2 + $0xe] sm:$0xff]
      %v4284 = vld [vmem:[#allocation2 + $0x16] sm:$0xff]
      %v4285 = vld [vmem:[#allocation2 + $0x1e] sm:$0xff]
      %v4286 = vld [vmem:[#allocation2 + $0x26] sm:$0xff]
      %v4287 = vld [vmem:[#allocation2 + $0x2e] sm:$0xff]
      %v4288 = vld [vmem:[#allocation2 + $0x36] sm:$0xff]
      %v4289 = vld [vmem:[#allocation2 + $0x3e] sm:$0xff]
      %v4290 = vld [vmem:[#allocation2 + $0x46] sm:$0xff]
      %v4291 = vld [vmem:[#allocation2 + $0x4e] sm:$0xff]
      %v4292 = vld [vmem:[#allocation2 + $0x56] sm:$0xff]
      %v4293 = vld [vmem:[#allocation2 + $0x5e] sm:$0xff]
      %v4294 = vld [vmem:[#allocation2 + $0x66] sm:$0xff]
      %v4295 = vld [vmem:[#allocation2 + $0x6e] sm:$0xff]
      %v4296 = vld [vmem:[#allocation2 + $0x76] sm:$0xff]
      %v4297 = vld [vmem:[#allocation2 + $0x7e] sm:$0xff]
      %v4298 = vmax.f32 %v4266, %v4282
      %v4299 = vmax.f32 %v4267, %v4283
      %v4300 = vmax.f32 %v4268, %v4284
      %v4301 = vmax.f32 %v4269, %v4285
      %v4302 = vmax.f32 %v4270, %v4286
      %v4303 = vmax.f32 %v4271, %v4287
      %v4304 = vmax.f32 %v4272, %v4288
      %v4305 = vmax.f32 %v4273, %v4289
      %v4306 = vmax.f32 %v4274, %v4290
      %v4307 = vmax.f32 %v4275, %v4291
      %v4308 = vmax.f32 %v4276, %v4292
      %v4309 = vmax.f32 %v4277, %v4293
      %v4310 = vmax.f32 %v4278, %v4294
      %v4311 = vmax.f32 %v4279, %v4295
      %v4312 = vmax.f32 %v4280, %v4296
      %v4313 = vmax.f32 %v4281, %v4297
      %v4314 = vld [vmem:[#allocation2 + $0x80] sm:$0xff]
      %v4315 = vld [vmem:[#allocation2 + $0x88] sm:$0xff]
      %v4316 = vmax.f32 %v4298, %v4204
      %v4317 = vmax.f32 %v4299, %v4205
      %v4318 = vmax.f32 %v4300, %v4206
      %v4319 = vmax.f32 %v4301, %v4207
      %v4320 = vmax.f32 %v4302, %v4208
      %v4321 = vmax.f32 %v4303, %v4209
      %v4322 = vmax.f32 %v4304, %v4210
      %v4323 = vmax.f32 %v4305, %v4211
      %v4324 = vmax.f32 %v4306, %v4212
      %v4325 = vmax.f32 %v4307, %v4213
      %v4326 = vmax.f32 %v4308, %v4214
      %v4327 = vmax.f32 %v4309, %v4215
      %v4328 = vmax.f32 %v4310, %v4216
      %v4329 = vmax.f32 %v4311, %v4217
      %v4330 = vmax.f32 %v4312, %v4314
      %v4331 = vmax.f32 %v4313, %v4315
      %v4332 = vld [vmem:[#allocation2 + $0x82] sm:$0xff]
      %v4333 = vld [vmem:[#allocation2 + $0x8a] sm:$0xff]
      %v4334 = vmax.f32 %v4316, %v4220
      %v4335 = vmax.f32 %v4317, %v4221
      %v4336 = vmax.f32 %v4318, %v4222
      %v4337 = vmax.f32 %v4319, %v4223
      %v4338 = vmax.f32 %v4320, %v4224
      %v4339 = vmax.f32 %v4321, %v4225
      %v4340 = vmax.f32 %v4322, %v4226
      %v4341 = vmax.f32 %v4323, %v4227
      %v4342 = vmax.f32 %v4324, %v4228
      %v4343 = vmax.f32 %v4325, %v4229
      %v4344 = vmax.f32 %v4326, %v4230
      %v4345 = vmax.f32 %v4327, %v4231
      %v4346 = vmax.f32 %v4328, %v4232
      %v4347 = vmax.f32 %v4329, %v4233
      %v4348 = vmax.f32 %v4330, %v4332
      %v4349 = vmax.f32 %v4331, %v4333
      %v4350 = vld [vmem:[#allocation2 + $0x84] sm:$0xff]
      %v4351 = vld [vmem:[#allocation2 + $0x8c] sm:$0xff]
      %v4352 = vmax.f32 %v4334, %v4252
      %v4353 = vmax.f32 %v4335, %v4253
      %v4354 = vmax.f32 %v4336, %v4254
      %v4355 = vmax.f32 %v4337, %v4255
      %v4356 = vmax.f32 %v4338, %v4256
      %v4357 = vmax.f32 %v4339, %v4257
      %v4358 = vmax.f32 %v4340, %v4258
      %v4359 = vmax.f32 %v4341, %v4259
      %v4360 = vmax.f32 %v4342, %v4260
      %v4361 = vmax.f32 %v4343, %v4261
      %v4362 = vmax.f32 %v4344, %v4262
      %v4363 = vmax.f32 %v4345, %v4263
      %v4364 = vmax.f32 %v4346, %v4264
      %v4365 = vmax.f32 %v4347, %v4265
      %v4366 = vmax.f32 %v4348, %v4350
      %v4367 = vmax.f32 %v4349, %v4351
      %v4368 = vld [vmem:[#allocation2 + $0x86] sm:$0xff]
      %v4369 = vld [vmem:[#allocation2 + $0x8e] sm:$0xff]
      %v4370 = vmax.f32 %v4352, %v4284
      %v4371 = vmax.f32 %v4353, %v4285
      %v4372 = vmax.f32 %v4354, %v4286
      %v4373 = vmax.f32 %v4355, %v4287
      %v4374 = vmax.f32 %v4356, %v4288
      %v4375 = vmax.f32 %v4357, %v4289
      %v4376 = vmax.f32 %v4358, %v4290
      %v4377 = vmax.f32 %v4359, %v4291
      %v4378 = vmax.f32 %v4360, %v4292
      %v4379 = vmax.f32 %v4361, %v4293
      %v4380 = vmax.f32 %v4362, %v4294
      %v4381 = vmax.f32 %v4363, %v4295
      %v4382 = vmax.f32 %v4364, %v4296
      %v4383 = vmax.f32 %v4365, %v4297
      %v4384 = vmax.f32 %v4366, %v4368
      %v4385 = vmax.f32 %v4367, %v4369
      %v4386 = vld [vmem:[#allocation2 + $0x90] sm:$0xff]
      %v4387 = vld [vmem:[#allocation2 + $0x98] sm:$0xff]
      %v4388 = vmax.f32 %v4370, %v4206
      %v4389 = vmax.f32 %v4371, %v4207
      %v4390 = vmax.f32 %v4372, %v4208
      %v4391 = vmax.f32 %v4373, %v4209
      %v4392 = vmax.f32 %v4374, %v4210
      %v4393 = vmax.f32 %v4375, %v4211
      %v4394 = vmax.f32 %v4376, %v4212
      %v4395 = vmax.f32 %v4377, %v4213
      %v4396 = vmax.f32 %v4378, %v4214
      %v4397 = vmax.f32 %v4379, %v4215
      %v4398 = vmax.f32 %v4380, %v4216
      %v4399 = vmax.f32 %v4381, %v4217
      %v4400 = vmax.f32 %v4382, %v4314
      %v4401 = vmax.f32 %v4383, %v4315
      %v4402 = vmax.f32 %v4384, %v4386
      %v4403 = vmax.f32 %v4385, %v4387
      %v4404 = vld [vmem:[#allocation2 + $0x92] sm:$0xff]
      %v4405 = vld [vmem:[#allocation2 + $0x9a] sm:$0xff]
      %v4406 = vmax.f32 %v4388, %v4222
      %v4407 = vmax.f32 %v4389, %v4223
      %v4408 = vmax.f32 %v4390, %v4224
      %v4409 = vmax.f32 %v4391, %v4225
      %v4410 = vmax.f32 %v4392, %v4226
      %v4411 = vmax.f32 %v4393, %v4227
      %v4412 = vmax.f32 %v4394, %v4228
      %v4413 = vmax.f32 %v4395, %v4229
      %v4414 = vmax.f32 %v4396, %v4230
      %v4415 = vmax.f32 %v4397, %v4231
      %v4416 = vmax.f32 %v4398, %v4232
      %v4417 = vmax.f32 %v4399, %v4233
      %v4418 = vmax.f32 %v4400, %v4332
      %v4419 = vmax.f32 %v4401, %v4333
      %v4420 = vmax.f32 %v4402, %v4404
      %v4421 = vmax.f32 %v4403, %v4405
      %v4422 = vld [vmem:[#allocation2 + $0x94] sm:$0xff]
      %v4423 = vld [vmem:[#allocation2 + $0x9c] sm:$0xff]
      %v4424 = vmax.f32 %v4406, %v4254
      %v4425 = vmax.f32 %v4407, %v4255
      %v4426 = vmax.f32 %v4408, %v4256
      %v4427 = vmax.f32 %v4409, %v4257
      %v4428 = vmax.f32 %v4410, %v4258
      %v4429 = vmax.f32 %v4411, %v4259
      %v4430 = vmax.f32 %v4412, %v4260
      %v4431 = vmax.f32 %v4413, %v4261
      %v4432 = vmax.f32 %v4414, %v4262
      %v4433 = vmax.f32 %v4415, %v4263
      %v4434 = vmax.f32 %v4416, %v4264
      %v4435 = vmax.f32 %v4417, %v4265
      %v4436 = vmax.f32 %v4418, %v4350
      %v4437 = vmax.f32 %v4419, %v4351
      %v4438 = vmax.f32 %v4420, %v4422
      %v4439 = vmax.f32 %v4421, %v4423
      %v4440 = vld [vmem:[#allocation2 + $0x96] sm:$0xff]
      %v4441 = vld [vmem:[#allocation2 + $0x9e] sm:$0xff]
      %v4442 = vmax.f32 %v4424, %v4286
      %v4443 = vmax.f32 %v4425, %v4287
      %v4444 = vmax.f32 %v4426, %v4288
      %v4445 = vmax.f32 %v4427, %v4289
      %v4446 = vmax.f32 %v4428, %v4290
      %v4447 = vmax.f32 %v4429, %v4291
      %v4448 = vmax.f32 %v4430, %v4292
      %v4449 = vmax.f32 %v4431, %v4293
      %v4450 = vmax.f32 %v4432, %v4294
      %v4451 = vmax.f32 %v4433, %v4295
      %v4452 = vmax.f32 %v4434, %v4296
      %v4453 = vmax.f32 %v4435, %v4297
      %v4454 = vmax.f32 %v4436, %v4368
      %v4455 = vmax.f32 %v4437, %v4369
      %v4456 = vmax.f32 %v4438, %v4440
      %v4457 = vmax.f32 %v4439, %v4441
      %v4458 = vld [vmem:[#allocation2 + $0xa0] sm:$0xff]
      %v4459 = vld [vmem:[#allocation2 + $0xa8] sm:$0xff]
      %v4460 = vmax.f32 %v4442, %v4208
      %v4461 = vmax.f32 %v4443, %v4209
      %v4462 = vmax.f32 %v4444, %v4210
      %v4463 = vmax.f32 %v4445, %v4211
      %v4464 = vmax.f32 %v4446, %v4212
      %v4465 = vmax.f32 %v4447, %v4213
      %v4466 = vmax.f32 %v4448, %v4214
      %v4467 = vmax.f32 %v4449, %v4215
      %v4468 = vmax.f32 %v4450, %v4216
      %v4469 = vmax.f32 %v4451, %v4217
      %v4470 = vmax.f32 %v4452, %v4314
      %v4471 = vmax.f32 %v4453, %v4315
      %v4472 = vmax.f32 %v4454, %v4386
      %v4473 = vmax.f32 %v4455, %v4387
      %v4474 = vmax.f32 %v4456, %v4458
      %v4475 = vmax.f32 %v4457, %v4459
      %v4476 = vld [vmem:[#allocation2 + $0xa2] sm:$0xff]
      %v4477 = vld [vmem:[#allocation2 + $0xaa] sm:$0xff]
      %v4478 = vmax.f32 %v4460, %v4224
      %v4479 = vmax.f32 %v4461, %v4225
      %v4480 = vmax.f32 %v4462, %v4226
      %v4481 = vmax.f32 %v4463, %v4227
      %v4482 = vmax.f32 %v4464, %v4228
      %v4483 = vmax.f32 %v4465, %v4229
      %v4484 = vmax.f32 %v4466, %v4230
      %v4485 = vmax.f32 %v4467, %v4231
      %v4486 = vmax.f32 %v4468, %v4232
      %v4487 = vmax.f32 %v4469, %v4233
      %v4488 = vmax.f32 %v4470, %v4332
      %v4489 = vmax.f32 %v4471, %v4333
      %v4490 = vmax.f32 %v4472, %v4404
      %v4491 = vmax.f32 %v4473, %v4405
      %v4492 = vmax.f32 %v4474, %v4476
      %v4493 = vmax.f32 %v4475, %v4477
      %v4494 = vld [vmem:[#allocation2 + $0xa4] sm:$0xff]
      %v4495 = vld [vmem:[#allocation2 + $0xac] sm:$0xff]
      %v4496 = vmax.f32 %v4478, %v4256
      %v4497 = vmax.f32 %v4479, %v4257
      %v4498 = vmax.f32 %v4480, %v4258
      %v4499 = vmax.f32 %v4481, %v4259
      %v4500 = vmax.f32 %v4482, %v4260
      %v4501 = vmax.f32 %v4483, %v4261
      %v4502 = vmax.f32 %v4484, %v4262
      %v4503 = vmax.f32 %v4485, %v4263
      %v4504 = vmax.f32 %v4486, %v4264
      %v4505 = vmax.f32 %v4487, %v4265
      %v4506 = vmax.f32 %v4488, %v4350
      %v4507 = vmax.f32 %v4489, %v4351
      %v4508 = vmax.f32 %v4490, %v4422
      %v4509 = vmax.f32 %v4491, %v4423
      %v4510 = vmax.f32 %v4492, %v4494
      %v4511 = vmax.f32 %v4493, %v4495
      %v4512 = vld [vmem:[#allocation2 + $0xa6] sm:$0xff]
      %v4513 = vld [vmem:[#allocation2 + $0xae] sm:$0xff]
      %v4514 = vmax.f32 %v4496, %v4288
      %v4515 = vmax.f32 %v4497, %v4289
      %v4516 = vmax.f32 %v4498, %v4290
      %v4517 = vmax.f32 %v4499, %v4291
      %v4518 = vmax.f32 %v4500, %v4292
      %v4519 = vmax.f32 %v4501, %v4293
      %v4520 = vmax.f32 %v4502, %v4294
      %v4521 = vmax.f32 %v4503, %v4295
      %v4522 = vmax.f32 %v4504, %v4296
      %v4523 = vmax.f32 %v4505, %v4297
      %v4524 = vmax.f32 %v4506, %v4368
      %v4525 = vmax.f32 %v4507, %v4369
      %v4526 = vmax.f32 %v4508, %v4440
      %v4527 = vmax.f32 %v4509, %v4441
      %v4528 = vmax.f32 %v4510, %v4512
      %v4529 = vmax.f32 %v4511, %v4513
      %4530 = vst.msk [vmem:[#allocation3] sm:$0xff] %vm4177, %v4514
      %4531 = vst.msk [vmem:[#allocation3 + $0x8] sm:$0xff] %vm4177, %v4515
      %4532 = vst.msk [vmem:[#allocation3 + $0x10] sm:$0xff] %vm4177, %v4516
      %4533 = vst.msk [vmem:[#allocation3 + $0x18] sm:$0xff] %vm4177, %v4517
      %4534 = vst.msk [vmem:[#allocation3 + $0x20] sm:$0xff] %vm4177, %v4518
      %4535 = vst.msk [vmem:[#allocation3 + $0x28] sm:$0xff] %vm4177, %v4519
      %4536 = vst.msk [vmem:[#allocation3 + $0x30] sm:$0xff] %vm4177, %v4520
      %4537 = vst.msk [vmem:[#allocation3 + $0x38] sm:$0xff] %vm4177, %v4521
      %4538 = vst.msk [vmem:[#allocation3 + $0x40] sm:$0xff] %vm4177, %v4522
      %4539 = vst.msk [vmem:[#allocation3 + $0x48] sm:$0xff] %vm4177, %v4523
      %4540 = vst.msk [vmem:[#allocation3 + $0x50] sm:$0xff] %vm4177, %v4524
      %4541 = vst.msk [vmem:[#allocation3 + $0x58] sm:$0xff] %vm4177, %v4525
      %4542 = vst.msk [vmem:[#allocation3 + $0x60] sm:$0xff] %vm4177, %v4526
      %4543 = vst.msk [vmem:[#allocation3 + $0x68] sm:$0xff] %vm4177, %v4527
      %4544 = vst.msk [vmem:[#allocation3 + $0x70] sm:$0xff] %vm4177, %v4528
      %4545 = vst.msk [vmem:[#allocation3 + $0x78] sm:$0xff] %vm4177, %v4529
      %v4546 = vld [vmem:[#allocation3 + $0x24] sm:$0x3]
      %v4547 = vld [vmem:[%s447] sm:$0xff]
      %v4548 = vld [vmem:[%s447 + $0x8] sm:$0xff]
      %v4549 = vld [vmem:[%s447 + $0x10] sm:$0xff]
      %v4550 = vld [vmem:[%s447 + $0x18] sm:$0xff]
      %v4551 = vld [vmem:[%s447 + $0x20] sm:$0xff]
      %v4552 = vld [vmem:[%s447 + $0x28] sm:$0xff]
      %v4553 = vld [vmem:[%s447 + $0x30] sm:$0xff]
      %v4554 = vld [vmem:[%s447 + $0x38] sm:$0xff]
      %v4555 = vld [vmem:[%s447 + $0x40] sm:$0xff]
      %v4556 = vld [vmem:[%s447 + $0x48] sm:$0xff]
      %v4557 = vld [vmem:[%s447 + $0x50] sm:$0xff]
      %v4558 = vld [vmem:[%s447 + $0x58] sm:$0xff]
      %v4559 = vld [vmem:[%s447 + $0x60] sm:$0xff]
      %v4560 = vld [vmem:[%s447 + $0x68] sm:$0xff]
      %v4561 = vld [vmem:[%s447 + $0x70] sm:$0xff]
      %v4562 = vld [vmem:[%s447 + $0x78] sm:$0xff]
      %v4563 = vld [vmem:[%s447 + $0x80] sm:$0xff]
      %v4564 = vld [vmem:[%s447 + $0x88] sm:$0xff]
      %v4565 = vld [vmem:[%s447 + $0x90] sm:$0xff]
      %v4566 = vld [vmem:[%s447 + $0x98] sm:$0xff]
      %v4567 = vld [vmem:[%s447 + $0xa0] sm:$0xff]
      %v4568 = vld [vmem:[%s447 + $0xa8] sm:$0xff]
      %v4569 = vld [vmem:[%s447 + $0xb0] sm:$0xff]
      %v4570 = vld [vmem:[%s447 + $0xb8] sm:$0xff]
      %v4571 = vld [vmem:[%s447 + $0xc0] sm:$0xff]
      %v4572 = vld [vmem:[%s447 + $0xc8] sm:$0xff]
      %v4573 = vld [vmem:[%s447 + $0xd0] sm:$0xff]
      %v4574 = vld [vmem:[%s447 + $0xd8] sm:$0xff]
      %v4575 = vld [vmem:[%s447 + $0xe0] sm:$0xff]
      %v4576 = vld [vmem:[%s447 + $0xe8] sm:$0xff]
      %v4577 = vld [vmem:[%s447 + $0xf0] sm:$0xff]
      %v4578 = vld [vmem:[%s447 + $0xf8] sm:$0xff]
      %v4579 = vld [vmem:[%s451] sm:$0xff]
      %v4581 = vperm.slane %v4579, 0
      %v4582 = vperm.slane %v4579, 1
      %v4583 = vperm.slane %v4579, 2
      %v4584 = vperm.slane %v4579, 3
      %v4585 = vperm.slane %v4579, 4
      %v4586 = vperm.slane %v4579, 5
      %v4587 = vperm.slane %v4579, 6
      %v4588 = vperm.slane %v4579, 7
      %v4598 = vsel %vm4177, %v4546, 0
      %4600 = vmatpush.msra.mxu0 0.0
      %4601 = vmatpush.msra.mxu0 0.0
      %4602 = vmatpush.msra.mxu0 0.0
      %4603 = vmatpush.msra.mxu0 0.0
      %4604 = vmatpush.msra.mxu0 0.0
      %4605 = vmatpush.msra.mxu0 0.0
      %4606 = vmatpush.msra.mxu0 0.0
      %4607 = vmatpush.msra.mxu0 0.0
      %4608 = vmatpush.msra.mxu0 0.0
      %4609 = vmatpush.msra.mxu0 0.0
      %4610 = vmatpush.msra.mxu0 0.0
      %4611 = vmatpush.msra.mxu0 0.0
      %4612 = vmatpush.msra.mxu0 %v4571
      %4613 = vmatpush.msra.mxu0 %v4563
      %4614 = vmatpush.msra.mxu0 %v4555
      %4615 = vmatpush.msra.mxu0 %v4547
      %4616 = vmatmul.f32.gmra.mxu0 %v4598
      %v4617 = vpop.f32.mrf.mxu0
      %v4618 = vadd.f32 %v4581, %v4617
      %4619 = vdwg.mxu0
      %4620 = vmatpush.msra.mxu0 0.0
      %4621 = vmatpush.msra.mxu0 0.0
      %4622 = vmatpush.msra.mxu0 0.0
      %4623 = vmatpush.msra.mxu0 0.0
      %4624 = vmatpush.msra.mxu0 0.0
      %4625 = vmatpush.msra.mxu0 0.0
      %4626 = vmatpush.msra.mxu0 0.0
      %4627 = vmatpush.msra.mxu0 0.0
      %4628 = vmatpush.msra.mxu0 0.0
      %4629 = vmatpush.msra.mxu0 0.0
      %4630 = vmatpush.msra.mxu0 0.0
      %4631 = vmatpush.msra.mxu0 0.0
      %4632 = vmatpush.msra.mxu0 %v4572
      %4633 = vmatpush.msra.mxu0 %v4564
      %4634 = vmatpush.msra.mxu0 %v4556
      %4635 = vmatpush.msra.mxu0 %v4548
      %4636 = vmatmul.f32.gmra.mxu0 %v4598
      %v4637 = vpop.f32.mrf.mxu0
      %v4638 = vadd.f32 %v4582, %v4637
      %4639 = vdwg.mxu0
      %4640 = vmatpush.msra.mxu0 0.0
      %4641 = vmatpush.msra.mxu0 0.0
      %4642 = vmatpush.msra.mxu0 0.0
      %4643 = vmatpush.msra.mxu0 0.0
      %4644 = vmatpush.msra.mxu0 0.0
      %4645 = vmatpush.msra.mxu0 0.0
      %4646 = vmatpush.msra.mxu0 0.0
      %4647 = vmatpush.msra.mxu0 0.0
      %4648 = vmatpush.msra.mxu0 0.0
      %4649 = vmatpush.msra.mxu0 0.0
      %4650 = vmatpush.msra.mxu0 0.0
      %4651 = vmatpush.msra.mxu0 0.0
      %4652 = vmatpush.msra.mxu0 %v4573
      %4653 = vmatpush.msra.mxu0 %v4565
      %4654 = vmatpush.msra.mxu0 %v4557
      %4655 = vmatpush.msra.mxu0 %v4549
      %4656 = vmatmul.f32.gmra.mxu0 %v4598
      %v4657 = vpop.f32.mrf.mxu0
      %v4658 = vadd.f32 %v4583, %v4657
      %4659 = vdwg.mxu0
      %4660 = vmatpush.msra.mxu0 0.0
      %4661 = vmatpush.msra.mxu0 0.0
      %4662 = vmatpush.msra.mxu0 0.0
      %4663 = vmatpush.msra.mxu0 0.0
      %4664 = vmatpush.msra.mxu0 0.0
      %4665 = vmatpush.msra.mxu0 0.0
      %4666 = vmatpush.msra.mxu0 0.0
      %4667 = vmatpush.msra.mxu0 0.0
      %4668 = vmatpush.msra.mxu0 0.0
      %4669 = vmatpush.msra.mxu0 0.0
      %4670 = vmatpush.msra.mxu0 0.0
      %4671 = vmatpush.msra.mxu0 0.0
      %4672 = vmatpush.msra.mxu0 %v4574
      %4673 = vmatpush.msra.mxu0 %v4566
      %4674 = vmatpush.msra.mxu0 %v4558
      %4675 = vmatpush.msra.mxu0 %v4550
      %4676 = vmatmul.f32.gmra.mxu0 %v4598
      %v4677 = vpop.f32.mrf.mxu0
      %v4678 = vadd.f32 %v4584, %v4677
      %4679 = vdwg.mxu0
      %4680 = vmatpush.msra.mxu0 0.0
      %4681 = vmatpush.msra.mxu0 0.0
      %4682 = vmatpush.msra.mxu0 0.0
      %4683 = vmatpush.msra.mxu0 0.0
      %4684 = vmatpush.msra.mxu0 0.0
      %4685 = vmatpush.msra.mxu0 0.0
      %4686 = vmatpush.msra.mxu0 0.0
      %4687 = vmatpush.msra.mxu0 0.0
      %4688 = vmatpush.msra.mxu0 0.0
      %4689 = vmatpush.msra.mxu0 0.0
      %4690 = vmatpush.msra.mxu0 0.0
      %4691 = vmatpush.msra.mxu0 0.0
      %4692 = vmatpush.msra.mxu0 %v4575
      %4693 = vmatpush.msra.mxu0 %v4567
      %4694 = vmatpush.msra.mxu0 %v4559
      %4695 = vmatpush.msra.mxu0 %v4551
      %4696 = vmatmul.f32.gmra.mxu0 %v4598
      %v4697 = vpop.f32.mrf.mxu0
      %v4698 = vadd.f32 %v4585, %v4697
      %4699 = vdwg.mxu0
      %4700 = vmatpush.msra.mxu0 0.0
      %4701 = vmatpush.msra.mxu0 0.0
      %4702 = vmatpush.msra.mxu0 0.0
      %4703 = vmatpush.msra.mxu0 0.0
      %4704 = vmatpush.msra.mxu0 0.0
      %4705 = vmatpush.msra.mxu0 0.0
      %4706 = vmatpush.msra.mxu0 0.0
      %4707 = vmatpush.msra.mxu0 0.0
      %4708 = vmatpush.msra.mxu0 0.0
      %4709 = vmatpush.msra.mxu0 0.0
      %4710 = vmatpush.msra.mxu0 0.0
      %4711 = vmatpush.msra.mxu0 0.0
      %4712 = vmatpush.msra.mxu0 %v4576
      %4713 = vmatpush.msra.mxu0 %v4568
      %4714 = vmatpush.msra.mxu0 %v4560
      %4715 = vmatpush.msra.mxu0 %v4552
      %4716 = vmatmul.f32.gmra.mxu0 %v4598
      %v4717 = vpop.f32.mrf.mxu0
      %v4718 = vadd.f32 %v4586, %v4717
      %4719 = vdwg.mxu0
      %4720 = vmatpush.msra.mxu0 0.0
      %4721 = vmatpush.msra.mxu0 0.0
      %4722 = vmatpush.msra.mxu0 0.0
      %4723 = vmatpush.msra.mxu0 0.0
      %4724 = vmatpush.msra.mxu0 0.0
      %4725 = vmatpush.msra.mxu0 0.0
      %4726 = vmatpush.msra.mxu0 0.0
      %4727 = vmatpush.msra.mxu0 0.0
      %4728 = vmatpush.msra.mxu0 0.0
      %4729 = vmatpush.msra.mxu0 0.0
      %4730 = vmatpush.msra.mxu0 0.0
      %4731 = vmatpush.msra.mxu0 0.0
      %4732 = vmatpush.msra.mxu0 %v4577
      %4733 = vmatpush.msra.mxu0 %v4569
      %4734 = vmatpush.msra.mxu0 %v4561
      %4735 = vmatpush.msra.mxu0 %v4553
      %4736 = vmatmul.f32.gmra.mxu0 %v4598
      %v4737 = vpop.f32.mrf.mxu0
      %v4738 = vadd.f32 %v4587, %v4737
      %4739 = vdwg.mxu0
      %4740 = vmatpush.msra.mxu0 0.0
      %4741 = vmatpush.msra.mxu0 0.0
      %4742 = vmatpush.msra.mxu0 0.0
      %4743 = vmatpush.msra.mxu0 0.0
      %4744 = vmatpush.msra.mxu0 0.0
      %4745 = vmatpush.msra.mxu0 0.0
      %4746 = vmatpush.msra.mxu0 0.0
      %4747 = vmatpush.msra.mxu0 0.0
      %4748 = vmatpush.msra.mxu0 0.0
      %4749 = vmatpush.msra.mxu0 0.0
      %4750 = vmatpush.msra.mxu0 0.0
      %4751 = vmatpush.msra.mxu0 0.0
      %4752 = vmatpush.msra.mxu0 %v4578
      %4753 = vmatpush.msra.mxu0 %v4570
      %4754 = vmatpush.msra.mxu0 %v4562
      %4755 = vmatpush.msra.mxu0 %v4554
      %4756 = vmatmul.f32.gmra.mxu0 %v4598
      %v4757 = vpop.f32.mrf.mxu0
      %v4758 = vadd.f32 %v4588, %v4757
      %4759 = vdwg.mxu0
      %v4760 = vmax.f32 %v4618, 0.0
      %v4761 = vmax.f32 %v4638, 0.0
      %v4762 = vmax.f32 %v4658, 0.0
      %v4763 = vmax.f32 %v4678, 0.0
      %v4764 = vmax.f32 %v4698, 0.0
      %v4765 = vmax.f32 %v4718, 0.0
      %v4766 = vmax.f32 %v4738, 0.0
      %v4767 = vmax.f32 %v4758, 0.0
      %v4768 = vld [vmem:[%s456] sm:$0xff]
      %v4769 = vld [vmem:[%s456 + $0x8] sm:$0xff]
      %v4770 = vld [vmem:[%s456 + $0x10] sm:$0xff]
      %v4771 = vld [vmem:[%s456 + $0x18] sm:$0xff]
      %v4772 = vld [vmem:[%s456 + $0x20] sm:$0xff]
      %v4773 = vld [vmem:[%s456 + $0x28] sm:$0xff]
      %v4774 = vld [vmem:[%s456 + $0x30] sm:$0xff]
      %v4775 = vld [vmem:[%s456 + $0x38] sm:$0xff]
      %v4776 = vld [vmem:[%s456 + $0x40] sm:$0xff]
      %v4777 = vld [vmem:[%s456 + $0x48] sm:$0xff]
      %v4778 = vld [vmem:[%s456 + $0x50] sm:$0xff]
      %v4779 = vld [vmem:[%s456 + $0x58] sm:$0xff]
      %v4780 = vld [vmem:[%s456 + $0x60] sm:$0xff]
      %v4781 = vld [vmem:[%s456 + $0x68] sm:$0xff]
      %v4782 = vld [vmem:[%s456 + $0x70] sm:$0xff]
      %v4783 = vld [vmem:[%s456 + $0x78] sm:$0xff]
      %v4784 = vld [vmem:[%s456 + $0x80] sm:$0xff]
      %v4785 = vld [vmem:[%s456 + $0x88] sm:$0xff]
      %v4786 = vld [vmem:[%s456 + $0x90] sm:$0xff]
      %v4787 = vld [vmem:[%s456 + $0x98] sm:$0xff]
      %v4788 = vld [vmem:[%s456 + $0xa0] sm:$0xff]
      %v4789 = vld [vmem:[%s456 + $0xa8] sm:$0xff]
      %v4790 = vld [vmem:[%s456 + $0xb0] sm:$0xff]
      %v4791 = vld [vmem:[%s456 + $0xb8] sm:$0xff]
      %v4792 = vld [vmem:[%s456 + $0xc0] sm:$0xff]
      %v4793 = vld [vmem:[%s456 + $0xc8] sm:$0xff]
      %v4794 = vld [vmem:[%s456 + $0xd0] sm:$0xff]
      %v4795 = vld [vmem:[%s456 + $0xd8] sm:$0xff]
      %v4796 = vld [vmem:[%s456 + $0xe0] sm:$0xff]
      %v4797 = vld [vmem:[%s456 + $0xe8] sm:$0xff]
      %v4798 = vld [vmem:[%s456 + $0xf0] sm:$0xff]
      %v4799 = vld [vmem:[%s456 + $0xf8] sm:$0xff]
      %v4800 = vld [vmem:[%s456 + $0x100] sm:$0xff]
      %v4801 = vld [vmem:[%s456 + $0x108] sm:$0xff]
      %v4802 = vld [vmem:[%s456 + $0x110] sm:$0xff]
      %v4803 = vld [vmem:[%s456 + $0x118] sm:$0xff]
      %v4804 = vld [vmem:[%s456 + $0x120] sm:$0xff]
      %v4805 = vld [vmem:[%s456 + $0x128] sm:$0xff]
      %v4806 = vld [vmem:[%s456 + $0x130] sm:$0xff]
      %v4807 = vld [vmem:[%s456 + $0x138] sm:$0xff]
      %v4808 = vld [vmem:[%s456 + $0x140] sm:$0xff]
      %v4809 = vld [vmem:[%s456 + $0x148] sm:$0xff]
      %v4810 = vld [vmem:[%s456 + $0x150] sm:$0xff]
      %v4811 = vld [vmem:[%s456 + $0x158] sm:$0xff]
      %v4812 = vld [vmem:[%s456 + $0x160] sm:$0xff]
      %v4813 = vld [vmem:[%s456 + $0x168] sm:$0xff]
      %v4814 = vld [vmem:[%s456 + $0x170] sm:$0xff]
      %v4815 = vld [vmem:[%s456 + $0x178] sm:$0xff]
      %v4816 = vld [vmem:[%s456 + $0x180] sm:$0xff]
      %v4817 = vld [vmem:[%s456 + $0x188] sm:$0xff]
      %v4818 = vld [vmem:[%s456 + $0x190] sm:$0xff]
      %v4819 = vld [vmem:[%s456 + $0x198] sm:$0xff]
      %v4820 = vld [vmem:[%s456 + $0x1a0] sm:$0xff]
      %v4821 = vld [vmem:[%s456 + $0x1a8] sm:$0xff]
      %v4822 = vld [vmem:[%s456 + $0x1b0] sm:$0xff]
      %v4823 = vld [vmem:[%s456 + $0x1b8] sm:$0xff]
      %v4824 = vld [vmem:[%s456 + $0x1c0] sm:$0xff]
      %v4825 = vld [vmem:[%s456 + $0x1c8] sm:$0xff]
      %v4826 = vld [vmem:[%s456 + $0x1d0] sm:$0xff]
      %v4827 = vld [vmem:[%s456 + $0x1d8] sm:$0xff]
      %v4828 = vld [vmem:[%s456 + $0x1e0] sm:$0xff]
      %v4829 = vld [vmem:[%s456 + $0x1e8] sm:$0xff]
      %v4830 = vld [vmem:[%s456 + $0x1f0] sm:$0xff]
      %v4831 = vld [vmem:[%s456 + $0x1f8] sm:$0xff]
      %v4832 = vld [vmem:[%s456 + $0x200] sm:$0xff]
      %v4833 = vld [vmem:[%s456 + $0x208] sm:$0xff]
      %v4834 = vld [vmem:[%s456 + $0x210] sm:$0xff]
      %v4835 = vld [vmem:[%s456 + $0x218] sm:$0xff]
      %v4836 = vld [vmem:[%s456 + $0x220] sm:$0xff]
      %v4837 = vld [vmem:[%s456 + $0x228] sm:$0xff]
      %v4838 = vld [vmem:[%s456 + $0x230] sm:$0xff]
      %v4839 = vld [vmem:[%s456 + $0x238] sm:$0xff]
      %v4840 = vld [vmem:[%s456 + $0x240] sm:$0xff]
      %v4841 = vld [vmem:[%s456 + $0x248] sm:$0xff]
      %v4842 = vld [vmem:[%s456 + $0x250] sm:$0xff]
      %v4843 = vld [vmem:[%s456 + $0x258] sm:$0xff]
      %v4844 = vld [vmem:[%s456 + $0x260] sm:$0xff]
      %v4845 = vld [vmem:[%s456 + $0x268] sm:$0xff]
      %v4846 = vld [vmem:[%s456 + $0x270] sm:$0xff]
      %v4847 = vld [vmem:[%s456 + $0x278] sm:$0xff]
      %v4848 = vld [vmem:[%s456 + $0x280] sm:$0xff]
      %v4849 = vld [vmem:[%s456 + $0x288] sm:$0xff]
      %v4850 = vld [vmem:[%s456 + $0x290] sm:$0xff]
      %v4851 = vld [vmem:[%s456 + $0x298] sm:$0xff]
      %v4852 = vld [vmem:[%s456 + $0x2a0] sm:$0xff]
      %v4853 = vld [vmem:[%s456 + $0x2a8] sm:$0xff]
      %v4854 = vld [vmem:[%s456 + $0x2b0] sm:$0xff]
      %v4855 = vld [vmem:[%s456 + $0x2b8] sm:$0xff]
      %v4856 = vld [vmem:[%s456 + $0x2c0] sm:$0xff]
      %v4857 = vld [vmem:[%s456 + $0x2c8] sm:$0xff]
      %v4858 = vld [vmem:[%s456 + $0x2d0] sm:$0xff]
      %v4859 = vld [vmem:[%s456 + $0x2d8] sm:$0xff]
      %v4860 = vld [vmem:[%s456 + $0x2e0] sm:$0xff]
      %v4861 = vld [vmem:[%s456 + $0x2e8] sm:$0xff]
      %v4862 = vld [vmem:[%s456 + $0x2f0] sm:$0xff]
      %v4863 = vld [vmem:[%s456 + $0x2f8] sm:$0xff]
      %v4864 = vld [vmem:[%s456 + $0x300] sm:$0xff]
      %v4865 = vld [vmem:[%s456 + $0x308] sm:$0xff]
      %v4866 = vld [vmem:[%s456 + $0x310] sm:$0xff]
      %v4867 = vld [vmem:[%s456 + $0x318] sm:$0xff]
      %v4868 = vld [vmem:[%s456 + $0x320] sm:$0xff]
      %v4869 = vld [vmem:[%s456 + $0x328] sm:$0xff]
      %v4870 = vld [vmem:[%s456 + $0x330] sm:$0xff]
      %v4871 = vld [vmem:[%s456 + $0x338] sm:$0xff]
      %v4872 = vld [vmem:[%s456 + $0x340] sm:$0xff]
      %v4873 = vld [vmem:[%s456 + $0x348] sm:$0xff]
      %v4874 = vld [vmem:[%s456 + $0x350] sm:$0xff]
      %v4875 = vld [vmem:[%s456 + $0x358] sm:$0xff]
      %v4876 = vld [vmem:[%s456 + $0x360] sm:$0xff]
      %v4877 = vld [vmem:[%s456 + $0x368] sm:$0xff]
      %v4878 = vld [vmem:[%s456 + $0x370] sm:$0xff]
      %v4879 = vld [vmem:[%s456 + $0x378] sm:$0xff]
      %v4880 = vld [vmem:[%s456 + $0x380] sm:$0xff]
      %v4881 = vld [vmem:[%s456 + $0x388] sm:$0xff]
      %v4882 = vld [vmem:[%s456 + $0x390] sm:$0xff]
      %v4883 = vld [vmem:[%s456 + $0x398] sm:$0xff]
      %v4884 = vld [vmem:[%s456 + $0x3a0] sm:$0xff]
      %v4885 = vld [vmem:[%s456 + $0x3a8] sm:$0xff]
      %v4886 = vld [vmem:[%s456 + $0x3b0] sm:$0xff]
      %v4887 = vld [vmem:[%s456 + $0x3b8] sm:$0xff]
      %v4888 = vld [vmem:[%s456 + $0x3c0] sm:$0xff]
      %v4889 = vld [vmem:[%s456 + $0x3c8] sm:$0xff]
      %v4890 = vld [vmem:[%s456 + $0x3d0] sm:$0xff]
      %v4891 = vld [vmem:[%s456 + $0x3d8] sm:$0xff]
      %v4892 = vld [vmem:[%s456 + $0x3e0] sm:$0xff]
      %v4893 = vld [vmem:[%s456 + $0x3e8] sm:$0xff]
      %v4894 = vld [vmem:[%s456 + $0x3f0] sm:$0xff]
      %v4895 = vld [vmem:[%s456 + $0x3f8] sm:$0xff]
      %v4896 = vld [vmem:[%s456 + $0x400] sm:$0xff]
      %v4897 = vld [vmem:[%s456 + $0x408] sm:$0xff]
      %v4898 = vld [vmem:[%s456 + $0x410] sm:$0xff]
      %v4899 = vld [vmem:[%s456 + $0x418] sm:$0xff]
      %v4900 = vld [vmem:[%s456 + $0x420] sm:$0xff]
      %v4901 = vld [vmem:[%s456 + $0x428] sm:$0xff]
      %v4902 = vld [vmem:[%s456 + $0x430] sm:$0xff]
      %v4903 = vld [vmem:[%s456 + $0x438] sm:$0xff]
      %v4904 = vld [vmem:[%s456 + $0x440] sm:$0xff]
      %v4905 = vld [vmem:[%s456 + $0x448] sm:$0xff]
      %v4906 = vld [vmem:[%s456 + $0x450] sm:$0xff]
      %v4907 = vld [vmem:[%s456 + $0x458] sm:$0xff]
      %v4908 = vld [vmem:[%s456 + $0x460] sm:$0xff]
      %v4909 = vld [vmem:[%s456 + $0x468] sm:$0xff]
      %v4910 = vld [vmem:[%s456 + $0x470] sm:$0xff]
      %v4911 = vld [vmem:[%s456 + $0x478] sm:$0xff]
      %v4912 = vld [vmem:[%s456 + $0x480] sm:$0xff]
      %v4913 = vld [vmem:[%s456 + $0x488] sm:$0xff]
      %v4914 = vld [vmem:[%s456 + $0x490] sm:$0xff]
      %v4915 = vld [vmem:[%s456 + $0x498] sm:$0xff]
      %v4916 = vld [vmem:[%s456 + $0x4a0] sm:$0xff]
      %v4917 = vld [vmem:[%s456 + $0x4a8] sm:$0xff]
      %v4918 = vld [vmem:[%s456 + $0x4b0] sm:$0xff]
      %v4919 = vld [vmem:[%s456 + $0x4b8] sm:$0xff]
      %v4920 = vld [vmem:[%s456 + $0x4c0] sm:$0xff]
      %v4921 = vld [vmem:[%s456 + $0x4c8] sm:$0xff]
      %v4922 = vld [vmem:[%s456 + $0x4d0] sm:$0xff]
      %v4923 = vld [vmem:[%s456 + $0x4d8] sm:$0xff]
      %v4924 = vld [vmem:[%s456 + $0x4e0] sm:$0xff]
      %v4925 = vld [vmem:[%s456 + $0x4e8] sm:$0xff]
      %v4926 = vld [vmem:[%s456 + $0x4f0] sm:$0xff]
      %v4927 = vld [vmem:[%s456 + $0x4f8] sm:$0xff]
      %v4928 = vld [vmem:[%s456 + $0x500] sm:$0xff]
      %v4929 = vld [vmem:[%s456 + $0x508] sm:$0xff]
      %v4930 = vld [vmem:[%s456 + $0x510] sm:$0xff]
      %v4931 = vld [vmem:[%s456 + $0x518] sm:$0xff]
      %v4932 = vld [vmem:[%s456 + $0x520] sm:$0xff]
      %v4933 = vld [vmem:[%s456 + $0x528] sm:$0xff]
      %v4934 = vld [vmem:[%s456 + $0x530] sm:$0xff]
      %v4935 = vld [vmem:[%s456 + $0x538] sm:$0xff]
      %v4936 = vld [vmem:[%s456 + $0x540] sm:$0xff]
      %v4937 = vld [vmem:[%s456 + $0x548] sm:$0xff]
      %v4938 = vld [vmem:[%s456 + $0x550] sm:$0xff]
      %v4939 = vld [vmem:[%s456 + $0x558] sm:$0xff]
      %v4940 = vld [vmem:[%s456 + $0x560] sm:$0xff]
      %v4941 = vld [vmem:[%s456 + $0x568] sm:$0xff]
      %v4942 = vld [vmem:[%s456 + $0x570] sm:$0xff]
      %v4943 = vld [vmem:[%s456 + $0x578] sm:$0xff]
      %v4944 = vld [vmem:[%s456 + $0x580] sm:$0xff]
      %v4945 = vld [vmem:[%s456 + $0x588] sm:$0xff]
      %v4946 = vld [vmem:[%s456 + $0x590] sm:$0xff]
      %v4947 = vld [vmem:[%s456 + $0x598] sm:$0xff]
      %v4948 = vld [vmem:[%s456 + $0x5a0] sm:$0xff]
      %v4949 = vld [vmem:[%s456 + $0x5a8] sm:$0xff]
      %v4950 = vld [vmem:[%s456 + $0x5b0] sm:$0xff]
      %v4951 = vld [vmem:[%s456 + $0x5b8] sm:$0xff]
      %v4952 = vld [vmem:[%s456 + $0x5c0] sm:$0xff]
      %v4953 = vld [vmem:[%s456 + $0x5c8] sm:$0xff]
      %v4954 = vld [vmem:[%s456 + $0x5d0] sm:$0xff]
      %v4955 = vld [vmem:[%s456 + $0x5d8] sm:$0xff]
      %v4956 = vld [vmem:[%s456 + $0x5e0] sm:$0xff]
      %v4957 = vld [vmem:[%s456 + $0x5e8] sm:$0xff]
      %v4958 = vld [vmem:[%s456 + $0x5f0] sm:$0xff]
      %v4959 = vld [vmem:[%s456 + $0x5f8] sm:$0xff]
      %v4960 = vld [vmem:[%s456 + $0x600] sm:$0xff]
      %v4961 = vld [vmem:[%s456 + $0x608] sm:$0xff]
      %v4962 = vld [vmem:[%s456 + $0x610] sm:$0xff]
      %v4963 = vld [vmem:[%s456 + $0x618] sm:$0xff]
      %v4964 = vld [vmem:[%s456 + $0x620] sm:$0xff]
      %v4965 = vld [vmem:[%s456 + $0x628] sm:$0xff]
      %v4966 = vld [vmem:[%s456 + $0x630] sm:$0xff]
      %v4967 = vld [vmem:[%s456 + $0x638] sm:$0xff]
      %v4968 = vld [vmem:[%s456 + $0x640] sm:$0xff]
      %v4969 = vld [vmem:[%s456 + $0x648] sm:$0xff]
      %v4970 = vld [vmem:[%s456 + $0x650] sm:$0xff]
      %v4971 = vld [vmem:[%s456 + $0x658] sm:$0xff]
      %v4972 = vld [vmem:[%s456 + $0x660] sm:$0xff]
      %v4973 = vld [vmem:[%s456 + $0x668] sm:$0xff]
      %v4974 = vld [vmem:[%s456 + $0x670] sm:$0xff]
      %v4975 = vld [vmem:[%s456 + $0x678] sm:$0xff]
      %v4976 = vld [vmem:[%s456 + $0x680] sm:$0xff]
      %v4977 = vld [vmem:[%s456 + $0x688] sm:$0xff]
      %v4978 = vld [vmem:[%s456 + $0x690] sm:$0xff]
      %v4979 = vld [vmem:[%s456 + $0x698] sm:$0xff]
      %v4980 = vld [vmem:[%s456 + $0x6a0] sm:$0xff]
      %v4981 = vld [vmem:[%s456 + $0x6a8] sm:$0xff]
      %v4982 = vld [vmem:[%s456 + $0x6b0] sm:$0xff]
      %v4983 = vld [vmem:[%s456 + $0x6b8] sm:$0xff]
      %v4984 = vld [vmem:[%s456 + $0x6c0] sm:$0xff]
      %v4985 = vld [vmem:[%s456 + $0x6c8] sm:$0xff]
      %v4986 = vld [vmem:[%s456 + $0x6d0] sm:$0xff]
      %v4987 = vld [vmem:[%s456 + $0x6d8] sm:$0xff]
      %v4988 = vld [vmem:[%s456 + $0x6e0] sm:$0xff]
      %v4989 = vld [vmem:[%s456 + $0x6e8] sm:$0xff]
      %v4990 = vld [vmem:[%s456 + $0x6f0] sm:$0xff]
      %v4991 = vld [vmem:[%s456 + $0x6f8] sm:$0xff]
      %v4992 = vld [vmem:[%s456 + $0x700] sm:$0xff]
      %v4993 = vld [vmem:[%s456 + $0x708] sm:$0xff]
      %v4994 = vld [vmem:[%s456 + $0x710] sm:$0xff]
      %v4995 = vld [vmem:[%s456 + $0x718] sm:$0xff]
      %v4996 = vld [vmem:[%s456 + $0x720] sm:$0xff]
      %v4997 = vld [vmem:[%s456 + $0x728] sm:$0xff]
      %v4998 = vld [vmem:[%s456 + $0x730] sm:$0xff]
      %v4999 = vld [vmem:[%s456 + $0x738] sm:$0xff]
      %v5000 = vld [vmem:[%s456 + $0x740] sm:$0xff]
      %v5001 = vld [vmem:[%s456 + $0x748] sm:$0xff]
      %v5002 = vld [vmem:[%s456 + $0x750] sm:$0xff]
      %v5003 = vld [vmem:[%s456 + $0x758] sm:$0xff]
      %v5004 = vld [vmem:[%s456 + $0x760] sm:$0xff]
      %v5005 = vld [vmem:[%s456 + $0x768] sm:$0xff]
      %v5006 = vld [vmem:[%s456 + $0x770] sm:$0xff]
      %v5007 = vld [vmem:[%s456 + $0x778] sm:$0xff]
      %v5008 = vld [vmem:[%s456 + $0x780] sm:$0xff]
      %v5009 = vld [vmem:[%s456 + $0x788] sm:$0xff]
      %v5010 = vld [vmem:[%s456 + $0x790] sm:$0xff]
      %v5011 = vld [vmem:[%s456 + $0x798] sm:$0xff]
      %v5012 = vld [vmem:[%s456 + $0x7a0] sm:$0xff]
      %v5013 = vld [vmem:[%s456 + $0x7a8] sm:$0xff]
      %v5014 = vld [vmem:[%s456 + $0x7b0] sm:$0xff]
      %v5015 = vld [vmem:[%s456 + $0x7b8] sm:$0xff]
      %v5016 = vld [vmem:[%s456 + $0x7c0] sm:$0xff]
      %v5017 = vld [vmem:[%s456 + $0x7c8] sm:$0xff]
      %v5018 = vld [vmem:[%s456 + $0x7d0] sm:$0xff]
      %v5019 = vld [vmem:[%s456 + $0x7d8] sm:$0xff]
      %v5020 = vld [vmem:[%s456 + $0x7e0] sm:$0xff]
      %v5021 = vld [vmem:[%s456 + $0x7e8] sm:$0xff]
      %v5022 = vld [vmem:[%s456 + $0x7f0] sm:$0xff]
      %v5023 = vld [vmem:[%s456 + $0x7f8] sm:$0xff]
      %v5024 = vld [vmem:[%s456 + $0x800] sm:$0xff]
      %v5025 = vld [vmem:[%s456 + $0x808] sm:$0xff]
      %v5026 = vld [vmem:[%s456 + $0x810] sm:$0xff]
      %v5027 = vld [vmem:[%s456 + $0x818] sm:$0xff]
      %v5028 = vld [vmem:[%s456 + $0x820] sm:$0xff]
      %v5029 = vld [vmem:[%s456 + $0x828] sm:$0xff]
      %v5030 = vld [vmem:[%s456 + $0x830] sm:$0xff]
      %v5031 = vld [vmem:[%s456 + $0x838] sm:$0xff]
      %v5032 = vld [vmem:[%s456 + $0x840] sm:$0xff]
      %v5033 = vld [vmem:[%s456 + $0x848] sm:$0xff]
      %v5034 = vld [vmem:[%s456 + $0x850] sm:$0xff]
      %v5035 = vld [vmem:[%s456 + $0x858] sm:$0xff]
      %v5036 = vld [vmem:[%s456 + $0x860] sm:$0xff]
      %v5037 = vld [vmem:[%s456 + $0x868] sm:$0xff]
      %v5038 = vld [vmem:[%s456 + $0x870] sm:$0xff]
      %v5039 = vld [vmem:[%s456 + $0x878] sm:$0xff]
      %v5040 = vld [vmem:[%s456 + $0x880] sm:$0xff]
      %v5041 = vld [vmem:[%s456 + $0x888] sm:$0xff]
      %v5042 = vld [vmem:[%s456 + $0x890] sm:$0xff]
      %v5043 = vld [vmem:[%s456 + $0x898] sm:$0xff]
      %v5044 = vld [vmem:[%s456 + $0x8a0] sm:$0xff]
      %v5045 = vld [vmem:[%s456 + $0x8a8] sm:$0xff]
      %v5046 = vld [vmem:[%s456 + $0x8b0] sm:$0xff]
      %v5047 = vld [vmem:[%s456 + $0x8b8] sm:$0xff]
      %v5048 = vld [vmem:[%s456 + $0x8c0] sm:$0xff]
      %v5049 = vld [vmem:[%s456 + $0x8c8] sm:$0xff]
      %v5050 = vld [vmem:[%s456 + $0x8d0] sm:$0xff]
      %v5051 = vld [vmem:[%s456 + $0x8d8] sm:$0xff]
      %v5052 = vld [vmem:[%s456 + $0x8e0] sm:$0xff]
      %v5053 = vld [vmem:[%s456 + $0x8e8] sm:$0xff]
      %v5054 = vld [vmem:[%s456 + $0x8f0] sm:$0xff]
      %v5055 = vld [vmem:[%s456 + $0x8f8] sm:$0xff]
      %v5056 = vld [vmem:[%s456 + $0x900] sm:$0xff]
      %v5057 = vld [vmem:[%s456 + $0x908] sm:$0xff]
      %v5058 = vld [vmem:[%s456 + $0x910] sm:$0xff]
      %v5059 = vld [vmem:[%s456 + $0x918] sm:$0xff]
      %v5060 = vld [vmem:[%s456 + $0x920] sm:$0xff]
      %v5061 = vld [vmem:[%s456 + $0x928] sm:$0xff]
      %v5062 = vld [vmem:[%s456 + $0x930] sm:$0xff]
      %v5063 = vld [vmem:[%s456 + $0x938] sm:$0xff]
      %v5064 = vld [vmem:[%s456 + $0x940] sm:$0xff]
      %v5065 = vld [vmem:[%s456 + $0x948] sm:$0xff]
      %v5066 = vld [vmem:[%s456 + $0x950] sm:$0xff]
      %v5067 = vld [vmem:[%s456 + $0x958] sm:$0xff]
      %v5068 = vld [vmem:[%s456 + $0x960] sm:$0xff]
      %v5069 = vld [vmem:[%s456 + $0x968] sm:$0xff]
      %v5070 = vld [vmem:[%s456 + $0x970] sm:$0xff]
      %v5071 = vld [vmem:[%s456 + $0x978] sm:$0xff]
      %v5072 = vld [vmem:[%s456 + $0x980] sm:$0xff]
      %v5073 = vld [vmem:[%s456 + $0x988] sm:$0xff]
      %v5074 = vld [vmem:[%s456 + $0x990] sm:$0xff]
      %v5075 = vld [vmem:[%s456 + $0x998] sm:$0xff]
      %v5076 = vld [vmem:[%s456 + $0x9a0] sm:$0xff]
      %v5077 = vld [vmem:[%s456 + $0x9a8] sm:$0xff]
      %v5078 = vld [vmem:[%s456 + $0x9b0] sm:$0xff]
      %v5079 = vld [vmem:[%s456 + $0x9b8] sm:$0xff]
      %v5080 = vld [vmem:[%s456 + $0x9c0] sm:$0xff]
      %v5081 = vld [vmem:[%s456 + $0x9c8] sm:$0xff]
      %v5082 = vld [vmem:[%s456 + $0x9d0] sm:$0xff]
      %v5083 = vld [vmem:[%s456 + $0x9d8] sm:$0xff]
      %v5084 = vld [vmem:[%s456 + $0x9e0] sm:$0xff]
      %v5085 = vld [vmem:[%s456 + $0x9e8] sm:$0xff]
      %v5086 = vld [vmem:[%s456 + $0x9f0] sm:$0xff]
      %v5087 = vld [vmem:[%s456 + $0x9f8] sm:$0xff]
      %v5088 = vld [vmem:[%s456 + $0xa00] sm:$0xff]
      %v5089 = vld [vmem:[%s456 + $0xa08] sm:$0xff]
      %v5090 = vld [vmem:[%s456 + $0xa10] sm:$0xff]
      %v5091 = vld [vmem:[%s456 + $0xa18] sm:$0xff]
      %v5092 = vld [vmem:[%s456 + $0xa20] sm:$0xff]
      %v5093 = vld [vmem:[%s456 + $0xa28] sm:$0xff]
      %v5094 = vld [vmem:[%s456 + $0xa30] sm:$0xff]
      %v5095 = vld [vmem:[%s456 + $0xa38] sm:$0xff]
      %v5096 = vld [vmem:[%s456 + $0xa40] sm:$0xff]
      %v5097 = vld [vmem:[%s456 + $0xa48] sm:$0xff]
      %v5098 = vld [vmem:[%s456 + $0xa50] sm:$0xff]
      %v5099 = vld [vmem:[%s456 + $0xa58] sm:$0xff]
      %v5100 = vld [vmem:[%s456 + $0xa60] sm:$0xff]
      %v5101 = vld [vmem:[%s456 + $0xa68] sm:$0xff]
      %v5102 = vld [vmem:[%s456 + $0xa70] sm:$0xff]
      %v5103 = vld [vmem:[%s456 + $0xa78] sm:$0xff]
      %v5104 = vld [vmem:[%s456 + $0xa80] sm:$0xff]
      %v5105 = vld [vmem:[%s456 + $0xa88] sm:$0xff]
      %v5106 = vld [vmem:[%s456 + $0xa90] sm:$0xff]
      %v5107 = vld [vmem:[%s456 + $0xa98] sm:$0xff]
      %v5108 = vld [vmem:[%s456 + $0xaa0] sm:$0xff]
      %v5109 = vld [vmem:[%s456 + $0xaa8] sm:$0xff]
      %v5110 = vld [vmem:[%s456 + $0xab0] sm:$0xff]
      %v5111 = vld [vmem:[%s456 + $0xab8] sm:$0xff]
      %v5112 = vld [vmem:[%s456 + $0xac0] sm:$0xff]
      %v5113 = vld [vmem:[%s456 + $0xac8] sm:$0xff]
      %v5114 = vld [vmem:[%s456 + $0xad0] sm:$0xff]
      %v5115 = vld [vmem:[%s456 + $0xad8] sm:$0xff]
      %v5116 = vld [vmem:[%s456 + $0xae0] sm:$0xff]
      %v5117 = vld [vmem:[%s456 + $0xae8] sm:$0xff]
      %v5118 = vld [vmem:[%s456 + $0xaf0] sm:$0xff]
      %v5119 = vld [vmem:[%s456 + $0xaf8] sm:$0xff]
      %v5120 = vld [vmem:[%s456 + $0xb00] sm:$0xff]
      %v5121 = vld [vmem:[%s456 + $0xb08] sm:$0xff]
      %v5122 = vld [vmem:[%s456 + $0xb10] sm:$0xff]
      %v5123 = vld [vmem:[%s456 + $0xb18] sm:$0xff]
      %v5124 = vld [vmem:[%s456 + $0xb20] sm:$0xff]
      %v5125 = vld [vmem:[%s456 + $0xb28] sm:$0xff]
      %v5126 = vld [vmem:[%s456 + $0xb30] sm:$0xff]
      %v5127 = vld [vmem:[%s456 + $0xb38] sm:$0xff]
      %v5128 = vld [vmem:[%s456 + $0xb40] sm:$0xff]
      %v5129 = vld [vmem:[%s456 + $0xb48] sm:$0xff]
      %v5130 = vld [vmem:[%s456 + $0xb50] sm:$0xff]
      %v5131 = vld [vmem:[%s456 + $0xb58] sm:$0xff]
      %v5132 = vld [vmem:[%s456 + $0xb60] sm:$0xff]
      %v5133 = vld [vmem:[%s456 + $0xb68] sm:$0xff]
      %v5134 = vld [vmem:[%s456 + $0xb70] sm:$0xff]
      %v5135 = vld [vmem:[%s456 + $0xb78] sm:$0xff]
      %v5136 = vld [vmem:[%s456 + $0xb80] sm:$0xff]
      %v5137 = vld [vmem:[%s456 + $0xb88] sm:$0xff]
      %v5138 = vld [vmem:[%s456 + $0xb90] sm:$0xff]
      %v5139 = vld [vmem:[%s456 + $0xb98] sm:$0xff]
      %v5140 = vld [vmem:[%s456 + $0xba0] sm:$0xff]
      %v5141 = vld [vmem:[%s456 + $0xba8] sm:$0xff]
      %v5142 = vld [vmem:[%s456 + $0xbb0] sm:$0xff]
      %v5143 = vld [vmem:[%s456 + $0xbb8] sm:$0xff]
      %v5144 = vld [vmem:[%s456 + $0xbc0] sm:$0xff]
      %v5145 = vld [vmem:[%s456 + $0xbc8] sm:$0xff]
      %v5146 = vld [vmem:[%s456 + $0xbd0] sm:$0xff]
      %v5147 = vld [vmem:[%s456 + $0xbd8] sm:$0xff]
      %v5148 = vld [vmem:[%s456 + $0xbe0] sm:$0xff]
      %v5149 = vld [vmem:[%s456 + $0xbe8] sm:$0xff]
      %v5150 = vld [vmem:[%s456 + $0xbf0] sm:$0xff]
      %v5151 = vld [vmem:[%s456 + $0xbf8] sm:$0xff]
      %v5152 = vld [vmem:[%s456 + $0xc00] sm:$0xff]
      %v5153 = vld [vmem:[%s456 + $0xc08] sm:$0xff]
      %v5154 = vld [vmem:[%s456 + $0xc10] sm:$0xff]
      %v5155 = vld [vmem:[%s456 + $0xc18] sm:$0xff]
      %v5156 = vld [vmem:[%s456 + $0xc20] sm:$0xff]
      %v5157 = vld [vmem:[%s456 + $0xc28] sm:$0xff]
      %v5158 = vld [vmem:[%s456 + $0xc30] sm:$0xff]
      %v5159 = vld [vmem:[%s456 + $0xc38] sm:$0xff]
      %v5160 = vld [vmem:[%s456 + $0xc40] sm:$0xff]
      %v5161 = vld [vmem:[%s456 + $0xc48] sm:$0xff]
      %v5162 = vld [vmem:[%s456 + $0xc50] sm:$0xff]
      %v5163 = vld [vmem:[%s456 + $0xc58] sm:$0xff]
      %v5164 = vld [vmem:[%s456 + $0xc60] sm:$0xff]
      %v5165 = vld [vmem:[%s456 + $0xc68] sm:$0xff]
      %v5166 = vld [vmem:[%s456 + $0xc70] sm:$0xff]
      %v5167 = vld [vmem:[%s456 + $0xc78] sm:$0xff]
      %v5168 = vld [vmem:[%s456 + $0xc80] sm:$0xff]
      %v5169 = vld [vmem:[%s456 + $0xc88] sm:$0xff]
      %v5170 = vld [vmem:[%s456 + $0xc90] sm:$0xff]
      %v5171 = vld [vmem:[%s456 + $0xc98] sm:$0xff]
      %v5172 = vld [vmem:[%s456 + $0xca0] sm:$0xff]
      %v5173 = vld [vmem:[%s456 + $0xca8] sm:$0xff]
      %v5174 = vld [vmem:[%s456 + $0xcb0] sm:$0xff]
      %v5175 = vld [vmem:[%s456 + $0xcb8] sm:$0xff]
      %v5176 = vld [vmem:[%s456 + $0xcc0] sm:$0xff]
      %v5177 = vld [vmem:[%s456 + $0xcc8] sm:$0xff]
      %v5178 = vld [vmem:[%s456 + $0xcd0] sm:$0xff]
      %v5179 = vld [vmem:[%s456 + $0xcd8] sm:$0xff]
      %v5180 = vld [vmem:[%s456 + $0xce0] sm:$0xff]
      %v5181 = vld [vmem:[%s456 + $0xce8] sm:$0xff]
      %v5182 = vld [vmem:[%s456 + $0xcf0] sm:$0xff]
      %v5183 = vld [vmem:[%s456 + $0xcf8] sm:$0xff]
      %v5184 = vld [vmem:[%s456 + $0xd00] sm:$0xff]
      %v5185 = vld [vmem:[%s456 + $0xd08] sm:$0xff]
      %v5186 = vld [vmem:[%s456 + $0xd10] sm:$0xff]
      %v5187 = vld [vmem:[%s456 + $0xd18] sm:$0xff]
      %v5188 = vld [vmem:[%s456 + $0xd20] sm:$0xff]
      %v5189 = vld [vmem:[%s456 + $0xd28] sm:$0xff]
      %v5190 = vld [vmem:[%s456 + $0xd30] sm:$0xff]
      %v5191 = vld [vmem:[%s456 + $0xd38] sm:$0xff]
      %v5192 = vld [vmem:[%s456 + $0xd40] sm:$0xff]
      %v5193 = vld [vmem:[%s456 + $0xd48] sm:$0xff]
      %v5194 = vld [vmem:[%s456 + $0xd50] sm:$0xff]
      %v5195 = vld [vmem:[%s456 + $0xd58] sm:$0xff]
      %v5196 = vld [vmem:[%s456 + $0xd60] sm:$0xff]
      %v5197 = vld [vmem:[%s456 + $0xd68] sm:$0xff]
      %v5198 = vld [vmem:[%s456 + $0xd70] sm:$0xff]
      %v5199 = vld [vmem:[%s456 + $0xd78] sm:$0xff]
      %v5200 = vld [vmem:[%s456 + $0xd80] sm:$0xff]
      %v5201 = vld [vmem:[%s456 + $0xd88] sm:$0xff]
      %v5202 = vld [vmem:[%s456 + $0xd90] sm:$0xff]
      %v5203 = vld [vmem:[%s456 + $0xd98] sm:$0xff]
      %v5204 = vld [vmem:[%s456 + $0xda0] sm:$0xff]
      %v5205 = vld [vmem:[%s456 + $0xda8] sm:$0xff]
      %v5206 = vld [vmem:[%s456 + $0xdb0] sm:$0xff]
      %v5207 = vld [vmem:[%s456 + $0xdb8] sm:$0xff]
      %v5208 = vld [vmem:[%s456 + $0xdc0] sm:$0xff]
      %v5209 = vld [vmem:[%s456 + $0xdc8] sm:$0xff]
      %v5210 = vld [vmem:[%s456 + $0xdd0] sm:$0xff]
      %v5211 = vld [vmem:[%s456 + $0xdd8] sm:$0xff]
      %v5212 = vld [vmem:[%s456 + $0xde0] sm:$0xff]
      %v5213 = vld [vmem:[%s456 + $0xde8] sm:$0xff]
      %v5214 = vld [vmem:[%s456 + $0xdf0] sm:$0xff]
      %v5215 = vld [vmem:[%s456 + $0xdf8] sm:$0xff]
      %v5216 = vld [vmem:[%s456 + $0xe00] sm:$0xff]
      %v5217 = vld [vmem:[%s456 + $0xe08] sm:$0xff]
      %v5218 = vld [vmem:[%s456 + $0xe10] sm:$0xff]
      %v5219 = vld [vmem:[%s456 + $0xe18] sm:$0xff]
      %v5220 = vld [vmem:[%s456 + $0xe20] sm:$0xff]
      %v5221 = vld [vmem:[%s456 + $0xe28] sm:$0xff]
      %v5222 = vld [vmem:[%s456 + $0xe30] sm:$0xff]
      %v5223 = vld [vmem:[%s456 + $0xe38] sm:$0xff]
      %v5224 = vld [vmem:[%s456 + $0xe40] sm:$0xff]
      %v5225 = vld [vmem:[%s456 + $0xe48] sm:$0xff]
      %v5226 = vld [vmem:[%s456 + $0xe50] sm:$0xff]
      %v5227 = vld [vmem:[%s456 + $0xe58] sm:$0xff]
      %v5228 = vld [vmem:[%s456 + $0xe60] sm:$0xff]
      %v5229 = vld [vmem:[%s456 + $0xe68] sm:$0xff]
      %v5230 = vld [vmem:[%s456 + $0xe70] sm:$0xff]
      %v5231 = vld [vmem:[%s456 + $0xe78] sm:$0xff]
      %v5232 = vld [vmem:[%s456 + $0xe80] sm:$0xff]
      %v5233 = vld [vmem:[%s456 + $0xe88] sm:$0xff]
      %v5234 = vld [vmem:[%s456 + $0xe90] sm:$0xff]
      %v5235 = vld [vmem:[%s456 + $0xe98] sm:$0xff]
      %v5236 = vld [vmem:[%s456 + $0xea0] sm:$0xff]
      %v5237 = vld [vmem:[%s456 + $0xea8] sm:$0xff]
      %v5238 = vld [vmem:[%s456 + $0xeb0] sm:$0xff]
      %v5239 = vld [vmem:[%s456 + $0xeb8] sm:$0xff]
      %v5240 = vld [vmem:[%s456 + $0xec0] sm:$0xff]
      %v5241 = vld [vmem:[%s456 + $0xec8] sm:$0xff]
      %v5242 = vld [vmem:[%s456 + $0xed0] sm:$0xff]
      %v5243 = vld [vmem:[%s456 + $0xed8] sm:$0xff]
      %v5244 = vld [vmem:[%s456 + $0xee0] sm:$0xff]
      %v5245 = vld [vmem:[%s456 + $0xee8] sm:$0xff]
      %v5246 = vld [vmem:[%s456 + $0xef0] sm:$0xff]
      %v5247 = vld [vmem:[%s456 + $0xef8] sm:$0xff]
      %v5248 = vld [vmem:[%s456 + $0xf00] sm:$0xff]
      %v5249 = vld [vmem:[%s456 + $0xf08] sm:$0xff]
      %v5250 = vld [vmem:[%s456 + $0xf10] sm:$0xff]
      %v5251 = vld [vmem:[%s456 + $0xf18] sm:$0xff]
      %v5252 = vld [vmem:[%s456 + $0xf20] sm:$0xff]
      %v5253 = vld [vmem:[%s456 + $0xf28] sm:$0xff]
      %v5254 = vld [vmem:[%s456 + $0xf30] sm:$0xff]
      %v5255 = vld [vmem:[%s456 + $0xf38] sm:$0xff]
      %v5256 = vld [vmem:[%s456 + $0xf40] sm:$0xff]
      %v5257 = vld [vmem:[%s456 + $0xf48] sm:$0xff]
      %v5258 = vld [vmem:[%s456 + $0xf50] sm:$0xff]
      %v5259 = vld [vmem:[%s456 + $0xf58] sm:$0xff]
      %v5260 = vld [vmem:[%s456 + $0xf60] sm:$0xff]
      %v5261 = vld [vmem:[%s456 + $0xf68] sm:$0xff]
      %v5262 = vld [vmem:[%s456 + $0xf70] sm:$0xff]
      %v5263 = vld [vmem:[%s456 + $0xf78] sm:$0xff]
      %v5264 = vld [vmem:[%s456 + $0xf80] sm:$0xff]
      %v5265 = vld [vmem:[%s456 + $0xf88] sm:$0xff]
      %v5266 = vld [vmem:[%s456 + $0xf90] sm:$0xff]
      %v5267 = vld [vmem:[%s456 + $0xf98] sm:$0xff]
      %v5268 = vld [vmem:[%s456 + $0xfa0] sm:$0xff]
      %v5269 = vld [vmem:[%s456 + $0xfa8] sm:$0xff]
      %v5270 = vld [vmem:[%s456 + $0xfb0] sm:$0xff]
      %v5271 = vld [vmem:[%s456 + $0xfb8] sm:$0xff]
      %v5272 = vld [vmem:[%s456 + $0xfc0] sm:$0xff]
      %v5273 = vld [vmem:[%s456 + $0xfc8] sm:$0xff]
      %v5274 = vld [vmem:[%s456 + $0xfd0] sm:$0xff]
      %v5275 = vld [vmem:[%s456 + $0xfd8] sm:$0xff]
      %v5276 = vld [vmem:[%s456 + $0xfe0] sm:$0xff]
      %v5277 = vld [vmem:[%s456 + $0xfe8] sm:$0xff]
      %v5278 = vld [vmem:[%s456 + $0xff0] sm:$0xff]
      %v5279 = vld [vmem:[%s456 + $0xff8] sm:$0xff]
      %v5280 = vld [vmem:[%s460] sm:$0xf]
      %v5282 = vperm.slane %v5280, 0
      %v5283 = vperm.slane %v5280, 1
      %v5284 = vperm.slane %v5280, 2
      %v5285 = vperm.slane %v5280, 3
      %5290 = vmatpush.msra.mxu0 %v4828
      %5291 = vmatpush.msra.mxu0 %v4824
      %5292 = vmatpush.msra.mxu0 %v4820
      %5293 = vmatpush.msra.mxu0 %v4816
      %5294 = vmatpush.msra.mxu0 %v4812
      %5295 = vmatpush.msra.mxu0 %v4808
      %5296 = vmatpush.msra.mxu0 %v4804
      %5297 = vmatpush.msra.mxu0 %v4800
      %5298 = vmatpush.msra.mxu0 %v4796
      %5299 = vmatpush.msra.mxu0 %v4792
      %5300 = vmatpush.msra.mxu0 %v4788
      %5301 = vmatpush.msra.mxu0 %v4784
      %5302 = vmatpush.msra.mxu0 %v4780
      %5303 = vmatpush.msra.mxu0 %v4776
      %5304 = vmatpush.msra.mxu0 %v4772
      %5305 = vmatpush.msra.mxu0 %v4768
      %5306 = vmatmul.f32.gmra.mxu0 %v4760
      %v5307 = vpop.f32.mrf.mxu0
      %v5308 = vadd.f32 %v5282, %v5307
      %5309 = vdwg.mxu0
      %5310 = vmatpush.msra.mxu0 %v4892
      %5311 = vmatpush.msra.mxu0 %v4888
      %5312 = vmatpush.msra.mxu0 %v4884
      %5313 = vmatpush.msra.mxu0 %v4880
      %5314 = vmatpush.msra.mxu0 %v4876
      %5315 = vmatpush.msra.mxu0 %v4872
      %5316 = vmatpush.msra.mxu0 %v4868
      %5317 = vmatpush.msra.mxu0 %v4864
      %5318 = vmatpush.msra.mxu0 %v4860
      %5319 = vmatpush.msra.mxu0 %v4856
      %5320 = vmatpush.msra.mxu0 %v4852
      %5321 = vmatpush.msra.mxu0 %v4848
      %5322 = vmatpush.msra.mxu0 %v4844
      %5323 = vmatpush.msra.mxu0 %v4840
      %5324 = vmatpush.msra.mxu0 %v4836
      %5325 = vmatpush.msra.mxu0 %v4832
      %5326 = vmatmul.f32.gmra.mxu0 %v4761
      %v5327 = vpop.f32.mrf.mxu0
      %v5328 = vadd.f32 %v5308, %v5327
      %5329 = vdwg.mxu0
      %5330 = vmatpush.msra.mxu0 %v4956
      %5331 = vmatpush.msra.mxu0 %v4952
      %5332 = vmatpush.msra.mxu0 %v4948
      %5333 = vmatpush.msra.mxu0 %v4944
      %5334 = vmatpush.msra.mxu0 %v4940
      %5335 = vmatpush.msra.mxu0 %v4936
      %5336 = vmatpush.msra.mxu0 %v4932
      %5337 = vmatpush.msra.mxu0 %v4928
      %5338 = vmatpush.msra.mxu0 %v4924
      %5339 = vmatpush.msra.mxu0 %v4920
      %5340 = vmatpush.msra.mxu0 %v4916
      %5341 = vmatpush.msra.mxu0 %v4912
      %5342 = vmatpush.msra.mxu0 %v4908
      %5343 = vmatpush.msra.mxu0 %v4904
      %5344 = vmatpush.msra.mxu0 %v4900
      %5345 = vmatpush.msra.mxu0 %v4896
      %5346 = vmatmul.f32.gmra.mxu0 %v4762
      %v5347 = vpop.f32.mrf.mxu0
      %v5348 = vadd.f32 %v5328, %v5347
      %5349 = vdwg.mxu0
      %5350 = vmatpush.msra.mxu0 %v5020
      %5351 = vmatpush.msra.mxu0 %v5016
      %5352 = vmatpush.msra.mxu0 %v5012
      %5353 = vmatpush.msra.mxu0 %v5008
      %5354 = vmatpush.msra.mxu0 %v5004
      %5355 = vmatpush.msra.mxu0 %v5000
      %5356 = vmatpush.msra.mxu0 %v4996
      %5357 = vmatpush.msra.mxu0 %v4992
      %5358 = vmatpush.msra.mxu0 %v4988
      %5359 = vmatpush.msra.mxu0 %v4984
      %5360 = vmatpush.msra.mxu0 %v4980
      %5361 = vmatpush.msra.mxu0 %v4976
      %5362 = vmatpush.msra.mxu0 %v4972
      %5363 = vmatpush.msra.mxu0 %v4968
      %5364 = vmatpush.msra.mxu0 %v4964
      %5365 = vmatpush.msra.mxu0 %v4960
      %5366 = vmatmul.f32.gmra.mxu0 %v4763
      %v5367 = vpop.f32.mrf.mxu0
      %v5368 = vadd.f32 %v5348, %v5367
      %5369 = vdwg.mxu0
      %5370 = vmatpush.msra.mxu0 %v5084
      %5371 = vmatpush.msra.mxu0 %v5080
      %5372 = vmatpush.msra.mxu0 %v5076
      %5373 = vmatpush.msra.mxu0 %v5072
      %5374 = vmatpush.msra.mxu0 %v5068
      %5375 = vmatpush.msra.mxu0 %v5064
      %5376 = vmatpush.msra.mxu0 %v5060
      %5377 = vmatpush.msra.mxu0 %v5056
      %5378 = vmatpush.msra.mxu0 %v5052
      %5379 = vmatpush.msra.mxu0 %v5048
      %5380 = vmatpush.msra.mxu0 %v5044
      %5381 = vmatpush.msra.mxu0 %v5040
      %5382 = vmatpush.msra.mxu0 %v5036
      %5383 = vmatpush.msra.mxu0 %v5032
      %5384 = vmatpush.msra.mxu0 %v5028
      %5385 = vmatpush.msra.mxu0 %v5024
      %5386 = vmatmul.f32.gmra.mxu0 %v4764
      %v5387 = vpop.f32.mrf.mxu0
      %v5388 = vadd.f32 %v5368, %v5387
      %5389 = vdwg.mxu0
      %5390 = vmatpush.msra.mxu0 %v5148
      %5391 = vmatpush.msra.mxu0 %v5144
      %5392 = vmatpush.msra.mxu0 %v5140
      %5393 = vmatpush.msra.mxu0 %v5136
      %5394 = vmatpush.msra.mxu0 %v5132
      %5395 = vmatpush.msra.mxu0 %v5128
      %5396 = vmatpush.msra.mxu0 %v5124
      %5397 = vmatpush.msra.mxu0 %v5120
      %5398 = vmatpush.msra.mxu0 %v5116
      %5399 = vmatpush.msra.mxu0 %v5112
      %5400 = vmatpush.msra.mxu0 %v5108
      %5401 = vmatpush.msra.mxu0 %v5104
      %5402 = vmatpush.msra.mxu0 %v5100
      %5403 = vmatpush.msra.mxu0 %v5096
      %5404 = vmatpush.msra.mxu0 %v5092
      %5405 = vmatpush.msra.mxu0 %v5088
      %5406 = vmatmul.f32.gmra.mxu0 %v4765
      %v5407 = vpop.f32.mrf.mxu0
      %v5408 = vadd.f32 %v5388, %v5407
      %5409 = vdwg.mxu0
      %5410 = vmatpush.msra.mxu0 %v5212
      %5411 = vmatpush.msra.mxu0 %v5208
      %5412 = vmatpush.msra.mxu0 %v5204
      %5413 = vmatpush.msra.mxu0 %v5200
      %5414 = vmatpush.msra.mxu0 %v5196
      %5415 = vmatpush.msra.mxu0 %v5192
      %5416 = vmatpush.msra.mxu0 %v5188
      %5417 = vmatpush.msra.mxu0 %v5184
      %5418 = vmatpush.msra.mxu0 %v5180
      %5419 = vmatpush.msra.mxu0 %v5176
      %5420 = vmatpush.msra.mxu0 %v5172
      %5421 = vmatpush.msra.mxu0 %v5168
      %5422 = vmatpush.msra.mxu0 %v5164
      %5423 = vmatpush.msra.mxu0 %v5160
      %5424 = vmatpush.msra.mxu0 %v5156
      %5425 = vmatpush.msra.mxu0 %v5152
      %5426 = vmatmul.f32.gmra.mxu0 %v4766
      %v5427 = vpop.f32.mrf.mxu0
      %v5428 = vadd.f32 %v5408, %v5427
      %5429 = vdwg.mxu0
      %5430 = vmatpush.msra.mxu0 %v5276
      %5431 = vmatpush.msra.mxu0 %v5272
      %5432 = vmatpush.msra.mxu0 %v5268
      %5433 = vmatpush.msra.mxu0 %v5264
      %5434 = vmatpush.msra.mxu0 %v5260
      %5435 = vmatpush.msra.mxu0 %v5256
      %5436 = vmatpush.msra.mxu0 %v5252
      %5437 = vmatpush.msra.mxu0 %v5248
      %5438 = vmatpush.msra.mxu0 %v5244
      %5439 = vmatpush.msra.mxu0 %v5240
      %5440 = vmatpush.msra.mxu0 %v5236
      %5441 = vmatpush.msra.mxu0 %v5232
      %5442 = vmatpush.msra.mxu0 %v5228
      %5443 = vmatpush.msra.mxu0 %v5224
      %5444 = vmatpush.msra.mxu0 %v5220
      %5445 = vmatpush.msra.mxu0 %v5216
      %5446 = vmatmul.f32.gmra.mxu0 %v4767
      %v5447 = vpop.f32.mrf.mxu0
      %v5448 = vadd.f32 %v5428, %v5447
      %5449 = vdwg.mxu0
      %5450 = vmatpush.msra.mxu0 %v4829
      %5451 = vmatpush.msra.mxu0 %v4825
      %5452 = vmatpush.msra.mxu0 %v4821
      %5453 = vmatpush.msra.mxu0 %v4817
      %5454 = vmatpush.msra.mxu0 %v4813
      %5455 = vmatpush.msra.mxu0 %v4809
      %5456 = vmatpush.msra.mxu0 %v4805
      %5457 = vmatpush.msra.mxu0 %v4801
      %5458 = vmatpush.msra.mxu0 %v4797
      %5459 = vmatpush.msra.mxu0 %v4793
      %5460 = vmatpush.msra.mxu0 %v4789
      %5461 = vmatpush.msra.mxu0 %v4785
      %5462 = vmatpush.msra.mxu0 %v4781
      %5463 = vmatpush.msra.mxu0 %v4777
      %5464 = vmatpush.msra.mxu0 %v4773
      %5465 = vmatpush.msra.mxu0 %v4769
      %5466 = vmatmul.f32.gmra.mxu0 %v4760
      %v5467 = vpop.f32.mrf.mxu0
      %v5468 = vadd.f32 %v5283, %v5467
      %5469 = vdwg.mxu0
      %5470 = vmatpush.msra.mxu0 %v4893
      %5471 = vmatpush.msra.mxu0 %v4889
      %5472 = vmatpush.msra.mxu0 %v4885
      %5473 = vmatpush.msra.mxu0 %v4881
      %5474 = vmatpush.msra.mxu0 %v4877
      %5475 = vmatpush.msra.mxu0 %v4873
      %5476 = vmatpush.msra.mxu0 %v4869
      %5477 = vmatpush.msra.mxu0 %v4865
      %5478 = vmatpush.msra.mxu0 %v4861
      %5479 = vmatpush.msra.mxu0 %v4857
      %5480 = vmatpush.msra.mxu0 %v4853
      %5481 = vmatpush.msra.mxu0 %v4849
      %5482 = vmatpush.msra.mxu0 %v4845
      %5483 = vmatpush.msra.mxu0 %v4841
      %5484 = vmatpush.msra.mxu0 %v4837
      %5485 = vmatpush.msra.mxu0 %v4833
      %5486 = vmatmul.f32.gmra.mxu0 %v4761
      %v5487 = vpop.f32.mrf.mxu0
      %v5488 = vadd.f32 %v5468, %v5487
      %5489 = vdwg.mxu0
      %5490 = vmatpush.msra.mxu0 %v4957
      %5491 = vmatpush.msra.mxu0 %v4953
      %5492 = vmatpush.msra.mxu0 %v4949
      %5493 = vmatpush.msra.mxu0 %v4945
      %5494 = vmatpush.msra.mxu0 %v4941
      %5495 = vmatpush.msra.mxu0 %v4937
      %5496 = vmatpush.msra.mxu0 %v4933
      %5497 = vmatpush.msra.mxu0 %v4929
      %5498 = vmatpush.msra.mxu0 %v4925
      %5499 = vmatpush.msra.mxu0 %v4921
      %5500 = vmatpush.msra.mxu0 %v4917
      %5501 = vmatpush.msra.mxu0 %v4913
      %5502 = vmatpush.msra.mxu0 %v4909
      %5503 = vmatpush.msra.mxu0 %v4905
      %5504 = vmatpush.msra.mxu0 %v4901
      %5505 = vmatpush.msra.mxu0 %v4897
      %5506 = vmatmul.f32.gmra.mxu0 %v4762
      %v5507 = vpop.f32.mrf.mxu0
      %v5508 = vadd.f32 %v5488, %v5507
      %5509 = vdwg.mxu0
      %5510 = vmatpush.msra.mxu0 %v5021
      %5511 = vmatpush.msra.mxu0 %v5017
      %5512 = vmatpush.msra.mxu0 %v5013
      %5513 = vmatpush.msra.mxu0 %v5009
      %5514 = vmatpush.msra.mxu0 %v5005
      %5515 = vmatpush.msra.mxu0 %v5001
      %5516 = vmatpush.msra.mxu0 %v4997
      %5517 = vmatpush.msra.mxu0 %v4993
      %5518 = vmatpush.msra.mxu0 %v4989
      %5519 = vmatpush.msra.mxu0 %v4985
      %5520 = vmatpush.msra.mxu0 %v4981
      %5521 = vmatpush.msra.mxu0 %v4977
      %5522 = vmatpush.msra.mxu0 %v4973
      %5523 = vmatpush.msra.mxu0 %v4969
      %5524 = vmatpush.msra.mxu0 %v4965
      %5525 = vmatpush.msra.mxu0 %v4961
      %5526 = vmatmul.f32.gmra.mxu0 %v4763
      %v5527 = vpop.f32.mrf.mxu0
      %v5528 = vadd.f32 %v5508, %v5527
      %5529 = vdwg.mxu0
      %5530 = vmatpush.msra.mxu0 %v5085
      %5531 = vmatpush.msra.mxu0 %v5081
      %5532 = vmatpush.msra.mxu0 %v5077
      %5533 = vmatpush.msra.mxu0 %v5073
      %5534 = vmatpush.msra.mxu0 %v5069
      %5535 = vmatpush.msra.mxu0 %v5065
      %5536 = vmatpush.msra.mxu0 %v5061
      %5537 = vmatpush.msra.mxu0 %v5057
      %5538 = vmatpush.msra.mxu0 %v5053
      %5539 = vmatpush.msra.mxu0 %v5049
      %5540 = vmatpush.msra.mxu0 %v5045
      %5541 = vmatpush.msra.mxu0 %v5041
      %5542 = vmatpush.msra.mxu0 %v5037
      %5543 = vmatpush.msra.mxu0 %v5033
      %5544 = vmatpush.msra.mxu0 %v5029
      %5545 = vmatpush.msra.mxu0 %v5025
      %5546 = vmatmul.f32.gmra.mxu0 %v4764
      %v5547 = vpop.f32.mrf.mxu0
      %v5548 = vadd.f32 %v5528, %v5547
      %5549 = vdwg.mxu0
      %5550 = vmatpush.msra.mxu0 %v5149
      %5551 = vmatpush.msra.mxu0 %v5145
      %5552 = vmatpush.msra.mxu0 %v5141
      %5553 = vmatpush.msra.mxu0 %v5137
      %5554 = vmatpush.msra.mxu0 %v5133
      %5555 = vmatpush.msra.mxu0 %v5129
      %5556 = vmatpush.msra.mxu0 %v5125
      %5557 = vmatpush.msra.mxu0 %v5121
      %5558 = vmatpush.msra.mxu0 %v5117
      %5559 = vmatpush.msra.mxu0 %v5113
      %5560 = vmatpush.msra.mxu0 %v5109
      %5561 = vmatpush.msra.mxu0 %v5105
      %5562 = vmatpush.msra.mxu0 %v5101
      %5563 = vmatpush.msra.mxu0 %v5097
      %5564 = vmatpush.msra.mxu0 %v5093
      %5565 = vmatpush.msra.mxu0 %v5089
      %5566 = vmatmul.f32.gmra.mxu0 %v4765
      %v5567 = vpop.f32.mrf.mxu0
      %v5568 = vadd.f32 %v5548, %v5567
      %5569 = vdwg.mxu0
      %5570 = vmatpush.msra.mxu0 %v5213
      %5571 = vmatpush.msra.mxu0 %v5209
      %5572 = vmatpush.msra.mxu0 %v5205
      %5573 = vmatpush.msra.mxu0 %v5201
      %5574 = vmatpush.msra.mxu0 %v5197
      %5575 = vmatpush.msra.mxu0 %v5193
      %5576 = vmatpush.msra.mxu0 %v5189
      %5577 = vmatpush.msra.mxu0 %v5185
      %5578 = vmatpush.msra.mxu0 %v5181
      %5579 = vmatpush.msra.mxu0 %v5177
      %5580 = vmatpush.msra.mxu0 %v5173
      %5581 = vmatpush.msra.mxu0 %v5169
      %5582 = vmatpush.msra.mxu0 %v5165
      %5583 = vmatpush.msra.mxu0 %v5161
      %5584 = vmatpush.msra.mxu0 %v5157
      %5585 = vmatpush.msra.mxu0 %v5153
      %5586 = vmatmul.f32.gmra.mxu0 %v4766
      %v5587 = vpop.f32.mrf.mxu0
      %v5588 = vadd.f32 %v5568, %v5587
      %5589 = vdwg.mxu0
      %5590 = vmatpush.msra.mxu0 %v5277
      %5591 = vmatpush.msra.mxu0 %v5273
      %5592 = vmatpush.msra.mxu0 %v5269
      %5593 = vmatpush.msra.mxu0 %v5265
      %5594 = vmatpush.msra.mxu0 %v5261
      %5595 = vmatpush.msra.mxu0 %v5257
      %5596 = vmatpush.msra.mxu0 %v5253
      %5597 = vmatpush.msra.mxu0 %v5249
      %5598 = vmatpush.msra.mxu0 %v5245
      %5599 = vmatpush.msra.mxu0 %v5241
      %5600 = vmatpush.msra.mxu0 %v5237
      %5601 = vmatpush.msra.mxu0 %v5233
      %5602 = vmatpush.msra.mxu0 %v5229
      %5603 = vmatpush.msra.mxu0 %v5225
      %5604 = vmatpush.msra.mxu0 %v5221
      %5605 = vmatpush.msra.mxu0 %v5217
      %5606 = vmatmul.f32.gmra.mxu0 %v4767
      %v5607 = vpop.f32.mrf.mxu0
      %v5608 = vadd.f32 %v5588, %v5607
      %5609 = vdwg.mxu0
      %5610 = vmatpush.msra.mxu0 %v4830
      %5611 = vmatpush.msra.mxu0 %v4826
      %5612 = vmatpush.msra.mxu0 %v4822
      %5613 = vmatpush.msra.mxu0 %v4818
      %5614 = vmatpush.msra.mxu0 %v4814
      %5615 = vmatpush.msra.mxu0 %v4810
      %5616 = vmatpush.msra.mxu0 %v4806
      %5617 = vmatpush.msra.mxu0 %v4802
      %5618 = vmatpush.msra.mxu0 %v4798
      %5619 = vmatpush.msra.mxu0 %v4794
      %5620 = vmatpush.msra.mxu0 %v4790
      %5621 = vmatpush.msra.mxu0 %v4786
      %5622 = vmatpush.msra.mxu0 %v4782
      %5623 = vmatpush.msra.mxu0 %v4778
      %5624 = vmatpush.msra.mxu0 %v4774
      %5625 = vmatpush.msra.mxu0 %v4770
      %5626 = vmatmul.f32.gmra.mxu0 %v4760
      %v5627 = vpop.f32.mrf.mxu0
      %v5628 = vadd.f32 %v5284, %v5627
      %5629 = vdwg.mxu0
      %5630 = vmatpush.msra.mxu0 %v4894
      %5631 = vmatpush.msra.mxu0 %v4890
      %5632 = vmatpush.msra.mxu0 %v4886
      %5633 = vmatpush.msra.mxu0 %v4882
      %5634 = vmatpush.msra.mxu0 %v4878
      %5635 = vmatpush.msra.mxu0 %v4874
      %5636 = vmatpush.msra.mxu0 %v4870
      %5637 = vmatpush.msra.mxu0 %v4866
      %5638 = vmatpush.msra.mxu0 %v4862
      %5639 = vmatpush.msra.mxu0 %v4858
      %5640 = vmatpush.msra.mxu0 %v4854
      %5641 = vmatpush.msra.mxu0 %v4850
      %5642 = vmatpush.msra.mxu0 %v4846
      %5643 = vmatpush.msra.mxu0 %v4842
      %5644 = vmatpush.msra.mxu0 %v4838
      %5645 = vmatpush.msra.mxu0 %v4834
      %5646 = vmatmul.f32.gmra.mxu0 %v4761
      %v5647 = vpop.f32.mrf.mxu0
      %v5648 = vadd.f32 %v5628, %v5647
      %5649 = vdwg.mxu0
      %5650 = vmatpush.msra.mxu0 %v4958
      %5651 = vmatpush.msra.mxu0 %v4954
      %5652 = vmatpush.msra.mxu0 %v4950
      %5653 = vmatpush.msra.mxu0 %v4946
      %5654 = vmatpush.msra.mxu0 %v4942
      %5655 = vmatpush.msra.mxu0 %v4938
      %5656 = vmatpush.msra.mxu0 %v4934
      %5657 = vmatpush.msra.mxu0 %v4930
      %5658 = vmatpush.msra.mxu0 %v4926
      %5659 = vmatpush.msra.mxu0 %v4922
      %5660 = vmatpush.msra.mxu0 %v4918
      %5661 = vmatpush.msra.mxu0 %v4914
      %5662 = vmatpush.msra.mxu0 %v4910
      %5663 = vmatpush.msra.mxu0 %v4906
      %5664 = vmatpush.msra.mxu0 %v4902
      %5665 = vmatpush.msra.mxu0 %v4898
      %5666 = vmatmul.f32.gmra.mxu0 %v4762
      %v5667 = vpop.f32.mrf.mxu0
      %v5668 = vadd.f32 %v5648, %v5667
      %5669 = vdwg.mxu0
      %5670 = vmatpush.msra.mxu0 %v5022
      %5671 = vmatpush.msra.mxu0 %v5018
      %5672 = vmatpush.msra.mxu0 %v5014
      %5673 = vmatpush.msra.mxu0 %v5010
      %5674 = vmatpush.msra.mxu0 %v5006
      %5675 = vmatpush.msra.mxu0 %v5002
      %5676 = vmatpush.msra.mxu0 %v4998
      %5677 = vmatpush.msra.mxu0 %v4994
      %5678 = vmatpush.msra.mxu0 %v4990
      %5679 = vmatpush.msra.mxu0 %v4986
      %5680 = vmatpush.msra.mxu0 %v4982
      %5681 = vmatpush.msra.mxu0 %v4978
      %5682 = vmatpush.msra.mxu0 %v4974
      %5683 = vmatpush.msra.mxu0 %v4970
      %5684 = vmatpush.msra.mxu0 %v4966
      %5685 = vmatpush.msra.mxu0 %v4962
      %5686 = vmatmul.f32.gmra.mxu0 %v4763
      %v5687 = vpop.f32.mrf.mxu0
      %v5688 = vadd.f32 %v5668, %v5687
      %5689 = vdwg.mxu0
      %5690 = vmatpush.msra.mxu0 %v5086
      %5691 = vmatpush.msra.mxu0 %v5082
      %5692 = vmatpush.msra.mxu0 %v5078
      %5693 = vmatpush.msra.mxu0 %v5074
      %5694 = vmatpush.msra.mxu0 %v5070
      %5695 = vmatpush.msra.mxu0 %v5066
      %5696 = vmatpush.msra.mxu0 %v5062
      %5697 = vmatpush.msra.mxu0 %v5058
      %5698 = vmatpush.msra.mxu0 %v5054
      %5699 = vmatpush.msra.mxu0 %v5050
      %5700 = vmatpush.msra.mxu0 %v5046
      %5701 = vmatpush.msra.mxu0 %v5042
      %5702 = vmatpush.msra.mxu0 %v5038
      %5703 = vmatpush.msra.mxu0 %v5034
      %5704 = vmatpush.msra.mxu0 %v5030
      %5705 = vmatpush.msra.mxu0 %v5026
      %5706 = vmatmul.f32.gmra.mxu0 %v4764
      %v5707 = vpop.f32.mrf.mxu0
      %v5708 = vadd.f32 %v5688, %v5707
      %5709 = vdwg.mxu0
      %5710 = vmatpush.msra.mxu0 %v5150
      %5711 = vmatpush.msra.mxu0 %v5146
      %5712 = vmatpush.msra.mxu0 %v5142
      %5713 = vmatpush.msra.mxu0 %v5138
      %5714 = vmatpush.msra.mxu0 %v5134
      %5715 = vmatpush.msra.mxu0 %v5130
      %5716 = vmatpush.msra.mxu0 %v5126
      %5717 = vmatpush.msra.mxu0 %v5122
      %5718 = vmatpush.msra.mxu0 %v5118
      %5719 = vmatpush.msra.mxu0 %v5114
      %5720 = vmatpush.msra.mxu0 %v5110
      %5721 = vmatpush.msra.mxu0 %v5106
      %5722 = vmatpush.msra.mxu0 %v5102
      %5723 = vmatpush.msra.mxu0 %v5098
      %5724 = vmatpush.msra.mxu0 %v5094
      %5725 = vmatpush.msra.mxu0 %v5090
      %5726 = vmatmul.f32.gmra.mxu0 %v4765
      %v5727 = vpop.f32.mrf.mxu0
      %v5728 = vadd.f32 %v5708, %v5727
      %5729 = vdwg.mxu0
      %5730 = vmatpush.msra.mxu0 %v5214
      %5731 = vmatpush.msra.mxu0 %v5210
      %5732 = vmatpush.msra.mxu0 %v5206
      %5733 = vmatpush.msra.mxu0 %v5202
      %5734 = vmatpush.msra.mxu0 %v5198
      %5735 = vmatpush.msra.mxu0 %v5194
      %5736 = vmatpush.msra.mxu0 %v5190
      %5737 = vmatpush.msra.mxu0 %v5186
      %5738 = vmatpush.msra.mxu0 %v5182
      %5739 = vmatpush.msra.mxu0 %v5178
      %5740 = vmatpush.msra.mxu0 %v5174
      %5741 = vmatpush.msra.mxu0 %v5170
      %5742 = vmatpush.msra.mxu0 %v5166
      %5743 = vmatpush.msra.mxu0 %v5162
      %5744 = vmatpush.msra.mxu0 %v5158
      %5745 = vmatpush.msra.mxu0 %v5154
      %5746 = vmatmul.f32.gmra.mxu0 %v4766
      %v5747 = vpop.f32.mrf.mxu0
      %v5748 = vadd.f32 %v5728, %v5747
      %5749 = vdwg.mxu0
      %5750 = vmatpush.msra.mxu0 %v5278
      %5751 = vmatpush.msra.mxu0 %v5274
      %5752 = vmatpush.msra.mxu0 %v5270
      %5753 = vmatpush.msra.mxu0 %v5266
      %5754 = vmatpush.msra.mxu0 %v5262
      %5755 = vmatpush.msra.mxu0 %v5258
      %5756 = vmatpush.msra.mxu0 %v5254
      %5757 = vmatpush.msra.mxu0 %v5250
      %5758 = vmatpush.msra.mxu0 %v5246
      %5759 = vmatpush.msra.mxu0 %v5242
      %5760 = vmatpush.msra.mxu0 %v5238
      %5761 = vmatpush.msra.mxu0 %v5234
      %5762 = vmatpush.msra.mxu0 %v5230
      %5763 = vmatpush.msra.mxu0 %v5226
      %5764 = vmatpush.msra.mxu0 %v5222
      %5765 = vmatpush.msra.mxu0 %v5218
      %5766 = vmatmul.f32.gmra.mxu0 %v4767
      %v5767 = vpop.f32.mrf.mxu0
      %v5768 = vadd.f32 %v5748, %v5767
      %5769 = vdwg.mxu0
      %5770 = vmatpush.msra.mxu0 %v4831
      %5771 = vmatpush.msra.mxu0 %v4827
      %5772 = vmatpush.msra.mxu0 %v4823
      %5773 = vmatpush.msra.mxu0 %v4819
      %5774 = vmatpush.msra.mxu0 %v4815
      %5775 = vmatpush.msra.mxu0 %v4811
      %5776 = vmatpush.msra.mxu0 %v4807
      %5777 = vmatpush.msra.mxu0 %v4803
      %5778 = vmatpush.msra.mxu0 %v4799
      %5779 = vmatpush.msra.mxu0 %v4795
      %5780 = vmatpush.msra.mxu0 %v4791
      %5781 = vmatpush.msra.mxu0 %v4787
      %5782 = vmatpush.msra.mxu0 %v4783
      %5783 = vmatpush.msra.mxu0 %v4779
      %5784 = vmatpush.msra.mxu0 %v4775
      %5785 = vmatpush.msra.mxu0 %v4771
      %5786 = vmatmul.f32.gmra.mxu0 %v4760
      %v5787 = vpop.f32.mrf.mxu0
      %v5788 = vadd.f32 %v5285, %v5787
      %5789 = vdwg.mxu0
      %5790 = vmatpush.msra.mxu0 %v4895
      %5791 = vmatpush.msra.mxu0 %v4891
      %5792 = vmatpush.msra.mxu0 %v4887
      %5793 = vmatpush.msra.mxu0 %v4883
      %5794 = vmatpush.msra.mxu0 %v4879
      %5795 = vmatpush.msra.mxu0 %v4875
      %5796 = vmatpush.msra.mxu0 %v4871
      %5797 = vmatpush.msra.mxu0 %v4867
      %5798 = vmatpush.msra.mxu0 %v4863
      %5799 = vmatpush.msra.mxu0 %v4859
      %5800 = vmatpush.msra.mxu0 %v4855
      %5801 = vmatpush.msra.mxu0 %v4851
      %5802 = vmatpush.msra.mxu0 %v4847
      %5803 = vmatpush.msra.mxu0 %v4843
      %5804 = vmatpush.msra.mxu0 %v4839
      %5805 = vmatpush.msra.mxu0 %v4835
      %5806 = vmatmul.f32.gmra.mxu0 %v4761
      %v5807 = vpop.f32.mrf.mxu0
      %v5808 = vadd.f32 %v5788, %v5807
      %5809 = vdwg.mxu0
      %5810 = vmatpush.msra.mxu0 %v4959
      %5811 = vmatpush.msra.mxu0 %v4955
      %5812 = vmatpush.msra.mxu0 %v4951
      %5813 = vmatpush.msra.mxu0 %v4947
      %5814 = vmatpush.msra.mxu0 %v4943
      %5815 = vmatpush.msra.mxu0 %v4939
      %5816 = vmatpush.msra.mxu0 %v4935
      %5817 = vmatpush.msra.mxu0 %v4931
      %5818 = vmatpush.msra.mxu0 %v4927
      %5819 = vmatpush.msra.mxu0 %v4923
      %5820 = vmatpush.msra.mxu0 %v4919
      %5821 = vmatpush.msra.mxu0 %v4915
      %5822 = vmatpush.msra.mxu0 %v4911
      %5823 = vmatpush.msra.mxu0 %v4907
      %5824 = vmatpush.msra.mxu0 %v4903
      %5825 = vmatpush.msra.mxu0 %v4899
      %5826 = vmatmul.f32.gmra.mxu0 %v4762
      %v5827 = vpop.f32.mrf.mxu0
      %v5828 = vadd.f32 %v5808, %v5827
      %5829 = vdwg.mxu0
      %5830 = vmatpush.msra.mxu0 %v5023
      %5831 = vmatpush.msra.mxu0 %v5019
      %5832 = vmatpush.msra.mxu0 %v5015
      %5833 = vmatpush.msra.mxu0 %v5011
      %5834 = vmatpush.msra.mxu0 %v5007
      %5835 = vmatpush.msra.mxu0 %v5003
      %5836 = vmatpush.msra.mxu0 %v4999
      %5837 = vmatpush.msra.mxu0 %v4995
      %5838 = vmatpush.msra.mxu0 %v4991
      %5839 = vmatpush.msra.mxu0 %v4987
      %5840 = vmatpush.msra.mxu0 %v4983
      %5841 = vmatpush.msra.mxu0 %v4979
      %5842 = vmatpush.msra.mxu0 %v4975
      %5843 = vmatpush.msra.mxu0 %v4971
      %5844 = vmatpush.msra.mxu0 %v4967
      %5845 = vmatpush.msra.mxu0 %v4963
      %5846 = vmatmul.f32.gmra.mxu0 %v4763
      %v5847 = vpop.f32.mrf.mxu0
      %v5848 = vadd.f32 %v5828, %v5847
      %5849 = vdwg.mxu0
      %5850 = vmatpush.msra.mxu0 %v5087
      %5851 = vmatpush.msra.mxu0 %v5083
      %5852 = vmatpush.msra.mxu0 %v5079
      %5853 = vmatpush.msra.mxu0 %v5075
      %5854 = vmatpush.msra.mxu0 %v5071
      %5855 = vmatpush.msra.mxu0 %v5067
      %5856 = vmatpush.msra.mxu0 %v5063
      %5857 = vmatpush.msra.mxu0 %v5059
      %5858 = vmatpush.msra.mxu0 %v5055
      %5859 = vmatpush.msra.mxu0 %v5051
      %5860 = vmatpush.msra.mxu0 %v5047
      %5861 = vmatpush.msra.mxu0 %v5043
      %5862 = vmatpush.msra.mxu0 %v5039
      %5863 = vmatpush.msra.mxu0 %v5035
      %5864 = vmatpush.msra.mxu0 %v5031
      %5865 = vmatpush.msra.mxu0 %v5027
      %5866 = vmatmul.f32.gmra.mxu0 %v4764
      %v5867 = vpop.f32.mrf.mxu0
      %v5868 = vadd.f32 %v5848, %v5867
      %5869 = vdwg.mxu0
      %5870 = vmatpush.msra.mxu0 %v5151
      %5871 = vmatpush.msra.mxu0 %v5147
      %5872 = vmatpush.msra.mxu0 %v5143
      %5873 = vmatpush.msra.mxu0 %v5139
      %5874 = vmatpush.msra.mxu0 %v5135
      %5875 = vmatpush.msra.mxu0 %v5131
      %5876 = vmatpush.msra.mxu0 %v5127
      %5877 = vmatpush.msra.mxu0 %v5123
      %5878 = vmatpush.msra.mxu0 %v5119
      %5879 = vmatpush.msra.mxu0 %v5115
      %5880 = vmatpush.msra.mxu0 %v5111
      %5881 = vmatpush.msra.mxu0 %v5107
      %5882 = vmatpush.msra.mxu0 %v5103
      %5883 = vmatpush.msra.mxu0 %v5099
      %5884 = vmatpush.msra.mxu0 %v5095
      %5885 = vmatpush.msra.mxu0 %v5091
      %5886 = vmatmul.f32.gmra.mxu0 %v4765
      %v5887 = vpop.f32.mrf.mxu0
      %v5888 = vadd.f32 %v5868, %v5887
      %5889 = vdwg.mxu0
      %5890 = vmatpush.msra.mxu0 %v5215
      %5891 = vmatpush.msra.mxu0 %v5211
      %5892 = vmatpush.msra.mxu0 %v5207
      %5893 = vmatpush.msra.mxu0 %v5203
      %5894 = vmatpush.msra.mxu0 %v5199
      %5895 = vmatpush.msra.mxu0 %v5195
      %5896 = vmatpush.msra.mxu0 %v5191
      %5897 = vmatpush.msra.mxu0 %v5187
      %5898 = vmatpush.msra.mxu0 %v5183
      %5899 = vmatpush.msra.mxu0 %v5179
      %5900 = vmatpush.msra.mxu0 %v5175
      %5901 = vmatpush.msra.mxu0 %v5171
      %5902 = vmatpush.msra.mxu0 %v5167
      %5903 = vmatpush.msra.mxu0 %v5163
      %5904 = vmatpush.msra.mxu0 %v5159
      %5905 = vmatpush.msra.mxu0 %v5155
      %5906 = vmatmul.f32.gmra.mxu0 %v4766
      %v5907 = vpop.f32.mrf.mxu0
      %v5908 = vadd.f32 %v5888, %v5907
      %5909 = vdwg.mxu0
      %5910 = vmatpush.msra.mxu0 %v5279
      %5911 = vmatpush.msra.mxu0 %v5275
      %5912 = vmatpush.msra.mxu0 %v5271
      %5913 = vmatpush.msra.mxu0 %v5267
      %5914 = vmatpush.msra.mxu0 %v5263
      %5915 = vmatpush.msra.mxu0 %v5259
      %5916 = vmatpush.msra.mxu0 %v5255
      %5917 = vmatpush.msra.mxu0 %v5251
      %5918 = vmatpush.msra.mxu0 %v5247
      %5919 = vmatpush.msra.mxu0 %v5243
      %5920 = vmatpush.msra.mxu0 %v5239
      %5921 = vmatpush.msra.mxu0 %v5235
      %5922 = vmatpush.msra.mxu0 %v5231
      %5923 = vmatpush.msra.mxu0 %v5227
      %5924 = vmatpush.msra.mxu0 %v5223
      %5925 = vmatpush.msra.mxu0 %v5219
      %5926 = vmatmul.f32.gmra.mxu0 %v4767
      %v5927 = vpop.f32.mrf.mxu0
      %v5928 = vadd.f32 %v5908, %v5927
      %5929 = vdwg.mxu0
      %v5930 = vmax.f32 %v5448, 0.0
      %v5931 = vmax.f32 %v5608, 0.0
      %v5932 = vmax.f32 %v5768, 0.0
      %v5933 = vmax.f32 %v5928, 0.0
      %v5934 = vld [vmem:[%s465] sm:$0xff]
      %v5935 = vld [vmem:[%s465 + $0x8] sm:$0xff]
      %v5936 = vld [vmem:[%s465 + $0x10] sm:$0xff]
      %v5937 = vld [vmem:[%s465 + $0x18] sm:$0xff]
      %v5938 = vld [vmem:[%s465 + $0x20] sm:$0xff]
      %v5939 = vld [vmem:[%s465 + $0x28] sm:$0xff]
      %v5940 = vld [vmem:[%s465 + $0x30] sm:$0xff]
      %v5941 = vld [vmem:[%s465 + $0x38] sm:$0xff]
      %v5942 = vld [vmem:[%s465 + $0x40] sm:$0xff]
      %v5943 = vld [vmem:[%s465 + $0x48] sm:$0xff]
      %v5944 = vld [vmem:[%s465 + $0x50] sm:$0xff]
      %v5945 = vld [vmem:[%s465 + $0x58] sm:$0xff]
      %v5946 = vld [vmem:[%s465 + $0x60] sm:$0xff]
      %v5947 = vld [vmem:[%s465 + $0x68] sm:$0xff]
      %v5948 = vld [vmem:[%s465 + $0x70] sm:$0xff]
      %v5949 = vld [vmem:[%s465 + $0x78] sm:$0xff]
      %v5950 = vld [vmem:[%s465 + $0x80] sm:$0xff]
      %v5951 = vld [vmem:[%s465 + $0x88] sm:$0xff]
      %v5952 = vld [vmem:[%s465 + $0x90] sm:$0xff]
      %v5953 = vld [vmem:[%s465 + $0x98] sm:$0xff]
      %v5954 = vld [vmem:[%s465 + $0xa0] sm:$0xff]
      %v5955 = vld [vmem:[%s465 + $0xa8] sm:$0xff]
      %v5956 = vld [vmem:[%s465 + $0xb0] sm:$0xff]
      %v5957 = vld [vmem:[%s465 + $0xb8] sm:$0xff]
      %v5958 = vld [vmem:[%s465 + $0xc0] sm:$0xff]
      %v5959 = vld [vmem:[%s465 + $0xc8] sm:$0xff]
      %v5960 = vld [vmem:[%s465 + $0xd0] sm:$0xff]
      %v5961 = vld [vmem:[%s465 + $0xd8] sm:$0xff]
      %v5962 = vld [vmem:[%s465 + $0xe0] sm:$0xff]
      %v5963 = vld [vmem:[%s465 + $0xe8] sm:$0xff]
      %v5964 = vld [vmem:[%s465 + $0xf0] sm:$0xff]
      %v5965 = vld [vmem:[%s465 + $0xf8] sm:$0xff]
      %v5966 = vld [vmem:[%s465 + $0x100] sm:$0xff]
      %v5967 = vld [vmem:[%s465 + $0x108] sm:$0xff]
      %v5968 = vld [vmem:[%s465 + $0x110] sm:$0xff]
      %v5969 = vld [vmem:[%s465 + $0x118] sm:$0xff]
      %v5970 = vld [vmem:[%s465 + $0x120] sm:$0xff]
      %v5971 = vld [vmem:[%s465 + $0x128] sm:$0xff]
      %v5972 = vld [vmem:[%s465 + $0x130] sm:$0xff]
      %v5973 = vld [vmem:[%s465 + $0x138] sm:$0xff]
      %v5974 = vld [vmem:[%s465 + $0x140] sm:$0xff]
      %v5975 = vld [vmem:[%s465 + $0x148] sm:$0xff]
      %v5976 = vld [vmem:[%s465 + $0x150] sm:$0xff]
      %v5977 = vld [vmem:[%s465 + $0x158] sm:$0xff]
      %v5978 = vld [vmem:[%s465 + $0x160] sm:$0xff]
      %v5979 = vld [vmem:[%s465 + $0x168] sm:$0xff]
      %v5980 = vld [vmem:[%s465 + $0x170] sm:$0xff]
      %v5981 = vld [vmem:[%s465 + $0x178] sm:$0xff]
      %v5982 = vld [vmem:[%s465 + $0x180] sm:$0xff]
      %v5983 = vld [vmem:[%s465 + $0x188] sm:$0xff]
      %v5984 = vld [vmem:[%s465 + $0x190] sm:$0xff]
      %v5985 = vld [vmem:[%s465 + $0x198] sm:$0xff]
      %v5986 = vld [vmem:[%s465 + $0x1a0] sm:$0xff]
      %v5987 = vld [vmem:[%s465 + $0x1a8] sm:$0xff]
      %v5988 = vld [vmem:[%s465 + $0x1b0] sm:$0xff]
      %v5989 = vld [vmem:[%s465 + $0x1b8] sm:$0xff]
      %v5990 = vld [vmem:[%s465 + $0x1c0] sm:$0xff]
      %v5991 = vld [vmem:[%s465 + $0x1c8] sm:$0xff]
      %v5992 = vld [vmem:[%s465 + $0x1d0] sm:$0xff]
      %v5993 = vld [vmem:[%s465 + $0x1d8] sm:$0xff]
      %v5994 = vld [vmem:[%s465 + $0x1e0] sm:$0xff]
      %v5995 = vld [vmem:[%s465 + $0x1e8] sm:$0xff]
      %v5996 = vld [vmem:[%s465 + $0x1f0] sm:$0xff]
      %v5997 = vld [vmem:[%s465 + $0x1f8] sm:$0xff]
      %v5998 = vld [vmem:[%s468] sm:$0x1]
      %v6000 = vperm.slane %v5998, 0
      %6002 = vmatpush.msra.mxu0 %v5949
      %6003 = vmatpush.msra.mxu0 %v5948
      %6004 = vmatpush.msra.mxu0 %v5947
      %6005 = vmatpush.msra.mxu0 %v5946
      %6006 = vmatpush.msra.mxu0 %v5945
      %6007 = vmatpush.msra.mxu0 %v5944
      %6008 = vmatpush.msra.mxu0 %v5943
      %6009 = vmatpush.msra.mxu0 %v5942
      %6010 = vmatpush.msra.mxu0 %v5941
      %6011 = vmatpush.msra.mxu0 %v5940
      %6012 = vmatpush.msra.mxu0 %v5939
      %6013 = vmatpush.msra.mxu0 %v5938
      %6014 = vmatpush.msra.mxu0 %v5937
      %6015 = vmatpush.msra.mxu0 %v5936
      %6016 = vmatpush.msra.mxu0 %v5935
      %6017 = vmatpush.msra.mxu0 %v5934
      %6018 = vmatmul.f32.gmra.mxu0 %v5930
      %v6019 = vpop.f32.mrf.mxu0
      %v6020 = vadd.f32 %v6000, %v6019
      %6021 = vdwg.mxu0
      %6022 = vmatpush.msra.mxu0 %v5965
      %6023 = vmatpush.msra.mxu0 %v5964
      %6024 = vmatpush.msra.mxu0 %v5963
      %6025 = vmatpush.msra.mxu0 %v5962
      %6026 = vmatpush.msra.mxu0 %v5961
      %6027 = vmatpush.msra.mxu0 %v5960
      %6028 = vmatpush.msra.mxu0 %v5959
      %6029 = vmatpush.msra.mxu0 %v5958
      %6030 = vmatpush.msra.mxu0 %v5957
      %6031 = vmatpush.msra.mxu0 %v5956
      %6032 = vmatpush.msra.mxu0 %v5955
      %6033 = vmatpush.msra.mxu0 %v5954
      %6034 = vmatpush.msra.mxu0 %v5953
      %6035 = vmatpush.msra.mxu0 %v5952
      %6036 = vmatpush.msra.mxu0 %v5951
      %6037 = vmatpush.msra.mxu0 %v5950
      %6038 = vmatmul.f32.gmra.mxu0 %v5931
      %v6039 = vpop.f32.mrf.mxu0
      %v6040 = vadd.f32 %v6020, %v6039
      %6041 = vdwg.mxu0
      %6042 = vmatpush.msra.mxu0 %v5981
      %6043 = vmatpush.msra.mxu0 %v5980
      %6044 = vmatpush.msra.mxu0 %v5979
      %6045 = vmatpush.msra.mxu0 %v5978
      %6046 = vmatpush.msra.mxu0 %v5977
      %6047 = vmatpush.msra.mxu0 %v5976
      %6048 = vmatpush.msra.mxu0 %v5975
      %6049 = vmatpush.msra.mxu0 %v5974
      %6050 = vmatpush.msra.mxu0 %v5973
      %6051 = vmatpush.msra.mxu0 %v5972
      %6052 = vmatpush.msra.mxu0 %v5971
      %6053 = vmatpush.msra.mxu0 %v5970
      %6054 = vmatpush.msra.mxu0 %v5969
      %6055 = vmatpush.msra.mxu0 %v5968
      %6056 = vmatpush.msra.mxu0 %v5967
      %6057 = vmatpush.msra.mxu0 %v5966
      %6058 = vmatmul.f32.gmra.mxu0 %v5932
      %v6059 = vpop.f32.mrf.mxu0
      %v6060 = vadd.f32 %v6040, %v6059
      %6061 = vdwg.mxu0
      %6062 = vmatpush.msra.mxu0 %v5997
      %6063 = vmatpush.msra.mxu0 %v5996
      %6064 = vmatpush.msra.mxu0 %v5995
      %6065 = vmatpush.msra.mxu0 %v5994
      %6066 = vmatpush.msra.mxu0 %v5993
      %6067 = vmatpush.msra.mxu0 %v5992
      %6068 = vmatpush.msra.mxu0 %v5991
      %6069 = vmatpush.msra.mxu0 %v5990
      %6070 = vmatpush.msra.mxu0 %v5989
      %6071 = vmatpush.msra.mxu0 %v5988
      %6072 = vmatpush.msra.mxu0 %v5987
      %6073 = vmatpush.msra.mxu0 %v5986
      %6074 = vmatpush.msra.mxu0 %v5985
      %6075 = vmatpush.msra.mxu0 %v5984
      %6076 = vmatpush.msra.mxu0 %v5983
      %6077 = vmatpush.msra.mxu0 %v5982
      %6078 = vmatmul.f32.gmra.mxu0 %v5933
      %v6079 = vpop.f32.mrf.mxu0
      %v6080 = vadd.f32 %v6060, %v6079
      %6081 = vdwg.mxu0
      %6082 = vst [vmem:[%s472] sm:$0x3] %v6080
      %p6083 = scmp.lt.s32.totalorder %s20, 4
      %s6084 = scalar_select %p6083, %s20, 4
      %s6085 = smul.addr %s6084, 2
      %s6086 = scalar_lea.vmem %s9, %s6085
      // Predicated region
      $region57: #{ensemble_forward.3} parent=55 // pred_check
        %p6087 = pneg %p272
      $region58: #{ensemble_forward.3} parent=55 // pred_check_branch
        %6089 = sbr.rel (%p6087) target = $region60
      $region59: #{ensemble_forward.3} parent=55 // pred_region
        _
      $region60: #{ensemble_forward.3} parent=55 // pred_fallthru
        _
    $region56: #{ensemble_forward.3} parent=5 // pred_fallthru
      _
    %p6090 = scmp.le.s32.totalorder 2, %s15
    // Predicated region
    $region61: #{ensemble_forward.3} parent=5 // pred_check
      %p6091 = pneg %p6090
    $region62: #{ensemble_forward.3} parent=5 // pred_check_branch
      %6093 = sbr.rel (%p6091) target = $region64
    $region63: #{ensemble_forward.3} parent=5 // pred_region
      %s6094 = ssub.s32 %s15, 2
      // Predicated region
      $region65: #{ensemble_forward.3} parent=63 // pred_check
        %p6095 = pneg %p278
      $region66: #{ensemble_forward.3} parent=63 // pred_check_branch
        %6097 = sbr.rel (%p6095) target = $region68
      $region67: #{ensemble_forward.3} parent=63 // pred_region
        %p6098 = scmp.lt.s32.totalorder %s21, 4
        %s6099 = scalar_select %p6098, %s21, 4
        %s6100 = smul.addr %s6099, 2
        %s6101 = scalar_lea.vmem %s9, %s6100
      $region68: #{ensemble_forward.3} parent=63 // pred_fallthru
        _
    $region64: #{ensemble_forward.3} parent=5 // pred_fallthru
      _
  $region6: #{ensemble_forward.3} parent=0 // loop_footer
    %s19 = sadd.s32 1, %s15
  $region7: #{ensemble_forward.3} parent=0 // loop_footer_branch
    %14 = sbr.rel target = $region3
  $region8: #{ensemble_forward.3} parent=0 // loop_exit
    _

</llo_original>
